<compile_context>
chip_gen: v6e
topology: v6e:2x2x1
jax: 0.10.0
libtpu: 0.0.40
codegen_flags: <defaults>
</compile_context>

<pallas_src>
import functools

import jax
import jax.numpy as jnp
from jax.experimental import pallas as pl
from jax.experimental.pallas import tpu as pltpu


def _denoiser_kernel(x_ref, we_ref, wbn_ref, wd_ref, bias_ref,
                     o_ref, pad_ref, ecol_ref, *, H, W, B):
    # x_ref   : (B, 1, H*W)       B images, flattened spatially (lane-dense)
    # we_ref  : (C, 16)           encoder weight, col t = kh*3+kw, cols 9..15 = 0
    # wbn_ref : (3, 9, C, C)      bottleneck weights, [layer, tap] = (Cout, Cin)
    # wd_ref  : (9, 1, C)         decoder (transpose-conv rewritten as conv)
    # bias_ref: (C, 5)            col 0 enc, cols 1..3 bottleneck, col 4 dec
    # o_ref   : (B, 1, H*W)       output images (lane-dense, Cout=1)
    # pad_ref : (C, H*W + 2*(W+1)) flat zero-padded activation scratch
    # ecol_ref: (16, H*W)         encoder tap slab (K padded to 16)
    f32 = jnp.float32
    HW = H * W
    PAD = W + 1
    C = bias_ref.shape[0]

    # Per-step scratch init: only the halo bands (the interior is overwritten
    # by every layer) and the zero K-padding rows of the encoder slab.
    pad_ref[:, 0:PAD] = jnp.zeros((C, PAD), f32)
    pad_ref[:, PAD + HW:2 * PAD + HW] = jnp.zeros((C, PAD), f32)
    ecol_ref[8:16, :] = jnp.zeros((8, HW), f32)

    # Lane masks killing the horizontal wrap of the flattened (H*W) axis.
    wpos = jax.lax.broadcasted_iota(jnp.int32, (1, HW), 1) % W
    mask_l = (wpos >= 1).astype(f32)       # column w-1 exists
    mask_r = (wpos <= W - 2).astype(f32)   # column w+1 exists

    shifts = [dh * W + dw for dh in (-1, 0, 1) for dw in (-1, 0, 1)]

    def tap(rows, t):
        # Zero-padded 3x3 tap t of the activation stored at pad_ref[:, PAD:PAD+HW].
        # Vertical out-of-range reads land in the zero halo bands; the
        # horizontal wrap is removed by mask_l / mask_r on the results.
        s = shifts[t]
        return pad_ref[0:rows, PAD + s:PAD + s + HW]

    def conv_accum(weight_for_tap):
        # sum_t W_t @ tap_t, grouped by horizontal offset so each wrap mask is
        # applied once to a grouped partial sum (the mask is per spatial lane,
        # so it commutes with the channel contraction), not once per tap.
        groups = [None, None, None]
        for t in range(9):
            p = jnp.dot(weight_for_tap(t), tap(C, t),
                        preferred_element_type=f32)
            dw = t % 3
            groups[dw] = p if groups[dw] is None else groups[dw] + p
        return groups[0] * mask_l + groups[1] + groups[2] * mask_r

    b_enc = bias_ref[:, 0:1]          # (C, 1)
    b_dec = bias_ref[0:1, 4:5]        # (1, 1)

    for b in range(B):
        # ------------- encoder: Conv2d(1 -> 64) + ReLU  (MXU, K=16) ---------
        pad_ref[0:1, PAD:PAD + HW] = x_ref[b]
        for t in range(9):
            v = tap(1, t)                     # (1, HW) taps are cheap to mask
            if t % 3 == 0:
                v = v * mask_l
            elif t % 3 == 2:
                v = v * mask_r
            ecol_ref[t:t + 1, :] = v
        y = jnp.dot(we_ref[...], ecol_ref[...], preferred_element_type=f32)
        pad_ref[:, PAD:PAD + HW] = jnp.maximum(y + b_enc, 0.0)

        # ------------- bottleneck: 3 x Conv2d(64 -> 64) + ReLU --------------
        for l in range(3):
            y = conv_accum(lambda t, l=l: wbn_ref[l, t])
            pad_ref[:, PAD:PAD + HW] = jnp.maximum(
                y + bias_ref[:, l + 1:l + 2], 0.0)

        # ------------- decoder: ConvTranspose2d(64 -> 1) + ReLU -------------
        # stride=1, padding=1 transpose-conv == conv with flipped, swapped kernel.
        y = conv_accum(lambda t: wd_ref[t])
        o_ref[b] = jnp.maximum(y + b_dec, 0.0)


def _prep_weights(params):
    """Reformat PyTorch-native weights for the in-kernel layouts."""
    C = params["enc_w"].shape[0]  # 64
    # encoder (Cout, 1, 3, 3) -> (Cout, 9) with col t = kh*3+kw, K padded to 16
    w_enc = params["enc_w"].reshape(C, 9).astype(jnp.float32)
    w_enc = jnp.pad(w_enc, ((0, 0), (0, 7)))
    # bottleneck (Cout, Cin, 3, 3) -> (3, 9, Cout, Cin)
    w_bn = jnp.stack([jnp.transpose(w, (2, 3, 0, 1)).reshape(9, C, C)
                      for w in params["bn_w"]]).astype(jnp.float32)
    # decoder ConvTranspose2d weight (Cin, Cout=1, 3, 3): equivalent conv has
    # a flipped kernel with in/out swapped -> (9, 1, Cin)
    wd = jnp.flip(params["dec_w"], axis=(2, 3))
    w_dec = jnp.transpose(wd, (2, 3, 1, 0)).reshape(9, 1, C).astype(jnp.float32)
    # bias pack (C, 5): enc, bn0, bn1, bn2, dec (dec broadcast down the rows)
    bias = jnp.stack(
        [params["enc_b"], params["bn_b"][0], params["bn_b"][1],
         params["bn_b"][2],
         jnp.full((C,), params["dec_b"][0], jnp.float32)], axis=1)
    return w_enc, w_bn, w_dec, bias


def _pick_batch_block(n):
    """Images per grid step: amortise step overhead but keep >=2 grid steps."""
    for b in (8, 4, 2):
        if n % b == 0 and n // b >= 2:
            return b
    return 1


@jax.jit
def denoiser_forward(x_nchw, params):
    N, Cin, H, W = x_nchw.shape
    assert Cin == 1
    HW = H * W
    C = params["enc_w"].shape[0]
    w_enc, w_bn, w_dec, bias = _prep_weights(params)
    x = x_nchw.reshape(N, 1, HW).astype(jnp.float32)
    B = _pick_batch_block(N)

    kernel = functools.partial(_denoiser_kernel, H=H, W=W, B=B)
    out = pl.pallas_call(
        kernel,
        out_shape=jax.ShapeDtypeStruct((N, 1, HW), jnp.float32),
        grid=(N // B,),
        in_specs=[
            pl.BlockSpec((B, 1, HW), lambda n: (n, 0, 0)),        # x
            pl.BlockSpec((C, 16), lambda n: (0, 0)),              # w_enc
            pl.BlockSpec((3, 9, C, C), lambda n: (0, 0, 0, 0)),   # w_bn
            pl.BlockSpec((9, 1, C), lambda n: (0, 0, 0)),         # w_dec
            pl.BlockSpec((C, 5), lambda n: (0, 0)),               # bias pack
        ],
        out_specs=pl.BlockSpec((B, 1, HW), lambda n: (n, 0, 0)),
        scratch_shapes=[
            pltpu.VMEM((C, HW + 2 * (W + 1)), jnp.float32),       # padded act
            pltpu.VMEM((16, HW), jnp.float32),                    # encoder slab
        ],
        compiler_params=pltpu.CompilerParams(
            dimension_semantics=("parallel",)),
    )(x, w_enc, w_bn, w_dec, bias)
    return out.reshape(N, 1, H, W)


def init_params(key):
    """Deterministic params with PyTorch-native shapes."""
    ks = jax.random.split(key, 10)

    def conv_w(k, cout, cin):
        return (jax.random.normal(k, (cout, cin, 3, 3), jnp.float32)
                * (1.0 / jnp.sqrt(cin * 9.0)))

    return {
        "enc_w": conv_w(ks[0], 64, 1),
        "enc_b": jax.random.normal(ks[1], (64,), jnp.float32) * 0.01,
        "bn_w": [conv_w(ks[2 + 2 * i], 64, 64) for i in range(3)],
        "bn_b": [jax.random.normal(ks[3 + 2 * i], (64,), jnp.float32) * 0.01
                 for i in range(3)],
        "dec_w": (jax.random.normal(ks[8], (64, 1, 3, 3), jnp.float32)
                  * (1.0 / jnp.sqrt(64 * 9.0))),
        "dec_b": jax.random.normal(ks[9], (1,), jnp.float32) * 0.01,
    }


def _to_khwc(w_oihw):
    # (Cout, Cin, kh, kw) -> (kh, kw, Cin, Cout)  (HWIO)
    return jnp.transpose(w_oihw, (2, 3, 1, 0))


def _convtranspose_to_conv(w_iohw):
    # ConvTranspose2d (Cin, Cout, kh, kw), stride=1, padding=1, k=3
    # == Conv2d(padding=1) with flipped kernel, in/out swapped -> HWIO.
    return jnp.transpose(jnp.flip(w_iohw, axis=(2, 3)), (2, 3, 0, 1))


def _reference_forward(x_nchw, params):
    """Pure-JAX reference (lax.conv) for the correctness check."""
    x = jnp.transpose(x_nchw, (0, 2, 3, 1)).astype(jnp.float32)

    def conv(x, w_khwc, b):
        y = jax.lax.conv_general_dilated(
            x, w_khwc, window_strides=(1, 1), padding=((1, 1), (1, 1)),
            dimension_numbers=("NHWC", "HWIO", "NHWC"))
        return jnp.maximum(y + b, 0.0)

    x = conv(x, _to_khwc(params["enc_w"]), params["enc_b"])
    for i in range(3):
        x = conv(x, _to_khwc(params["bn_w"][i]), params["bn_b"][i])
    x = conv(x, _convtranspose_to_conv(params["dec_w"]), params["dec_b"])
    return jnp.transpose(x, (0, 3, 1, 2))


if __name__ == "__main__":
    key = jax.random.PRNGKey(0)
    k_x, k_p = jax.random.split(key)
    # module's first conv takes 1 input channel
    x = jax.random.normal(k_x, (2, 1, 16, 16), jnp.float32)
    params = init_params(k_p)

    out = jax.block_until_ready(denoiser_forward(x, params))
    ref = _reference_forward(x, params)

    assert out.shape == (2, 1, 16, 16)
    err = float(jnp.max(jnp.abs(out - ref)))
    assert err < 1e-3, f"max abs err {err}"
    print("KERNEL_OK")
</pallas_src>

<mosaic_0001>
module attributes {stable_mosaic.version = 11 : i64} {
  func.func @_denoiser_kernel(%arg0: i32, %arg1: memref<1x1x256xf32, #tpu.memory_space<vmem>>, %arg2: memref<64x16xf32, #tpu.memory_space<vmem>>, %arg3: memref<3x9x64x64xf32, #tpu.memory_space<vmem>>, %arg4: memref<9x1x64xf32, #tpu.memory_space<vmem>>, %arg5: memref<64x5xf32, #tpu.memory_space<vmem>>, %arg6: memref<1x1x256xf32, #tpu.memory_space<vmem>>, %arg7: memref<64x290xf32, #tpu.memory_space<vmem>>, %arg8: memref<16x256xf32, #tpu.memory_space<vmem>>) attributes {dimension_semantics = [#tpu.dimension_semantics<parallel>], iteration_bounds = array<i64: 2>, scalar_prefetch = 0 : i64, scratch_operands = 2 : i64, tpu.core_type = #tpu.core_type<tc>, window_params = [{transform_indices = @transform_0, window_bounds = array<i64: 1, 1, 256>}, {pipeline_mode = #tpu.pipeline_mode<synchronous>, transform_indices = @transform_1, window_bounds = array<i64: 64, 16>}, {pipeline_mode = #tpu.pipeline_mode<synchronous>, transform_indices = @transform_2, window_bounds = array<i64: 3, 9, 64, 64>}, {pipeline_mode = #tpu.pipeline_mode<synchronous>, transform_indices = @transform_3, window_bounds = array<i64: 9, 1, 64>}, {pipeline_mode = #tpu.pipeline_mode<synchronous>, transform_indices = @transform_4, window_bounds = array<i64: 64, 5>}, {transform_indices = @transform_5, window_bounds = array<i64: 1, 1, 256>}]} {
    %cst = arith.constant 0.000000e+00 : f32
    %0 = vector.broadcast %cst : f32 to vector<64x17xf32>
    %c0 = arith.constant 0 : index
    %c0_0 = arith.constant 0 : index
    %1 = vector.load %arg7[%c0, %c0_0] : memref<64x290xf32, #tpu.memory_space<vmem>>, vector<64x17xf32>
    tpu.vector_store %arg7[%c0, %c0_0], %0 {strides = array<i32>} : memref<64x290xf32, #tpu.memory_space<vmem>>, vector<64x17xf32>,
    %cst_1 = arith.constant 0.000000e+00 : f32
    %2 = vector.broadcast %cst_1 : f32 to vector<64x17xf32>
    %c0_2 = arith.constant 0 : index
    %c273 = arith.constant 273 : index
    %3 = vector.load %arg7[%c0_2, %c273] : memref<64x290xf32, #tpu.memory_space<vmem>>, vector<64x17xf32>
    tpu.vector_store %arg7[%c0_2, %c273], %2 {strides = array<i32>} : memref<64x290xf32, #tpu.memory_space<vmem>>, vector<64x17xf32>,
    %cst_3 = arith.constant 0.000000e+00 : f32
    %4 = vector.broadcast %cst_3 : f32 to vector<8x256xf32>
    %c8 = arith.constant 8 : index
    %c0_4 = arith.constant 0 : index
    %5 = vector.load %arg8[%c8, %c0_4] : memref<16x256xf32, #tpu.memory_space<vmem>>, vector<8x256xf32>
    tpu.vector_store %arg8[%c8, %c0_4], %4 {strides = array<i32>} : memref<16x256xf32, #tpu.memory_space<vmem>>, vector<8x256xf32>,
    %6 = tpu.iota {dimensions = array<i32: 1>} : vector<1x256xi32>
    %c16_i32 = arith.constant 16 : i32
    %c0_i32 = arith.constant 0 : i32
    %7 = arith.cmpi eq, %c16_i32, %c0_i32 : i32
    %c1_i32 = arith.constant 1 : i32
    %8 = arith.select %7, %c1_i32, %c16_i32 : i32
    %9 = vector.broadcast %8 : i32 to vector<1x256xi32>
    %10 = arith.remsi %6, %9 : vector<1x256xi32>
    %c0_i32_5 = arith.constant 0 : i32
    %11 = vector.broadcast %c0_i32_5 : i32 to vector<1x256xi32>
    %12 = arith.cmpi ne, %10, %11 : vector<1x256xi32>
    %c0_i32_6 = arith.constant 0 : i32
    %13 = vector.broadcast %c0_i32_6 : i32 to vector<1x256xi32>
    %14 = arith.cmpi slt, %10, %13 : vector<1x256xi32>
    %c0_i32_7 = arith.constant 0 : i32
    %15 = arith.cmpi slt, %8, %c0_i32_7 : i32
    %16 = vector.broadcast %15 : i1 to vector<1x256xi1>
    %17 = vector.broadcast %16 : vector<1x256xi1> to vector<1x256xi1>
    %18 = arith.xori %14, %17 : vector<1x256xi1>
    %19 = arith.andi %18, %12 : vector<1x256xi1>
    %20 = vector.broadcast %8 : i32 to vector<1x256xi32>
    %21 = arith.addi %10, %20 : vector<1x256xi32>
    %22 = arith.select %19, %21, %10 : vector<1x256xi1>, vector<1x256xi32>
    %c1_i32_8 = arith.constant 1 : i32
    %23 = vector.broadcast %c1_i32_8 : i32 to vector<1x256xi32>
    %24 = arith.cmpi sge, %22, %23 : vector<1x256xi32>
    %25 = arith.extui %24 : vector<1x256xi1> to vector<1x256xi32>
    %26 = arith.sitofp %25 : vector<1x256xi32> to vector<1x256xf32>
    %c14_i32 = arith.constant 14 : i32
    %27 = vector.broadcast %c14_i32 : i32 to vector<1x256xi32>
    %28 = arith.cmpi sle, %22, %27 : vector<1x256xi32>
    %29 = arith.extui %28 : vector<1x256xi1> to vector<1x256xi32>
    %30 = arith.sitofp %29 : vector<1x256xi32> to vector<1x256xf32>
    %c0_9 = arith.constant 0 : index
    %c0_10 = arith.constant 0 : index
    %31 = vector.load %arg5[%c0_9, %c0_10] : memref<64x5xf32, #tpu.memory_space<vmem>>, vector<64x1xf32>
    %c0_11 = arith.constant 0 : index
    %c4 = arith.constant 4 : index
    %32 = vector.load %arg5[%c0_11, %c4] : memref<64x5xf32, #tpu.memory_space<vmem>>, vector<1x1xf32>
    %c0_12 = arith.constant 0 : index
    %c0_13 = arith.constant 0 : index
    %c0_14 = arith.constant 0 : index
    %33 = vector.load %arg1[%c0_12, %c0_13, %c0_14] : memref<1x1x256xf32, #tpu.memory_space<vmem>>, vector<1x1x256xf32>
    %34 = vector.shape_cast %33 : vector<1x1x256xf32> to vector<1x256xf32>
    %c0_15 = arith.constant 0 : index
    %c17 = arith.constant 17 : index
    %35 = vector.load %arg7[%c0_15, %c17] : memref<64x290xf32, #tpu.memory_space<vmem>>, vector<1x256xf32>
    tpu.vector_store %arg7[%c0_15, %c17], %34 {strides = array<i32>} : memref<64x290xf32, #tpu.memory_space<vmem>>, vector<1x256xf32>,
    %c0_16 = arith.constant 0 : index
    %c0_17 = arith.constant 0 : index
    %36 = vector.load %arg7[%c0_16, %c0_17] : memref<64x290xf32, #tpu.memory_space<vmem>>, vector<1x256xf32>
    %37 = arith.mulf %36, %26 : vector<1x256xf32>
    %c0_18 = arith.constant 0 : index
    %c0_19 = arith.constant 0 : index
    %38 = vector.load %arg8[%c0_18, %c0_19] : memref<16x256xf32, #tpu.memory_space<vmem>>, vector<1x256xf32>
    tpu.vector_store %arg8[%c0_18, %c0_19], %37 {strides = array<i32>} : memref<16x256xf32, #tpu.memory_space<vmem>>, vector<1x256xf32>,
    %c0_20 = arith.constant 0 : index
    %c1 = arith.constant 1 : index
    %39 = vector.load %arg7[%c0_20, %c1] : memref<64x290xf32, #tpu.memory_space<vmem>>, vector<1x256xf32>
    %c1_21 = arith.constant 1 : index
    %c0_22 = arith.constant 0 : index
    %40 = vector.load %arg8[%c1_21, %c0_22] : memref<16x256xf32, #tpu.memory_space<vmem>>, vector<1x256xf32>
    tpu.vector_store %arg8[%c1_21, %c0_22], %39 {strides = array<i32>} : memref<16x256xf32, #tpu.memory_space<vmem>>, vector<1x256xf32>,
    %c0_23 = arith.constant 0 : index
    %c2 = arith.constant 2 : index
    %41 = vector.load %arg7[%c0_23, %c2] : memref<64x290xf32, #tpu.memory_space<vmem>>, vector<1x256xf32>
    %42 = arith.mulf %41, %30 : vector<1x256xf32>
    %c2_24 = arith.constant 2 : index
    %c0_25 = arith.constant 0 : index
    %43 = vector.load %arg8[%c2_24, %c0_25] : memref<16x256xf32, #tpu.memory_space<vmem>>, vector<1x256xf32>
    tpu.vector_store %arg8[%c2_24, %c0_25], %42 {strides = array<i32>} : memref<16x256xf32, #tpu.memory_space<vmem>>, vector<1x256xf32>,
    %c0_26 = arith.constant 0 : index
    %c16 = arith.constant 16 : index
    %44 = vector.load %arg7[%c0_26, %c16] : memref<64x290xf32, #tpu.memory_space<vmem>>, vector<1x256xf32>
    %45 = arith.mulf %44, %26 : vector<1x256xf32>
    %c3 = arith.constant 3 : index
    %c0_27 = arith.constant 0 : index
    %46 = vector.load %arg8[%c3, %c0_27] : memref<16x256xf32, #tpu.memory_space<vmem>>, vector<1x256xf32>
    tpu.vector_store %arg8[%c3, %c0_27], %45 {strides = array<i32>} : memref<16x256xf32, #tpu.memory_space<vmem>>, vector<1x256xf32>,
    %c0_28 = arith.constant 0 : index
    %c17_29 = arith.constant 17 : index
    %47 = vector.load %arg7[%c0_28, %c17_29] : memref<64x290xf32, #tpu.memory_space<vmem>>, vector<1x256xf32>
    %c4_30 = arith.constant 4 : index
    %c0_31 = arith.constant 0 : index
    %48 = vector.load %arg8[%c4_30, %c0_31] : memref<16x256xf32, #tpu.memory_space<vmem>>, vector<1x256xf32>
    tpu.vector_store %arg8[%c4_30, %c0_31], %47 {strides = array<i32>} : memref<16x256xf32, #tpu.memory_space<vmem>>, vector<1x256xf32>,
    %c0_32 = arith.constant 0 : index
    %c18 = arith.constant 18 : index
    %49 = vector.load %arg7[%c0_32, %c18] : memref<64x290xf32, #tpu.memory_space<vmem>>, vector<1x256xf32>
    %50 = arith.mulf %49, %30 : vector<1x256xf32>
    %c5 = arith.constant 5 : index
    %c0_33 = arith.constant 0 : index
    %51 = vector.load %arg8[%c5, %c0_33] : memref<16x256xf32, #tpu.memory_space<vmem>>, vector<1x256xf32>
    tpu.vector_store %arg8[%c5, %c0_33], %50 {strides = array<i32>} : memref<16x256xf32, #tpu.memory_space<vmem>>, vector<1x256xf32>,
    %c0_34 = arith.constant 0 : index
    %c32 = arith.constant 32 : index
    %52 = vector.load %arg7[%c0_34, %c32] : memref<64x290xf32, #tpu.memory_space<vmem>>, vector<1x256xf32>
    %53 = arith.mulf %52, %26 : vector<1x256xf32>
    %c6 = arith.constant 6 : index
    %c0_35 = arith.constant 0 : index
    %54 = vector.load %arg8[%c6, %c0_35] : memref<16x256xf32, #tpu.memory_space<vmem>>, vector<1x256xf32>
    tpu.vector_store %arg8[%c6, %c0_35], %53 {strides = array<i32>} : memref<16x256xf32, #tpu.memory_space<vmem>>, vector<1x256xf32>,
    %c0_36 = arith.constant 0 : index
    %c33 = arith.constant 33 : index
    %55 = vector.load %arg7[%c0_36, %c33] : memref<64x290xf32, #tpu.memory_space<vmem>>, vector<1x256xf32>
    %c7 = arith.constant 7 : index
    %c0_37 = arith.constant 0 : index
    %56 = vector.load %arg8[%c7, %c0_37] : memref<16x256xf32, #tpu.memory_space<vmem>>, vector<1x256xf32>
    tpu.vector_store %arg8[%c7, %c0_37], %55 {strides = array<i32>} : memref<16x256xf32, #tpu.memory_space<vmem>>, vector<1x256xf32>,
    %c0_38 = arith.constant 0 : index
    %c34 = arith.constant 34 : index
    %57 = vector.load %arg7[%c0_38, %c34] : memref<64x290xf32, #tpu.memory_space<vmem>>, vector<1x256xf32>
    %58 = arith.mulf %57, %30 : vector<1x256xf32>
    %c8_39 = arith.constant 8 : index
    %c0_40 = arith.constant 0 : index
    %59 = vector.load %arg8[%c8_39, %c0_40] : memref<16x256xf32, #tpu.memory_space<vmem>>, vector<1x256xf32>
    tpu.vector_store %arg8[%c8_39, %c0_40], %58 {strides = array<i32>} : memref<16x256xf32, #tpu.memory_space<vmem>>, vector<1x256xf32>,
    %c0_41 = arith.constant 0 : index
    %c0_42 = arith.constant 0 : index
    %60 = vector.load %arg2[%c0_41, %c0_42] : memref<64x16xf32, #tpu.memory_space<vmem>>, vector<64x16xf32>
    %c0_43 = arith.constant 0 : index
    %c0_44 = arith.constant 0 : index
    %61 = vector.load %arg8[%c0_43, %c0_44] : memref<16x256xf32, #tpu.memory_space<vmem>>, vector<16x256xf32>
    %cst_45 = arith.constant dense<0.000000e+00> : vector<64x256xf32>
    %62 = tpu.matmul %60, %61, %cst_45 {dimension_numbers = #tpu.dot_dimension_numbers<[1], [0], [0], [1], [0, 0, 1, 1], [], []>} : vector<64x16xf32>, vector<16x256xf32>, vector<64x256xf32> -> vector<64x256xf32>
    %63 = vector.broadcast %31 : vector<64x1xf32> to vector<64x256xf32>
    %64 = arith.addf %62, %63 : vector<64x256xf32>
    %cst_46 = arith.constant 0.000000e+00 : f32
    %65 = vector.broadcast %cst_46 : f32 to vector<64x256xf32>
    %66 = arith.maximumf %64, %65 : vector<64x256xf32>
    %c0_47 = arith.constant 0 : index
    %c17_48 = arith.constant 17 : index
    %67 = vector.load %arg7[%c0_47, %c17_48] : memref<64x290xf32, #tpu.memory_space<vmem>>, vector<64x256xf32>
    tpu.vector_store %arg7[%c0_47, %c17_48], %66 {strides = array<i32>} : memref<64x290xf32, #tpu.memory_space<vmem>>, vector<64x256xf32>,
    %c0_49 = arith.constant 0 : index
    %c0_50 = arith.constant 0 : index
    %c0_51 = arith.constant 0 : index
    %c0_52 = arith.constant 0 : index
    %68 = vector.load %arg3[%c0_49, %c0_50, %c0_51, %c0_52] : memref<3x9x64x64xf32, #tpu.memory_space<vmem>>, vector<1x1x64x64xf32>
    %69 = vector.shape_cast %68 : vector<1x1x64x64xf32> to vector<64x64xf32>
    %c0_53 = arith.constant 0 : index
    %c0_54 = arith.constant 0 : index
    %70 = vector.load %arg7[%c0_53, %c0_54] : memref<64x290xf32, #tpu.memory_space<vmem>>, vector<64x256xf32>
    %cst_55 = arith.constant dense<0.000000e+00> : vector<64x256xf32>
    %71 = tpu.matmul %69, %70, %cst_55 {dimension_numbers = #tpu.dot_dimension_numbers<[1], [0], [0], [1], [0, 0, 1, 1], [], []>} : vector<64x64xf32>, vector<64x256xf32>, vector<64x256xf32> -> vector<64x256xf32>
    %c0_56 = arith.constant 0 : index
    %c1_57 = arith.constant 1 : index
    %c0_58 = arith.constant 0 : index
    %c0_59 = arith.constant 0 : index
    %72 = vector.load %arg3[%c0_56, %c1_57, %c0_58, %c0_59] : memref<3x9x64x64xf32, #tpu.memory_space<vmem>>, vector<1x1x64x64xf32>
    %73 = vector.shape_cast %72 : vector<1x1x64x64xf32> to vector<64x64xf32>
    %c0_60 = arith.constant 0 : index
    %c1_61 = arith.constant 1 : index
    %74 = vector.load %arg7[%c0_60, %c1_61] : memref<64x290xf32, #tpu.memory_space<vmem>>, vector<64x256xf32>
    %cst_62 = arith.constant dense<0.000000e+00> : vector<64x256xf32>
    %75 = tpu.matmul %73, %74, %cst_62 {dimension_numbers = #tpu.dot_dimension_numbers<[1], [0], [0], [1], [0, 0, 1, 1], [], []>} : vector<64x64xf32>, vector<64x256xf32>, vector<64x256xf32> -> vector<64x256xf32>
    %c0_63 = arith.constant 0 : index
    %c2_64 = arith.constant 2 : index
    %c0_65 = arith.constant 0 : index
    %c0_66 = arith.constant 0 : index
    %76 = vector.load %arg3[%c0_63, %c2_64, %c0_65, %c0_66] : memref<3x9x64x64xf32, #tpu.memory_space<vmem>>, vector<1x1x64x64xf32>
    %77 = vector.shape_cast %76 : vector<1x1x64x64xf32> to vector<64x64xf32>
    %c0_67 = arith.constant 0 : index
    %c2_68 = arith.constant 2 : index
    %78 = vector.load %arg7[%c0_67, %c2_68] : memref<64x290xf32, #tpu.memory_space<vmem>>, vector<64x256xf32>
    %cst_69 = arith.constant dense<0.000000e+00> : vector<64x256xf32>
    %79 = tpu.matmul %77, %78, %cst_69 {dimension_numbers = #tpu.dot_dimension_numbers<[1], [0], [0], [1], [0, 0, 1, 1], [], []>} : vector<64x64xf32>, vector<64x256xf32>, vector<64x256xf32> -> vector<64x256xf32>
    %c0_70 = arith.constant 0 : index
    %c3_71 = arith.constant 3 : index
    %c0_72 = arith.constant 0 : index
    %c0_73 = arith.constant 0 : index
    %80 = vector.load %arg3[%c0_70, %c3_71, %c0_72, %c0_73] : memref<3x9x64x64xf32, #tpu.memory_space<vmem>>, vector<1x1x64x64xf32>
    %81 = vector.shape_cast %80 : vector<1x1x64x64xf32> to vector<64x64xf32>
    %c0_74 = arith.constant 0 : index
    %c16_75 = arith.constant 16 : index
    %82 = vector.load %arg7[%c0_74, %c16_75] : memref<64x290xf32, #tpu.memory_space<vmem>>, vector<64x256xf32>
    %cst_76 = arith.constant dense<0.000000e+00> : vector<64x256xf32>
    %83 = tpu.matmul %81, %82, %cst_76 {dimension_numbers = #tpu.dot_dimension_numbers<[1], [0], [0], [1], [0, 0, 1, 1], [], []>} : vector<64x64xf32>, vector<64x256xf32>, vector<64x256xf32> -> vector<64x256xf32>
    %84 = arith.addf %71, %83 : vector<64x256xf32>
    %c0_77 = arith.constant 0 : index
    %c4_78 = arith.constant 4 : index
    %c0_79 = arith.constant 0 : index
    %c0_80 = arith.constant 0 : index
    %85 = vector.load %arg3[%c0_77, %c4_78, %c0_79, %c0_80] : memref<3x9x64x64xf32, #tpu.memory_space<vmem>>, vector<1x1x64x64xf32>
    %86 = vector.shape_cast %85 : vector<1x1x64x64xf32> to vector<64x64xf32>
    %c0_81 = arith.constant 0 : index
    %c17_82 = arith.constant 17 : index
    %87 = vector.load %arg7[%c0_81, %c17_82] : memref<64x290xf32, #tpu.memory_space<vmem>>, vector<64x256xf32>
    %cst_83 = arith.constant dense<0.000000e+00> : vector<64x256xf32>
    %88 = tpu.matmul %86, %87, %cst_83 {dimension_numbers = #tpu.dot_dimension_numbers<[1], [0], [0], [1], [0, 0, 1, 1], [], []>} : vector<64x64xf32>, vector<64x256xf32>, vector<64x256xf32> -> vector<64x256xf32>
    %89 = arith.addf %75, %88 : vector<64x256xf32>
    %c0_84 = arith.constant 0 : index
    %c5_85 = arith.constant 5 : index
    %c0_86 = arith.constant 0 : index
    %c0_87 = arith.constant 0 : index
    %90 = vector.load %arg3[%c0_84, %c5_85, %c0_86, %c0_87] : memref<3x9x64x64xf32, #tpu.memory_space<vmem>>, vector<1x1x64x64xf32>
    %91 = vector.shape_cast %90 : vector<1x1x64x64xf32> to vector<64x64xf32>
    %c0_88 = arith.constant 0 : index
    %c18_89 = arith.constant 18 : index
    %92 = vector.load %arg7[%c0_88, %c18_89] : memref<64x290xf32, #tpu.memory_space<vmem>>, vector<64x256xf32>
    %cst_90 = arith.constant dense<0.000000e+00> : vector<64x256xf32>
    %93 = tpu.matmul %91, %92, %cst_90 {dimension_numbers = #tpu.dot_dimension_numbers<[1], [0], [0], [1], [0, 0, 1, 1], [], []>} : vector<64x64xf32>, vector<64x256xf32>, vector<64x256xf32> -> vector<64x256xf32>
    %94 = arith.addf %79, %93 : vector<64x256xf32>
    %c0_91 = arith.constant 0 : index
    %c6_92 = arith.constant 6 : index
    %c0_93 = arith.constant 0 : index
    %c0_94 = arith.constant 0 : index
    %95 = vector.load %arg3[%c0_91, %c6_92, %c0_93, %c0_94] : memref<3x9x64x64xf32, #tpu.memory_space<vmem>>, vector<1x1x64x64xf32>
    %96 = vector.shape_cast %95 : vector<1x1x64x64xf32> to vector<64x64xf32>
    %c0_95 = arith.constant 0 : index
    %c32_96 = arith.constant 32 : index
    %97 = vector.load %arg7[%c0_95, %c32_96] : memref<64x290xf32, #tpu.memory_space<vmem>>, vector<64x256xf32>
    %cst_97 = arith.constant dense<0.000000e+00> : vector<64x256xf32>
    %98 = tpu.matmul %96, %97, %cst_97 {dimension_numbers = #tpu.dot_dimension_numbers<[1], [0], [0], [1], [0, 0, 1, 1], [], []>} : vector<64x64xf32>, vector<64x256xf32>, vector<64x256xf32> -> vector<64x256xf32>
    %99 = arith.addf %84, %98 : vector<64x256xf32>
    %c0_98 = arith.constant 0 : index
    %c7_99 = arith.constant 7 : index
    %c0_100 = arith.constant 0 : index
    %c0_101 = arith.constant 0 : index
    %100 = vector.load %arg3[%c0_98, %c7_99, %c0_100, %c0_101] : memref<3x9x64x64xf32, #tpu.memory_space<vmem>>, vector<1x1x64x64xf32>
    %101 = vector.shape_cast %100 : vector<1x1x64x64xf32> to vector<64x64xf32>
    %c0_102 = arith.constant 0 : index
    %c33_103 = arith.constant 33 : index
    %102 = vector.load %arg7[%c0_102, %c33_103] : memref<64x290xf32, #tpu.memory_space<vmem>>, vector<64x256xf32>
    %cst_104 = arith.constant dense<0.000000e+00> : vector<64x256xf32>
    %103 = tpu.matmul %101, %102, %cst_104 {dimension_numbers = #tpu.dot_dimension_numbers<[1], [0], [0], [1], [0, 0, 1, 1], [], []>} : vector<64x64xf32>, vector<64x256xf32>, vector<64x256xf32> -> vector<64x256xf32>
    %104 = arith.addf %89, %103 : vector<64x256xf32>
    %c0_105 = arith.constant 0 : index
    %c8_106 = arith.constant 8 : index
    %c0_107 = arith.constant 0 : index
    %c0_108 = arith.constant 0 : index
    %105 = vector.load %arg3[%c0_105, %c8_106, %c0_107, %c0_108] : memref<3x9x64x64xf32, #tpu.memory_space<vmem>>, vector<1x1x64x64xf32>
    %106 = vector.shape_cast %105 : vector<1x1x64x64xf32> to vector<64x64xf32>
    %c0_109 = arith.constant 0 : index
    %c34_110 = arith.constant 34 : index
    %107 = vector.load %arg7[%c0_109, %c34_110] : memref<64x290xf32, #tpu.memory_space<vmem>>, vector<64x256xf32>
    %cst_111 = arith.constant dense<0.000000e+00> : vector<64x256xf32>
    %108 = tpu.matmul %106, %107, %cst_111 {dimension_numbers = #tpu.dot_dimension_numbers<[1], [0], [0], [1], [0, 0, 1, 1], [], []>} : vector<64x64xf32>, vector<64x256xf32>, vector<64x256xf32> -> vector<64x256xf32>
    %109 = arith.addf %94, %108 : vector<64x256xf32>
    %110 = vector.broadcast %26 : vector<1x256xf32> to vector<64x256xf32>
    %111 = arith.mulf %99, %110 : vector<64x256xf32>
    %112 = arith.addf %111, %104 : vector<64x256xf32>
    %113 = vector.broadcast %30 : vector<1x256xf32> to vector<64x256xf32>
    %114 = arith.mulf %109, %113 : vector<64x256xf32>
    %115 = arith.addf %112, %114 : vector<64x256xf32>
    %c0_112 = arith.constant 0 : index
    %c1_113 = arith.constant 1 : index
    %116 = vector.load %arg5[%c0_112, %c1_113] : memref<64x5xf32, #tpu.memory_space<vmem>>, vector<64x1xf32>
    %117 = vector.broadcast %116 : vector<64x1xf32> to vector<64x256xf32>
    %118 = arith.addf %115, %117 : vector<64x256xf32>
    %cst_114 = arith.constant 0.000000e+00 : f32
    %119 = vector.broadcast %cst_114 : f32 to vector<64x256xf32>
    %120 = arith.maximumf %118, %119 : vector<64x256xf32>
    %c0_115 = arith.constant 0 : index
    %c17_116 = arith.constant 17 : index
    %121 = vector.load %arg7[%c0_115, %c17_116] : memref<64x290xf32, #tpu.memory_space<vmem>>, vector<64x256xf32>
    tpu.vector_store %arg7[%c0_115, %c17_116], %120 {strides = array<i32>} : memref<64x290xf32, #tpu.memory_space<vmem>>, vector<64x256xf32>,
    %c1_117 = arith.constant 1 : index
    %c0_118 = arith.constant 0 : index
    %c0_119 = arith.constant 0 : index
    %c0_120 = arith.constant 0 : index
    %122 = vector.load %arg3[%c1_117, %c0_118, %c0_119, %c0_120] : memref<3x9x64x64xf32, #tpu.memory_space<vmem>>, vector<1x1x64x64xf32>
    %123 = vector.shape_cast %122 : vector<1x1x64x64xf32> to vector<64x64xf32>
    %c0_121 = arith.constant 0 : index
    %c0_122 = arith.constant 0 : index
    %124 = vector.load %arg7[%c0_121, %c0_122] : memref<64x290xf32, #tpu.memory_space<vmem>>, vector<64x256xf32>
    %cst_123 = arith.constant dense<0.000000e+00> : vector<64x256xf32>
    %125 = tpu.matmul %123, %124, %cst_123 {dimension_numbers = #tpu.dot_dimension_numbers<[1], [0], [0], [1], [0, 0, 1, 1], [], []>} : vector<64x64xf32>, vector<64x256xf32>, vector<64x256xf32> -> vector<64x256xf32>
    %c1_124 = arith.constant 1 : index
    %c1_125 = arith.constant 1 : index
    %c0_126 = arith.constant 0 : index
    %c0_127 = arith.constant 0 : index
    %126 = vector.load %arg3[%c1_124, %c1_125, %c0_126, %c0_127] : memref<3x9x64x64xf32, #tpu.memory_space<vmem>>, vector<1x1x64x64xf32>
    %127 = vector.shape_cast %126 : vector<1x1x64x64xf32> to vector<64x64xf32>
    %c0_128 = arith.constant 0 : index
    %c1_129 = arith.constant 1 : index
    %128 = vector.load %arg7[%c0_128, %c1_129] : memref<64x290xf32, #tpu.memory_space<vmem>>, vector<64x256xf32>
    %cst_130 = arith.constant dense<0.000000e+00> : vector<64x256xf32>
    %129 = tpu.matmul %127, %128, %cst_130 {dimension_numbers = #tpu.dot_dimension_numbers<[1], [0], [0], [1], [0, 0, 1, 1], [], []>} : vector<64x64xf32>, vector<64x256xf32>, vector<64x256xf32> -> vector<64x256xf32>
    %c1_131 = arith.constant 1 : index
    %c2_132 = arith.constant 2 : index
    %c0_133 = arith.constant 0 : index
    %c0_134 = arith.constant 0 : index
    %130 = vector.load %arg3[%c1_131, %c2_132, %c0_133, %c0_134] : memref<3x9x64x64xf32, #tpu.memory_space<vmem>>, vector<1x1x64x64xf32>
    %131 = vector.shape_cast %130 : vector<1x1x64x64xf32> to vector<64x64xf32>
    %c0_135 = arith.constant 0 : index
    %c2_136 = arith.constant 2 : index
    %132 = vector.load %arg7[%c0_135, %c2_136] : memref<64x290xf32, #tpu.memory_space<vmem>>, vector<64x256xf32>
    %cst_137 = arith.constant dense<0.000000e+00> : vector<64x256xf32>
    %133 = tpu.matmul %131, %132, %cst_137 {dimension_numbers = #tpu.dot_dimension_numbers<[1], [0], [0], [1], [0, 0, 1, 1], [], []>} : vector<64x64xf32>, vector<64x256xf32>, vector<64x256xf32> -> vector<64x256xf32>
    %c1_138 = arith.constant 1 : index
    %c3_139 = arith.constant 3 : index
    %c0_140 = arith.constant 0 : index
    %c0_141 = arith.constant 0 : index
    %134 = vector.load %arg3[%c1_138, %c3_139, %c0_140, %c0_141] : memref<3x9x64x64xf32, #tpu.memory_space<vmem>>, vector<1x1x64x64xf32>
    %135 = vector.shape_cast %134 : vector<1x1x64x64xf32> to vector<64x64xf32>
    %c0_142 = arith.constant 0 : index
    %c16_143 = arith.constant 16 : index
    %136 = vector.load %arg7[%c0_142, %c16_143] : memref<64x290xf32, #tpu.memory_space<vmem>>, vector<64x256xf32>
    %cst_144 = arith.constant dense<0.000000e+00> : vector<64x256xf32>
    %137 = tpu.matmul %135, %136, %cst_144 {dimension_numbers = #tpu.dot_dimension_numbers<[1], [0], [0], [1], [0, 0, 1, 1], [], []>} : vector<64x64xf32>, vector<64x256xf32>, vector<64x256xf32> -> vector<64x256xf32>
    %138 = arith.addf %125, %137 : vector<64x256xf32>
    %c1_145 = arith.constant 1 : index
    %c4_146 = arith.constant 4 : index
    %c0_147 = arith.constant 0 : index
    %c0_148 = arith.constant 0 : index
    %139 = vector.load %arg3[%c1_145, %c4_146, %c0_147, %c0_148] : memref<3x9x64x64xf32, #tpu.memory_space<vmem>>, vector<1x1x64x64xf32>
    %140 = vector.shape_cast %139 : vector<1x1x64x64xf32> to vector<64x64xf32>
    %c0_149 = arith.constant 0 : index
    %c17_150 = arith.constant 17 : index
    %141 = vector.load %arg7[%c0_149, %c17_150] : memref<64x290xf32, #tpu.memory_space<vmem>>, vector<64x256xf32>
    %cst_151 = arith.constant dense<0.000000e+00> : vector<64x256xf32>
    %142 = tpu.matmul %140, %141, %cst_151 {dimension_numbers = #tpu.dot_dimension_numbers<[1], [0], [0], [1], [0, 0, 1, 1], [], []>} : vector<64x64xf32>, vector<64x256xf32>, vector<64x256xf32> -> vector<64x256xf32>
    %143 = arith.addf %129, %142 : vector<64x256xf32>
    %c1_152 = arith.constant 1 : index
    %c5_153 = arith.constant 5 : index
    %c0_154 = arith.constant 0 : index
    %c0_155 = arith.constant 0 : index
    %144 = vector.load %arg3[%c1_152, %c5_153, %c0_154, %c0_155] : memref<3x9x64x64xf32, #tpu.memory_space<vmem>>, vector<1x1x64x64xf32>
    %145 = vector.shape_cast %144 : vector<1x1x64x64xf32> to vector<64x64xf32>
    %c0_156 = arith.constant 0 : index
    %c18_157 = arith.constant 18 : index
    %146 = vector.load %arg7[%c0_156, %c18_157] : memref<64x290xf32, #tpu.memory_space<vmem>>, vector<64x256xf32>
    %cst_158 = arith.constant dense<0.000000e+00> : vector<64x256xf32>
    %147 = tpu.matmul %145, %146, %cst_158 {dimension_numbers = #tpu.dot_dimension_numbers<[1], [0], [0], [1], [0, 0, 1, 1], [], []>} : vector<64x64xf32>, vector<64x256xf32>, vector<64x256xf32> -> vector<64x256xf32>
    %148 = arith.addf %133, %147 : vector<64x256xf32>
    %c1_159 = arith.constant 1 : index
    %c6_160 = arith.constant 6 : index
    %c0_161 = arith.constant 0 : index
    %c0_162 = arith.constant 0 : index
    %149 = vector.load %arg3[%c1_159, %c6_160, %c0_161, %c0_162] : memref<3x9x64x64xf32, #tpu.memory_space<vmem>>, vector<1x1x64x64xf32>
    %150 = vector.shape_cast %149 : vector<1x1x64x64xf32> to vector<64x64xf32>
    %c0_163 = arith.constant 0 : index
    %c32_164 = arith.constant 32 : index
    %151 = vector.load %arg7[%c0_163, %c32_164] : memref<64x290xf32, #tpu.memory_space<vmem>>, vector<64x256xf32>
    %cst_165 = arith.constant dense<0.000000e+00> : vector<64x256xf32>
    %152 = tpu.matmul %150, %151, %cst_165 {dimension_numbers = #tpu.dot_dimension_numbers<[1], [0], [0], [1], [0, 0, 1, 1], [], []>} : vector<64x64xf32>, vector<64x256xf32>, vector<64x256xf32> -> vector<64x256xf32>
    %153 = arith.addf %138, %152 : vector<64x256xf32>
    %c1_166 = arith.constant 1 : index
    %c7_167 = arith.constant 7 : index
    %c0_168 = arith.constant 0 : index
    %c0_169 = arith.constant 0 : index
    %154 = vector.load %arg3[%c1_166, %c7_167, %c0_168, %c0_169] : memref<3x9x64x64xf32, #tpu.memory_space<vmem>>, vector<1x1x64x64xf32>
    %155 = vector.shape_cast %154 : vector<1x1x64x64xf32> to vector<64x64xf32>
    %c0_170 = arith.constant 0 : index
    %c33_171 = arith.constant 33 : index
    %156 = vector.load %arg7[%c0_170, %c33_171] : memref<64x290xf32, #tpu.memory_space<vmem>>, vector<64x256xf32>
    %cst_172 = arith.constant dense<0.000000e+00> : vector<64x256xf32>
    %157 = tpu.matmul %155, %156, %cst_172 {dimension_numbers = #tpu.dot_dimension_numbers<[1], [0], [0], [1], [0, 0, 1, 1], [], []>} : vector<64x64xf32>, vector<64x256xf32>, vector<64x256xf32> -> vector<64x256xf32>
    %158 = arith.addf %143, %157 : vector<64x256xf32>
    %c1_173 = arith.constant 1 : index
    %c8_174 = arith.constant 8 : index
    %c0_175 = arith.constant 0 : index
    %c0_176 = arith.constant 0 : index
    %159 = vector.load %arg3[%c1_173, %c8_174, %c0_175, %c0_176] : memref<3x9x64x64xf32, #tpu.memory_space<vmem>>, vector<1x1x64x64xf32>
    %160 = vector.shape_cast %159 : vector<1x1x64x64xf32> to vector<64x64xf32>
    %c0_177 = arith.constant 0 : index
    %c34_178 = arith.constant 34 : index
    %161 = vector.load %arg7[%c0_177, %c34_178] : memref<64x290xf32, #tpu.memory_space<vmem>>, vector<64x256xf32>
    %cst_179 = arith.constant dense<0.000000e+00> : vector<64x256xf32>
    %162 = tpu.matmul %160, %161, %cst_179 {dimension_numbers = #tpu.dot_dimension_numbers<[1], [0], [0], [1], [0, 0, 1, 1], [], []>} : vector<64x64xf32>, vector<64x256xf32>, vector<64x256xf32> -> vector<64x256xf32>
    %163 = arith.addf %148, %162 : vector<64x256xf32>
    %164 = vector.broadcast %26 : vector<1x256xf32> to vector<64x256xf32>
    %165 = arith.mulf %153, %164 : vector<64x256xf32>
    %166 = arith.addf %165, %158 : vector<64x256xf32>
    %167 = vector.broadcast %30 : vector<1x256xf32> to vector<64x256xf32>
    %168 = arith.mulf %163, %167 : vector<64x256xf32>
    %169 = arith.addf %166, %168 : vector<64x256xf32>
    %c0_180 = arith.constant 0 : index
    %c2_181 = arith.constant 2 : index
    %170 = vector.load %arg5[%c0_180, %c2_181] : memref<64x5xf32, #tpu.memory_space<vmem>>, vector<64x1xf32>
    %171 = vector.broadcast %170 : vector<64x1xf32> to vector<64x256xf32>
    %172 = arith.addf %169, %171 : vector<64x256xf32>
    %cst_182 = arith.constant 0.000000e+00 : f32
    %173 = vector.broadcast %cst_182 : f32 to vector<64x256xf32>
    %174 = arith.maximumf %172, %173 : vector<64x256xf32>
    %c0_183 = arith.constant 0 : index
    %c17_184 = arith.constant 17 : index
    %175 = vector.load %arg7[%c0_183, %c17_184] : memref<64x290xf32, #tpu.memory_space<vmem>>, vector<64x256xf32>
    tpu.vector_store %arg7[%c0_183, %c17_184], %174 {strides = array<i32>} : memref<64x290xf32, #tpu.memory_space<vmem>>, vector<64x256xf32>,
    %c2_185 = arith.constant 2 : index
    %c0_186 = arith.constant 0 : index
    %c0_187 = arith.constant 0 : index
    %c0_188 = arith.constant 0 : index
    %176 = vector.load %arg3[%c2_185, %c0_186, %c0_187, %c0_188] : memref<3x9x64x64xf32, #tpu.memory_space<vmem>>, vector<1x1x64x64xf32>
    %177 = vector.shape_cast %176 : vector<1x1x64x64xf32> to vector<64x64xf32>
    %c0_189 = arith.constant 0 : index
    %c0_190 = arith.constant 0 : index
    %178 = vector.load %arg7[%c0_189, %c0_190] : memref<64x290xf32, #tpu.memory_space<vmem>>, vector<64x256xf32>
    %cst_191 = arith.constant dense<0.000000e+00> : vector<64x256xf32>
    %179 = tpu.matmul %177, %178, %cst_191 {dimension_numbers = #tpu.dot_dimension_numbers<[1], [0], [0], [1], [0, 0, 1, 1], [], []>} : vector<64x64xf32>, vector<64x256xf32>, vector<64x256xf32> -> vector<64x256xf32>
    %c2_192 = arith.constant 2 : index
    %c1_193 = arith.constant 1 : index
    %c0_194 = arith.constant 0 : index
    %c0_195 = arith.constant 0 : index
    %180 = vector.load %arg3[%c2_192, %c1_193, %c0_194, %c0_195] : memref<3x9x64x64xf32, #tpu.memory_space<vmem>>, vector<1x1x64x64xf32>
    %181 = vector.shape_cast %180 : vector<1x1x64x64xf32> to vector<64x64xf32>
    %c0_196 = arith.constant 0 : index
    %c1_197 = arith.constant 1 : index
    %182 = vector.load %arg7[%c0_196, %c1_197] : memref<64x290xf32, #tpu.memory_space<vmem>>, vector<64x256xf32>
    %cst_198 = arith.constant dense<0.000000e+00> : vector<64x256xf32>
    %183 = tpu.matmul %181, %182, %cst_198 {dimension_numbers = #tpu.dot_dimension_numbers<[1], [0], [0], [1], [0, 0, 1, 1], [], []>} : vector<64x64xf32>, vector<64x256xf32>, vector<64x256xf32> -> vector<64x256xf32>
    %c2_199 = arith.constant 2 : index
    %c2_200 = arith.constant 2 : index
    %c0_201 = arith.constant 0 : index
    %c0_202 = arith.constant 0 : index
    %184 = vector.load %arg3[%c2_199, %c2_200, %c0_201, %c0_202] : memref<3x9x64x64xf32, #tpu.memory_space<vmem>>, vector<1x1x64x64xf32>
    %185 = vector.shape_cast %184 : vector<1x1x64x64xf32> to vector<64x64xf32>
    %c0_203 = arith.constant 0 : index
    %c2_204 = arith.constant 2 : index
    %186 = vector.load %arg7[%c0_203, %c2_204] : memref<64x290xf32, #tpu.memory_space<vmem>>, vector<64x256xf32>
    %cst_205 = arith.constant dense<0.000000e+00> : vector<64x256xf32>
    %187 = tpu.matmul %185, %186, %cst_205 {dimension_numbers = #tpu.dot_dimension_numbers<[1], [0], [0], [1], [0, 0, 1, 1], [], []>} : vector<64x64xf32>, vector<64x256xf32>, vector<64x256xf32> -> vector<64x256xf32>
    %c2_206 = arith.constant 2 : index
    %c3_207 = arith.constant 3 : index
    %c0_208 = arith.constant 0 : index
    %c0_209 = arith.constant 0 : index
    %188 = vector.load %arg3[%c2_206, %c3_207, %c0_208, %c0_209] : memref<3x9x64x64xf32, #tpu.memory_space<vmem>>, vector<1x1x64x64xf32>
    %189 = vector.shape_cast %188 : vector<1x1x64x64xf32> to vector<64x64xf32>
    %c0_210 = arith.constant 0 : index
    %c16_211 = arith.constant 16 : index
    %190 = vector.load %arg7[%c0_210, %c16_211] : memref<64x290xf32, #tpu.memory_space<vmem>>, vector<64x256xf32>
    %cst_212 = arith.constant dense<0.000000e+00> : vector<64x256xf32>
    %191 = tpu.matmul %189, %190, %cst_212 {dimension_numbers = #tpu.dot_dimension_numbers<[1], [0], [0], [1], [0, 0, 1, 1], [], []>} : vector<64x64xf32>, vector<64x256xf32>, vector<64x256xf32> -> vector<64x256xf32>
    %192 = arith.addf %179, %191 : vector<64x256xf32>
    %c2_213 = arith.constant 2 : index
    %c4_214 = arith.constant 4 : index
    %c0_215 = arith.constant 0 : index
    %c0_216 = arith.constant 0 : index
    %193 = vector.load %arg3[%c2_213, %c4_214, %c0_215, %c0_216] : memref<3x9x64x64xf32, #tpu.memory_space<vmem>>, vector<1x1x64x64xf32>
    %194 = vector.shape_cast %193 : vector<1x1x64x64xf32> to vector<64x64xf32>
    %c0_217 = arith.constant 0 : index
    %c17_218 = arith.constant 17 : index
    %195 = vector.load %arg7[%c0_217, %c17_218] : memref<64x290xf32, #tpu.memory_space<vmem>>, vector<64x256xf32>
    %cst_219 = arith.constant dense<0.000000e+00> : vector<64x256xf32>
    %196 = tpu.matmul %194, %195, %cst_219 {dimension_numbers = #tpu.dot_dimension_numbers<[1], [0], [0], [1], [0, 0, 1, 1], [], []>} : vector<64x64xf32>, vector<64x256xf32>, vector<64x256xf32> -> vector<64x256xf32>
    %197 = arith.addf %183, %196 : vector<64x256xf32>
    %c2_220 = arith.constant 2 : index
    %c5_221 = arith.constant 5 : index
    %c0_222 = arith.constant 0 : index
    %c0_223 = arith.constant 0 : index
    %198 = vector.load %arg3[%c2_220, %c5_221, %c0_222, %c0_223] : memref<3x9x64x64xf32, #tpu.memory_space<vmem>>, vector<1x1x64x64xf32>
    %199 = vector.shape_cast %198 : vector<1x1x64x64xf32> to vector<64x64xf32>
    %c0_224 = arith.constant 0 : index
    %c18_225 = arith.constant 18 : index
    %200 = vector.load %arg7[%c0_224, %c18_225] : memref<64x290xf32, #tpu.memory_space<vmem>>, vector<64x256xf32>
    %cst_226 = arith.constant dense<0.000000e+00> : vector<64x256xf32>
    %201 = tpu.matmul %199, %200, %cst_226 {dimension_numbers = #tpu.dot_dimension_numbers<[1], [0], [0], [1], [0, 0, 1, 1], [], []>} : vector<64x64xf32>, vector<64x256xf32>, vector<64x256xf32> -> vector<64x256xf32>
    %202 = arith.addf %187, %201 : vector<64x256xf32>
    %c2_227 = arith.constant 2 : index
    %c6_228 = arith.constant 6 : index
    %c0_229 = arith.constant 0 : index
    %c0_230 = arith.constant 0 : index
    %203 = vector.load %arg3[%c2_227, %c6_228, %c0_229, %c0_230] : memref<3x9x64x64xf32, #tpu.memory_space<vmem>>, vector<1x1x64x64xf32>
    %204 = vector.shape_cast %203 : vector<1x1x64x64xf32> to vector<64x64xf32>
    %c0_231 = arith.constant 0 : index
    %c32_232 = arith.constant 32 : index
    %205 = vector.load %arg7[%c0_231, %c32_232] : memref<64x290xf32, #tpu.memory_space<vmem>>, vector<64x256xf32>
    %cst_233 = arith.constant dense<0.000000e+00> : vector<64x256xf32>
    %206 = tpu.matmul %204, %205, %cst_233 {dimension_numbers = #tpu.dot_dimension_numbers<[1], [0], [0], [1], [0, 0, 1, 1], [], []>} : vector<64x64xf32>, vector<64x256xf32>, vector<64x256xf32> -> vector<64x256xf32>
    %207 = arith.addf %192, %206 : vector<64x256xf32>
    %c2_234 = arith.constant 2 : index
    %c7_235 = arith.constant 7 : index
    %c0_236 = arith.constant 0 : index
    %c0_237 = arith.constant 0 : index
    %208 = vector.load %arg3[%c2_234, %c7_235, %c0_236, %c0_237] : memref<3x9x64x64xf32, #tpu.memory_space<vmem>>, vector<1x1x64x64xf32>
    %209 = vector.shape_cast %208 : vector<1x1x64x64xf32> to vector<64x64xf32>
    %c0_238 = arith.constant 0 : index
    %c33_239 = arith.constant 33 : index
    %210 = vector.load %arg7[%c0_238, %c33_239] : memref<64x290xf32, #tpu.memory_space<vmem>>, vector<64x256xf32>
    %cst_240 = arith.constant dense<0.000000e+00> : vector<64x256xf32>
    %211 = tpu.matmul %209, %210, %cst_240 {dimension_numbers = #tpu.dot_dimension_numbers<[1], [0], [0], [1], [0, 0, 1, 1], [], []>} : vector<64x64xf32>, vector<64x256xf32>, vector<64x256xf32> -> vector<64x256xf32>
    %212 = arith.addf %197, %211 : vector<64x256xf32>
    %c2_241 = arith.constant 2 : index
    %c8_242 = arith.constant 8 : index
    %c0_243 = arith.constant 0 : index
    %c0_244 = arith.constant 0 : index
    %213 = vector.load %arg3[%c2_241, %c8_242, %c0_243, %c0_244] : memref<3x9x64x64xf32, #tpu.memory_space<vmem>>, vector<1x1x64x64xf32>
    %214 = vector.shape_cast %213 : vector<1x1x64x64xf32> to vector<64x64xf32>
    %c0_245 = arith.constant 0 : index
    %c34_246 = arith.constant 34 : index
    %215 = vector.load %arg7[%c0_245, %c34_246] : memref<64x290xf32, #tpu.memory_space<vmem>>, vector<64x256xf32>
    %cst_247 = arith.constant dense<0.000000e+00> : vector<64x256xf32>
    %216 = tpu.matmul %214, %215, %cst_247 {dimension_numbers = #tpu.dot_dimension_numbers<[1], [0], [0], [1], [0, 0, 1, 1], [], []>} : vector<64x64xf32>, vector<64x256xf32>, vector<64x256xf32> -> vector<64x256xf32>
    %217 = arith.addf %202, %216 : vector<64x256xf32>
    %218 = vector.broadcast %26 : vector<1x256xf32> to vector<64x256xf32>
    %219 = arith.mulf %207, %218 : vector<64x256xf32>
    %220 = arith.addf %219, %212 : vector<64x256xf32>
    %221 = vector.broadcast %30 : vector<1x256xf32> to vector<64x256xf32>
    %222 = arith.mulf %217, %221 : vector<64x256xf32>
    %223 = arith.addf %220, %222 : vector<64x256xf32>
    %c0_248 = arith.constant 0 : index
    %c3_249 = arith.constant 3 : index
    %224 = vector.load %arg5[%c0_248, %c3_249] : memref<64x5xf32, #tpu.memory_space<vmem>>, vector<64x1xf32>
    %225 = vector.broadcast %224 : vector<64x1xf32> to vector<64x256xf32>
    %226 = arith.addf %223, %225 : vector<64x256xf32>
    %cst_250 = arith.constant 0.000000e+00 : f32
    %227 = vector.broadcast %cst_250 : f32 to vector<64x256xf32>
    %228 = arith.maximumf %226, %227 : vector<64x256xf32>
    %c0_251 = arith.constant 0 : index
    %c17_252 = arith.constant 17 : index
    %229 = vector.load %arg7[%c0_251, %c17_252] : memref<64x290xf32, #tpu.memory_space<vmem>>, vector<64x256xf32>
    tpu.vector_store %arg7[%c0_251, %c17_252], %228 {strides = array<i32>} : memref<64x290xf32, #tpu.memory_space<vmem>>, vector<64x256xf32>,
    %c0_253 = arith.constant 0 : index
    %c0_254 = arith.constant 0 : index
    %c0_255 = arith.constant 0 : index
    %230 = vector.load %arg4[%c0_253, %c0_254, %c0_255] : memref<9x1x64xf32, #tpu.memory_space<vmem>>, vector<1x1x64xf32>
    %231 = vector.shape_cast %230 : vector<1x1x64xf32> to vector<1x64xf32>
    %c0_256 = arith.constant 0 : index
    %c0_257 = arith.constant 0 : index
    %232 = vector.load %arg7[%c0_256, %c0_257] : memref<64x290xf32, #tpu.memory_space<vmem>>, vector<64x256xf32>
    %cst_258 = arith.constant dense<0.000000e+00> : vector<1x256xf32>
    %233 = tpu.matmul %231, %232, %cst_258 {dimension_numbers = #tpu.dot_dimension_numbers<[1], [0], [0], [1], [0, 0, 1, 1], [], []>} : vector<1x64xf32>, vector<64x256xf32>, vector<1x256xf32> -> vector<1x256xf32>
    %c1_259 = arith.constant 1 : index
    %c0_260 = arith.constant 0 : index
    %c0_261 = arith.constant 0 : index
    %234 = vector.load %arg4[%c1_259, %c0_260, %c0_261] : memref<9x1x64xf32, #tpu.memory_space<vmem>>, vector<1x1x64xf32>
    %235 = vector.shape_cast %234 : vector<1x1x64xf32> to vector<1x64xf32>
    %c0_262 = arith.constant 0 : index
    %c1_263 = arith.constant 1 : index
    %236 = vector.load %arg7[%c0_262, %c1_263] : memref<64x290xf32, #tpu.memory_space<vmem>>, vector<64x256xf32>
    %cst_264 = arith.constant dense<0.000000e+00> : vector<1x256xf32>
    %237 = tpu.matmul %235, %236, %cst_264 {dimension_numbers = #tpu.dot_dimension_numbers<[1], [0], [0], [1], [0, 0, 1, 1], [], []>} : vector<1x64xf32>, vector<64x256xf32>, vector<1x256xf32> -> vector<1x256xf32>
    %c2_265 = arith.constant 2 : index
    %c0_266 = arith.constant 0 : index
    %c0_267 = arith.constant 0 : index
    %238 = vector.load %arg4[%c2_265, %c0_266, %c0_267] : memref<9x1x64xf32, #tpu.memory_space<vmem>>, vector<1x1x64xf32>
    %239 = vector.shape_cast %238 : vector<1x1x64xf32> to vector<1x64xf32>
    %c0_268 = arith.constant 0 : index
    %c2_269 = arith.constant 2 : index
    %240 = vector.load %arg7[%c0_268, %c2_269] : memref<64x290xf32, #tpu.memory_space<vmem>>, vector<64x256xf32>
    %cst_270 = arith.constant dense<0.000000e+00> : vector<1x256xf32>
    %241 = tpu.matmul %239, %240, %cst_270 {dimension_numbers = #tpu.dot_dimension_numbers<[1], [0], [0], [1], [0, 0, 1, 1], [], []>} : vector<1x64xf32>, vector<64x256xf32>, vector<1x256xf32> -> vector<1x256xf32>
    %c3_271 = arith.constant 3 : index
    %c0_272 = arith.constant 0 : index
    %c0_273 = arith.constant 0 : index
    %242 = vector.load %arg4[%c3_271, %c0_272, %c0_273] : memref<9x1x64xf32, #tpu.memory_space<vmem>>, vector<1x1x64xf32>
    %243 = vector.shape_cast %242 : vector<1x1x64xf32> to vector<1x64xf32>
    %c0_274 = arith.constant 0 : index
    %c16_275 = arith.constant 16 : index
    %244 = vector.load %arg7[%c0_274, %c16_275] : memref<64x290xf32, #tpu.memory_space<vmem>>, vector<64x256xf32>
    %cst_276 = arith.constant dense<0.000000e+00> : vector<1x256xf32>
    %245 = tpu.matmul %243, %244, %cst_276 {dimension_numbers = #tpu.dot_dimension_numbers<[1], [0], [0], [1], [0, 0, 1, 1], [], []>} : vector<1x64xf32>, vector<64x256xf32>, vector<1x256xf32> -> vector<1x256xf32>
    %246 = arith.addf %233, %245 : vector<1x256xf32>
    %c4_277 = arith.constant 4 : index
    %c0_278 = arith.constant 0 : index
    %c0_279 = arith.constant 0 : index
    %247 = vector.load %arg4[%c4_277, %c0_278, %c0_279] : memref<9x1x64xf32, #tpu.memory_space<vmem>>, vector<1x1x64xf32>
    %248 = vector.shape_cast %247 : vector<1x1x64xf32> to vector<1x64xf32>
    %c0_280 = arith.constant 0 : index
    %c17_281 = arith.constant 17 : index
    %249 = vector.load %arg7[%c0_280, %c17_281] : memref<64x290xf32, #tpu.memory_space<vmem>>, vector<64x256xf32>
    %cst_282 = arith.constant dense<0.000000e+00> : vector<1x256xf32>
    %250 = tpu.matmul %248, %249, %cst_282 {dimension_numbers = #tpu.dot_dimension_numbers<[1], [0], [0], [1], [0, 0, 1, 1], [], []>} : vector<1x64xf32>, vector<64x256xf32>, vector<1x256xf32> -> vector<1x256xf32>
    %251 = arith.addf %237, %250 : vector<1x256xf32>
    %c5_283 = arith.constant 5 : index
    %c0_284 = arith.constant 0 : index
    %c0_285 = arith.constant 0 : index
    %252 = vector.load %arg4[%c5_283, %c0_284, %c0_285] : memref<9x1x64xf32, #tpu.memory_space<vmem>>, vector<1x1x64xf32>
    %253 = vector.shape_cast %252 : vector<1x1x64xf32> to vector<1x64xf32>
    %c0_286 = arith.constant 0 : index
    %c18_287 = arith.constant 18 : index
    %254 = vector.load %arg7[%c0_286, %c18_287] : memref<64x290xf32, #tpu.memory_space<vmem>>, vector<64x256xf32>
    %cst_288 = arith.constant dense<0.000000e+00> : vector<1x256xf32>
    %255 = tpu.matmul %253, %254, %cst_288 {dimension_numbers = #tpu.dot_dimension_numbers<[1], [0], [0], [1], [0, 0, 1, 1], [], []>} : vector<1x64xf32>, vector<64x256xf32>, vector<1x256xf32> -> vector<1x256xf32>
    %256 = arith.addf %241, %255 : vector<1x256xf32>
    %c6_289 = arith.constant 6 : index
    %c0_290 = arith.constant 0 : index
    %c0_291 = arith.constant 0 : index
    %257 = vector.load %arg4[%c6_289, %c0_290, %c0_291] : memref<9x1x64xf32, #tpu.memory_space<vmem>>, vector<1x1x64xf32>
    %258 = vector.shape_cast %257 : vector<1x1x64xf32> to vector<1x64xf32>
    %c0_292 = arith.constant 0 : index
    %c32_293 = arith.constant 32 : index
    %259 = vector.load %arg7[%c0_292, %c32_293] : memref<64x290xf32, #tpu.memory_space<vmem>>, vector<64x256xf32>
    %cst_294 = arith.constant dense<0.000000e+00> : vector<1x256xf32>
    %260 = tpu.matmul %258, %259, %cst_294 {dimension_numbers = #tpu.dot_dimension_numbers<[1], [0], [0], [1], [0, 0, 1, 1], [], []>} : vector<1x64xf32>, vector<64x256xf32>, vector<1x256xf32> -> vector<1x256xf32>
    %261 = arith.addf %246, %260 : vector<1x256xf32>
    %c7_295 = arith.constant 7 : index
    %c0_296 = arith.constant 0 : index
    %c0_297 = arith.constant 0 : index
    %262 = vector.load %arg4[%c7_295, %c0_296, %c0_297] : memref<9x1x64xf32, #tpu.memory_space<vmem>>, vector<1x1x64xf32>
    %263 = vector.shape_cast %262 : vector<1x1x64xf32> to vector<1x64xf32>
    %c0_298 = arith.constant 0 : index
    %c33_299 = arith.constant 33 : index
    %264 = vector.load %arg7[%c0_298, %c33_299] : memref<64x290xf32, #tpu.memory_space<vmem>>, vector<64x256xf32>
    %cst_300 = arith.constant dense<0.000000e+00> : vector<1x256xf32>
    %265 = tpu.matmul %263, %264, %cst_300 {dimension_numbers = #tpu.dot_dimension_numbers<[1], [0], [0], [1], [0, 0, 1, 1], [], []>} : vector<1x64xf32>, vector<64x256xf32>, vector<1x256xf32> -> vector<1x256xf32>
    %266 = arith.addf %251, %265 : vector<1x256xf32>
    %c8_301 = arith.constant 8 : index
    %c0_302 = arith.constant 0 : index
    %c0_303 = arith.constant 0 : index
    %267 = vector.load %arg4[%c8_301, %c0_302, %c0_303] : memref<9x1x64xf32, #tpu.memory_space<vmem>>, vector<1x1x64xf32>
    %268 = vector.shape_cast %267 : vector<1x1x64xf32> to vector<1x64xf32>
    %c0_304 = arith.constant 0 : index
    %c34_305 = arith.constant 34 : index
    %269 = vector.load %arg7[%c0_304, %c34_305] : memref<64x290xf32, #tpu.memory_space<vmem>>, vector<64x256xf32>
    %cst_306 = arith.constant dense<0.000000e+00> : vector<1x256xf32>
    %270 = tpu.matmul %268, %269, %cst_306 {dimension_numbers = #tpu.dot_dimension_numbers<[1], [0], [0], [1], [0, 0, 1, 1], [], []>} : vector<1x64xf32>, vector<64x256xf32>, vector<1x256xf32> -> vector<1x256xf32>
    %271 = arith.addf %256, %270 : vector<1x256xf32>
    %272 = arith.mulf %261, %26 : vector<1x256xf32>
    %273 = arith.addf %272, %266 : vector<1x256xf32>
    %274 = arith.mulf %271, %30 : vector<1x256xf32>
    %275 = arith.addf %273, %274 : vector<1x256xf32>
    %276 = vector.broadcast %32 : vector<1x1xf32> to vector<1x256xf32>
    %277 = arith.addf %275, %276 : vector<1x256xf32>
    %cst_307 = arith.constant 0.000000e+00 : f32
    %278 = vector.broadcast %cst_307 : f32 to vector<1x256xf32>
    %279 = arith.maximumf %277, %278 : vector<1x256xf32>
    %c0_308 = arith.constant 0 : index
    %c0_309 = arith.constant 0 : index
    %c0_310 = arith.constant 0 : index
    %280 = vector.load %arg6[%c0_308, %c0_309, %c0_310] : memref<1x1x256xf32, #tpu.memory_space<vmem>>, vector<1x1x256xf32>
    %281 = vector.shape_cast %280 : vector<1x1x256xf32> to vector<1x256xf32>
    %282 = vector.shape_cast %279 : vector<1x256xf32> to vector<1x1x256xf32>
    tpu.vector_store %arg6[%c0_308, %c0_309, %c0_310], %282 {strides = array<i32>} : memref<1x1x256xf32, #tpu.memory_space<vmem>>, vector<1x1x256xf32>,
    return
  }
  func.func @transform_0(%arg0: i32) -> (i32, i32, i32) {
    %c0_i32 = arith.constant 0 : i32
    %c0_i32_0 = arith.constant 0 : i32
    %c0_i32_1 = arith.constant 0 : i32
    return %arg0, %c0_i32, %c0_i32_0 : i32, i32, i32
  }
  func.func @transform_1(%arg0: i32) -> (i32, i32) {
    %c0_i32 = arith.constant 0 : i32
    %c0_i32_0 = arith.constant 0 : i32
    %c0_i32_1 = arith.constant 0 : i32
    return %c0_i32, %c0_i32_0 : i32, i32
  }
  func.func @transform_2(%arg0: i32) -> (i32, i32, i32, i32) {
    %c0_i32 = arith.constant 0 : i32
    %c0_i32_0 = arith.constant 0 : i32
    %c0_i32_1 = arith.constant 0 : i32
    %c0_i32_2 = arith.constant 0 : i32
    %c0_i32_3 = arith.constant 0 : i32
    return %c0_i32, %c0_i32_0, %c0_i32_1, %c0_i32_2 : i32, i32, i32, i32
  }
  func.func @transform_3(%arg0: i32) -> (i32, i32, i32) {
    %c0_i32 = arith.constant 0 : i32
    %c0_i32_0 = arith.constant 0 : i32
    %c0_i32_1 = arith.constant 0 : i32
    %c0_i32_2 = arith.constant 0 : i32
    return %c0_i32, %c0_i32_0, %c0_i32_1 : i32, i32, i32
  }
  func.func @transform_4(%arg0: i32) -> (i32, i32) {
    %c0_i32 = arith.constant 0 : i32
    %c0_i32_0 = arith.constant 0 : i32
    %c0_i32_1 = arith.constant 0 : i32
    return %c0_i32, %c0_i32_0 : i32, i32
  }
  func.func @transform_5(%arg0: i32) -> (i32, i32, i32) {
    %c0_i32 = arith.constant 0 : i32
    %c0_i32_0 = arith.constant 0 : i32
    %c0_i32_1 = arith.constant 0 : i32
    return %arg0, %c0_i32, %c0_i32_0 : i32, i32, i32
  }
}

</mosaic_0001>

<llo_original>
// kernel: denoiser_forward.1
$region0: #{denoiser_forward.1}
  #allocation0 [shape = 'u32[]', space=smem, size = 0x4, offset = 0x4, fixed_abs, tag = 'smem constant byte address 0x4 - core index']
  #allocation1 [shape = 'u32[144,128]{1,0:T(1,128)}', space=vmem, size = 0x12000, scoped, tag = 'internal scratch']
  #allocation2 [shape = 'f32[64,290]{1,0:T(8,128)}', space=vmem, size = 0x18000, scoped, tag = 'scratch operand']
  #allocation3 [shape = 'f32[16,256]{1,0:T(8,128)}', space=vmem, size = 0x4000, scoped, tag = 'scratch operand']
  %s0 = inlined_call_operand.vmem [shape: f32[2,1,256], index: 0, kind: input, shape index: {}]
  %s1 = inlined_call_operand.vmem [shape: f32[64,16], index: 1, kind: input, shape index: {}]
  %s2 = inlined_call_operand.vmem [shape: f32[3,9,64,64], index: 2, kind: input, shape index: {}]
  %s3 = inlined_call_operand.vmem [shape: f32[9,1,64], index: 3, kind: input, shape index: {}]
  %s4 = inlined_call_operand.vmem [shape: f32[64,5], index: 4, kind: input, shape index: {}]
  %s5 = inlined_call_operand.vmem [shape: f32[2,1,256], index: 5, kind: output, shape index: {}]
  %s6 = sld [smem:[#allocation0]]
  $region53: #{denoiser_forward.1} parent=0
    _
  %s8 = ssub.s32 1, %s6
  %s9 = scalar_select 0, %s8, %s6
  loop: start=0, step=1, limit=4
  $region2: #{denoiser_forward.1} parent=0 // loop_pre_header
    _
  $region3: #{denoiser_forward.1} parent=0 // loop_header
    %s11 = sphi 0, %s15
    %p12 = scmp.ge.s32.totalorder %s11, 4
    %s21 = sphi 0, %s23
    %s24 = sphi 0, %s21
    %s25 = sphi 0, %s24
    %s41 = sphi 0, %s25
    %s45 = sphi 0, %s45
    %s47 = sphi 0, %s45
    %s48 = sphi 0, %s47
    %s62 = sphi 0, %s48
    %s66 = sphi 0, %s66
    %s68 = sphi 0, %s66
    %s69 = sphi 0, %s68
    %s83 = sphi 0, %s69
    %s87 = sphi 0, %s87
    %s89 = sphi 0, %s87
    %s90 = sphi 0, %s89
    %s104 = sphi 0, %s90
    %s108 = sphi 0, %s108
    %s110 = sphi 0, %s108
    %s111 = sphi 0, %s110
    %s125 = sphi 0, %s111
    %s131 = sphi 0, %s133
    %s134 = sphi 0, %s131
    %s135 = sphi 0, %s134
    %s151 = sphi 0, %s135
  $region4: #{denoiser_forward.1} parent=0 // loop_header_branch
    %14 = sbr.rel (%p12) target = $region8
  $region5: #{denoiser_forward.1} parent=0 // loop_body
    %s16 = ssub.s32 %s11, 1
    %s17 = ssub.s32 %s11, 2
    %s18 = sadd.s32 %s11, 1
    %s19 = ssub.s32 %s11, %s18
    %p20 = scmp.eq.s32.totalorder %s19, 0
    %s22 = sadd.s32 %s21, 1
    %s23 = scalar_select %p20, %s21, %s22
    %p26 = pneg %p20
    %p27 = scmp.eq.s32.totalorder %s11, 1
    %p28 = por %p26, %p27
    %p29 = scmp.ne.s32.totalorder %s21, %s24
    %p30 = scmp.eq.s32.totalorder %s11, 0
    %p31 = por %p29, %p30
    %p32 = scmp.ne.s32.totalorder %s21, %s24
    %p33 = scmp.eq.s32.totalorder %s16, 1
    %p34 = por %p32, %p33
    %p35 = scmp.ne.s32.totalorder %s24, %s25
    %p36 = scmp.eq.s32.totalorder %s16, 0
    %p37 = por %p35, %p36
    %p38 = scmp.ne.s32.totalorder %s24, %s25
    %p39 = scmp.eq.s32.totalorder %s17, 1
    %p40 = por %p38, %p39
    %p42 = scmp.ne.s32.totalorder %s25, %s41
    %p43 = scmp.eq.s32.totalorder %s17, 0
    %p44 = por %p42, %p43
    %s46 = sadd.s32 %s45, 1
    %p49 = scmp.eq.s32.totalorder %s11, 1
    %p50 = scmp.ne.s32.totalorder %s45, %s47
    %p51 = scmp.eq.s32.totalorder %s11, 0
    %p52 = por %p50, %p51
    %p53 = scmp.ne.s32.totalorder %s45, %s47
    %p54 = scmp.eq.s32.totalorder %s16, 1
    %p55 = por %p53, %p54
    %p56 = scmp.ne.s32.totalorder %s47, %s48
    %p57 = scmp.eq.s32.totalorder %s16, 0
    %p58 = por %p56, %p57
    %p59 = scmp.ne.s32.totalorder %s47, %s48
    %p60 = scmp.eq.s32.totalorder %s17, 1
    %p61 = por %p59, %p60
    %p63 = scmp.ne.s32.totalorder %s48, %s62
    %p64 = scmp.eq.s32.totalorder %s17, 0
    %p65 = por %p63, %p64
    %s67 = sadd.s32 %s66, 1
    %p70 = scmp.eq.s32.totalorder %s11, 1
    %p71 = scmp.ne.s32.totalorder %s66, %s68
    %p72 = scmp.eq.s32.totalorder %s11, 0
    %p73 = por %p71, %p72
    %p74 = scmp.ne.s32.totalorder %s66, %s68
    %p75 = scmp.eq.s32.totalorder %s16, 1
    %p76 = por %p74, %p75
    %p77 = scmp.ne.s32.totalorder %s68, %s69
    %p78 = scmp.eq.s32.totalorder %s16, 0
    %p79 = por %p77, %p78
    %p80 = scmp.ne.s32.totalorder %s68, %s69
    %p81 = scmp.eq.s32.totalorder %s17, 1
    %p82 = por %p80, %p81
    %p84 = scmp.ne.s32.totalorder %s69, %s83
    %p85 = scmp.eq.s32.totalorder %s17, 0
    %p86 = por %p84, %p85
    %s88 = sadd.s32 %s87, 1
    %p91 = scmp.eq.s32.totalorder %s11, 1
    %p92 = scmp.ne.s32.totalorder %s87, %s89
    %p93 = scmp.eq.s32.totalorder %s11, 0
    %p94 = por %p92, %p93
    %p95 = scmp.ne.s32.totalorder %s87, %s89
    %p96 = scmp.eq.s32.totalorder %s16, 1
    %p97 = por %p95, %p96
    %p98 = scmp.ne.s32.totalorder %s89, %s90
    %p99 = scmp.eq.s32.totalorder %s16, 0
    %p100 = por %p98, %p99
    %p101 = scmp.ne.s32.totalorder %s89, %s90
    %p102 = scmp.eq.s32.totalorder %s17, 1
    %p103 = por %p101, %p102
    %p105 = scmp.ne.s32.totalorder %s90, %s104
    %p106 = scmp.eq.s32.totalorder %s17, 0
    %p107 = por %p105, %p106
    %s109 = sadd.s32 %s108, 1
    %p112 = scmp.eq.s32.totalorder %s11, 1
    %p113 = scmp.ne.s32.totalorder %s108, %s110
    %p114 = scmp.eq.s32.totalorder %s11, 0
    %p115 = por %p113, %p114
    %p116 = scmp.ne.s32.totalorder %s108, %s110
    %p117 = scmp.eq.s32.totalorder %s16, 1
    %p118 = por %p116, %p117
    %p119 = scmp.ne.s32.totalorder %s110, %s111
    %p120 = scmp.eq.s32.totalorder %s16, 0
    %p121 = por %p119, %p120
    %p122 = scmp.ne.s32.totalorder %s110, %s111
    %p123 = scmp.eq.s32.totalorder %s17, 1
    %p124 = por %p122, %p123
    %p126 = scmp.ne.s32.totalorder %s111, %s125
    %p127 = scmp.eq.s32.totalorder %s17, 0
    %p128 = por %p126, %p127
    %s129 = ssub.s32 %s11, %s18
    %p130 = scmp.eq.s32.totalorder %s129, 0
    %s132 = sadd.s32 %s131, 1
    %s133 = scalar_select %p130, %s131, %s132
    %p136 = pneg %p130
    %p137 = scmp.eq.s32.totalorder %s11, 1
    %p138 = por %p136, %p137
    %p139 = scmp.ne.s32.totalorder %s131, %s134
    %p140 = scmp.eq.s32.totalorder %s11, 0
    %p141 = por %p139, %p140
    %p142 = scmp.ne.s32.totalorder %s131, %s134
    %p143 = scmp.eq.s32.totalorder %s16, 1
    %p144 = por %p142, %p143
    %p145 = scmp.ne.s32.totalorder %s134, %s135
    %p146 = scmp.eq.s32.totalorder %s16, 0
    %p147 = por %p145, %p146
    %p148 = scmp.ne.s32.totalorder %s134, %s135
    %p149 = scmp.eq.s32.totalorder %s17, 1
    %p150 = por %p148, %p149
    %p152 = scmp.ne.s32.totalorder %s135, %s151
    %p153 = scmp.eq.s32.totalorder %s17, 0
    %p154 = por %p152, %p153
    %p155 = scmp.le.s32.totalorder 1, %s11
    %p156 = scmp.lt.s32.totalorder %s11, 3
    %p157 = pnand %p155, %p156
    %p158 = pneg %p157
    // Predicated region
    $region9: #{denoiser_forward.1} parent=5 // pred_check
      _
    $region10: #{denoiser_forward.1} parent=5 // pred_check_branch
      %160 = sbr.rel (%p157) target = $region12
    $region11: #{denoiser_forward.1} parent=5 // pred_region
      %s161 = ssub.s32 %s11, 1
      // Predicated region
      $region13: #{denoiser_forward.1} parent=11 // pred_check
        %p162 = pneg %p58
      $region14: #{denoiser_forward.1} parent=11 // pred_check_branch
        %164 = sbr.rel (%p162) target = $region16
      $region15: #{denoiser_forward.1} parent=11 // pred_region
        _
      $region16: #{denoiser_forward.1} parent=11 // pred_fallthru
        _
      // Predicated region
      $region17: #{denoiser_forward.1} parent=11 // pred_check
        %p165 = pneg %p79
      $region18: #{denoiser_forward.1} parent=11 // pred_check_branch
        %167 = sbr.rel (%p165) target = $region20
      $region19: #{denoiser_forward.1} parent=11 // pred_region
        _
      $region20: #{denoiser_forward.1} parent=11 // pred_fallthru
        _
      // Predicated region
      $region21: #{denoiser_forward.1} parent=11 // pred_check
        %p168 = pneg %p100
      $region22: #{denoiser_forward.1} parent=11 // pred_check_branch
        %170 = sbr.rel (%p168) target = $region24
      $region23: #{denoiser_forward.1} parent=11 // pred_region
        _
      $region24: #{denoiser_forward.1} parent=11 // pred_fallthru
        _
      // Predicated region
      $region25: #{denoiser_forward.1} parent=11 // pred_check
        %p171 = pneg %p121
      $region26: #{denoiser_forward.1} parent=11 // pred_check_branch
        %173 = sbr.rel (%p171) target = $region28
      $region27: #{denoiser_forward.1} parent=11 // pred_region
        _
      $region28: #{denoiser_forward.1} parent=11 // pred_fallthru
        _
    $region12: #{denoiser_forward.1} parent=5 // pred_fallthru
      _
    %p174 = scmp.lt.s32.totalorder %s11, 2
    // Predicated region
    $region29: #{denoiser_forward.1} parent=5 // pred_check
      %p175 = pneg %p174
    $region30: #{denoiser_forward.1} parent=5 // pred_check_branch
      %177 = sbr.rel (%p175) target = $region32
    $region31: #{denoiser_forward.1} parent=5 // pred_region
      // Predicated region
      $region33: #{denoiser_forward.1} parent=31 // pred_check
        %p178 = pneg %p31
      $region34: #{denoiser_forward.1} parent=31 // pred_check_branch
        %180 = sbr.rel (%p178) target = $region36
      $region35: #{denoiser_forward.1} parent=31 // pred_region
        %p181 = scmp.lt.s32.totalorder %s11, 1
        %s182 = scalar_select %p181, %s11, 1
        %s183 = smul.addr %s182, 2
        %s184 = scalar_lea.vmem %s0, %s183
      $region36: #{denoiser_forward.1} parent=31 // pred_fallthru
        _
    $region32: #{denoiser_forward.1} parent=5 // pred_fallthru
      _
    %p185 = scmp.le.s32.totalorder 1, %s11
    %p186 = scmp.lt.s32.totalorder %s11, 3
    %p187 = pnand %p185, %p186
    %p188 = pneg %p187
    // Predicated region
    $region37: #{denoiser_forward.1} parent=5 // pred_check
      _
    $region38: #{denoiser_forward.1} parent=5 // pred_check_branch
      %190 = sbr.rel (%p187) target = $region40
    $region39: #{denoiser_forward.1} parent=5 // pred_region
      %s191 = ssub.s32 %s11, 1
      %p192 = scmp.lt.s32.totalorder %s16, 1
      %s193 = scalar_select %p192, %s16, 1
      %s194 = smul.addr %s193, 2
      %s195 = scalar_lea.vmem %s0, %s194
      %p196 = pneg %p37
      %p197 = pneg %p34
      %p198 = pneg %p58
      %p199 = pneg %p55
      %p200 = pneg %p79
      %p201 = pneg %p76
      %p202 = pneg %p100
      %p203 = pneg %p97
      %p204 = pneg %p121
      %p205 = pneg %p118
      %p206 = pneg %p147
      %p207 = pneg %p144
      %p208 = scmp.lt.s32.totalorder %s16, 1
      %s209 = scalar_select %p208, %s16, 1
      %s210 = smul.addr %s209, 2
      %s211 = scalar_lea.vmem %s5, %s210
      %p212 = scmp.lt.s32.totalorder %s16, 1
      %s213 = scalar_select %p212, %s16, 1
      %s214 = smul.addr %s213, 2
      %s215 = scalar_lea.vmem %s0, %s214
      %p216 = scmp.lt.s32.totalorder %s16, 1
      %s217 = scalar_select %p216, %s16, 1
      %s218 = smul.addr %s217, 2
      %s219 = scalar_lea.vmem %s5, %s218
      %vm220 = vcmask 138240
      %221 = vst.msk [vmem:[#allocation2] sm:$0xff] %vm220, 0.0
      %222 = vst.msk [vmem:[#allocation2 + $0x18] sm:$0xff] %vm220, 0.0
      %223 = vst.msk [vmem:[#allocation2 + $0x30] sm:$0xff] %vm220, 0.0
      %224 = vst.msk [vmem:[#allocation2 + $0x48] sm:$0xff] %vm220, 0.0
      %225 = vst.msk [vmem:[#allocation2 + $0x60] sm:$0xff] %vm220, 0.0
      %226 = vst.msk [vmem:[#allocation2 + $0x78] sm:$0xff] %vm220, 0.0
      %227 = vst.msk [vmem:[#allocation2 + $0x90] sm:$0xff] %vm220, 0.0
      %228 = vst.msk [vmem:[#allocation2 + $0xa8] sm:$0xff] %vm220, 0.0
      %vm229 = vcmask 277640
      %230 = vst.msk [vmem:[#allocation2 + $0x10] sm:$0xff] %vm229, 0.0
      %231 = vst.msk [vmem:[#allocation2 + $0x28] sm:$0xff] %vm229, 0.0
      %232 = vst.msk [vmem:[#allocation2 + $0x40] sm:$0xff] %vm229, 0.0
      %233 = vst.msk [vmem:[#allocation2 + $0x58] sm:$0xff] %vm229, 0.0
      %234 = vst.msk [vmem:[#allocation2 + $0x70] sm:$0xff] %vm229, 0.0
      %235 = vst.msk [vmem:[#allocation2 + $0x88] sm:$0xff] %vm229, 0.0
      %236 = vst.msk [vmem:[#allocation2 + $0xa0] sm:$0xff] %vm229, 0.0
      %237 = vst.msk [vmem:[#allocation2 + $0xb8] sm:$0xff] %vm229, 0.0
      %238 = vst [vmem:[#allocation3 + $0x10] sm:$0xff] 0.0
      %239 = vst [vmem:[#allocation3 + $0x18] sm:$0xff] 0.0
      %v240 = vlaneseq
      %v241 = vand.u32 %v240, 127
      %v242 = vadd.s32 %v241, 128
      %vm243 = vcmp.lt.s32.totalorder %v241, 0
      %v244 = vsub.s32 0, %v241
      %v245 = vsel %vm243, %v244, %v241
      %v246 = vshrl.u32 %v245, 4
      %v247 = vand.u32 %v245, 15
      %v248 = vsub.s32 0, %v247
      %v249 = vsel %vm243, %v248, %v247
      %vm250 = vcmp.lt.s32.totalorder %v242, 0
      %v251 = vsub.s32 0, %v242
      %v252 = vsel %vm250, %v251, %v242
      %v253 = vshrl.u32 %v252, 4
      %v254 = vand.u32 %v252, 15
      %v255 = vsub.s32 0, %v254
      %v256 = vsel %vm250, %v255, %v254
      %vm257 = vcmp.ne.s32.totalorder %v249, 0
      %vm258 = vcmp.ne.s32.totalorder %v256, 0
      %vm259 = vcmp.lt.s32.totalorder %v249, 0
      %vm260 = vcmp.lt.s32.totalorder %v256, 0
      %vm261 = vmand %vm259, %vm257
      %vm262 = vmand %vm260, %vm258
      %v263 = vadd.s32 %v249, 16
      %v264 = vadd.s32 %v256, 16
      %v265 = vsel %vm261, %v263, %v249
      %v266 = vsel %vm262, %v264, %v256
      %vm267 = vcmp.ge.s32.totalorder %v265, 1
      %vm268 = vcmp.ge.s32.totalorder %v266, 1
      %v269 = vsel %vm267, 1, 0
      %v270 = vsel %vm268, 1, 0
      %v271 = vcvt.s32.f32 %v269
      %v272 = vcvt.s32.f32 %v270
      %vm273 = vcmp.le.s32.totalorder %v265, 14
      %vm274 = vcmp.le.s32.totalorder %v266, 14
      %v275 = vsel %vm273, 1, 0
      %v276 = vsel %vm274, 1, 0
      %v277 = vcvt.s32.f32 %v275
      %v278 = vcvt.s32.f32 %v276
      %v279 = vld [vmem:[%s4] sm:$0xff]
      %v280 = vld [vmem:[%s4 + $0x8] sm:$0xff]
      %v281 = vld [vmem:[%s4 + $0x10] sm:$0xff]
      %v282 = vld [vmem:[%s4 + $0x18] sm:$0xff]
      %v283 = vld [vmem:[%s4 + $0x20] sm:$0xff]
      %v284 = vld [vmem:[%s4 + $0x28] sm:$0xff]
      %v285 = vld [vmem:[%s4 + $0x30] sm:$0xff]
      %v286 = vld [vmem:[%s4 + $0x38] sm:$0xff]
      %v287 = vld [vmem:[%s4] sm:$0x1]
      %v288 = vld [vmem:[%s215] sm:$0x3]
      %290 = vrot.lane.b32.xlu0 %v288, 17
      %v291 = vpop.permute.xlu0 %290
      %v292 = vrot.slane %v291, 7
      %v293 = vsel %vm220, %v292, %v291
      %v295 = vlaneseq
      %vm296 = vcmp.ge.s32.totalorder %v295, 17
      %vm297 = vcmp.lt.s32.totalorder %v295, 273
      %vm298 = vmand %vm296, %vm297
      %299 = vst.msk [vmem:[#allocation2] ss:$8 sm:$0x7] %vm298, %v293
      %300 = vst.msk [vmem:[#allocation2] ss:$8 sm:$0x0] %vm298, %v293
      %v301 = vld [vmem:[#allocation2] ss:$8 sm:$0x3]
      %v304 = vcombine.low %v271, %v272
      %v306 = vunpack.c.l.s4 1966171168
      %v307 = vunpack.c.0.s8 %v306
      %v308 = vlaneseq
      %v309 = vshrl.u32 %v308, 7
      %v310 = vsub.s32 %v307, %v309
      %v311 = vrot.slane %v304, %v310
      %v313 = vunpack.c.l.s4 1966171168
      %v314 = vunpack.c.0.s8 %v313
      %v315 = vlaneseq
      %v316 = vshrl.u32 %v315, 7
      %v317 = vsub.s32 %v314, %v316
      %v318 = vrot.slane %v311, %v317
      %v320 = vmul.f32 %v301, %v318
      %vm321 = vcmp.ge.s32.totalorder %v295, 0
      %vm322 = vcmp.lt.s32.totalorder %v295, 256
      %vm323 = vmand %vm321, %vm322
      %324 = vst.msk [vmem:[#allocation3] ss:$8 sm:$0x3] %vm323, %v320
      %325 = vst.msk [vmem:[#allocation3] ss:$8 sm:$0x0] %vm323, %v320
      %v326 = vld [vmem:[#allocation2] ss:$8 sm:$0x7]
      %328 = vrot.lane.b32.xlu0 %v326, 127
      %v329 = vpop.permute.xlu0 %328
      %v330 = vrot.slane %v329, 1
      %vm331 = vcmask 1039360
      %v332 = vsel %vm331, %v329, %v330
      %s334 = scalar_lea.vmem [#allocation3], 1
      %335 = vst.msk [vmem:[%s334] ss:$8 sm:$0x3] %vm323, %v332
      %336 = vst.msk [vmem:[%s334] ss:$8 sm:$0x0] %vm323, %v332
      %v337 = vld [vmem:[#allocation2] ss:$8 sm:$0x7]
      %v340 = vcombine.low %v277, %v278
      %v342 = vunpack.c.l.s4 1966171168
      %v343 = vunpack.c.0.s8 %v342
      %v344 = vlaneseq
      %v345 = vshrl.u32 %v344, 7
      %v346 = vsub.s32 %v343, %v345
      %v347 = vrot.slane %v340, %v346
      %v349 = vunpack.c.l.s4 1966171168
      %v350 = vunpack.c.0.s8 %v349
      %v351 = vlaneseq
      %v352 = vshrl.u32 %v351, 7
      %v353 = vsub.s32 %v350, %v352
      %v354 = vrot.slane %v347, %v353
      %355 = vrot.lane.b32.xlu0 %v354, 2
      %v356 = vpop.permute.xlu0 %355
      %v357 = vrot.slane %v356, 7
      %vm358 = vcmask 15360
      %v359 = vsel %vm358, %v357, %v356
      %v361 = vmul.f32 %v337, %v359
      %363 = vrot.lane.b32.xlu0 %v361, 126
      %v364 = vpop.permute.xlu0 %363
      %v365 = vrot.slane %v364, 1
      %vm366 = vcmask 1031168
      %v367 = vsel %vm366, %v364, %v365
      %s369 = scalar_lea.vmem [#allocation3], 2
      %370 = vst.msk [vmem:[%s369] ss:$8 sm:$0x3] %vm323, %v367
      %371 = vst.msk [vmem:[%s369] ss:$8 sm:$0x0] %vm323, %v367
      %v372 = vld [vmem:[#allocation2] ss:$8 sm:$0x7]
      %373 = vrot.lane.b32.xlu0 %v318, 16
      %v374 = vpop.permute.xlu0 %373
      %v375 = vrot.slane %v374, 7
      %vm376 = vcmask 130048
      %v377 = vsel %vm376, %v375, %v374
      %v379 = vmul.f32 %v372, %v377
      %381 = vrot.lane.b32.xlu0 %v379, 112
      %v382 = vpop.permute.xlu0 %381
      %v383 = vrot.slane %v382, 1
      %vm384 = vcmask 916480
      %v385 = vsel %vm384, %v382, %v383
      %s387 = scalar_lea.vmem [#allocation3], 3
      %388 = vst.msk [vmem:[%s387] ss:$8 sm:$0x3] %vm323, %v385
      %389 = vst.msk [vmem:[%s387] ss:$8 sm:$0x0] %vm323, %v385
      %v390 = vld [vmem:[#allocation2] ss:$8 sm:$0x7]
      %392 = vrot.lane.b32.xlu0 %v390, 111
      %v393 = vpop.permute.xlu0 %392
      %v394 = vrot.slane %v393, 1
      %vm395 = vcmask 908288
      %v396 = vsel %vm395, %v393, %v394
      %s398 = scalar_lea.vmem [#allocation3], 4
      %399 = vst.msk [vmem:[%s398] ss:$8 sm:$0x3] %vm323, %v396
      %400 = vst.msk [vmem:[%s398] ss:$8 sm:$0x0] %vm323, %v396
      %v401 = vld [vmem:[#allocation2] ss:$8 sm:$0x7]
      %402 = vrot.lane.b32.xlu0 %v354, 18
      %v403 = vpop.permute.xlu0 %402
      %v404 = vrot.slane %v403, 7
      %vm405 = vcmask 146432
      %v406 = vsel %vm405, %v404, %v403
      %v408 = vmul.f32 %v401, %v406
      %410 = vrot.lane.b32.xlu0 %v408, 110
      %v411 = vpop.permute.xlu0 %410
      %v412 = vrot.slane %v411, 1
      %vm413 = vcmask 900096
      %v414 = vsel %vm413, %v411, %v412
      %s416 = scalar_lea.vmem [#allocation3], 5
      %417 = vst.msk [vmem:[%s416] ss:$8 sm:$0x3] %vm323, %v414
      %418 = vst.msk [vmem:[%s416] ss:$8 sm:$0x0] %vm323, %v414
      %v419 = vld [vmem:[#allocation2] ss:$8 sm:$0x7]
      %420 = vrot.lane.b32.xlu0 %v318, 32
      %v421 = vpop.permute.xlu0 %420
      %v422 = vrot.slane %v421, 7
      %vm423 = vcmask 261120
      %v424 = vsel %vm423, %v422, %v421
      %v426 = vmul.f32 %v419, %v424
      %428 = vrot.lane.b32.xlu0 %v426, 96
      %v429 = vpop.permute.xlu0 %428
      %v430 = vrot.slane %v429, 1
      %vm431 = vcmask 785408
      %v432 = vsel %vm431, %v429, %v430
      %s434 = scalar_lea.vmem [#allocation3], 6
      %435 = vst.msk [vmem:[%s434] ss:$8 sm:$0x3] %vm323, %v432
      %436 = vst.msk [vmem:[%s434] ss:$8 sm:$0x0] %vm323, %v432
      %v437 = vld [vmem:[#allocation2] ss:$8 sm:$0x7]
      %439 = vrot.lane.b32.xlu0 %v437, 95
      %v440 = vpop.permute.xlu0 %439
      %v441 = vrot.slane %v440, 1
      %vm442 = vcmask 777216
      %v443 = vsel %vm442, %v440, %v441
      %s445 = scalar_lea.vmem [#allocation3], 7
      %446 = vst.msk [vmem:[%s445] ss:$8 sm:$0x3] %vm323, %v443
      %447 = vst.msk [vmem:[%s445] ss:$8 sm:$0x0] %vm323, %v443
      %v448 = vld [vmem:[#allocation2] ss:$8 sm:$0x7]
      %449 = vrot.lane.b32.xlu0 %v354, 34
      %v450 = vpop.permute.xlu0 %449
      %v451 = vrot.slane %v450, 7
      %vm452 = vcmask 277504
      %v453 = vsel %vm452, %v451, %v450
      %v455 = vmul.f32 %v448, %v453
      %457 = vrot.lane.b32.xlu0 %v455, 94
      %v458 = vpop.permute.xlu0 %457
      %v459 = vrot.slane %v458, 1
      %vm460 = vcmask 769024
      %v461 = vsel %vm460, %v458, %v459
      %s463 = scalar_lea.vmem [#allocation3], 16
      %464 = vst.msk [vmem:[%s463] ss:$8 sm:$0x3] %vm323, %v461
      %465 = vst.msk [vmem:[%s463] ss:$8 sm:$0x0] %vm323, %v461
      %v466 = vld [vmem:[%s1] sm:$0xff]
      %v467 = vld [vmem:[%s1 + $0x8] sm:$0xff]
      %v468 = vld [vmem:[%s1 + $0x10] sm:$0xff]
      %v469 = vld [vmem:[%s1 + $0x18] sm:$0xff]
      %v470 = vld [vmem:[%s1 + $0x20] sm:$0xff]
      %v471 = vld [vmem:[%s1 + $0x28] sm:$0xff]
      %v472 = vld [vmem:[%s1 + $0x30] sm:$0xff]
      %v473 = vld [vmem:[%s1 + $0x38] sm:$0xff]
      %v474 = vld [vmem:[#allocation3] sm:$0xff]
      %v475 = vld [vmem:[#allocation3 + $0x8] sm:$0xff]
      %v476 = vld [vmem:[#allocation3 + $0x10] sm:$0xff]
      %v477 = vld [vmem:[#allocation3 + $0x18] sm:$0xff]
      %479 = vset.pattern.permute.xlu0 0
      %480 = vperm.xlu0 %479, %v279
      %v481 = vpop.permute.xlu0 %480
      %484 = vset.pattern.permute.xlu0 0
      %485 = vperm.xlu0 %484, %v280
      %v486 = vpop.permute.xlu0 %485
      %489 = vset.pattern.permute.xlu0 0
      %490 = vperm.xlu0 %489, %v281
      %v491 = vpop.permute.xlu0 %490
      %494 = vset.pattern.permute.xlu0 0
      %495 = vperm.xlu0 %494, %v282
      %v496 = vpop.permute.xlu0 %495
      %499 = vset.pattern.permute.xlu0 0
      %500 = vperm.xlu0 %499, %v283
      %v501 = vpop.permute.xlu0 %500
      %504 = vset.pattern.permute.xlu0 0
      %505 = vperm.xlu0 %504, %v284
      %v506 = vpop.permute.xlu0 %505
      %509 = vset.pattern.permute.xlu0 0
      %510 = vperm.xlu0 %509, %v285
      %v511 = vpop.permute.xlu0 %510
      %514 = vset.pattern.permute.xlu0 0
      %515 = vperm.xlu0 %514, %v286
      %v516 = vpop.permute.xlu0 %515
      %v519 = vsel %vm376, %v466, 0
      %v522 = vsel %vm376, %v467, 0
      %v525 = vsel %vm376, %v468, 0
      %v528 = vsel %vm376, %v469, 0
      %v531 = vsel %vm376, %v470, 0
      %v534 = vsel %vm376, %v471, 0
      %v537 = vsel %vm376, %v472, 0
      %v540 = vsel %vm376, %v473, 0
      %542 = vmatprep.subr.mxu0 0.0
      %543 = vmatpush1.msra.mxu0 0.0
      %544 = vmatprep.subr.mxu0 0.0
      %545 = vmatpush1.msra.mxu0 0.0
      %546 = vmatprep.subr.mxu0 0.0
      %547 = vmatpush1.msra.mxu0 0.0
      %548 = vmatprep.subr.mxu0 0.0
      %549 = vmatpush1.msra.mxu0 0.0
      %550 = vmatprep.subr.mxu0 0.0
      %551 = vmatpush1.msra.mxu0 0.0
      %552 = vmatprep.subr.mxu0 0.0
      %553 = vmatpush1.msra.mxu0 0.0
      %554 = vmatprep.subr.mxu0 0.0
      %555 = vmatpush1.msra.mxu0 0.0
      %556 = vmatprep.subr.mxu0 0.0
      %557 = vmatpush1.msra.mxu0 0.0
      %558 = vmatprep.subr.mxu0 0.0
      %559 = vmatpush1.msra.mxu0 0.0
      %560 = vmatprep.subr.mxu0 0.0
      %561 = vmatpush1.msra.mxu0 0.0
      %562 = vmatprep.subr.mxu0 0.0
      %563 = vmatpush1.msra.mxu0 0.0
      %564 = vmatprep.subr.mxu0 0.0
      %565 = vmatpush1.msra.mxu0 0.0
      %566 = vmatprep.subr.mxu0 0.0
      %567 = vmatpush1.msra.mxu0 0.0
      %568 = vmatprep.subr.mxu0 0.0
      %569 = vmatpush1.msra.mxu0 0.0
      %570 = vmatprep.subr.mxu0 %v477
      %571 = vmatpush1.msra.mxu0 %v476
      %572 = vmatprep.subr.mxu0 %v475
      %573 = vmatpush1.msra.mxu0 %v474
      %574 = vmatprep.subr.mxu0 0.0
      %575 = vmatpush2.msra.mxu0 0.0
      %576 = vmatprep.subr.mxu0 0.0
      %577 = vmatpush2.msra.mxu0 0.0
      %578 = vmatprep.subr.mxu0 0.0
      %579 = vmatpush2.msra.mxu0 0.0
      %580 = vmatprep.subr.mxu0 0.0
      %581 = vmatpush2.msra.mxu0 0.0
      %582 = vmatprep.subr.mxu0 0.0
      %583 = vmatpush2.msra.mxu0 0.0
      %584 = vmatprep.subr.mxu0 0.0
      %585 = vmatpush2.msra.mxu0 0.0
      %586 = vmatprep.subr.mxu0 0.0
      %587 = vmatpush2.msra.mxu0 0.0
      %588 = vmatprep.subr.mxu0 0.0
      %589 = vmatpush2.msra.mxu0 0.0
      %590 = vmatprep.subr.mxu0 0.0
      %591 = vmatpush2.msra.mxu0 0.0
      %592 = vmatprep.subr.mxu0 0.0
      %593 = vmatpush2.msra.mxu0 0.0
      %594 = vmatprep.subr.mxu0 0.0
      %595 = vmatpush2.msra.mxu0 0.0
      %596 = vmatprep.subr.mxu0 0.0
      %597 = vmatpush2.msra.mxu0 0.0
      %598 = vmatprep.subr.mxu0 0.0
      %599 = vmatpush2.msra.mxu0 0.0
      %600 = vmatprep.subr.mxu0 0.0
      %601 = vmatpush2.msra.mxu0 0.0
      %602 = vmatprep.subr.mxu0 0.0
      %603 = vmatpush2.msra.mxu0 0.0
      %604 = vmatprep.subr.mxu0 0.0
      %605 = vmatpush2.msra.mxu0 0.0
      %606 = vmatprep.mubr.f32.mxu0 0.0
      %607 = vmatmul.mubr.f32.gmra.mxu0 %v519
      %v608 = vpop.f32.mrf.mxu0
      %v609 = vadd.f32 %v481, %v608
      %v610 = vpop.f32.mrf.mxu0
      %v611 = vadd.f32 %v481, %v610
      %612 = vmatprep.mubr.f32.mxu0 0.0
      %613 = vmatmul.mubr.f32.gmra.mxu0 %v522
      %v614 = vpop.f32.mrf.mxu0
      %v615 = vadd.f32 %v486, %v614
      %v616 = vpop.f32.mrf.mxu0
      %v617 = vadd.f32 %v486, %v616
      %618 = vmatprep.mubr.f32.mxu0 0.0
      %619 = vmatmul.mubr.f32.gmra.mxu0 %v525
      %v620 = vpop.f32.mrf.mxu0
      %v621 = vadd.f32 %v491, %v620
      %v622 = vpop.f32.mrf.mxu0
      %v623 = vadd.f32 %v491, %v622
      %624 = vmatprep.mubr.f32.mxu0 0.0
      %625 = vmatmul.mubr.f32.gmra.mxu0 %v528
      %v626 = vpop.f32.mrf.mxu0
      %v627 = vadd.f32 %v496, %v626
      %v628 = vpop.f32.mrf.mxu0
      %v629 = vadd.f32 %v496, %v628
      %630 = vmatprep.mubr.f32.mxu0 0.0
      %631 = vmatmul.mubr.f32.gmra.mxu0 %v531
      %v632 = vpop.f32.mrf.mxu0
      %v633 = vadd.f32 %v501, %v632
      %v634 = vpop.f32.mrf.mxu0
      %v635 = vadd.f32 %v501, %v634
      %636 = vmatprep.mubr.f32.mxu0 0.0
      %637 = vmatmul.mubr.f32.gmra.mxu0 %v534
      %v638 = vpop.f32.mrf.mxu0
      %v639 = vadd.f32 %v506, %v638
      %v640 = vpop.f32.mrf.mxu0
      %v641 = vadd.f32 %v506, %v640
      %642 = vmatprep.mubr.f32.mxu0 0.0
      %643 = vmatmul.mubr.f32.gmra.mxu0 %v537
      %v644 = vpop.f32.mrf.mxu0
      %v645 = vadd.f32 %v511, %v644
      %v646 = vpop.f32.mrf.mxu0
      %v647 = vadd.f32 %v511, %v646
      %648 = vmatprep.mubr.f32.mxu0 0.0
      %649 = vmatmul.mubr.f32.gmra.mxu0 %v540
      %v650 = vpop.f32.mrf.mxu0
      %v651 = vadd.f32 %v516, %v650
      %v652 = vpop.f32.mrf.mxu0
      %v653 = vadd.f32 %v516, %v652
      %654 = vdwg.mxu0
      %v655 = vmax.f32 %v609, 0.0
      %v656 = vmax.f32 %v611, 0.0
      %v657 = vmax.f32 %v615, 0.0
      %v658 = vmax.f32 %v617, 0.0
      %v659 = vmax.f32 %v621, 0.0
      %v660 = vmax.f32 %v623, 0.0
      %v661 = vmax.f32 %v627, 0.0
      %v662 = vmax.f32 %v629, 0.0
      %v663 = vmax.f32 %v633, 0.0
      %v664 = vmax.f32 %v635, 0.0
      %v665 = vmax.f32 %v639, 0.0
      %v666 = vmax.f32 %v641, 0.0
      %v667 = vmax.f32 %v645, 0.0
      %v668 = vmax.f32 %v647, 0.0
      %v669 = vmax.f32 %v651, 0.0
      %v670 = vmax.f32 %v653, 0.0
      %687 = vrot.lane.b32.xlu0 %v655, 17
      %v688 = vpop.permute.xlu0 %687
      %689 = vrot.lane.b32.xlu0 %v656, 17
      %v690 = vpop.permute.xlu0 %689
      %691 = vrot.lane.b32.xlu0 %v657, 17
      %v692 = vpop.permute.xlu0 %691
      %693 = vrot.lane.b32.xlu0 %v658, 17
      %v694 = vpop.permute.xlu0 %693
      %695 = vrot.lane.b32.xlu0 %v659, 17
      %v696 = vpop.permute.xlu0 %695
      %697 = vrot.lane.b32.xlu0 %v660, 17
      %v698 = vpop.permute.xlu0 %697
      %699 = vrot.lane.b32.xlu0 %v661, 17
      %v700 = vpop.permute.xlu0 %699
      %701 = vrot.lane.b32.xlu0 %v662, 17
      %v702 = vpop.permute.xlu0 %701
      %703 = vrot.lane.b32.xlu0 %v663, 17
      %v704 = vpop.permute.xlu0 %703
      %705 = vrot.lane.b32.xlu0 %v664, 17
      %v706 = vpop.permute.xlu0 %705
      %707 = vrot.lane.b32.xlu0 %v665, 17
      %v708 = vpop.permute.xlu0 %707
      %709 = vrot.lane.b32.xlu0 %v666, 17
      %v710 = vpop.permute.xlu0 %709
      %711 = vrot.lane.b32.xlu0 %v667, 17
      %v712 = vpop.permute.xlu0 %711
      %713 = vrot.lane.b32.xlu0 %v668, 17
      %v714 = vpop.permute.xlu0 %713
      %715 = vrot.lane.b32.xlu0 %v669, 17
      %v716 = vpop.permute.xlu0 %715
      %717 = vrot.lane.b32.xlu0 %v670, 17
      %v718 = vpop.permute.xlu0 %717
      %v719 = vsel %vm220, %v688, %v690
      %v720 = vsel %vm220, %v692, %v694
      %v721 = vsel %vm220, %v696, %v698
      %v722 = vsel %vm220, %v700, %v702
      %v723 = vsel %vm220, %v704, %v706
      %v724 = vsel %vm220, %v708, %v710
      %v725 = vsel %vm220, %v712, %v714
      %v726 = vsel %vm220, %v716, %v718
      %vm751 = vcmask 1047688
      %752 = vst.msk [vmem:[#allocation2] sm:$0xff] %vm751, %v688
      %753 = vst [vmem:[#allocation2 + $0x8] sm:$0xff] %v719
      %754 = vst.msk [vmem:[#allocation2 + $0x10] sm:$0xff] %vm220, %v690
      %755 = vst.msk [vmem:[#allocation2 + $0x18] sm:$0xff] %vm751, %v692
      %756 = vst [vmem:[#allocation2 + $0x20] sm:$0xff] %v720
      %757 = vst.msk [vmem:[#allocation2 + $0x28] sm:$0xff] %vm220, %v694
      %758 = vst.msk [vmem:[#allocation2 + $0x30] sm:$0xff] %vm751, %v696
      %759 = vst [vmem:[#allocation2 + $0x38] sm:$0xff] %v721
      %760 = vst.msk [vmem:[#allocation2 + $0x40] sm:$0xff] %vm220, %v698
      %761 = vst.msk [vmem:[#allocation2 + $0x48] sm:$0xff] %vm751, %v700
      %762 = vst [vmem:[#allocation2 + $0x50] sm:$0xff] %v722
      %763 = vst.msk [vmem:[#allocation2 + $0x58] sm:$0xff] %vm220, %v702
      %764 = vst.msk [vmem:[#allocation2 + $0x60] sm:$0xff] %vm751, %v704
      %765 = vst [vmem:[#allocation2 + $0x68] sm:$0xff] %v723
      %766 = vst.msk [vmem:[#allocation2 + $0x70] sm:$0xff] %vm220, %v706
      %767 = vst.msk [vmem:[#allocation2 + $0x78] sm:$0xff] %vm751, %v708
      %768 = vst [vmem:[#allocation2 + $0x80] sm:$0xff] %v724
      %769 = vst.msk [vmem:[#allocation2 + $0x88] sm:$0xff] %vm220, %v710
      %770 = vst.msk [vmem:[#allocation2 + $0x90] sm:$0xff] %vm751, %v712
      %771 = vst [vmem:[#allocation2 + $0x98] sm:$0xff] %v725
      %772 = vst.msk [vmem:[#allocation2 + $0xa0] sm:$0xff] %vm220, %v714
      %773 = vst.msk [vmem:[#allocation2 + $0xa8] sm:$0xff] %vm751, %v716
      %774 = vst [vmem:[#allocation2 + $0xb0] sm:$0xff] %v726
      %775 = vst.msk [vmem:[#allocation2 + $0xb8] sm:$0xff] %vm220, %v718
      %v776 = vld [vmem:[%s2] sm:$0xff]
      %v777 = vld [vmem:[%s2 + $0x8] sm:$0xff]
      %v778 = vld [vmem:[%s2 + $0x10] sm:$0xff]
      %v779 = vld [vmem:[%s2 + $0x18] sm:$0xff]
      %v780 = vld [vmem:[%s2 + $0x20] sm:$0xff]
      %v781 = vld [vmem:[%s2 + $0x28] sm:$0xff]
      %v782 = vld [vmem:[%s2 + $0x30] sm:$0xff]
      %v783 = vld [vmem:[%s2 + $0x38] sm:$0xff]
      %v784 = vld [vmem:[#allocation2] sm:$0xff]
      %v785 = vld [vmem:[#allocation2 + $0x8] sm:$0xff]
      %v786 = vld [vmem:[#allocation2 + $0x18] sm:$0xff]
      %v787 = vld [vmem:[#allocation2 + $0x20] sm:$0xff]
      %v788 = vld [vmem:[#allocation2 + $0x30] sm:$0xff]
      %v789 = vld [vmem:[#allocation2 + $0x38] sm:$0xff]
      %v790 = vld [vmem:[#allocation2 + $0x48] sm:$0xff]
      %v791 = vld [vmem:[#allocation2 + $0x50] sm:$0xff]
      %v792 = vld [vmem:[#allocation2 + $0x60] sm:$0xff]
      %v793 = vld [vmem:[#allocation2 + $0x68] sm:$0xff]
      %v794 = vld [vmem:[#allocation2 + $0x78] sm:$0xff]
      %v795 = vld [vmem:[#allocation2 + $0x80] sm:$0xff]
      %v796 = vld [vmem:[#allocation2 + $0x90] sm:$0xff]
      %v797 = vld [vmem:[#allocation2 + $0x98] sm:$0xff]
      %v798 = vld [vmem:[#allocation2 + $0xa8] sm:$0xff]
      %v799 = vld [vmem:[#allocation2 + $0xb0] sm:$0xff]
      %s800 = scalar_lea.vmem %s2, 64
      %v801 = vld [vmem:[%s800] sm:$0xff]
      %v802 = vld [vmem:[%s800 + $0x8] sm:$0xff]
      %v803 = vld [vmem:[%s800 + $0x10] sm:$0xff]
      %v804 = vld [vmem:[%s800 + $0x18] sm:$0xff]
      %v805 = vld [vmem:[%s800 + $0x20] sm:$0xff]
      %v806 = vld [vmem:[%s800 + $0x28] sm:$0xff]
      %v807 = vld [vmem:[%s800 + $0x30] sm:$0xff]
      %v808 = vld [vmem:[%s800 + $0x38] sm:$0xff]
      %v809 = vld [vmem:[#allocation2 + $0x10] sm:$0xff]
      %v810 = vld [vmem:[#allocation2 + $0x28] sm:$0xff]
      %v811 = vld [vmem:[#allocation2 + $0x40] sm:$0xff]
      %v812 = vld [vmem:[#allocation2 + $0x58] sm:$0xff]
      %v813 = vld [vmem:[#allocation2 + $0x70] sm:$0xff]
      %v814 = vld [vmem:[#allocation2 + $0x88] sm:$0xff]
      %v815 = vld [vmem:[#allocation2 + $0xa0] sm:$0xff]
      %v816 = vld [vmem:[#allocation2 + $0xb8] sm:$0xff]
      %s817 = scalar_lea.vmem %s2, 128
      %v818 = vld [vmem:[%s817] sm:$0xff]
      %v819 = vld [vmem:[%s817 + $0x8] sm:$0xff]
      %v820 = vld [vmem:[%s817 + $0x10] sm:$0xff]
      %v821 = vld [vmem:[%s817 + $0x18] sm:$0xff]
      %v822 = vld [vmem:[%s817 + $0x20] sm:$0xff]
      %v823 = vld [vmem:[%s817 + $0x28] sm:$0xff]
      %v824 = vld [vmem:[%s817 + $0x30] sm:$0xff]
      %v825 = vld [vmem:[%s817 + $0x38] sm:$0xff]
      %s826 = scalar_lea.vmem %s2, 192
      %v827 = vld [vmem:[%s826] sm:$0xff]
      %v828 = vld [vmem:[%s826 + $0x8] sm:$0xff]
      %v829 = vld [vmem:[%s826 + $0x10] sm:$0xff]
      %v830 = vld [vmem:[%s826 + $0x18] sm:$0xff]
      %v831 = vld [vmem:[%s826 + $0x20] sm:$0xff]
      %v832 = vld [vmem:[%s826 + $0x28] sm:$0xff]
      %v833 = vld [vmem:[%s826 + $0x30] sm:$0xff]
      %v834 = vld [vmem:[%s826 + $0x38] sm:$0xff]
      %859 = vrot.lane.b32.xlu0 %v784, 112
      %v860 = vpop.permute.xlu0 %859
      %861 = vrot.lane.b32.xlu0 %v785, 112
      %v862 = vpop.permute.xlu0 %861
      %863 = vrot.lane.b32.xlu0 %v809, 112
      %v864 = vpop.permute.xlu0 %863
      %865 = vrot.lane.b32.xlu0 %v786, 112
      %v866 = vpop.permute.xlu0 %865
      %867 = vrot.lane.b32.xlu0 %v787, 112
      %v868 = vpop.permute.xlu0 %867
      %869 = vrot.lane.b32.xlu0 %v810, 112
      %v870 = vpop.permute.xlu0 %869
      %871 = vrot.lane.b32.xlu0 %v788, 112
      %v872 = vpop.permute.xlu0 %871
      %873 = vrot.lane.b32.xlu0 %v789, 112
      %v874 = vpop.permute.xlu0 %873
      %875 = vrot.lane.b32.xlu0 %v811, 112
      %v876 = vpop.permute.xlu0 %875
      %877 = vrot.lane.b32.xlu0 %v790, 112
      %v878 = vpop.permute.xlu0 %877
      %879 = vrot.lane.b32.xlu0 %v791, 112
      %v880 = vpop.permute.xlu0 %879
      %881 = vrot.lane.b32.xlu0 %v812, 112
      %v882 = vpop.permute.xlu0 %881
      %883 = vrot.lane.b32.xlu0 %v792, 112
      %v884 = vpop.permute.xlu0 %883
      %885 = vrot.lane.b32.xlu0 %v793, 112
      %v886 = vpop.permute.xlu0 %885
      %887 = vrot.lane.b32.xlu0 %v813, 112
      %v888 = vpop.permute.xlu0 %887
      %889 = vrot.lane.b32.xlu0 %v794, 112
      %v890 = vpop.permute.xlu0 %889
      %891 = vrot.lane.b32.xlu0 %v795, 112
      %v892 = vpop.permute.xlu0 %891
      %893 = vrot.lane.b32.xlu0 %v814, 112
      %v894 = vpop.permute.xlu0 %893
      %895 = vrot.lane.b32.xlu0 %v796, 112
      %v896 = vpop.permute.xlu0 %895
      %897 = vrot.lane.b32.xlu0 %v797, 112
      %v898 = vpop.permute.xlu0 %897
      %899 = vrot.lane.b32.xlu0 %v815, 112
      %v900 = vpop.permute.xlu0 %899
      %901 = vrot.lane.b32.xlu0 %v798, 112
      %v902 = vpop.permute.xlu0 %901
      %903 = vrot.lane.b32.xlu0 %v799, 112
      %v904 = vpop.permute.xlu0 %903
      %905 = vrot.lane.b32.xlu0 %v816, 112
      %v906 = vpop.permute.xlu0 %905
      %v907 = vsel %vm384, %v860, %v862
      %v908 = vsel %vm384, %v862, %v864
      %v909 = vsel %vm384, %v866, %v868
      %v910 = vsel %vm384, %v868, %v870
      %v911 = vsel %vm384, %v872, %v874
      %v912 = vsel %vm384, %v874, %v876
      %v913 = vsel %vm384, %v878, %v880
      %v914 = vsel %vm384, %v880, %v882
      %v915 = vsel %vm384, %v884, %v886
      %v916 = vsel %vm384, %v886, %v888
      %v917 = vsel %vm384, %v890, %v892
      %v918 = vsel %vm384, %v892, %v894
      %v919 = vsel %vm384, %v896, %v898
      %v920 = vsel %vm384, %v898, %v900
      %v921 = vsel %vm384, %v902, %v904
      %v922 = vsel %vm384, %v904, %v906
      %vm939 = vcmask 523264
      %v941 = vsel %vm939, %v827, 0
      %v944 = vsel %vm939, %v828, 0
      %v947 = vsel %vm939, %v829, 0
      %v950 = vsel %vm939, %v830, 0
      %v953 = vsel %vm939, %v831, 0
      %v956 = vsel %vm939, %v832, 0
      %v959 = vsel %vm939, %v833, 0
      %v962 = vsel %vm939, %v834, 0
      %964 = vmatprep.subr.mxu0 0.0
      %965 = vmatpush1.msra.mxu0 0.0
      %966 = vmatprep.subr.mxu0 0.0
      %967 = vmatpush1.msra.mxu0 0.0
      %968 = vmatprep.subr.mxu0 0.0
      %969 = vmatpush1.msra.mxu0 0.0
      %970 = vmatprep.subr.mxu0 0.0
      %971 = vmatpush1.msra.mxu0 0.0
      %972 = vmatprep.subr.mxu0 0.0
      %973 = vmatpush1.msra.mxu0 0.0
      %974 = vmatprep.subr.mxu0 0.0
      %975 = vmatpush1.msra.mxu0 0.0
      %976 = vmatprep.subr.mxu0 0.0
      %977 = vmatpush1.msra.mxu0 0.0
      %978 = vmatprep.subr.mxu0 0.0
      %979 = vmatpush1.msra.mxu0 0.0
      %980 = vmatprep.subr.mxu0 %v922
      %981 = vmatpush1.msra.mxu0 %v921
      %982 = vmatprep.subr.mxu0 %v920
      %983 = vmatpush1.msra.mxu0 %v919
      %984 = vmatprep.subr.mxu0 %v918
      %985 = vmatpush1.msra.mxu0 %v917
      %986 = vmatprep.subr.mxu0 %v916
      %987 = vmatpush1.msra.mxu0 %v915
      %988 = vmatprep.subr.mxu0 %v914
      %989 = vmatpush1.msra.mxu0 %v913
      %990 = vmatprep.subr.mxu0 %v912
      %991 = vmatpush1.msra.mxu0 %v911
      %992 = vmatprep.subr.mxu0 %v910
      %993 = vmatpush1.msra.mxu0 %v909
      %994 = vmatprep.subr.mxu0 %v908
      %995 = vmatpush1.msra.mxu0 %v907
      %996 = vmatprep.subr.mxu0 0.0
      %997 = vmatpush2.msra.mxu0 0.0
      %998 = vmatprep.subr.mxu0 0.0
      %999 = vmatpush2.msra.mxu0 0.0
      %1000 = vmatprep.subr.mxu0 0.0
      %1001 = vmatpush2.msra.mxu0 0.0
      %1002 = vmatprep.subr.mxu0 0.0
      %1003 = vmatpush2.msra.mxu0 0.0
      %1004 = vmatprep.subr.mxu0 0.0
      %1005 = vmatpush2.msra.mxu0 0.0
      %1006 = vmatprep.subr.mxu0 0.0
      %1007 = vmatpush2.msra.mxu0 0.0
      %1008 = vmatprep.subr.mxu0 0.0
      %1009 = vmatpush2.msra.mxu0 0.0
      %1010 = vmatprep.subr.mxu0 0.0
      %1011 = vmatpush2.msra.mxu0 0.0
      %1012 = vmatprep.subr.mxu0 0.0
      %1013 = vmatpush2.msra.mxu0 0.0
      %1014 = vmatprep.subr.mxu0 0.0
      %1015 = vmatpush2.msra.mxu0 0.0
      %1016 = vmatprep.subr.mxu0 0.0
      %1017 = vmatpush2.msra.mxu0 0.0
      %1018 = vmatprep.subr.mxu0 0.0
      %1019 = vmatpush2.msra.mxu0 0.0
      %1020 = vmatprep.subr.mxu0 0.0
      %1021 = vmatpush2.msra.mxu0 0.0
      %1022 = vmatprep.subr.mxu0 0.0
      %1023 = vmatpush2.msra.mxu0 0.0
      %1024 = vmatprep.subr.mxu0 0.0
      %1025 = vmatpush2.msra.mxu0 0.0
      %1026 = vmatprep.subr.mxu0 0.0
      %1027 = vmatpush2.msra.mxu0 0.0
      %1028 = vmatprep.mubr.f32.mxu0 0.0
      %1029 = vmatmul.mubr.f32.gmra.mxu0 %v941
      %v1030 = vpop.f32.mrf.mxu0
      %v1031 = vadd.f32 0.0, %v1030
      %v1032 = vpop.f32.mrf.mxu0
      %v1033 = vadd.f32 0.0, %v1032
      %1034 = vmatprep.mubr.f32.mxu0 0.0
      %1035 = vmatmul.mubr.f32.gmra.mxu0 %v944
      %v1036 = vpop.f32.mrf.mxu0
      %v1037 = vadd.f32 0.0, %v1036
      %v1038 = vpop.f32.mrf.mxu0
      %v1039 = vadd.f32 0.0, %v1038
      %1040 = vmatprep.mubr.f32.mxu0 0.0
      %1041 = vmatmul.mubr.f32.gmra.mxu0 %v947
      %v1042 = vpop.f32.mrf.mxu0
      %v1043 = vadd.f32 0.0, %v1042
      %v1044 = vpop.f32.mrf.mxu0
      %v1045 = vadd.f32 0.0, %v1044
      %1046 = vmatprep.mubr.f32.mxu0 0.0
      %1047 = vmatmul.mubr.f32.gmra.mxu0 %v950
      %v1048 = vpop.f32.mrf.mxu0
      %v1049 = vadd.f32 0.0, %v1048
      %v1050 = vpop.f32.mrf.mxu0
      %v1051 = vadd.f32 0.0, %v1050
      %1052 = vmatprep.mubr.f32.mxu0 0.0
      %1053 = vmatmul.mubr.f32.gmra.mxu0 %v953
      %v1054 = vpop.f32.mrf.mxu0
      %v1055 = vadd.f32 0.0, %v1054
      %v1056 = vpop.f32.mrf.mxu0
      %v1057 = vadd.f32 0.0, %v1056
      %1058 = vmatprep.mubr.f32.mxu0 0.0
      %1059 = vmatmul.mubr.f32.gmra.mxu0 %v956
      %v1060 = vpop.f32.mrf.mxu0
      %v1061 = vadd.f32 0.0, %v1060
      %v1062 = vpop.f32.mrf.mxu0
      %v1063 = vadd.f32 0.0, %v1062
      %1064 = vmatprep.mubr.f32.mxu0 0.0
      %1065 = vmatmul.mubr.f32.gmra.mxu0 %v959
      %v1066 = vpop.f32.mrf.mxu0
      %v1067 = vadd.f32 0.0, %v1066
      %v1068 = vpop.f32.mrf.mxu0
      %v1069 = vadd.f32 0.0, %v1068
      %1070 = vmatprep.mubr.f32.mxu0 0.0
      %1071 = vmatmul.mubr.f32.gmra.mxu0 %v962
      %v1072 = vpop.f32.mrf.mxu0
      %v1073 = vadd.f32 0.0, %v1072
      %v1074 = vpop.f32.mrf.mxu0
      %v1075 = vadd.f32 0.0, %v1074
      %1076 = vdwg.mxu0
      %v1078 = vsel %vm939, %v776, 0
      %v1081 = vsel %vm939, %v777, 0
      %v1084 = vsel %vm939, %v778, 0
      %v1087 = vsel %vm939, %v779, 0
      %v1090 = vsel %vm939, %v780, 0
      %v1093 = vsel %vm939, %v781, 0
      %v1096 = vsel %vm939, %v782, 0
      %v1099 = vsel %vm939, %v783, 0
      %1101 = vmatprep.subr.mxu0 0.0
      %1102 = vmatpush1.msra.mxu0 0.0
      %1103 = vmatprep.subr.mxu0 0.0
      %1104 = vmatpush1.msra.mxu0 0.0
      %1105 = vmatprep.subr.mxu0 0.0
      %1106 = vmatpush1.msra.mxu0 0.0
      %1107 = vmatprep.subr.mxu0 0.0
      %1108 = vmatpush1.msra.mxu0 0.0
      %1109 = vmatprep.subr.mxu0 0.0
      %1110 = vmatpush1.msra.mxu0 0.0
      %1111 = vmatprep.subr.mxu0 0.0
      %1112 = vmatpush1.msra.mxu0 0.0
      %1113 = vmatprep.subr.mxu0 0.0
      %1114 = vmatpush1.msra.mxu0 0.0
      %1115 = vmatprep.subr.mxu0 0.0
      %1116 = vmatpush1.msra.mxu0 0.0
      %1117 = vmatprep.subr.mxu0 %v799
      %1118 = vmatpush1.msra.mxu0 %v798
      %1119 = vmatprep.subr.mxu0 %v797
      %1120 = vmatpush1.msra.mxu0 %v796
      %1121 = vmatprep.subr.mxu0 %v795
      %1122 = vmatpush1.msra.mxu0 %v794
      %1123 = vmatprep.subr.mxu0 %v793
      %1124 = vmatpush1.msra.mxu0 %v792
      %1125 = vmatprep.subr.mxu0 %v791
      %1126 = vmatpush1.msra.mxu0 %v790
      %1127 = vmatprep.subr.mxu0 %v789
      %1128 = vmatpush1.msra.mxu0 %v788
      %1129 = vmatprep.subr.mxu0 %v787
      %1130 = vmatpush1.msra.mxu0 %v786
      %1131 = vmatprep.subr.mxu0 %v785
      %1132 = vmatpush1.msra.mxu0 %v784
      %1133 = vmatprep.subr.mxu0 0.0
      %1134 = vmatpush2.msra.mxu0 0.0
      %1135 = vmatprep.subr.mxu0 0.0
      %1136 = vmatpush2.msra.mxu0 0.0
      %1137 = vmatprep.subr.mxu0 0.0
      %1138 = vmatpush2.msra.mxu0 0.0
      %1139 = vmatprep.subr.mxu0 0.0
      %1140 = vmatpush2.msra.mxu0 0.0
      %1141 = vmatprep.subr.mxu0 0.0
      %1142 = vmatpush2.msra.mxu0 0.0
      %1143 = vmatprep.subr.mxu0 0.0
      %1144 = vmatpush2.msra.mxu0 0.0
      %1145 = vmatprep.subr.mxu0 0.0
      %1146 = vmatpush2.msra.mxu0 0.0
      %1147 = vmatprep.subr.mxu0 0.0
      %1148 = vmatpush2.msra.mxu0 0.0
      %1149 = vmatprep.subr.mxu0 0.0
      %1150 = vmatpush2.msra.mxu0 0.0
      %1151 = vmatprep.subr.mxu0 0.0
      %1152 = vmatpush2.msra.mxu0 0.0
      %1153 = vmatprep.subr.mxu0 0.0
      %1154 = vmatpush2.msra.mxu0 0.0
      %1155 = vmatprep.subr.mxu0 0.0
      %1156 = vmatpush2.msra.mxu0 0.0
      %1157 = vmatprep.subr.mxu0 0.0
      %1158 = vmatpush2.msra.mxu0 0.0
      %1159 = vmatprep.subr.mxu0 0.0
      %1160 = vmatpush2.msra.mxu0 0.0
      %1161 = vmatprep.subr.mxu0 0.0
      %1162 = vmatpush2.msra.mxu0 0.0
      %1163 = vmatprep.subr.mxu0 0.0
      %1164 = vmatpush2.msra.mxu0 0.0
      %1165 = vmatprep.mubr.f32.mxu0 0.0
      %1166 = vmatmul.mubr.f32.gmra.mxu0 %v1078
      %v1167 = vpop.f32.mrf.mxu0
      %v1168 = vadd.f32 %v1031, %v1167
      %v1169 = vpop.f32.mrf.mxu0
      %v1170 = vadd.f32 %v1033, %v1169
      %1171 = vmatprep.mubr.f32.mxu0 0.0
      %1172 = vmatmul.mubr.f32.gmra.mxu0 %v1081
      %v1173 = vpop.f32.mrf.mxu0
      %v1174 = vadd.f32 %v1037, %v1173
      %v1175 = vpop.f32.mrf.mxu0
      %v1176 = vadd.f32 %v1039, %v1175
      %1177 = vmatprep.mubr.f32.mxu0 0.0
      %1178 = vmatmul.mubr.f32.gmra.mxu0 %v1084
      %v1179 = vpop.f32.mrf.mxu0
      %v1180 = vadd.f32 %v1043, %v1179
      %v1181 = vpop.f32.mrf.mxu0
      %v1182 = vadd.f32 %v1045, %v1181
      %1183 = vmatprep.mubr.f32.mxu0 0.0
      %1184 = vmatmul.mubr.f32.gmra.mxu0 %v1087
      %v1185 = vpop.f32.mrf.mxu0
      %v1186 = vadd.f32 %v1049, %v1185
      %v1187 = vpop.f32.mrf.mxu0
      %v1188 = vadd.f32 %v1051, %v1187
      %1189 = vmatprep.mubr.f32.mxu0 0.0
      %1190 = vmatmul.mubr.f32.gmra.mxu0 %v1090
      %v1191 = vpop.f32.mrf.mxu0
      %v1192 = vadd.f32 %v1055, %v1191
      %v1193 = vpop.f32.mrf.mxu0
      %v1194 = vadd.f32 %v1057, %v1193
      %1195 = vmatprep.mubr.f32.mxu0 0.0
      %1196 = vmatmul.mubr.f32.gmra.mxu0 %v1093
      %v1197 = vpop.f32.mrf.mxu0
      %v1198 = vadd.f32 %v1061, %v1197
      %v1199 = vpop.f32.mrf.mxu0
      %v1200 = vadd.f32 %v1063, %v1199
      %1201 = vmatprep.mubr.f32.mxu0 0.0
      %1202 = vmatmul.mubr.f32.gmra.mxu0 %v1096
      %v1203 = vpop.f32.mrf.mxu0
      %v1204 = vadd.f32 %v1067, %v1203
      %v1205 = vpop.f32.mrf.mxu0
      %v1206 = vadd.f32 %v1069, %v1205
      %1207 = vmatprep.mubr.f32.mxu0 0.0
      %1208 = vmatmul.mubr.f32.gmra.mxu0 %v1099
      %v1209 = vpop.f32.mrf.mxu0
      %v1210 = vadd.f32 %v1073, %v1209
      %v1211 = vpop.f32.mrf.mxu0
      %v1212 = vadd.f32 %v1075, %v1211
      %1213 = vdwg.mxu0
      %s1214 = scalar_lea.vmem %s2, 256
      %v1215 = vld [vmem:[%s1214] sm:$0xff]
      %v1216 = vld [vmem:[%s1214 + $0x8] sm:$0xff]
      %v1217 = vld [vmem:[%s1214 + $0x10] sm:$0xff]
      %v1218 = vld [vmem:[%s1214 + $0x18] sm:$0xff]
      %v1219 = vld [vmem:[%s1214 + $0x20] sm:$0xff]
      %v1220 = vld [vmem:[%s1214 + $0x28] sm:$0xff]
      %v1221 = vld [vmem:[%s1214 + $0x30] sm:$0xff]
      %v1222 = vld [vmem:[%s1214 + $0x38] sm:$0xff]
      %1223 = vrot.lane.b32.xlu0 %v784, 111
      %v1224 = vpop.permute.xlu0 %1223
      %1225 = vrot.lane.b32.xlu0 %v785, 111
      %v1226 = vpop.permute.xlu0 %1225
      %1227 = vrot.lane.b32.xlu0 %v809, 111
      %v1228 = vpop.permute.xlu0 %1227
      %1229 = vrot.lane.b32.xlu0 %v786, 111
      %v1230 = vpop.permute.xlu0 %1229
      %1231 = vrot.lane.b32.xlu0 %v787, 111
      %v1232 = vpop.permute.xlu0 %1231
      %1233 = vrot.lane.b32.xlu0 %v810, 111
      %v1234 = vpop.permute.xlu0 %1233
      %1235 = vrot.lane.b32.xlu0 %v788, 111
      %v1236 = vpop.permute.xlu0 %1235
      %1237 = vrot.lane.b32.xlu0 %v789, 111
      %v1238 = vpop.permute.xlu0 %1237
      %1239 = vrot.lane.b32.xlu0 %v811, 111
      %v1240 = vpop.permute.xlu0 %1239
      %1241 = vrot.lane.b32.xlu0 %v790, 111
      %v1242 = vpop.permute.xlu0 %1241
      %1243 = vrot.lane.b32.xlu0 %v791, 111
      %v1244 = vpop.permute.xlu0 %1243
      %1245 = vrot.lane.b32.xlu0 %v812, 111
      %v1246 = vpop.permute.xlu0 %1245
      %1247 = vrot.lane.b32.xlu0 %v792, 111
      %v1248 = vpop.permute.xlu0 %1247
      %1249 = vrot.lane.b32.xlu0 %v793, 111
      %v1250 = vpop.permute.xlu0 %1249
      %1251 = vrot.lane.b32.xlu0 %v813, 111
      %v1252 = vpop.permute.xlu0 %1251
      %1253 = vrot.lane.b32.xlu0 %v794, 111
      %v1254 = vpop.permute.xlu0 %1253
      %1255 = vrot.lane.b32.xlu0 %v795, 111
      %v1256 = vpop.permute.xlu0 %1255
      %1257 = vrot.lane.b32.xlu0 %v814, 111
      %v1258 = vpop.permute.xlu0 %1257
      %1259 = vrot.lane.b32.xlu0 %v796, 111
      %v1260 = vpop.permute.xlu0 %1259
      %1261 = vrot.lane.b32.xlu0 %v797, 111
      %v1262 = vpop.permute.xlu0 %1261
      %1263 = vrot.lane.b32.xlu0 %v815, 111
      %v1264 = vpop.permute.xlu0 %1263
      %1265 = vrot.lane.b32.xlu0 %v798, 111
      %v1266 = vpop.permute.xlu0 %1265
      %1267 = vrot.lane.b32.xlu0 %v799, 111
      %v1268 = vpop.permute.xlu0 %1267
      %1269 = vrot.lane.b32.xlu0 %v816, 111
      %v1270 = vpop.permute.xlu0 %1269
      %v1271 = vsel %vm395, %v1224, %v1226
      %v1272 = vsel %vm395, %v1226, %v1228
      %v1273 = vsel %vm395, %v1230, %v1232
      %v1274 = vsel %vm395, %v1232, %v1234
      %v1275 = vsel %vm395, %v1236, %v1238
      %v1276 = vsel %vm395, %v1238, %v1240
      %v1277 = vsel %vm395, %v1242, %v1244
      %v1278 = vsel %vm395, %v1244, %v1246
      %v1279 = vsel %vm395, %v1248, %v1250
      %v1280 = vsel %vm395, %v1250, %v1252
      %v1281 = vsel %vm395, %v1254, %v1256
      %v1282 = vsel %vm395, %v1256, %v1258
      %v1283 = vsel %vm395, %v1260, %v1262
      %v1284 = vsel %vm395, %v1262, %v1264
      %v1285 = vsel %vm395, %v1266, %v1268
      %v1286 = vsel %vm395, %v1268, %v1270
      %v1304 = vsel %vm939, %v1215, 0
      %v1307 = vsel %vm939, %v1216, 0
      %v1310 = vsel %vm939, %v1217, 0
      %v1313 = vsel %vm939, %v1218, 0
      %v1316 = vsel %vm939, %v1219, 0
      %v1319 = vsel %vm939, %v1220, 0
      %v1322 = vsel %vm939, %v1221, 0
      %v1325 = vsel %vm939, %v1222, 0
      %1327 = vmatprep.subr.mxu0 0.0
      %1328 = vmatpush1.msra.mxu0 0.0
      %1329 = vmatprep.subr.mxu0 0.0
      %1330 = vmatpush1.msra.mxu0 0.0
      %1331 = vmatprep.subr.mxu0 0.0
      %1332 = vmatpush1.msra.mxu0 0.0
      %1333 = vmatprep.subr.mxu0 0.0
      %1334 = vmatpush1.msra.mxu0 0.0
      %1335 = vmatprep.subr.mxu0 0.0
      %1336 = vmatpush1.msra.mxu0 0.0
      %1337 = vmatprep.subr.mxu0 0.0
      %1338 = vmatpush1.msra.mxu0 0.0
      %1339 = vmatprep.subr.mxu0 0.0
      %1340 = vmatpush1.msra.mxu0 0.0
      %1341 = vmatprep.subr.mxu0 0.0
      %1342 = vmatpush1.msra.mxu0 0.0
      %1343 = vmatprep.subr.mxu0 %v1286
      %1344 = vmatpush1.msra.mxu0 %v1285
      %1345 = vmatprep.subr.mxu0 %v1284
      %1346 = vmatpush1.msra.mxu0 %v1283
      %1347 = vmatprep.subr.mxu0 %v1282
      %1348 = vmatpush1.msra.mxu0 %v1281
      %1349 = vmatprep.subr.mxu0 %v1280
      %1350 = vmatpush1.msra.mxu0 %v1279
      %1351 = vmatprep.subr.mxu0 %v1278
      %1352 = vmatpush1.msra.mxu0 %v1277
      %1353 = vmatprep.subr.mxu0 %v1276
      %1354 = vmatpush1.msra.mxu0 %v1275
      %1355 = vmatprep.subr.mxu0 %v1274
      %1356 = vmatpush1.msra.mxu0 %v1273
      %1357 = vmatprep.subr.mxu0 %v1272
      %1358 = vmatpush1.msra.mxu0 %v1271
      %1359 = vmatprep.subr.mxu0 0.0
      %1360 = vmatpush2.msra.mxu0 0.0
      %1361 = vmatprep.subr.mxu0 0.0
      %1362 = vmatpush2.msra.mxu0 0.0
      %1363 = vmatprep.subr.mxu0 0.0
      %1364 = vmatpush2.msra.mxu0 0.0
      %1365 = vmatprep.subr.mxu0 0.0
      %1366 = vmatpush2.msra.mxu0 0.0
      %1367 = vmatprep.subr.mxu0 0.0
      %1368 = vmatpush2.msra.mxu0 0.0
      %1369 = vmatprep.subr.mxu0 0.0
      %1370 = vmatpush2.msra.mxu0 0.0
      %1371 = vmatprep.subr.mxu0 0.0
      %1372 = vmatpush2.msra.mxu0 0.0
      %1373 = vmatprep.subr.mxu0 0.0
      %1374 = vmatpush2.msra.mxu0 0.0
      %1375 = vmatprep.subr.mxu0 0.0
      %1376 = vmatpush2.msra.mxu0 0.0
      %1377 = vmatprep.subr.mxu0 0.0
      %1378 = vmatpush2.msra.mxu0 0.0
      %1379 = vmatprep.subr.mxu0 0.0
      %1380 = vmatpush2.msra.mxu0 0.0
      %1381 = vmatprep.subr.mxu0 0.0
      %1382 = vmatpush2.msra.mxu0 0.0
      %1383 = vmatprep.subr.mxu0 0.0
      %1384 = vmatpush2.msra.mxu0 0.0
      %1385 = vmatprep.subr.mxu0 0.0
      %1386 = vmatpush2.msra.mxu0 0.0
      %1387 = vmatprep.subr.mxu0 0.0
      %1388 = vmatpush2.msra.mxu0 0.0
      %1389 = vmatprep.subr.mxu0 0.0
      %1390 = vmatpush2.msra.mxu0 0.0
      %1391 = vmatprep.mubr.f32.mxu0 0.0
      %1392 = vmatmul.mubr.f32.gmra.mxu0 %v1304
      %v1393 = vpop.f32.mrf.mxu0
      %v1394 = vadd.f32 0.0, %v1393
      %v1395 = vpop.f32.mrf.mxu0
      %v1396 = vadd.f32 0.0, %v1395
      %1397 = vmatprep.mubr.f32.mxu0 0.0
      %1398 = vmatmul.mubr.f32.gmra.mxu0 %v1307
      %v1399 = vpop.f32.mrf.mxu0
      %v1400 = vadd.f32 0.0, %v1399
      %v1401 = vpop.f32.mrf.mxu0
      %v1402 = vadd.f32 0.0, %v1401
      %1403 = vmatprep.mubr.f32.mxu0 0.0
      %1404 = vmatmul.mubr.f32.gmra.mxu0 %v1310
      %v1405 = vpop.f32.mrf.mxu0
      %v1406 = vadd.f32 0.0, %v1405
      %v1407 = vpop.f32.mrf.mxu0
      %v1408 = vadd.f32 0.0, %v1407
      %1409 = vmatprep.mubr.f32.mxu0 0.0
      %1410 = vmatmul.mubr.f32.gmra.mxu0 %v1313
      %v1411 = vpop.f32.mrf.mxu0
      %v1412 = vadd.f32 0.0, %v1411
      %v1413 = vpop.f32.mrf.mxu0
      %v1414 = vadd.f32 0.0, %v1413
      %1415 = vmatprep.mubr.f32.mxu0 0.0
      %1416 = vmatmul.mubr.f32.gmra.mxu0 %v1316
      %v1417 = vpop.f32.mrf.mxu0
      %v1418 = vadd.f32 0.0, %v1417
      %v1419 = vpop.f32.mrf.mxu0
      %v1420 = vadd.f32 0.0, %v1419
      %1421 = vmatprep.mubr.f32.mxu0 0.0
      %1422 = vmatmul.mubr.f32.gmra.mxu0 %v1319
      %v1423 = vpop.f32.mrf.mxu0
      %v1424 = vadd.f32 0.0, %v1423
      %v1425 = vpop.f32.mrf.mxu0
      %v1426 = vadd.f32 0.0, %v1425
      %1427 = vmatprep.mubr.f32.mxu0 0.0
      %1428 = vmatmul.mubr.f32.gmra.mxu0 %v1322
      %v1429 = vpop.f32.mrf.mxu0
      %v1430 = vadd.f32 0.0, %v1429
      %v1431 = vpop.f32.mrf.mxu0
      %v1432 = vadd.f32 0.0, %v1431
      %1433 = vmatprep.mubr.f32.mxu0 0.0
      %1434 = vmatmul.mubr.f32.gmra.mxu0 %v1325
      %v1435 = vpop.f32.mrf.mxu0
      %v1436 = vadd.f32 0.0, %v1435
      %v1437 = vpop.f32.mrf.mxu0
      %v1438 = vadd.f32 0.0, %v1437
      %1439 = vdwg.mxu0
      %1440 = vrot.lane.b32.xlu0 %v784, 127
      %v1441 = vpop.permute.xlu0 %1440
      %1442 = vrot.lane.b32.xlu0 %v785, 127
      %v1443 = vpop.permute.xlu0 %1442
      %1444 = vrot.lane.b32.xlu0 %v809, 127
      %v1445 = vpop.permute.xlu0 %1444
      %1446 = vrot.lane.b32.xlu0 %v786, 127
      %v1447 = vpop.permute.xlu0 %1446
      %1448 = vrot.lane.b32.xlu0 %v787, 127
      %v1449 = vpop.permute.xlu0 %1448
      %1450 = vrot.lane.b32.xlu0 %v810, 127
      %v1451 = vpop.permute.xlu0 %1450
      %1452 = vrot.lane.b32.xlu0 %v788, 127
      %v1453 = vpop.permute.xlu0 %1452
      %1454 = vrot.lane.b32.xlu0 %v789, 127
      %v1455 = vpop.permute.xlu0 %1454
      %1456 = vrot.lane.b32.xlu0 %v811, 127
      %v1457 = vpop.permute.xlu0 %1456
      %1458 = vrot.lane.b32.xlu0 %v790, 127
      %v1459 = vpop.permute.xlu0 %1458
      %1460 = vrot.lane.b32.xlu0 %v791, 127
      %v1461 = vpop.permute.xlu0 %1460
      %1462 = vrot.lane.b32.xlu0 %v812, 127
      %v1463 = vpop.permute.xlu0 %1462
      %1464 = vrot.lane.b32.xlu0 %v792, 127
      %v1465 = vpop.permute.xlu0 %1464
      %1466 = vrot.lane.b32.xlu0 %v793, 127
      %v1467 = vpop.permute.xlu0 %1466
      %1468 = vrot.lane.b32.xlu0 %v813, 127
      %v1469 = vpop.permute.xlu0 %1468
      %1470 = vrot.lane.b32.xlu0 %v794, 127
      %v1471 = vpop.permute.xlu0 %1470
      %1472 = vrot.lane.b32.xlu0 %v795, 127
      %v1473 = vpop.permute.xlu0 %1472
      %1474 = vrot.lane.b32.xlu0 %v814, 127
      %v1475 = vpop.permute.xlu0 %1474
      %1476 = vrot.lane.b32.xlu0 %v796, 127
      %v1477 = vpop.permute.xlu0 %1476
      %1478 = vrot.lane.b32.xlu0 %v797, 127
      %v1479 = vpop.permute.xlu0 %1478
      %1480 = vrot.lane.b32.xlu0 %v815, 127
      %v1481 = vpop.permute.xlu0 %1480
      %1482 = vrot.lane.b32.xlu0 %v798, 127
      %v1483 = vpop.permute.xlu0 %1482
      %1484 = vrot.lane.b32.xlu0 %v799, 127
      %v1485 = vpop.permute.xlu0 %1484
      %1486 = vrot.lane.b32.xlu0 %v816, 127
      %v1487 = vpop.permute.xlu0 %1486
      %v1488 = vsel %vm331, %v1441, %v1443
      %v1489 = vsel %vm331, %v1443, %v1445
      %v1490 = vsel %vm331, %v1447, %v1449
      %v1491 = vsel %vm331, %v1449, %v1451
      %v1492 = vsel %vm331, %v1453, %v1455
      %v1493 = vsel %vm331, %v1455, %v1457
      %v1494 = vsel %vm331, %v1459, %v1461
      %v1495 = vsel %vm331, %v1461, %v1463
      %v1496 = vsel %vm331, %v1465, %v1467
      %v1497 = vsel %vm331, %v1467, %v1469
      %v1498 = vsel %vm331, %v1471, %v1473
      %v1499 = vsel %vm331, %v1473, %v1475
      %v1500 = vsel %vm331, %v1477, %v1479
      %v1501 = vsel %vm331, %v1479, %v1481
      %v1502 = vsel %vm331, %v1483, %v1485
      %v1503 = vsel %vm331, %v1485, %v1487
      %v1521 = vsel %vm939, %v801, 0
      %v1524 = vsel %vm939, %v802, 0
      %v1527 = vsel %vm939, %v803, 0
      %v1530 = vsel %vm939, %v804, 0
      %v1533 = vsel %vm939, %v805, 0
      %v1536 = vsel %vm939, %v806, 0
      %v1539 = vsel %vm939, %v807, 0
      %v1542 = vsel %vm939, %v808, 0
      %1544 = vmatprep.subr.mxu0 0.0
      %1545 = vmatpush1.msra.mxu0 0.0
      %1546 = vmatprep.subr.mxu0 0.0
      %1547 = vmatpush1.msra.mxu0 0.0
      %1548 = vmatprep.subr.mxu0 0.0
      %1549 = vmatpush1.msra.mxu0 0.0
      %1550 = vmatprep.subr.mxu0 0.0
      %1551 = vmatpush1.msra.mxu0 0.0
      %1552 = vmatprep.subr.mxu0 0.0
      %1553 = vmatpush1.msra.mxu0 0.0
      %1554 = vmatprep.subr.mxu0 0.0
      %1555 = vmatpush1.msra.mxu0 0.0
      %1556 = vmatprep.subr.mxu0 0.0
      %1557 = vmatpush1.msra.mxu0 0.0
      %1558 = vmatprep.subr.mxu0 0.0
      %1559 = vmatpush1.msra.mxu0 0.0
      %1560 = vmatprep.subr.mxu0 %v1503
      %1561 = vmatpush1.msra.mxu0 %v1502
      %1562 = vmatprep.subr.mxu0 %v1501
      %1563 = vmatpush1.msra.mxu0 %v1500
      %1564 = vmatprep.subr.mxu0 %v1499
      %1565 = vmatpush1.msra.mxu0 %v1498
      %1566 = vmatprep.subr.mxu0 %v1497
      %1567 = vmatpush1.msra.mxu0 %v1496
      %1568 = vmatprep.subr.mxu0 %v1495
      %1569 = vmatpush1.msra.mxu0 %v1494
      %1570 = vmatprep.subr.mxu0 %v1493
      %1571 = vmatpush1.msra.mxu0 %v1492
      %1572 = vmatprep.subr.mxu0 %v1491
      %1573 = vmatpush1.msra.mxu0 %v1490
      %1574 = vmatprep.subr.mxu0 %v1489
      %1575 = vmatpush1.msra.mxu0 %v1488
      %1576 = vmatprep.subr.mxu0 0.0
      %1577 = vmatpush2.msra.mxu0 0.0
      %1578 = vmatprep.subr.mxu0 0.0
      %1579 = vmatpush2.msra.mxu0 0.0
      %1580 = vmatprep.subr.mxu0 0.0
      %1581 = vmatpush2.msra.mxu0 0.0
      %1582 = vmatprep.subr.mxu0 0.0
      %1583 = vmatpush2.msra.mxu0 0.0
      %1584 = vmatprep.subr.mxu0 0.0
      %1585 = vmatpush2.msra.mxu0 0.0
      %1586 = vmatprep.subr.mxu0 0.0
      %1587 = vmatpush2.msra.mxu0 0.0
      %1588 = vmatprep.subr.mxu0 0.0
      %1589 = vmatpush2.msra.mxu0 0.0
      %1590 = vmatprep.subr.mxu0 0.0
      %1591 = vmatpush2.msra.mxu0 0.0
      %1592 = vmatprep.subr.mxu0 0.0
      %1593 = vmatpush2.msra.mxu0 0.0
      %1594 = vmatprep.subr.mxu0 0.0
      %1595 = vmatpush2.msra.mxu0 0.0
      %1596 = vmatprep.subr.mxu0 0.0
      %1597 = vmatpush2.msra.mxu0 0.0
      %1598 = vmatprep.subr.mxu0 0.0
      %1599 = vmatpush2.msra.mxu0 0.0
      %1600 = vmatprep.subr.mxu0 0.0
      %1601 = vmatpush2.msra.mxu0 0.0
      %1602 = vmatprep.subr.mxu0 0.0
      %1603 = vmatpush2.msra.mxu0 0.0
      %1604 = vmatprep.subr.mxu0 0.0
      %1605 = vmatpush2.msra.mxu0 0.0
      %1606 = vmatprep.subr.mxu0 0.0
      %1607 = vmatpush2.msra.mxu0 0.0
      %1608 = vmatprep.mubr.f32.mxu0 0.0
      %1609 = vmatmul.mubr.f32.gmra.mxu0 %v1521
      %v1610 = vpop.f32.mrf.mxu0
      %v1611 = vadd.f32 %v1394, %v1610
      %v1612 = vpop.f32.mrf.mxu0
      %v1613 = vadd.f32 %v1396, %v1612
      %1614 = vmatprep.mubr.f32.mxu0 0.0
      %1615 = vmatmul.mubr.f32.gmra.mxu0 %v1524
      %v1616 = vpop.f32.mrf.mxu0
      %v1617 = vadd.f32 %v1400, %v1616
      %v1618 = vpop.f32.mrf.mxu0
      %v1619 = vadd.f32 %v1402, %v1618
      %1620 = vmatprep.mubr.f32.mxu0 0.0
      %1621 = vmatmul.mubr.f32.gmra.mxu0 %v1527
      %v1622 = vpop.f32.mrf.mxu0
      %v1623 = vadd.f32 %v1406, %v1622
      %v1624 = vpop.f32.mrf.mxu0
      %v1625 = vadd.f32 %v1408, %v1624
      %1626 = vmatprep.mubr.f32.mxu0 0.0
      %1627 = vmatmul.mubr.f32.gmra.mxu0 %v1530
      %v1628 = vpop.f32.mrf.mxu0
      %v1629 = vadd.f32 %v1412, %v1628
      %v1630 = vpop.f32.mrf.mxu0
      %v1631 = vadd.f32 %v1414, %v1630
      %1632 = vmatprep.mubr.f32.mxu0 0.0
      %1633 = vmatmul.mubr.f32.gmra.mxu0 %v1533
      %v1634 = vpop.f32.mrf.mxu0
      %v1635 = vadd.f32 %v1418, %v1634
      %v1636 = vpop.f32.mrf.mxu0
      %v1637 = vadd.f32 %v1420, %v1636
      %1638 = vmatprep.mubr.f32.mxu0 0.0
      %1639 = vmatmul.mubr.f32.gmra.mxu0 %v1536
      %v1640 = vpop.f32.mrf.mxu0
      %v1641 = vadd.f32 %v1424, %v1640
      %v1642 = vpop.f32.mrf.mxu0
      %v1643 = vadd.f32 %v1426, %v1642
      %1644 = vmatprep.mubr.f32.mxu0 0.0
      %1645 = vmatmul.mubr.f32.gmra.mxu0 %v1539
      %v1646 = vpop.f32.mrf.mxu0
      %v1647 = vadd.f32 %v1430, %v1646
      %v1648 = vpop.f32.mrf.mxu0
      %v1649 = vadd.f32 %v1432, %v1648
      %1650 = vmatprep.mubr.f32.mxu0 0.0
      %1651 = vmatmul.mubr.f32.gmra.mxu0 %v1542
      %v1652 = vpop.f32.mrf.mxu0
      %v1653 = vadd.f32 %v1436, %v1652
      %v1654 = vpop.f32.mrf.mxu0
      %v1655 = vadd.f32 %v1438, %v1654
      %1656 = vdwg.mxu0
      %s1657 = scalar_lea.vmem %s2, 320
      %v1658 = vld [vmem:[%s1657] sm:$0xff]
      %v1659 = vld [vmem:[%s1657 + $0x8] sm:$0xff]
      %v1660 = vld [vmem:[%s1657 + $0x10] sm:$0xff]
      %v1661 = vld [vmem:[%s1657 + $0x18] sm:$0xff]
      %v1662 = vld [vmem:[%s1657 + $0x20] sm:$0xff]
      %v1663 = vld [vmem:[%s1657 + $0x28] sm:$0xff]
      %v1664 = vld [vmem:[%s1657 + $0x30] sm:$0xff]
      %v1665 = vld [vmem:[%s1657 + $0x38] sm:$0xff]
      %1666 = vrot.lane.b32.xlu0 %v784, 110
      %v1667 = vpop.permute.xlu0 %1666
      %1668 = vrot.lane.b32.xlu0 %v785, 110
      %v1669 = vpop.permute.xlu0 %1668
      %1670 = vrot.lane.b32.xlu0 %v809, 110
      %v1671 = vpop.permute.xlu0 %1670
      %1672 = vrot.lane.b32.xlu0 %v786, 110
      %v1673 = vpop.permute.xlu0 %1672
      %1674 = vrot.lane.b32.xlu0 %v787, 110
      %v1675 = vpop.permute.xlu0 %1674
      %1676 = vrot.lane.b32.xlu0 %v810, 110
      %v1677 = vpop.permute.xlu0 %1676
      %1678 = vrot.lane.b32.xlu0 %v788, 110
      %v1679 = vpop.permute.xlu0 %1678
      %1680 = vrot.lane.b32.xlu0 %v789, 110
      %v1681 = vpop.permute.xlu0 %1680
      %1682 = vrot.lane.b32.xlu0 %v811, 110
      %v1683 = vpop.permute.xlu0 %1682
      %1684 = vrot.lane.b32.xlu0 %v790, 110
      %v1685 = vpop.permute.xlu0 %1684
      %1686 = vrot.lane.b32.xlu0 %v791, 110
      %v1687 = vpop.permute.xlu0 %1686
      %1688 = vrot.lane.b32.xlu0 %v812, 110
      %v1689 = vpop.permute.xlu0 %1688
      %1690 = vrot.lane.b32.xlu0 %v792, 110
      %v1691 = vpop.permute.xlu0 %1690
      %1692 = vrot.lane.b32.xlu0 %v793, 110
      %v1693 = vpop.permute.xlu0 %1692
      %1694 = vrot.lane.b32.xlu0 %v813, 110
      %v1695 = vpop.permute.xlu0 %1694
      %1696 = vrot.lane.b32.xlu0 %v794, 110
      %v1697 = vpop.permute.xlu0 %1696
      %1698 = vrot.lane.b32.xlu0 %v795, 110
      %v1699 = vpop.permute.xlu0 %1698
      %1700 = vrot.lane.b32.xlu0 %v814, 110
      %v1701 = vpop.permute.xlu0 %1700
      %1702 = vrot.lane.b32.xlu0 %v796, 110
      %v1703 = vpop.permute.xlu0 %1702
      %1704 = vrot.lane.b32.xlu0 %v797, 110
      %v1705 = vpop.permute.xlu0 %1704
      %1706 = vrot.lane.b32.xlu0 %v815, 110
      %v1707 = vpop.permute.xlu0 %1706
      %1708 = vrot.lane.b32.xlu0 %v798, 110
      %v1709 = vpop.permute.xlu0 %1708
      %1710 = vrot.lane.b32.xlu0 %v799, 110
      %v1711 = vpop.permute.xlu0 %1710
      %1712 = vrot.lane.b32.xlu0 %v816, 110
      %v1713 = vpop.permute.xlu0 %1712
      %v1714 = vsel %vm413, %v1667, %v1669
      %v1715 = vsel %vm413, %v1669, %v1671
      %v1716 = vsel %vm413, %v1673, %v1675
      %v1717 = vsel %vm413, %v1675, %v1677
      %v1718 = vsel %vm413, %v1679, %v1681
      %v1719 = vsel %vm413, %v1681, %v1683
      %v1720 = vsel %vm413, %v1685, %v1687
      %v1721 = vsel %vm413, %v1687, %v1689
      %v1722 = vsel %vm413, %v1691, %v1693
      %v1723 = vsel %vm413, %v1693, %v1695
      %v1724 = vsel %vm413, %v1697, %v1699
      %v1725 = vsel %vm413, %v1699, %v1701
      %v1726 = vsel %vm413, %v1703, %v1705
      %v1727 = vsel %vm413, %v1705, %v1707
      %v1728 = vsel %vm413, %v1709, %v1711
      %v1729 = vsel %vm413, %v1711, %v1713
      %v1747 = vsel %vm939, %v1658, 0
      %v1750 = vsel %vm939, %v1659, 0
      %v1753 = vsel %vm939, %v1660, 0
      %v1756 = vsel %vm939, %v1661, 0
      %v1759 = vsel %vm939, %v1662, 0
      %v1762 = vsel %vm939, %v1663, 0
      %v1765 = vsel %vm939, %v1664, 0
      %v1768 = vsel %vm939, %v1665, 0
      %1770 = vmatprep.subr.mxu0 0.0
      %1771 = vmatpush1.msra.mxu0 0.0
      %1772 = vmatprep.subr.mxu0 0.0
      %1773 = vmatpush1.msra.mxu0 0.0
      %1774 = vmatprep.subr.mxu0 0.0
      %1775 = vmatpush1.msra.mxu0 0.0
      %1776 = vmatprep.subr.mxu0 0.0
      %1777 = vmatpush1.msra.mxu0 0.0
      %1778 = vmatprep.subr.mxu0 0.0
      %1779 = vmatpush1.msra.mxu0 0.0
      %1780 = vmatprep.subr.mxu0 0.0
      %1781 = vmatpush1.msra.mxu0 0.0
      %1782 = vmatprep.subr.mxu0 0.0
      %1783 = vmatpush1.msra.mxu0 0.0
      %1784 = vmatprep.subr.mxu0 0.0
      %1785 = vmatpush1.msra.mxu0 0.0
      %1786 = vmatprep.subr.mxu0 %v1729
      %1787 = vmatpush1.msra.mxu0 %v1728
      %1788 = vmatprep.subr.mxu0 %v1727
      %1789 = vmatpush1.msra.mxu0 %v1726
      %1790 = vmatprep.subr.mxu0 %v1725
      %1791 = vmatpush1.msra.mxu0 %v1724
      %1792 = vmatprep.subr.mxu0 %v1723
      %1793 = vmatpush1.msra.mxu0 %v1722
      %1794 = vmatprep.subr.mxu0 %v1721
      %1795 = vmatpush1.msra.mxu0 %v1720
      %1796 = vmatprep.subr.mxu0 %v1719
      %1797 = vmatpush1.msra.mxu0 %v1718
      %1798 = vmatprep.subr.mxu0 %v1717
      %1799 = vmatpush1.msra.mxu0 %v1716
      %1800 = vmatprep.subr.mxu0 %v1715
      %1801 = vmatpush1.msra.mxu0 %v1714
      %1802 = vmatprep.subr.mxu0 0.0
      %1803 = vmatpush2.msra.mxu0 0.0
      %1804 = vmatprep.subr.mxu0 0.0
      %1805 = vmatpush2.msra.mxu0 0.0
      %1806 = vmatprep.subr.mxu0 0.0
      %1807 = vmatpush2.msra.mxu0 0.0
      %1808 = vmatprep.subr.mxu0 0.0
      %1809 = vmatpush2.msra.mxu0 0.0
      %1810 = vmatprep.subr.mxu0 0.0
      %1811 = vmatpush2.msra.mxu0 0.0
      %1812 = vmatprep.subr.mxu0 0.0
      %1813 = vmatpush2.msra.mxu0 0.0
      %1814 = vmatprep.subr.mxu0 0.0
      %1815 = vmatpush2.msra.mxu0 0.0
      %1816 = vmatprep.subr.mxu0 0.0
      %1817 = vmatpush2.msra.mxu0 0.0
      %1818 = vmatprep.subr.mxu0 0.0
      %1819 = vmatpush2.msra.mxu0 0.0
      %1820 = vmatprep.subr.mxu0 0.0
      %1821 = vmatpush2.msra.mxu0 0.0
      %1822 = vmatprep.subr.mxu0 0.0
      %1823 = vmatpush2.msra.mxu0 0.0
      %1824 = vmatprep.subr.mxu0 0.0
      %1825 = vmatpush2.msra.mxu0 0.0
      %1826 = vmatprep.subr.mxu0 0.0
      %1827 = vmatpush2.msra.mxu0 0.0
      %1828 = vmatprep.subr.mxu0 0.0
      %1829 = vmatpush2.msra.mxu0 0.0
      %1830 = vmatprep.subr.mxu0 0.0
      %1831 = vmatpush2.msra.mxu0 0.0
      %1832 = vmatprep.subr.mxu0 0.0
      %1833 = vmatpush2.msra.mxu0 0.0
      %1834 = vmatprep.mubr.f32.mxu0 0.0
      %1835 = vmatmul.mubr.f32.gmra.mxu0 %v1747
      %v1836 = vpop.f32.mrf.mxu0
      %v1837 = vadd.f32 0.0, %v1836
      %v1838 = vpop.f32.mrf.mxu0
      %v1839 = vadd.f32 0.0, %v1838
      %1840 = vmatprep.mubr.f32.mxu0 0.0
      %1841 = vmatmul.mubr.f32.gmra.mxu0 %v1750
      %v1842 = vpop.f32.mrf.mxu0
      %v1843 = vadd.f32 0.0, %v1842
      %v1844 = vpop.f32.mrf.mxu0
      %v1845 = vadd.f32 0.0, %v1844
      %1846 = vmatprep.mubr.f32.mxu0 0.0
      %1847 = vmatmul.mubr.f32.gmra.mxu0 %v1753
      %v1848 = vpop.f32.mrf.mxu0
      %v1849 = vadd.f32 0.0, %v1848
      %v1850 = vpop.f32.mrf.mxu0
      %v1851 = vadd.f32 0.0, %v1850
      %1852 = vmatprep.mubr.f32.mxu0 0.0
      %1853 = vmatmul.mubr.f32.gmra.mxu0 %v1756
      %v1854 = vpop.f32.mrf.mxu0
      %v1855 = vadd.f32 0.0, %v1854
      %v1856 = vpop.f32.mrf.mxu0
      %v1857 = vadd.f32 0.0, %v1856
      %1858 = vmatprep.mubr.f32.mxu0 0.0
      %1859 = vmatmul.mubr.f32.gmra.mxu0 %v1759
      %v1860 = vpop.f32.mrf.mxu0
      %v1861 = vadd.f32 0.0, %v1860
      %v1862 = vpop.f32.mrf.mxu0
      %v1863 = vadd.f32 0.0, %v1862
      %1864 = vmatprep.mubr.f32.mxu0 0.0
      %1865 = vmatmul.mubr.f32.gmra.mxu0 %v1762
      %v1866 = vpop.f32.mrf.mxu0
      %v1867 = vadd.f32 0.0, %v1866
      %v1868 = vpop.f32.mrf.mxu0
      %v1869 = vadd.f32 0.0, %v1868
      %1870 = vmatprep.mubr.f32.mxu0 0.0
      %1871 = vmatmul.mubr.f32.gmra.mxu0 %v1765
      %v1872 = vpop.f32.mrf.mxu0
      %v1873 = vadd.f32 0.0, %v1872
      %v1874 = vpop.f32.mrf.mxu0
      %v1875 = vadd.f32 0.0, %v1874
      %1876 = vmatprep.mubr.f32.mxu0 0.0
      %1877 = vmatmul.mubr.f32.gmra.mxu0 %v1768
      %v1878 = vpop.f32.mrf.mxu0
      %v1879 = vadd.f32 0.0, %v1878
      %v1880 = vpop.f32.mrf.mxu0
      %v1881 = vadd.f32 0.0, %v1880
      %1882 = vdwg.mxu0
      %1883 = vrot.lane.b32.xlu0 %v784, 126
      %v1884 = vpop.permute.xlu0 %1883
      %1885 = vrot.lane.b32.xlu0 %v785, 126
      %v1886 = vpop.permute.xlu0 %1885
      %1887 = vrot.lane.b32.xlu0 %v809, 126
      %v1888 = vpop.permute.xlu0 %1887
      %1889 = vrot.lane.b32.xlu0 %v786, 126
      %v1890 = vpop.permute.xlu0 %1889
      %1891 = vrot.lane.b32.xlu0 %v787, 126
      %v1892 = vpop.permute.xlu0 %1891
      %1893 = vrot.lane.b32.xlu0 %v810, 126
      %v1894 = vpop.permute.xlu0 %1893
      %1895 = vrot.lane.b32.xlu0 %v788, 126
      %v1896 = vpop.permute.xlu0 %1895
      %1897 = vrot.lane.b32.xlu0 %v789, 126
      %v1898 = vpop.permute.xlu0 %1897
      %1899 = vrot.lane.b32.xlu0 %v811, 126
      %v1900 = vpop.permute.xlu0 %1899
      %1901 = vrot.lane.b32.xlu0 %v790, 126
      %v1902 = vpop.permute.xlu0 %1901
      %1903 = vrot.lane.b32.xlu0 %v791, 126
      %v1904 = vpop.permute.xlu0 %1903
      %1905 = vrot.lane.b32.xlu0 %v812, 126
      %v1906 = vpop.permute.xlu0 %1905
      %1907 = vrot.lane.b32.xlu0 %v792, 126
      %v1908 = vpop.permute.xlu0 %1907
      %1909 = vrot.lane.b32.xlu0 %v793, 126
      %v1910 = vpop.permute.xlu0 %1909
      %1911 = vrot.lane.b32.xlu0 %v813, 126
      %v1912 = vpop.permute.xlu0 %1911
      %1913 = vrot.lane.b32.xlu0 %v794, 126
      %v1914 = vpop.permute.xlu0 %1913
      %1915 = vrot.lane.b32.xlu0 %v795, 126
      %v1916 = vpop.permute.xlu0 %1915
      %1917 = vrot.lane.b32.xlu0 %v814, 126
      %v1918 = vpop.permute.xlu0 %1917
      %1919 = vrot.lane.b32.xlu0 %v796, 126
      %v1920 = vpop.permute.xlu0 %1919
      %1921 = vrot.lane.b32.xlu0 %v797, 126
      %v1922 = vpop.permute.xlu0 %1921
      %1923 = vrot.lane.b32.xlu0 %v815, 126
      %v1924 = vpop.permute.xlu0 %1923
      %1925 = vrot.lane.b32.xlu0 %v798, 126
      %v1926 = vpop.permute.xlu0 %1925
      %1927 = vrot.lane.b32.xlu0 %v799, 126
      %v1928 = vpop.permute.xlu0 %1927
      %1929 = vrot.lane.b32.xlu0 %v816, 126
      %v1930 = vpop.permute.xlu0 %1929
      %v1931 = vsel %vm366, %v1884, %v1886
      %v1932 = vsel %vm366, %v1886, %v1888
      %v1933 = vsel %vm366, %v1890, %v1892
      %v1934 = vsel %vm366, %v1892, %v1894
      %v1935 = vsel %vm366, %v1896, %v1898
      %v1936 = vsel %vm366, %v1898, %v1900
      %v1937 = vsel %vm366, %v1902, %v1904
      %v1938 = vsel %vm366, %v1904, %v1906
      %v1939 = vsel %vm366, %v1908, %v1910
      %v1940 = vsel %vm366, %v1910, %v1912
      %v1941 = vsel %vm366, %v1914, %v1916
      %v1942 = vsel %vm366, %v1916, %v1918
      %v1943 = vsel %vm366, %v1920, %v1922
      %v1944 = vsel %vm366, %v1922, %v1924
      %v1945 = vsel %vm366, %v1926, %v1928
      %v1946 = vsel %vm366, %v1928, %v1930
      %v1964 = vsel %vm939, %v818, 0
      %v1967 = vsel %vm939, %v819, 0
      %v1970 = vsel %vm939, %v820, 0
      %v1973 = vsel %vm939, %v821, 0
      %v1976 = vsel %vm939, %v822, 0
      %v1979 = vsel %vm939, %v823, 0
      %v1982 = vsel %vm939, %v824, 0
      %v1985 = vsel %vm939, %v825, 0
      %1987 = vmatprep.subr.mxu0 0.0
      %1988 = vmatpush1.msra.mxu0 0.0
      %1989 = vmatprep.subr.mxu0 0.0
      %1990 = vmatpush1.msra.mxu0 0.0
      %1991 = vmatprep.subr.mxu0 0.0
      %1992 = vmatpush1.msra.mxu0 0.0
      %1993 = vmatprep.subr.mxu0 0.0
      %1994 = vmatpush1.msra.mxu0 0.0
      %1995 = vmatprep.subr.mxu0 0.0
      %1996 = vmatpush1.msra.mxu0 0.0
      %1997 = vmatprep.subr.mxu0 0.0
      %1998 = vmatpush1.msra.mxu0 0.0
      %1999 = vmatprep.subr.mxu0 0.0
      %2000 = vmatpush1.msra.mxu0 0.0
      %2001 = vmatprep.subr.mxu0 0.0
      %2002 = vmatpush1.msra.mxu0 0.0
      %2003 = vmatprep.subr.mxu0 %v1946
      %2004 = vmatpush1.msra.mxu0 %v1945
      %2005 = vmatprep.subr.mxu0 %v1944
      %2006 = vmatpush1.msra.mxu0 %v1943
      %2007 = vmatprep.subr.mxu0 %v1942
      %2008 = vmatpush1.msra.mxu0 %v1941
      %2009 = vmatprep.subr.mxu0 %v1940
      %2010 = vmatpush1.msra.mxu0 %v1939
      %2011 = vmatprep.subr.mxu0 %v1938
      %2012 = vmatpush1.msra.mxu0 %v1937
      %2013 = vmatprep.subr.mxu0 %v1936
      %2014 = vmatpush1.msra.mxu0 %v1935
      %2015 = vmatprep.subr.mxu0 %v1934
      %2016 = vmatpush1.msra.mxu0 %v1933
      %2017 = vmatprep.subr.mxu0 %v1932
      %2018 = vmatpush1.msra.mxu0 %v1931
      %2019 = vmatprep.subr.mxu0 0.0
      %2020 = vmatpush2.msra.mxu0 0.0
      %2021 = vmatprep.subr.mxu0 0.0
      %2022 = vmatpush2.msra.mxu0 0.0
      %2023 = vmatprep.subr.mxu0 0.0
      %2024 = vmatpush2.msra.mxu0 0.0
      %2025 = vmatprep.subr.mxu0 0.0
      %2026 = vmatpush2.msra.mxu0 0.0
      %2027 = vmatprep.subr.mxu0 0.0
      %2028 = vmatpush2.msra.mxu0 0.0
      %2029 = vmatprep.subr.mxu0 0.0
      %2030 = vmatpush2.msra.mxu0 0.0
      %2031 = vmatprep.subr.mxu0 0.0
      %2032 = vmatpush2.msra.mxu0 0.0
      %2033 = vmatprep.subr.mxu0 0.0
      %2034 = vmatpush2.msra.mxu0 0.0
      %2035 = vmatprep.subr.mxu0 0.0
      %2036 = vmatpush2.msra.mxu0 0.0
      %2037 = vmatprep.subr.mxu0 0.0
      %2038 = vmatpush2.msra.mxu0 0.0
      %2039 = vmatprep.subr.mxu0 0.0
      %2040 = vmatpush2.msra.mxu0 0.0
      %2041 = vmatprep.subr.mxu0 0.0
      %2042 = vmatpush2.msra.mxu0 0.0
      %2043 = vmatprep.subr.mxu0 0.0
      %2044 = vmatpush2.msra.mxu0 0.0
      %2045 = vmatprep.subr.mxu0 0.0
      %2046 = vmatpush2.msra.mxu0 0.0
      %2047 = vmatprep.subr.mxu0 0.0
      %2048 = vmatpush2.msra.mxu0 0.0
      %2049 = vmatprep.subr.mxu0 0.0
      %2050 = vmatpush2.msra.mxu0 0.0
      %2051 = vmatprep.mubr.f32.mxu0 0.0
      %2052 = vmatmul.mubr.f32.gmra.mxu0 %v1964
      %v2053 = vpop.f32.mrf.mxu0
      %v2054 = vadd.f32 %v1837, %v2053
      %v2055 = vpop.f32.mrf.mxu0
      %v2056 = vadd.f32 %v1839, %v2055
      %2057 = vmatprep.mubr.f32.mxu0 0.0
      %2058 = vmatmul.mubr.f32.gmra.mxu0 %v1967
      %v2059 = vpop.f32.mrf.mxu0
      %v2060 = vadd.f32 %v1843, %v2059
      %v2061 = vpop.f32.mrf.mxu0
      %v2062 = vadd.f32 %v1845, %v2061
      %2063 = vmatprep.mubr.f32.mxu0 0.0
      %2064 = vmatmul.mubr.f32.gmra.mxu0 %v1970
      %v2065 = vpop.f32.mrf.mxu0
      %v2066 = vadd.f32 %v1849, %v2065
      %v2067 = vpop.f32.mrf.mxu0
      %v2068 = vadd.f32 %v1851, %v2067
      %2069 = vmatprep.mubr.f32.mxu0 0.0
      %2070 = vmatmul.mubr.f32.gmra.mxu0 %v1973
      %v2071 = vpop.f32.mrf.mxu0
      %v2072 = vadd.f32 %v1855, %v2071
      %v2073 = vpop.f32.mrf.mxu0
      %v2074 = vadd.f32 %v1857, %v2073
      %2075 = vmatprep.mubr.f32.mxu0 0.0
      %2076 = vmatmul.mubr.f32.gmra.mxu0 %v1976
      %v2077 = vpop.f32.mrf.mxu0
      %v2078 = vadd.f32 %v1861, %v2077
      %v2079 = vpop.f32.mrf.mxu0
      %v2080 = vadd.f32 %v1863, %v2079
      %2081 = vmatprep.mubr.f32.mxu0 0.0
      %2082 = vmatmul.mubr.f32.gmra.mxu0 %v1979
      %v2083 = vpop.f32.mrf.mxu0
      %v2084 = vadd.f32 %v1867, %v2083
      %v2085 = vpop.f32.mrf.mxu0
      %v2086 = vadd.f32 %v1869, %v2085
      %2087 = vmatprep.mubr.f32.mxu0 0.0
      %2088 = vmatmul.mubr.f32.gmra.mxu0 %v1982
      %v2089 = vpop.f32.mrf.mxu0
      %v2090 = vadd.f32 %v1873, %v2089
      %v2091 = vpop.f32.mrf.mxu0
      %v2092 = vadd.f32 %v1875, %v2091
      %2093 = vmatprep.mubr.f32.mxu0 0.0
      %2094 = vmatmul.mubr.f32.gmra.mxu0 %v1985
      %v2095 = vpop.f32.mrf.mxu0
      %v2096 = vadd.f32 %v1879, %v2095
      %v2097 = vpop.f32.mrf.mxu0
      %v2098 = vadd.f32 %v1881, %v2097
      %2099 = vdwg.mxu0
      %s2100 = scalar_lea.vmem %s2, 384
      %v2101 = vld [vmem:[%s2100] sm:$0xff]
      %v2102 = vld [vmem:[%s2100 + $0x8] sm:$0xff]
      %v2103 = vld [vmem:[%s2100 + $0x10] sm:$0xff]
      %v2104 = vld [vmem:[%s2100 + $0x18] sm:$0xff]
      %v2105 = vld [vmem:[%s2100 + $0x20] sm:$0xff]
      %v2106 = vld [vmem:[%s2100 + $0x28] sm:$0xff]
      %v2107 = vld [vmem:[%s2100 + $0x30] sm:$0xff]
      %v2108 = vld [vmem:[%s2100 + $0x38] sm:$0xff]
      %2109 = vrot.lane.b32.xlu0 %v784, 96
      %v2110 = vpop.permute.xlu0 %2109
      %2111 = vrot.lane.b32.xlu0 %v785, 96
      %v2112 = vpop.permute.xlu0 %2111
      %2113 = vrot.lane.b32.xlu0 %v809, 96
      %v2114 = vpop.permute.xlu0 %2113
      %2115 = vrot.lane.b32.xlu0 %v786, 96
      %v2116 = vpop.permute.xlu0 %2115
      %2117 = vrot.lane.b32.xlu0 %v787, 96
      %v2118 = vpop.permute.xlu0 %2117
      %2119 = vrot.lane.b32.xlu0 %v810, 96
      %v2120 = vpop.permute.xlu0 %2119
      %2121 = vrot.lane.b32.xlu0 %v788, 96
      %v2122 = vpop.permute.xlu0 %2121
      %2123 = vrot.lane.b32.xlu0 %v789, 96
      %v2124 = vpop.permute.xlu0 %2123
      %2125 = vrot.lane.b32.xlu0 %v811, 96
      %v2126 = vpop.permute.xlu0 %2125
      %2127 = vrot.lane.b32.xlu0 %v790, 96
      %v2128 = vpop.permute.xlu0 %2127
      %2129 = vrot.lane.b32.xlu0 %v791, 96
      %v2130 = vpop.permute.xlu0 %2129
      %2131 = vrot.lane.b32.xlu0 %v812, 96
      %v2132 = vpop.permute.xlu0 %2131
      %2133 = vrot.lane.b32.xlu0 %v792, 96
      %v2134 = vpop.permute.xlu0 %2133
      %2135 = vrot.lane.b32.xlu0 %v793, 96
      %v2136 = vpop.permute.xlu0 %2135
      %2137 = vrot.lane.b32.xlu0 %v813, 96
      %v2138 = vpop.permute.xlu0 %2137
      %2139 = vrot.lane.b32.xlu0 %v794, 96
      %v2140 = vpop.permute.xlu0 %2139
      %2141 = vrot.lane.b32.xlu0 %v795, 96
      %v2142 = vpop.permute.xlu0 %2141
      %2143 = vrot.lane.b32.xlu0 %v814, 96
      %v2144 = vpop.permute.xlu0 %2143
      %2145 = vrot.lane.b32.xlu0 %v796, 96
      %v2146 = vpop.permute.xlu0 %2145
      %2147 = vrot.lane.b32.xlu0 %v797, 96
      %v2148 = vpop.permute.xlu0 %2147
      %2149 = vrot.lane.b32.xlu0 %v815, 96
      %v2150 = vpop.permute.xlu0 %2149
      %2151 = vrot.lane.b32.xlu0 %v798, 96
      %v2152 = vpop.permute.xlu0 %2151
      %2153 = vrot.lane.b32.xlu0 %v799, 96
      %v2154 = vpop.permute.xlu0 %2153
      %2155 = vrot.lane.b32.xlu0 %v816, 96
      %v2156 = vpop.permute.xlu0 %2155
      %v2157 = vsel %vm431, %v2110, %v2112
      %v2158 = vsel %vm431, %v2112, %v2114
      %v2159 = vsel %vm431, %v2116, %v2118
      %v2160 = vsel %vm431, %v2118, %v2120
      %v2161 = vsel %vm431, %v2122, %v2124
      %v2162 = vsel %vm431, %v2124, %v2126
      %v2163 = vsel %vm431, %v2128, %v2130
      %v2164 = vsel %vm431, %v2130, %v2132
      %v2165 = vsel %vm431, %v2134, %v2136
      %v2166 = vsel %vm431, %v2136, %v2138
      %v2167 = vsel %vm431, %v2140, %v2142
      %v2168 = vsel %vm431, %v2142, %v2144
      %v2169 = vsel %vm431, %v2146, %v2148
      %v2170 = vsel %vm431, %v2148, %v2150
      %v2171 = vsel %vm431, %v2152, %v2154
      %v2172 = vsel %vm431, %v2154, %v2156
      %v2190 = vsel %vm939, %v2101, 0
      %v2193 = vsel %vm939, %v2102, 0
      %v2196 = vsel %vm939, %v2103, 0
      %v2199 = vsel %vm939, %v2104, 0
      %v2202 = vsel %vm939, %v2105, 0
      %v2205 = vsel %vm939, %v2106, 0
      %v2208 = vsel %vm939, %v2107, 0
      %v2211 = vsel %vm939, %v2108, 0
      %2213 = vmatprep.subr.mxu0 0.0
      %2214 = vmatpush1.msra.mxu0 0.0
      %2215 = vmatprep.subr.mxu0 0.0
      %2216 = vmatpush1.msra.mxu0 0.0
      %2217 = vmatprep.subr.mxu0 0.0
      %2218 = vmatpush1.msra.mxu0 0.0
      %2219 = vmatprep.subr.mxu0 0.0
      %2220 = vmatpush1.msra.mxu0 0.0
      %2221 = vmatprep.subr.mxu0 0.0
      %2222 = vmatpush1.msra.mxu0 0.0
      %2223 = vmatprep.subr.mxu0 0.0
      %2224 = vmatpush1.msra.mxu0 0.0
      %2225 = vmatprep.subr.mxu0 0.0
      %2226 = vmatpush1.msra.mxu0 0.0
      %2227 = vmatprep.subr.mxu0 0.0
      %2228 = vmatpush1.msra.mxu0 0.0
      %2229 = vmatprep.subr.mxu0 %v2172
      %2230 = vmatpush1.msra.mxu0 %v2171
      %2231 = vmatprep.subr.mxu0 %v2170
      %2232 = vmatpush1.msra.mxu0 %v2169
      %2233 = vmatprep.subr.mxu0 %v2168
      %2234 = vmatpush1.msra.mxu0 %v2167
      %2235 = vmatprep.subr.mxu0 %v2166
      %2236 = vmatpush1.msra.mxu0 %v2165
      %2237 = vmatprep.subr.mxu0 %v2164
      %2238 = vmatpush1.msra.mxu0 %v2163
      %2239 = vmatprep.subr.mxu0 %v2162
      %2240 = vmatpush1.msra.mxu0 %v2161
      %2241 = vmatprep.subr.mxu0 %v2160
      %2242 = vmatpush1.msra.mxu0 %v2159
      %2243 = vmatprep.subr.mxu0 %v2158
      %2244 = vmatpush1.msra.mxu0 %v2157
      %2245 = vmatprep.subr.mxu0 0.0
      %2246 = vmatpush2.msra.mxu0 0.0
      %2247 = vmatprep.subr.mxu0 0.0
      %2248 = vmatpush2.msra.mxu0 0.0
      %2249 = vmatprep.subr.mxu0 0.0
      %2250 = vmatpush2.msra.mxu0 0.0
      %2251 = vmatprep.subr.mxu0 0.0
      %2252 = vmatpush2.msra.mxu0 0.0
      %2253 = vmatprep.subr.mxu0 0.0
      %2254 = vmatpush2.msra.mxu0 0.0
      %2255 = vmatprep.subr.mxu0 0.0
      %2256 = vmatpush2.msra.mxu0 0.0
      %2257 = vmatprep.subr.mxu0 0.0
      %2258 = vmatpush2.msra.mxu0 0.0
      %2259 = vmatprep.subr.mxu0 0.0
      %2260 = vmatpush2.msra.mxu0 0.0
      %2261 = vmatprep.subr.mxu0 0.0
      %2262 = vmatpush2.msra.mxu0 0.0
      %2263 = vmatprep.subr.mxu0 0.0
      %2264 = vmatpush2.msra.mxu0 0.0
      %2265 = vmatprep.subr.mxu0 0.0
      %2266 = vmatpush2.msra.mxu0 0.0
      %2267 = vmatprep.subr.mxu0 0.0
      %2268 = vmatpush2.msra.mxu0 0.0
      %2269 = vmatprep.subr.mxu0 0.0
      %2270 = vmatpush2.msra.mxu0 0.0
      %2271 = vmatprep.subr.mxu0 0.0
      %2272 = vmatpush2.msra.mxu0 0.0
      %2273 = vmatprep.subr.mxu0 0.0
      %2274 = vmatpush2.msra.mxu0 0.0
      %2275 = vmatprep.subr.mxu0 0.0
      %2276 = vmatpush2.msra.mxu0 0.0
      %2277 = vmatprep.mubr.f32.mxu0 0.0
      %2278 = vmatmul.mubr.f32.gmra.mxu0 %v2190
      %v2279 = vpop.f32.mrf.mxu0
      %v2280 = vadd.f32 0.0, %v2279
      %v2281 = vpop.f32.mrf.mxu0
      %v2282 = vadd.f32 0.0, %v2281
      %2283 = vmatprep.mubr.f32.mxu0 0.0
      %2284 = vmatmul.mubr.f32.gmra.mxu0 %v2193
      %v2285 = vpop.f32.mrf.mxu0
      %v2286 = vadd.f32 0.0, %v2285
      %v2287 = vpop.f32.mrf.mxu0
      %v2288 = vadd.f32 0.0, %v2287
      %2289 = vmatprep.mubr.f32.mxu0 0.0
      %2290 = vmatmul.mubr.f32.gmra.mxu0 %v2196
      %v2291 = vpop.f32.mrf.mxu0
      %v2292 = vadd.f32 0.0, %v2291
      %v2293 = vpop.f32.mrf.mxu0
      %v2294 = vadd.f32 0.0, %v2293
      %2295 = vmatprep.mubr.f32.mxu0 0.0
      %2296 = vmatmul.mubr.f32.gmra.mxu0 %v2199
      %v2297 = vpop.f32.mrf.mxu0
      %v2298 = vadd.f32 0.0, %v2297
      %v2299 = vpop.f32.mrf.mxu0
      %v2300 = vadd.f32 0.0, %v2299
      %2301 = vmatprep.mubr.f32.mxu0 0.0
      %2302 = vmatmul.mubr.f32.gmra.mxu0 %v2202
      %v2303 = vpop.f32.mrf.mxu0
      %v2304 = vadd.f32 0.0, %v2303
      %v2305 = vpop.f32.mrf.mxu0
      %v2306 = vadd.f32 0.0, %v2305
      %2307 = vmatprep.mubr.f32.mxu0 0.0
      %2308 = vmatmul.mubr.f32.gmra.mxu0 %v2205
      %v2309 = vpop.f32.mrf.mxu0
      %v2310 = vadd.f32 0.0, %v2309
      %v2311 = vpop.f32.mrf.mxu0
      %v2312 = vadd.f32 0.0, %v2311
      %2313 = vmatprep.mubr.f32.mxu0 0.0
      %2314 = vmatmul.mubr.f32.gmra.mxu0 %v2208
      %v2315 = vpop.f32.mrf.mxu0
      %v2316 = vadd.f32 0.0, %v2315
      %v2317 = vpop.f32.mrf.mxu0
      %v2318 = vadd.f32 0.0, %v2317
      %2319 = vmatprep.mubr.f32.mxu0 0.0
      %2320 = vmatmul.mubr.f32.gmra.mxu0 %v2211
      %v2321 = vpop.f32.mrf.mxu0
      %v2322 = vadd.f32 0.0, %v2321
      %v2323 = vpop.f32.mrf.mxu0
      %v2324 = vadd.f32 0.0, %v2323
      %2325 = vdwg.mxu0
      %v2326 = vadd.f32 %v1168, %v2280
      %v2327 = vadd.f32 %v1170, %v2282
      %v2328 = vadd.f32 %v1174, %v2286
      %v2329 = vadd.f32 %v1176, %v2288
      %v2330 = vadd.f32 %v1180, %v2292
      %v2331 = vadd.f32 %v1182, %v2294
      %v2332 = vadd.f32 %v1186, %v2298
      %v2333 = vadd.f32 %v1188, %v2300
      %v2334 = vadd.f32 %v1192, %v2304
      %v2335 = vadd.f32 %v1194, %v2306
      %v2336 = vadd.f32 %v1198, %v2310
      %v2337 = vadd.f32 %v1200, %v2312
      %v2338 = vadd.f32 %v1204, %v2316
      %v2339 = vadd.f32 %v1206, %v2318
      %v2340 = vadd.f32 %v1210, %v2322
      %v2341 = vadd.f32 %v1212, %v2324
      %s2342 = scalar_lea.vmem %s2, 448
      %v2343 = vld [vmem:[%s2342] sm:$0xff]
      %v2344 = vld [vmem:[%s2342 + $0x8] sm:$0xff]
      %v2345 = vld [vmem:[%s2342 + $0x10] sm:$0xff]
      %v2346 = vld [vmem:[%s2342 + $0x18] sm:$0xff]
      %v2347 = vld [vmem:[%s2342 + $0x20] sm:$0xff]
      %v2348 = vld [vmem:[%s2342 + $0x28] sm:$0xff]
      %v2349 = vld [vmem:[%s2342 + $0x30] sm:$0xff]
      %v2350 = vld [vmem:[%s2342 + $0x38] sm:$0xff]
      %2351 = vrot.lane.b32.xlu0 %v784, 95
      %v2352 = vpop.permute.xlu0 %2351
      %2353 = vrot.lane.b32.xlu0 %v785, 95
      %v2354 = vpop.permute.xlu0 %2353
      %2355 = vrot.lane.b32.xlu0 %v809, 95
      %v2356 = vpop.permute.xlu0 %2355
      %2357 = vrot.lane.b32.xlu0 %v786, 95
      %v2358 = vpop.permute.xlu0 %2357
      %2359 = vrot.lane.b32.xlu0 %v787, 95
      %v2360 = vpop.permute.xlu0 %2359
      %2361 = vrot.lane.b32.xlu0 %v810, 95
      %v2362 = vpop.permute.xlu0 %2361
      %2363 = vrot.lane.b32.xlu0 %v788, 95
      %v2364 = vpop.permute.xlu0 %2363
      %2365 = vrot.lane.b32.xlu0 %v789, 95
      %v2366 = vpop.permute.xlu0 %2365
      %2367 = vrot.lane.b32.xlu0 %v811, 95
      %v2368 = vpop.permute.xlu0 %2367
      %2369 = vrot.lane.b32.xlu0 %v790, 95
      %v2370 = vpop.permute.xlu0 %2369
      %2371 = vrot.lane.b32.xlu0 %v791, 95
      %v2372 = vpop.permute.xlu0 %2371
      %2373 = vrot.lane.b32.xlu0 %v812, 95
      %v2374 = vpop.permute.xlu0 %2373
      %2375 = vrot.lane.b32.xlu0 %v792, 95
      %v2376 = vpop.permute.xlu0 %2375
      %2377 = vrot.lane.b32.xlu0 %v793, 95
      %v2378 = vpop.permute.xlu0 %2377
      %2379 = vrot.lane.b32.xlu0 %v813, 95
      %v2380 = vpop.permute.xlu0 %2379
      %2381 = vrot.lane.b32.xlu0 %v794, 95
      %v2382 = vpop.permute.xlu0 %2381
      %2383 = vrot.lane.b32.xlu0 %v795, 95
      %v2384 = vpop.permute.xlu0 %2383
      %2385 = vrot.lane.b32.xlu0 %v814, 95
      %v2386 = vpop.permute.xlu0 %2385
      %2387 = vrot.lane.b32.xlu0 %v796, 95
      %v2388 = vpop.permute.xlu0 %2387
      %2389 = vrot.lane.b32.xlu0 %v797, 95
      %v2390 = vpop.permute.xlu0 %2389
      %2391 = vrot.lane.b32.xlu0 %v815, 95
      %v2392 = vpop.permute.xlu0 %2391
      %2393 = vrot.lane.b32.xlu0 %v798, 95
      %v2394 = vpop.permute.xlu0 %2393
      %2395 = vrot.lane.b32.xlu0 %v799, 95
      %v2396 = vpop.permute.xlu0 %2395
      %2397 = vrot.lane.b32.xlu0 %v816, 95
      %v2398 = vpop.permute.xlu0 %2397
      %v2399 = vsel %vm442, %v2352, %v2354
      %v2400 = vsel %vm442, %v2354, %v2356
      %v2401 = vsel %vm442, %v2358, %v2360
      %v2402 = vsel %vm442, %v2360, %v2362
      %v2403 = vsel %vm442, %v2364, %v2366
      %v2404 = vsel %vm442, %v2366, %v2368
      %v2405 = vsel %vm442, %v2370, %v2372
      %v2406 = vsel %vm442, %v2372, %v2374
      %v2407 = vsel %vm442, %v2376, %v2378
      %v2408 = vsel %vm442, %v2378, %v2380
      %v2409 = vsel %vm442, %v2382, %v2384
      %v2410 = vsel %vm442, %v2384, %v2386
      %v2411 = vsel %vm442, %v2388, %v2390
      %v2412 = vsel %vm442, %v2390, %v2392
      %v2413 = vsel %vm442, %v2394, %v2396
      %v2414 = vsel %vm442, %v2396, %v2398
      %v2432 = vsel %vm939, %v2343, 0
      %v2435 = vsel %vm939, %v2344, 0
      %v2438 = vsel %vm939, %v2345, 0
      %v2441 = vsel %vm939, %v2346, 0
      %v2444 = vsel %vm939, %v2347, 0
      %v2447 = vsel %vm939, %v2348, 0
      %v2450 = vsel %vm939, %v2349, 0
      %v2453 = vsel %vm939, %v2350, 0
      %2455 = vmatprep.subr.mxu0 0.0
      %2456 = vmatpush1.msra.mxu0 0.0
      %2457 = vmatprep.subr.mxu0 0.0
      %2458 = vmatpush1.msra.mxu0 0.0
      %2459 = vmatprep.subr.mxu0 0.0
      %2460 = vmatpush1.msra.mxu0 0.0
      %2461 = vmatprep.subr.mxu0 0.0
      %2462 = vmatpush1.msra.mxu0 0.0
      %2463 = vmatprep.subr.mxu0 0.0
      %2464 = vmatpush1.msra.mxu0 0.0
      %2465 = vmatprep.subr.mxu0 0.0
      %2466 = vmatpush1.msra.mxu0 0.0
      %2467 = vmatprep.subr.mxu0 0.0
      %2468 = vmatpush1.msra.mxu0 0.0
      %2469 = vmatprep.subr.mxu0 0.0
      %2470 = vmatpush1.msra.mxu0 0.0
      %2471 = vmatprep.subr.mxu0 %v2414
      %2472 = vmatpush1.msra.mxu0 %v2413
      %2473 = vmatprep.subr.mxu0 %v2412
      %2474 = vmatpush1.msra.mxu0 %v2411
      %2475 = vmatprep.subr.mxu0 %v2410
      %2476 = vmatpush1.msra.mxu0 %v2409
      %2477 = vmatprep.subr.mxu0 %v2408
      %2478 = vmatpush1.msra.mxu0 %v2407
      %2479 = vmatprep.subr.mxu0 %v2406
      %2480 = vmatpush1.msra.mxu0 %v2405
      %2481 = vmatprep.subr.mxu0 %v2404
      %2482 = vmatpush1.msra.mxu0 %v2403
      %2483 = vmatprep.subr.mxu0 %v2402
      %2484 = vmatpush1.msra.mxu0 %v2401
      %2485 = vmatprep.subr.mxu0 %v2400
      %2486 = vmatpush1.msra.mxu0 %v2399
      %2487 = vmatprep.subr.mxu0 0.0
      %2488 = vmatpush2.msra.mxu0 0.0
      %2489 = vmatprep.subr.mxu0 0.0
      %2490 = vmatpush2.msra.mxu0 0.0
      %2491 = vmatprep.subr.mxu0 0.0
      %2492 = vmatpush2.msra.mxu0 0.0
      %2493 = vmatprep.subr.mxu0 0.0
      %2494 = vmatpush2.msra.mxu0 0.0
      %2495 = vmatprep.subr.mxu0 0.0
      %2496 = vmatpush2.msra.mxu0 0.0
      %2497 = vmatprep.subr.mxu0 0.0
      %2498 = vmatpush2.msra.mxu0 0.0
      %2499 = vmatprep.subr.mxu0 0.0
      %2500 = vmatpush2.msra.mxu0 0.0
      %2501 = vmatprep.subr.mxu0 0.0
      %2502 = vmatpush2.msra.mxu0 0.0
      %2503 = vmatprep.subr.mxu0 0.0
      %2504 = vmatpush2.msra.mxu0 0.0
      %2505 = vmatprep.subr.mxu0 0.0
      %2506 = vmatpush2.msra.mxu0 0.0
      %2507 = vmatprep.subr.mxu0 0.0
      %2508 = vmatpush2.msra.mxu0 0.0
      %2509 = vmatprep.subr.mxu0 0.0
      %2510 = vmatpush2.msra.mxu0 0.0
      %2511 = vmatprep.subr.mxu0 0.0
      %2512 = vmatpush2.msra.mxu0 0.0
      %2513 = vmatprep.subr.mxu0 0.0
      %2514 = vmatpush2.msra.mxu0 0.0
      %2515 = vmatprep.subr.mxu0 0.0
      %2516 = vmatpush2.msra.mxu0 0.0
      %2517 = vmatprep.subr.mxu0 0.0
      %2518 = vmatpush2.msra.mxu0 0.0
      %2519 = vmatprep.mubr.f32.mxu0 0.0
      %2520 = vmatmul.mubr.f32.gmra.mxu0 %v2432
      %v2521 = vpop.f32.mrf.mxu0
      %v2522 = vadd.f32 0.0, %v2521
      %v2523 = vpop.f32.mrf.mxu0
      %v2524 = vadd.f32 0.0, %v2523
      %2525 = vmatprep.mubr.f32.mxu0 0.0
      %2526 = vmatmul.mubr.f32.gmra.mxu0 %v2435
      %v2527 = vpop.f32.mrf.mxu0
      %v2528 = vadd.f32 0.0, %v2527
      %v2529 = vpop.f32.mrf.mxu0
      %v2530 = vadd.f32 0.0, %v2529
      %2531 = vmatprep.mubr.f32.mxu0 0.0
      %2532 = vmatmul.mubr.f32.gmra.mxu0 %v2438
      %v2533 = vpop.f32.mrf.mxu0
      %v2534 = vadd.f32 0.0, %v2533
      %v2535 = vpop.f32.mrf.mxu0
      %v2536 = vadd.f32 0.0, %v2535
      %2537 = vmatprep.mubr.f32.mxu0 0.0
      %2538 = vmatmul.mubr.f32.gmra.mxu0 %v2441
      %v2539 = vpop.f32.mrf.mxu0
      %v2540 = vadd.f32 0.0, %v2539
      %v2541 = vpop.f32.mrf.mxu0
      %v2542 = vadd.f32 0.0, %v2541
      %2543 = vmatprep.mubr.f32.mxu0 0.0
      %2544 = vmatmul.mubr.f32.gmra.mxu0 %v2444
      %v2545 = vpop.f32.mrf.mxu0
      %v2546 = vadd.f32 0.0, %v2545
      %v2547 = vpop.f32.mrf.mxu0
      %v2548 = vadd.f32 0.0, %v2547
      %2549 = vmatprep.mubr.f32.mxu0 0.0
      %2550 = vmatmul.mubr.f32.gmra.mxu0 %v2447
      %v2551 = vpop.f32.mrf.mxu0
      %v2552 = vadd.f32 0.0, %v2551
      %v2553 = vpop.f32.mrf.mxu0
      %v2554 = vadd.f32 0.0, %v2553
      %2555 = vmatprep.mubr.f32.mxu0 0.0
      %2556 = vmatmul.mubr.f32.gmra.mxu0 %v2450
      %v2557 = vpop.f32.mrf.mxu0
      %v2558 = vadd.f32 0.0, %v2557
      %v2559 = vpop.f32.mrf.mxu0
      %v2560 = vadd.f32 0.0, %v2559
      %2561 = vmatprep.mubr.f32.mxu0 0.0
      %2562 = vmatmul.mubr.f32.gmra.mxu0 %v2453
      %v2563 = vpop.f32.mrf.mxu0
      %v2564 = vadd.f32 0.0, %v2563
      %v2565 = vpop.f32.mrf.mxu0
      %v2566 = vadd.f32 0.0, %v2565
      %2567 = vdwg.mxu0
      %v2568 = vadd.f32 %v1611, %v2522
      %v2569 = vadd.f32 %v1613, %v2524
      %v2570 = vadd.f32 %v1617, %v2528
      %v2571 = vadd.f32 %v1619, %v2530
      %v2572 = vadd.f32 %v1623, %v2534
      %v2573 = vadd.f32 %v1625, %v2536
      %v2574 = vadd.f32 %v1629, %v2540
      %v2575 = vadd.f32 %v1631, %v2542
      %v2576 = vadd.f32 %v1635, %v2546
      %v2577 = vadd.f32 %v1637, %v2548
      %v2578 = vadd.f32 %v1641, %v2552
      %v2579 = vadd.f32 %v1643, %v2554
      %v2580 = vadd.f32 %v1647, %v2558
      %v2581 = vadd.f32 %v1649, %v2560
      %v2582 = vadd.f32 %v1653, %v2564
      %v2583 = vadd.f32 %v1655, %v2566
      %s2584 = scalar_lea.vmem %s2, 512
      %v2585 = vld [vmem:[%s2584] sm:$0xff]
      %v2586 = vld [vmem:[%s2584 + $0x8] sm:$0xff]
      %v2587 = vld [vmem:[%s2584 + $0x10] sm:$0xff]
      %v2588 = vld [vmem:[%s2584 + $0x18] sm:$0xff]
      %v2589 = vld [vmem:[%s2584 + $0x20] sm:$0xff]
      %v2590 = vld [vmem:[%s2584 + $0x28] sm:$0xff]
      %v2591 = vld [vmem:[%s2584 + $0x30] sm:$0xff]
      %v2592 = vld [vmem:[%s2584 + $0x38] sm:$0xff]
      %2593 = vrot.lane.b32.xlu0 %v784, 94
      %v2594 = vpop.permute.xlu0 %2593
      %2595 = vrot.lane.b32.xlu0 %v785, 94
      %v2596 = vpop.permute.xlu0 %2595
      %2597 = vrot.lane.b32.xlu0 %v809, 94
      %v2598 = vpop.permute.xlu0 %2597
      %2599 = vrot.lane.b32.xlu0 %v786, 94
      %v2600 = vpop.permute.xlu0 %2599
      %2601 = vrot.lane.b32.xlu0 %v787, 94
      %v2602 = vpop.permute.xlu0 %2601
      %2603 = vrot.lane.b32.xlu0 %v810, 94
      %v2604 = vpop.permute.xlu0 %2603
      %2605 = vrot.lane.b32.xlu0 %v788, 94
      %v2606 = vpop.permute.xlu0 %2605
      %2607 = vrot.lane.b32.xlu0 %v789, 94
      %v2608 = vpop.permute.xlu0 %2607
      %2609 = vrot.lane.b32.xlu0 %v811, 94
      %v2610 = vpop.permute.xlu0 %2609
      %2611 = vrot.lane.b32.xlu0 %v790, 94
      %v2612 = vpop.permute.xlu0 %2611
      %2613 = vrot.lane.b32.xlu0 %v791, 94
      %v2614 = vpop.permute.xlu0 %2613
      %2615 = vrot.lane.b32.xlu0 %v812, 94
      %v2616 = vpop.permute.xlu0 %2615
      %2617 = vrot.lane.b32.xlu0 %v792, 94
      %v2618 = vpop.permute.xlu0 %2617
      %2619 = vrot.lane.b32.xlu0 %v793, 94
      %v2620 = vpop.permute.xlu0 %2619
      %2621 = vrot.lane.b32.xlu0 %v813, 94
      %v2622 = vpop.permute.xlu0 %2621
      %2623 = vrot.lane.b32.xlu0 %v794, 94
      %v2624 = vpop.permute.xlu0 %2623
      %2625 = vrot.lane.b32.xlu0 %v795, 94
      %v2626 = vpop.permute.xlu0 %2625
      %2627 = vrot.lane.b32.xlu0 %v814, 94
      %v2628 = vpop.permute.xlu0 %2627
      %2629 = vrot.lane.b32.xlu0 %v796, 94
      %v2630 = vpop.permute.xlu0 %2629
      %2631 = vrot.lane.b32.xlu0 %v797, 94
      %v2632 = vpop.permute.xlu0 %2631
      %2633 = vrot.lane.b32.xlu0 %v815, 94
      %v2634 = vpop.permute.xlu0 %2633
      %2635 = vrot.lane.b32.xlu0 %v798, 94
      %v2636 = vpop.permute.xlu0 %2635
      %2637 = vrot.lane.b32.xlu0 %v799, 94
      %v2638 = vpop.permute.xlu0 %2637
      %2639 = vrot.lane.b32.xlu0 %v816, 94
      %v2640 = vpop.permute.xlu0 %2639
      %v2641 = vsel %vm460, %v2594, %v2596
      %v2642 = vsel %vm460, %v2596, %v2598
      %v2643 = vsel %vm460, %v2600, %v2602
      %v2644 = vsel %vm460, %v2602, %v2604
      %v2645 = vsel %vm460, %v2606, %v2608
      %v2646 = vsel %vm460, %v2608, %v2610
      %v2647 = vsel %vm460, %v2612, %v2614
      %v2648 = vsel %vm460, %v2614, %v2616
      %v2649 = vsel %vm460, %v2618, %v2620
      %v2650 = vsel %vm460, %v2620, %v2622
      %v2651 = vsel %vm460, %v2624, %v2626
      %v2652 = vsel %vm460, %v2626, %v2628
      %v2653 = vsel %vm460, %v2630, %v2632
      %v2654 = vsel %vm460, %v2632, %v2634
      %v2655 = vsel %vm460, %v2636, %v2638
      %v2656 = vsel %vm460, %v2638, %v2640
      %v2674 = vsel %vm939, %v2585, 0
      %v2677 = vsel %vm939, %v2586, 0
      %v2680 = vsel %vm939, %v2587, 0
      %v2683 = vsel %vm939, %v2588, 0
      %v2686 = vsel %vm939, %v2589, 0
      %v2689 = vsel %vm939, %v2590, 0
      %v2692 = vsel %vm939, %v2591, 0
      %v2695 = vsel %vm939, %v2592, 0
      %2697 = vmatprep.subr.mxu0 0.0
      %2698 = vmatpush1.msra.mxu0 0.0
      %2699 = vmatprep.subr.mxu0 0.0
      %2700 = vmatpush1.msra.mxu0 0.0
      %2701 = vmatprep.subr.mxu0 0.0
      %2702 = vmatpush1.msra.mxu0 0.0
      %2703 = vmatprep.subr.mxu0 0.0
      %2704 = vmatpush1.msra.mxu0 0.0
      %2705 = vmatprep.subr.mxu0 0.0
      %2706 = vmatpush1.msra.mxu0 0.0
      %2707 = vmatprep.subr.mxu0 0.0
      %2708 = vmatpush1.msra.mxu0 0.0
      %2709 = vmatprep.subr.mxu0 0.0
      %2710 = vmatpush1.msra.mxu0 0.0
      %2711 = vmatprep.subr.mxu0 0.0
      %2712 = vmatpush1.msra.mxu0 0.0
      %2713 = vmatprep.subr.mxu0 %v2656
      %2714 = vmatpush1.msra.mxu0 %v2655
      %2715 = vmatprep.subr.mxu0 %v2654
      %2716 = vmatpush1.msra.mxu0 %v2653
      %2717 = vmatprep.subr.mxu0 %v2652
      %2718 = vmatpush1.msra.mxu0 %v2651
      %2719 = vmatprep.subr.mxu0 %v2650
      %2720 = vmatpush1.msra.mxu0 %v2649
      %2721 = vmatprep.subr.mxu0 %v2648
      %2722 = vmatpush1.msra.mxu0 %v2647
      %2723 = vmatprep.subr.mxu0 %v2646
      %2724 = vmatpush1.msra.mxu0 %v2645
      %2725 = vmatprep.subr.mxu0 %v2644
      %2726 = vmatpush1.msra.mxu0 %v2643
      %2727 = vmatprep.subr.mxu0 %v2642
      %2728 = vmatpush1.msra.mxu0 %v2641
      %2729 = vmatprep.subr.mxu0 0.0
      %2730 = vmatpush2.msra.mxu0 0.0
      %2731 = vmatprep.subr.mxu0 0.0
      %2732 = vmatpush2.msra.mxu0 0.0
      %2733 = vmatprep.subr.mxu0 0.0
      %2734 = vmatpush2.msra.mxu0 0.0
      %2735 = vmatprep.subr.mxu0 0.0
      %2736 = vmatpush2.msra.mxu0 0.0
      %2737 = vmatprep.subr.mxu0 0.0
      %2738 = vmatpush2.msra.mxu0 0.0
      %2739 = vmatprep.subr.mxu0 0.0
      %2740 = vmatpush2.msra.mxu0 0.0
      %2741 = vmatprep.subr.mxu0 0.0
      %2742 = vmatpush2.msra.mxu0 0.0
      %2743 = vmatprep.subr.mxu0 0.0
      %2744 = vmatpush2.msra.mxu0 0.0
      %2745 = vmatprep.subr.mxu0 0.0
      %2746 = vmatpush2.msra.mxu0 0.0
      %2747 = vmatprep.subr.mxu0 0.0
      %2748 = vmatpush2.msra.mxu0 0.0
      %2749 = vmatprep.subr.mxu0 0.0
      %2750 = vmatpush2.msra.mxu0 0.0
      %2751 = vmatprep.subr.mxu0 0.0
      %2752 = vmatpush2.msra.mxu0 0.0
      %2753 = vmatprep.subr.mxu0 0.0
      %2754 = vmatpush2.msra.mxu0 0.0
      %2755 = vmatprep.subr.mxu0 0.0
      %2756 = vmatpush2.msra.mxu0 0.0
      %2757 = vmatprep.subr.mxu0 0.0
      %2758 = vmatpush2.msra.mxu0 0.0
      %2759 = vmatprep.subr.mxu0 0.0
      %2760 = vmatpush2.msra.mxu0 0.0
      %2761 = vmatprep.mubr.f32.mxu0 0.0
      %2762 = vmatmul.mubr.f32.gmra.mxu0 %v2674
      %v2763 = vpop.f32.mrf.mxu0
      %v2764 = vadd.f32 0.0, %v2763
      %v2765 = vpop.f32.mrf.mxu0
      %v2766 = vadd.f32 0.0, %v2765
      %2767 = vmatprep.mubr.f32.mxu0 0.0
      %2768 = vmatmul.mubr.f32.gmra.mxu0 %v2677
      %v2769 = vpop.f32.mrf.mxu0
      %v2770 = vadd.f32 0.0, %v2769
      %v2771 = vpop.f32.mrf.mxu0
      %v2772 = vadd.f32 0.0, %v2771
      %2773 = vmatprep.mubr.f32.mxu0 0.0
      %2774 = vmatmul.mubr.f32.gmra.mxu0 %v2680
      %v2775 = vpop.f32.mrf.mxu0
      %v2776 = vadd.f32 0.0, %v2775
      %v2777 = vpop.f32.mrf.mxu0
      %v2778 = vadd.f32 0.0, %v2777
      %2779 = vmatprep.mubr.f32.mxu0 0.0
      %2780 = vmatmul.mubr.f32.gmra.mxu0 %v2683
      %v2781 = vpop.f32.mrf.mxu0
      %v2782 = vadd.f32 0.0, %v2781
      %v2783 = vpop.f32.mrf.mxu0
      %v2784 = vadd.f32 0.0, %v2783
      %2785 = vmatprep.mubr.f32.mxu0 0.0
      %2786 = vmatmul.mubr.f32.gmra.mxu0 %v2686
      %v2787 = vpop.f32.mrf.mxu0
      %v2788 = vadd.f32 0.0, %v2787
      %v2789 = vpop.f32.mrf.mxu0
      %v2790 = vadd.f32 0.0, %v2789
      %2791 = vmatprep.mubr.f32.mxu0 0.0
      %2792 = vmatmul.mubr.f32.gmra.mxu0 %v2689
      %v2793 = vpop.f32.mrf.mxu0
      %v2794 = vadd.f32 0.0, %v2793
      %v2795 = vpop.f32.mrf.mxu0
      %v2796 = vadd.f32 0.0, %v2795
      %2797 = vmatprep.mubr.f32.mxu0 0.0
      %2798 = vmatmul.mubr.f32.gmra.mxu0 %v2692
      %v2799 = vpop.f32.mrf.mxu0
      %v2800 = vadd.f32 0.0, %v2799
      %v2801 = vpop.f32.mrf.mxu0
      %v2802 = vadd.f32 0.0, %v2801
      %2803 = vmatprep.mubr.f32.mxu0 0.0
      %2804 = vmatmul.mubr.f32.gmra.mxu0 %v2695
      %v2805 = vpop.f32.mrf.mxu0
      %v2806 = vadd.f32 0.0, %v2805
      %v2807 = vpop.f32.mrf.mxu0
      %v2808 = vadd.f32 0.0, %v2807
      %2809 = vdwg.mxu0
      %v2810 = vadd.f32 %v2054, %v2764
      %v2811 = vadd.f32 %v2056, %v2766
      %v2812 = vadd.f32 %v2060, %v2770
      %v2813 = vadd.f32 %v2062, %v2772
      %v2814 = vadd.f32 %v2066, %v2776
      %v2815 = vadd.f32 %v2068, %v2778
      %v2816 = vadd.f32 %v2072, %v2782
      %v2817 = vadd.f32 %v2074, %v2784
      %v2818 = vadd.f32 %v2078, %v2788
      %v2819 = vadd.f32 %v2080, %v2790
      %v2820 = vadd.f32 %v2084, %v2794
      %v2821 = vadd.f32 %v2086, %v2796
      %v2822 = vadd.f32 %v2090, %v2800
      %v2823 = vadd.f32 %v2092, %v2802
      %v2824 = vadd.f32 %v2096, %v2806
      %v2825 = vadd.f32 %v2098, %v2808
      %v2826 = vmul.f32 %v2326, %v271
      %v2827 = vmul.f32 %v2327, %v272
      %v2828 = vmul.f32 %v2328, %v271
      %v2829 = vmul.f32 %v2329, %v272
      %v2830 = vmul.f32 %v2330, %v271
      %v2831 = vmul.f32 %v2331, %v272
      %v2832 = vmul.f32 %v2332, %v271
      %v2833 = vmul.f32 %v2333, %v272
      %v2834 = vmul.f32 %v2334, %v271
      %v2835 = vmul.f32 %v2335, %v272
      %v2836 = vmul.f32 %v2336, %v271
      %v2837 = vmul.f32 %v2337, %v272
      %v2838 = vmul.f32 %v2338, %v271
      %v2839 = vmul.f32 %v2339, %v272
      %v2840 = vmul.f32 %v2340, %v271
      %v2841 = vmul.f32 %v2341, %v272
      %v2842 = vadd.f32 %v2826, %v2568
      %v2843 = vadd.f32 %v2827, %v2569
      %v2844 = vadd.f32 %v2828, %v2570
      %v2845 = vadd.f32 %v2829, %v2571
      %v2846 = vadd.f32 %v2830, %v2572
      %v2847 = vadd.f32 %v2831, %v2573
      %v2848 = vadd.f32 %v2832, %v2574
      %v2849 = vadd.f32 %v2833, %v2575
      %v2850 = vadd.f32 %v2834, %v2576
      %v2851 = vadd.f32 %v2835, %v2577
      %v2852 = vadd.f32 %v2836, %v2578
      %v2853 = vadd.f32 %v2837, %v2579
      %v2854 = vadd.f32 %v2838, %v2580
      %v2855 = vadd.f32 %v2839, %v2581
      %v2856 = vadd.f32 %v2840, %v2582
      %v2857 = vadd.f32 %v2841, %v2583
      %v2858 = vmul.f32 %v2810, %v277
      %v2859 = vmul.f32 %v2811, %v278
      %v2860 = vmul.f32 %v2812, %v277
      %v2861 = vmul.f32 %v2813, %v278
      %v2862 = vmul.f32 %v2814, %v277
      %v2863 = vmul.f32 %v2815, %v278
      %v2864 = vmul.f32 %v2816, %v277
      %v2865 = vmul.f32 %v2817, %v278
      %v2866 = vmul.f32 %v2818, %v277
      %v2867 = vmul.f32 %v2819, %v278
      %v2868 = vmul.f32 %v2820, %v277
      %v2869 = vmul.f32 %v2821, %v278
      %v2870 = vmul.f32 %v2822, %v277
      %v2871 = vmul.f32 %v2823, %v278
      %v2872 = vmul.f32 %v2824, %v277
      %v2873 = vmul.f32 %v2825, %v278
      %v2874 = vadd.f32 %v2842, %v2858
      %v2875 = vadd.f32 %v2843, %v2859
      %v2876 = vadd.f32 %v2844, %v2860
      %v2877 = vadd.f32 %v2845, %v2861
      %v2878 = vadd.f32 %v2846, %v2862
      %v2879 = vadd.f32 %v2847, %v2863
      %v2880 = vadd.f32 %v2848, %v2864
      %v2881 = vadd.f32 %v2849, %v2865
      %v2882 = vadd.f32 %v2850, %v2866
      %v2883 = vadd.f32 %v2851, %v2867
      %v2884 = vadd.f32 %v2852, %v2868
      %v2885 = vadd.f32 %v2853, %v2869
      %v2886 = vadd.f32 %v2854, %v2870
      %v2887 = vadd.f32 %v2855, %v2871
      %v2888 = vadd.f32 %v2856, %v2872
      %v2889 = vadd.f32 %v2857, %v2873
      %v2890 = vld [vmem:[%s4] sm:$0xff]
      %v2891 = vld [vmem:[%s4 + $0x8] sm:$0xff]
      %v2892 = vld [vmem:[%s4 + $0x10] sm:$0xff]
      %v2893 = vld [vmem:[%s4 + $0x18] sm:$0xff]
      %v2894 = vld [vmem:[%s4 + $0x20] sm:$0xff]
      %v2895 = vld [vmem:[%s4 + $0x28] sm:$0xff]
      %v2896 = vld [vmem:[%s4 + $0x30] sm:$0xff]
      %v2897 = vld [vmem:[%s4 + $0x38] sm:$0xff]
      %2899 = vset.pattern.permute.xlu0 1
      %2900 = vperm.xlu0 %2899, %v2890
      %v2901 = vpop.permute.xlu0 %2900
      %2904 = vset.pattern.permute.xlu0 1
      %2905 = vperm.xlu0 %2904, %v2891
      %v2906 = vpop.permute.xlu0 %2905
      %2909 = vset.pattern.permute.xlu0 1
      %2910 = vperm.xlu0 %2909, %v2892
      %v2911 = vpop.permute.xlu0 %2910
      %2914 = vset.pattern.permute.xlu0 1
      %2915 = vperm.xlu0 %2914, %v2893
      %v2916 = vpop.permute.xlu0 %2915
      %2919 = vset.pattern.permute.xlu0 1
      %2920 = vperm.xlu0 %2919, %v2894
      %v2921 = vpop.permute.xlu0 %2920
      %2924 = vset.pattern.permute.xlu0 1
      %2925 = vperm.xlu0 %2924, %v2895
      %v2926 = vpop.permute.xlu0 %2925
      %2929 = vset.pattern.permute.xlu0 1
      %2930 = vperm.xlu0 %2929, %v2896
      %v2931 = vpop.permute.xlu0 %2930
      %2934 = vset.pattern.permute.xlu0 1
      %2935 = vperm.xlu0 %2934, %v2897
      %v2936 = vpop.permute.xlu0 %2935
      %v2938 = vadd.f32 %v2874, %v2901
      %v2939 = vadd.f32 %v2875, %v2901
      %v2940 = vadd.f32 %v2876, %v2906
      %v2941 = vadd.f32 %v2877, %v2906
      %v2942 = vadd.f32 %v2878, %v2911
      %v2943 = vadd.f32 %v2879, %v2911
      %v2944 = vadd.f32 %v2880, %v2916
      %v2945 = vadd.f32 %v2881, %v2916
      %v2946 = vadd.f32 %v2882, %v2921
      %v2947 = vadd.f32 %v2883, %v2921
      %v2948 = vadd.f32 %v2884, %v2926
      %v2949 = vadd.f32 %v2885, %v2926
      %v2950 = vadd.f32 %v2886, %v2931
      %v2951 = vadd.f32 %v2887, %v2931
      %v2952 = vadd.f32 %v2888, %v2936
      %v2953 = vadd.f32 %v2889, %v2936
      %v2954 = vmax.f32 %v2938, 0.0
      %v2955 = vmax.f32 %v2939, 0.0
      %v2956 = vmax.f32 %v2940, 0.0
      %v2957 = vmax.f32 %v2941, 0.0
      %v2958 = vmax.f32 %v2942, 0.0
      %v2959 = vmax.f32 %v2943, 0.0
      %v2960 = vmax.f32 %v2944, 0.0
      %v2961 = vmax.f32 %v2945, 0.0
      %v2962 = vmax.f32 %v2946, 0.0
      %v2963 = vmax.f32 %v2947, 0.0
      %v2964 = vmax.f32 %v2948, 0.0
      %v2965 = vmax.f32 %v2949, 0.0
      %v2966 = vmax.f32 %v2950, 0.0
      %v2967 = vmax.f32 %v2951, 0.0
      %v2968 = vmax.f32 %v2952, 0.0
      %v2969 = vmax.f32 %v2953, 0.0
      %2986 = vrot.lane.b32.xlu0 %v2954, 17
      %v2987 = vpop.permute.xlu0 %2986
      %2988 = vrot.lane.b32.xlu0 %v2955, 17
      %v2989 = vpop.permute.xlu0 %2988
      %2990 = vrot.lane.b32.xlu0 %v2956, 17
      %v2991 = vpop.permute.xlu0 %2990
      %2992 = vrot.lane.b32.xlu0 %v2957, 17
      %v2993 = vpop.permute.xlu0 %2992
      %2994 = vrot.lane.b32.xlu0 %v2958, 17
      %v2995 = vpop.permute.xlu0 %2994
      %2996 = vrot.lane.b32.xlu0 %v2959, 17
      %v2997 = vpop.permute.xlu0 %2996
      %2998 = vrot.lane.b32.xlu0 %v2960, 17
      %v2999 = vpop.permute.xlu0 %2998
      %3000 = vrot.lane.b32.xlu0 %v2961, 17
      %v3001 = vpop.permute.xlu0 %3000
      %3002 = vrot.lane.b32.xlu0 %v2962, 17
      %v3003 = vpop.permute.xlu0 %3002
      %3004 = vrot.lane.b32.xlu0 %v2963, 17
      %v3005 = vpop.permute.xlu0 %3004
      %3006 = vrot.lane.b32.xlu0 %v2964, 17
      %v3007 = vpop.permute.xlu0 %3006
      %3008 = vrot.lane.b32.xlu0 %v2965, 17
      %v3009 = vpop.permute.xlu0 %3008
      %3010 = vrot.lane.b32.xlu0 %v2966, 17
      %v3011 = vpop.permute.xlu0 %3010
      %3012 = vrot.lane.b32.xlu0 %v2967, 17
      %v3013 = vpop.permute.xlu0 %3012
      %3014 = vrot.lane.b32.xlu0 %v2968, 17
      %v3015 = vpop.permute.xlu0 %3014
      %3016 = vrot.lane.b32.xlu0 %v2969, 17
      %v3017 = vpop.permute.xlu0 %3016
      %v3018 = vsel %vm220, %v2987, %v2989
      %v3019 = vsel %vm220, %v2991, %v2993
      %v3020 = vsel %vm220, %v2995, %v2997
      %v3021 = vsel %vm220, %v2999, %v3001
      %v3022 = vsel %vm220, %v3003, %v3005
      %v3023 = vsel %vm220, %v3007, %v3009
      %v3024 = vsel %vm220, %v3011, %v3013
      %v3025 = vsel %vm220, %v3015, %v3017
      %3050 = vst.msk [vmem:[#allocation2] sm:$0xff] %vm751, %v2987
      %3051 = vst [vmem:[#allocation2 + $0x8] sm:$0xff] %v3018
      %3052 = vst.msk [vmem:[#allocation2 + $0x10] sm:$0xff] %vm220, %v2989
      %3053 = vst.msk [vmem:[#allocation2 + $0x18] sm:$0xff] %vm751, %v2991
      %3054 = vst [vmem:[#allocation2 + $0x20] sm:$0xff] %v3019
      %3055 = vst.msk [vmem:[#allocation2 + $0x28] sm:$0xff] %vm220, %v2993
      %3056 = vst.msk [vmem:[#allocation2 + $0x30] sm:$0xff] %vm751, %v2995
      %3057 = vst [vmem:[#allocation2 + $0x38] sm:$0xff] %v3020
      %3058 = vst.msk [vmem:[#allocation2 + $0x40] sm:$0xff] %vm220, %v2997
      %3059 = vst.msk [vmem:[#allocation2 + $0x48] sm:$0xff] %vm751, %v2999
      %3060 = vst [vmem:[#allocation2 + $0x50] sm:$0xff] %v3021
      %3061 = vst.msk [vmem:[#allocation2 + $0x58] sm:$0xff] %vm220, %v3001
      %3062 = vst.msk [vmem:[#allocation2 + $0x60] sm:$0xff] %vm751, %v3003
      %3063 = vst [vmem:[#allocation2 + $0x68] sm:$0xff] %v3022
      %3064 = vst.msk [vmem:[#allocation2 + $0x70] sm:$0xff] %vm220, %v3005
      %3065 = vst.msk [vmem:[#allocation2 + $0x78] sm:$0xff] %vm751, %v3007
      %3066 = vst [vmem:[#allocation2 + $0x80] sm:$0xff] %v3023
      %3067 = vst.msk [vmem:[#allocation2 + $0x88] sm:$0xff] %vm220, %v3009
      %3068 = vst.msk [vmem:[#allocation2 + $0x90] sm:$0xff] %vm751, %v3011
      %3069 = vst [vmem:[#allocation2 + $0x98] sm:$0xff] %v3024
      %3070 = vst.msk [vmem:[#allocation2 + $0xa0] sm:$0xff] %vm220, %v3013
      %3071 = vst.msk [vmem:[#allocation2 + $0xa8] sm:$0xff] %vm751, %v3015
      %3072 = vst [vmem:[#allocation2 + $0xb0] sm:$0xff] %v3025
      %3073 = vst.msk [vmem:[#allocation2 + $0xb8] sm:$0xff] %vm220, %v3017
      %s3074 = scalar_lea.vmem %s2, 576
      %v3075 = vld [vmem:[%s3074] sm:$0xff]
      %v3076 = vld [vmem:[%s3074 + $0x8] sm:$0xff]
      %v3077 = vld [vmem:[%s3074 + $0x10] sm:$0xff]
      %v3078 = vld [vmem:[%s3074 + $0x18] sm:$0xff]
      %v3079 = vld [vmem:[%s3074 + $0x20] sm:$0xff]
      %v3080 = vld [vmem:[%s3074 + $0x28] sm:$0xff]
      %v3081 = vld [vmem:[%s3074 + $0x30] sm:$0xff]
      %v3082 = vld [vmem:[%s3074 + $0x38] sm:$0xff]
      %v3083 = vld [vmem:[#allocation2] sm:$0xff]
      %v3084 = vld [vmem:[#allocation2 + $0x8] sm:$0xff]
      %v3085 = vld [vmem:[#allocation2 + $0x18] sm:$0xff]
      %v3086 = vld [vmem:[#allocation2 + $0x20] sm:$0xff]
      %v3087 = vld [vmem:[#allocation2 + $0x30] sm:$0xff]
      %v3088 = vld [vmem:[#allocation2 + $0x38] sm:$0xff]
      %v3089 = vld [vmem:[#allocation2 + $0x48] sm:$0xff]
      %v3090 = vld [vmem:[#allocation2 + $0x50] sm:$0xff]
      %v3091 = vld [vmem:[#allocation2 + $0x60] sm:$0xff]
      %v3092 = vld [vmem:[#allocation2 + $0x68] sm:$0xff]
      %v3093 = vld [vmem:[#allocation2 + $0x78] sm:$0xff]
      %v3094 = vld [vmem:[#allocation2 + $0x80] sm:$0xff]
      %v3095 = vld [vmem:[#allocation2 + $0x90] sm:$0xff]
      %v3096 = vld [vmem:[#allocation2 + $0x98] sm:$0xff]
      %v3097 = vld [vmem:[#allocation2 + $0xa8] sm:$0xff]
      %v3098 = vld [vmem:[#allocation2 + $0xb0] sm:$0xff]
      %s3099 = scalar_lea.vmem %s2, 640
      %v3100 = vld [vmem:[%s3099] sm:$0xff]
      %v3101 = vld [vmem:[%s3099 + $0x8] sm:$0xff]
      %v3102 = vld [vmem:[%s3099 + $0x10] sm:$0xff]
      %v3103 = vld [vmem:[%s3099 + $0x18] sm:$0xff]
      %v3104 = vld [vmem:[%s3099 + $0x20] sm:$0xff]
      %v3105 = vld [vmem:[%s3099 + $0x28] sm:$0xff]
      %v3106 = vld [vmem:[%s3099 + $0x30] sm:$0xff]
      %v3107 = vld [vmem:[%s3099 + $0x38] sm:$0xff]
      %v3108 = vld [vmem:[#allocation2 + $0x10] sm:$0xff]
      %v3109 = vld [vmem:[#allocation2 + $0x28] sm:$0xff]
      %v3110 = vld [vmem:[#allocation2 + $0x40] sm:$0xff]
      %v3111 = vld [vmem:[#allocation2 + $0x58] sm:$0xff]
      %v3112 = vld [vmem:[#allocation2 + $0x70] sm:$0xff]
      %v3113 = vld [vmem:[#allocation2 + $0x88] sm:$0xff]
      %v3114 = vld [vmem:[#allocation2 + $0xa0] sm:$0xff]
      %v3115 = vld [vmem:[#allocation2 + $0xb8] sm:$0xff]
      %s3116 = scalar_lea.vmem %s2, 704
      %v3117 = vld [vmem:[%s3116] sm:$0xff]
      %v3118 = vld [vmem:[%s3116 + $0x8] sm:$0xff]
      %v3119 = vld [vmem:[%s3116 + $0x10] sm:$0xff]
      %v3120 = vld [vmem:[%s3116 + $0x18] sm:$0xff]
      %v3121 = vld [vmem:[%s3116 + $0x20] sm:$0xff]
      %v3122 = vld [vmem:[%s3116 + $0x28] sm:$0xff]
      %v3123 = vld [vmem:[%s3116 + $0x30] sm:$0xff]
      %v3124 = vld [vmem:[%s3116 + $0x38] sm:$0xff]
      %s3125 = scalar_lea.vmem %s2, 768
      %v3126 = vld [vmem:[%s3125] sm:$0xff]
      %v3127 = vld [vmem:[%s3125 + $0x8] sm:$0xff]
      %v3128 = vld [vmem:[%s3125 + $0x10] sm:$0xff]
      %v3129 = vld [vmem:[%s3125 + $0x18] sm:$0xff]
      %v3130 = vld [vmem:[%s3125 + $0x20] sm:$0xff]
      %v3131 = vld [vmem:[%s3125 + $0x28] sm:$0xff]
      %v3132 = vld [vmem:[%s3125 + $0x30] sm:$0xff]
      %v3133 = vld [vmem:[%s3125 + $0x38] sm:$0xff]
      %3158 = vrot.lane.b32.xlu0 %v3083, 112
      %v3159 = vpop.permute.xlu0 %3158
      %3160 = vrot.lane.b32.xlu0 %v3084, 112
      %v3161 = vpop.permute.xlu0 %3160
      %3162 = vrot.lane.b32.xlu0 %v3108, 112
      %v3163 = vpop.permute.xlu0 %3162
      %3164 = vrot.lane.b32.xlu0 %v3085, 112
      %v3165 = vpop.permute.xlu0 %3164
      %3166 = vrot.lane.b32.xlu0 %v3086, 112
      %v3167 = vpop.permute.xlu0 %3166
      %3168 = vrot.lane.b32.xlu0 %v3109, 112
      %v3169 = vpop.permute.xlu0 %3168
      %3170 = vrot.lane.b32.xlu0 %v3087, 112
      %v3171 = vpop.permute.xlu0 %3170
      %3172 = vrot.lane.b32.xlu0 %v3088, 112
      %v3173 = vpop.permute.xlu0 %3172
      %3174 = vrot.lane.b32.xlu0 %v3110, 112
      %v3175 = vpop.permute.xlu0 %3174
      %3176 = vrot.lane.b32.xlu0 %v3089, 112
      %v3177 = vpop.permute.xlu0 %3176
      %3178 = vrot.lane.b32.xlu0 %v3090, 112
      %v3179 = vpop.permute.xlu0 %3178
      %3180 = vrot.lane.b32.xlu0 %v3111, 112
      %v3181 = vpop.permute.xlu0 %3180
      %3182 = vrot.lane.b32.xlu0 %v3091, 112
      %v3183 = vpop.permute.xlu0 %3182
      %3184 = vrot.lane.b32.xlu0 %v3092, 112
      %v3185 = vpop.permute.xlu0 %3184
      %3186 = vrot.lane.b32.xlu0 %v3112, 112
      %v3187 = vpop.permute.xlu0 %3186
      %3188 = vrot.lane.b32.xlu0 %v3093, 112
      %v3189 = vpop.permute.xlu0 %3188
      %3190 = vrot.lane.b32.xlu0 %v3094, 112
      %v3191 = vpop.permute.xlu0 %3190
      %3192 = vrot.lane.b32.xlu0 %v3113, 112
      %v3193 = vpop.permute.xlu0 %3192
      %3194 = vrot.lane.b32.xlu0 %v3095, 112
      %v3195 = vpop.permute.xlu0 %3194
      %3196 = vrot.lane.b32.xlu0 %v3096, 112
      %v3197 = vpop.permute.xlu0 %3196
      %3198 = vrot.lane.b32.xlu0 %v3114, 112
      %v3199 = vpop.permute.xlu0 %3198
      %3200 = vrot.lane.b32.xlu0 %v3097, 112
      %v3201 = vpop.permute.xlu0 %3200
      %3202 = vrot.lane.b32.xlu0 %v3098, 112
      %v3203 = vpop.permute.xlu0 %3202
      %3204 = vrot.lane.b32.xlu0 %v3115, 112
      %v3205 = vpop.permute.xlu0 %3204
      %v3206 = vsel %vm384, %v3159, %v3161
      %v3207 = vsel %vm384, %v3161, %v3163
      %v3208 = vsel %vm384, %v3165, %v3167
      %v3209 = vsel %vm384, %v3167, %v3169
      %v3210 = vsel %vm384, %v3171, %v3173
      %v3211 = vsel %vm384, %v3173, %v3175
      %v3212 = vsel %vm384, %v3177, %v3179
      %v3213 = vsel %vm384, %v3179, %v3181
      %v3214 = vsel %vm384, %v3183, %v3185
      %v3215 = vsel %vm384, %v3185, %v3187
      %v3216 = vsel %vm384, %v3189, %v3191
      %v3217 = vsel %vm384, %v3191, %v3193
      %v3218 = vsel %vm384, %v3195, %v3197
      %v3219 = vsel %vm384, %v3197, %v3199
      %v3220 = vsel %vm384, %v3201, %v3203
      %v3221 = vsel %vm384, %v3203, %v3205
      %v3239 = vsel %vm939, %v3126, 0
      %v3242 = vsel %vm939, %v3127, 0
      %v3245 = vsel %vm939, %v3128, 0
      %v3248 = vsel %vm939, %v3129, 0
      %v3251 = vsel %vm939, %v3130, 0
      %v3254 = vsel %vm939, %v3131, 0
      %v3257 = vsel %vm939, %v3132, 0
      %v3260 = vsel %vm939, %v3133, 0
      %3262 = vmatprep.subr.mxu0 0.0
      %3263 = vmatpush1.msra.mxu0 0.0
      %3264 = vmatprep.subr.mxu0 0.0
      %3265 = vmatpush1.msra.mxu0 0.0
      %3266 = vmatprep.subr.mxu0 0.0
      %3267 = vmatpush1.msra.mxu0 0.0
      %3268 = vmatprep.subr.mxu0 0.0
      %3269 = vmatpush1.msra.mxu0 0.0
      %3270 = vmatprep.subr.mxu0 0.0
      %3271 = vmatpush1.msra.mxu0 0.0
      %3272 = vmatprep.subr.mxu0 0.0
      %3273 = vmatpush1.msra.mxu0 0.0
      %3274 = vmatprep.subr.mxu0 0.0
      %3275 = vmatpush1.msra.mxu0 0.0
      %3276 = vmatprep.subr.mxu0 0.0
      %3277 = vmatpush1.msra.mxu0 0.0
      %3278 = vmatprep.subr.mxu0 %v3221
      %3279 = vmatpush1.msra.mxu0 %v3220
      %3280 = vmatprep.subr.mxu0 %v3219
      %3281 = vmatpush1.msra.mxu0 %v3218
      %3282 = vmatprep.subr.mxu0 %v3217
      %3283 = vmatpush1.msra.mxu0 %v3216
      %3284 = vmatprep.subr.mxu0 %v3215
      %3285 = vmatpush1.msra.mxu0 %v3214
      %3286 = vmatprep.subr.mxu0 %v3213
      %3287 = vmatpush1.msra.mxu0 %v3212
      %3288 = vmatprep.subr.mxu0 %v3211
      %3289 = vmatpush1.msra.mxu0 %v3210
      %3290 = vmatprep.subr.mxu0 %v3209
      %3291 = vmatpush1.msra.mxu0 %v3208
      %3292 = vmatprep.subr.mxu0 %v3207
      %3293 = vmatpush1.msra.mxu0 %v3206
      %3294 = vmatprep.subr.mxu0 0.0
      %3295 = vmatpush2.msra.mxu0 0.0
      %3296 = vmatprep.subr.mxu0 0.0
      %3297 = vmatpush2.msra.mxu0 0.0
      %3298 = vmatprep.subr.mxu0 0.0
      %3299 = vmatpush2.msra.mxu0 0.0
      %3300 = vmatprep.subr.mxu0 0.0
      %3301 = vmatpush2.msra.mxu0 0.0
      %3302 = vmatprep.subr.mxu0 0.0
      %3303 = vmatpush2.msra.mxu0 0.0
      %3304 = vmatprep.subr.mxu0 0.0
      %3305 = vmatpush2.msra.mxu0 0.0
      %3306 = vmatprep.subr.mxu0 0.0
      %3307 = vmatpush2.msra.mxu0 0.0
      %3308 = vmatprep.subr.mxu0 0.0
      %3309 = vmatpush2.msra.mxu0 0.0
      %3310 = vmatprep.subr.mxu0 0.0
      %3311 = vmatpush2.msra.mxu0 0.0
      %3312 = vmatprep.subr.mxu0 0.0
      %3313 = vmatpush2.msra.mxu0 0.0
      %3314 = vmatprep.subr.mxu0 0.0
      %3315 = vmatpush2.msra.mxu0 0.0
      %3316 = vmatprep.subr.mxu0 0.0
      %3317 = vmatpush2.msra.mxu0 0.0
      %3318 = vmatprep.subr.mxu0 0.0
      %3319 = vmatpush2.msra.mxu0 0.0
      %3320 = vmatprep.subr.mxu0 0.0
      %3321 = vmatpush2.msra.mxu0 0.0
      %3322 = vmatprep.subr.mxu0 0.0
      %3323 = vmatpush2.msra.mxu0 0.0
      %3324 = vmatprep.subr.mxu0 0.0
      %3325 = vmatpush2.msra.mxu0 0.0
      %3326 = vmatprep.mubr.f32.mxu0 0.0
      %3327 = vmatmul.mubr.f32.gmra.mxu0 %v3239
      %v3328 = vpop.f32.mrf.mxu0
      %v3329 = vadd.f32 0.0, %v3328
      %v3330 = vpop.f32.mrf.mxu0
      %v3331 = vadd.f32 0.0, %v3330
      %3332 = vmatprep.mubr.f32.mxu0 0.0
      %3333 = vmatmul.mubr.f32.gmra.mxu0 %v3242
      %v3334 = vpop.f32.mrf.mxu0
      %v3335 = vadd.f32 0.0, %v3334
      %v3336 = vpop.f32.mrf.mxu0
      %v3337 = vadd.f32 0.0, %v3336
      %3338 = vmatprep.mubr.f32.mxu0 0.0
      %3339 = vmatmul.mubr.f32.gmra.mxu0 %v3245
      %v3340 = vpop.f32.mrf.mxu0
      %v3341 = vadd.f32 0.0, %v3340
      %v3342 = vpop.f32.mrf.mxu0
      %v3343 = vadd.f32 0.0, %v3342
      %3344 = vmatprep.mubr.f32.mxu0 0.0
      %3345 = vmatmul.mubr.f32.gmra.mxu0 %v3248
      %v3346 = vpop.f32.mrf.mxu0
      %v3347 = vadd.f32 0.0, %v3346
      %v3348 = vpop.f32.mrf.mxu0
      %v3349 = vadd.f32 0.0, %v3348
      %3350 = vmatprep.mubr.f32.mxu0 0.0
      %3351 = vmatmul.mubr.f32.gmra.mxu0 %v3251
      %v3352 = vpop.f32.mrf.mxu0
      %v3353 = vadd.f32 0.0, %v3352
      %v3354 = vpop.f32.mrf.mxu0
      %v3355 = vadd.f32 0.0, %v3354
      %3356 = vmatprep.mubr.f32.mxu0 0.0
      %3357 = vmatmul.mubr.f32.gmra.mxu0 %v3254
      %v3358 = vpop.f32.mrf.mxu0
      %v3359 = vadd.f32 0.0, %v3358
      %v3360 = vpop.f32.mrf.mxu0
      %v3361 = vadd.f32 0.0, %v3360
      %3362 = vmatprep.mubr.f32.mxu0 0.0
      %3363 = vmatmul.mubr.f32.gmra.mxu0 %v3257
      %v3364 = vpop.f32.mrf.mxu0
      %v3365 = vadd.f32 0.0, %v3364
      %v3366 = vpop.f32.mrf.mxu0
      %v3367 = vadd.f32 0.0, %v3366
      %3368 = vmatprep.mubr.f32.mxu0 0.0
      %3369 = vmatmul.mubr.f32.gmra.mxu0 %v3260
      %v3370 = vpop.f32.mrf.mxu0
      %v3371 = vadd.f32 0.0, %v3370
      %v3372 = vpop.f32.mrf.mxu0
      %v3373 = vadd.f32 0.0, %v3372
      %3374 = vdwg.mxu0
      %v3376 = vsel %vm939, %v3075, 0
      %v3379 = vsel %vm939, %v3076, 0
      %v3382 = vsel %vm939, %v3077, 0
      %v3385 = vsel %vm939, %v3078, 0
      %v3388 = vsel %vm939, %v3079, 0
      %v3391 = vsel %vm939, %v3080, 0
      %v3394 = vsel %vm939, %v3081, 0
      %v3397 = vsel %vm939, %v3082, 0
      %3399 = vmatprep.subr.mxu0 0.0
      %3400 = vmatpush1.msra.mxu0 0.0
      %3401 = vmatprep.subr.mxu0 0.0
      %3402 = vmatpush1.msra.mxu0 0.0
      %3403 = vmatprep.subr.mxu0 0.0
      %3404 = vmatpush1.msra.mxu0 0.0
      %3405 = vmatprep.subr.mxu0 0.0
      %3406 = vmatpush1.msra.mxu0 0.0
      %3407 = vmatprep.subr.mxu0 0.0
      %3408 = vmatpush1.msra.mxu0 0.0
      %3409 = vmatprep.subr.mxu0 0.0
      %3410 = vmatpush1.msra.mxu0 0.0
      %3411 = vmatprep.subr.mxu0 0.0
      %3412 = vmatpush1.msra.mxu0 0.0
      %3413 = vmatprep.subr.mxu0 0.0
      %3414 = vmatpush1.msra.mxu0 0.0
      %3415 = vmatprep.subr.mxu0 %v3098
      %3416 = vmatpush1.msra.mxu0 %v3097
      %3417 = vmatprep.subr.mxu0 %v3096
      %3418 = vmatpush1.msra.mxu0 %v3095
      %3419 = vmatprep.subr.mxu0 %v3094
      %3420 = vmatpush1.msra.mxu0 %v3093
      %3421 = vmatprep.subr.mxu0 %v3092
      %3422 = vmatpush1.msra.mxu0 %v3091
      %3423 = vmatprep.subr.mxu0 %v3090
      %3424 = vmatpush1.msra.mxu0 %v3089
      %3425 = vmatprep.subr.mxu0 %v3088
      %3426 = vmatpush1.msra.mxu0 %v3087
      %3427 = vmatprep.subr.mxu0 %v3086
      %3428 = vmatpush1.msra.mxu0 %v3085
      %3429 = vmatprep.subr.mxu0 %v3084
      %3430 = vmatpush1.msra.mxu0 %v3083
      %3431 = vmatprep.subr.mxu0 0.0
      %3432 = vmatpush2.msra.mxu0 0.0
      %3433 = vmatprep.subr.mxu0 0.0
      %3434 = vmatpush2.msra.mxu0 0.0
      %3435 = vmatprep.subr.mxu0 0.0
      %3436 = vmatpush2.msra.mxu0 0.0
      %3437 = vmatprep.subr.mxu0 0.0
      %3438 = vmatpush2.msra.mxu0 0.0
      %3439 = vmatprep.subr.mxu0 0.0
      %3440 = vmatpush2.msra.mxu0 0.0
      %3441 = vmatprep.subr.mxu0 0.0
      %3442 = vmatpush2.msra.mxu0 0.0
      %3443 = vmatprep.subr.mxu0 0.0
      %3444 = vmatpush2.msra.mxu0 0.0
      %3445 = vmatprep.subr.mxu0 0.0
      %3446 = vmatpush2.msra.mxu0 0.0
      %3447 = vmatprep.subr.mxu0 0.0
      %3448 = vmatpush2.msra.mxu0 0.0
      %3449 = vmatprep.subr.mxu0 0.0
      %3450 = vmatpush2.msra.mxu0 0.0
      %3451 = vmatprep.subr.mxu0 0.0
      %3452 = vmatpush2.msra.mxu0 0.0
      %3453 = vmatprep.subr.mxu0 0.0
      %3454 = vmatpush2.msra.mxu0 0.0
      %3455 = vmatprep.subr.mxu0 0.0
      %3456 = vmatpush2.msra.mxu0 0.0
      %3457 = vmatprep.subr.mxu0 0.0
      %3458 = vmatpush2.msra.mxu0 0.0
      %3459 = vmatprep.subr.mxu0 0.0
      %3460 = vmatpush2.msra.mxu0 0.0
      %3461 = vmatprep.subr.mxu0 0.0
      %3462 = vmatpush2.msra.mxu0 0.0
      %3463 = vmatprep.mubr.f32.mxu0 0.0
      %3464 = vmatmul.mubr.f32.gmra.mxu0 %v3376
      %v3465 = vpop.f32.mrf.mxu0
      %v3466 = vadd.f32 %v3329, %v3465
      %v3467 = vpop.f32.mrf.mxu0
      %v3468 = vadd.f32 %v3331, %v3467
      %3469 = vmatprep.mubr.f32.mxu0 0.0
      %3470 = vmatmul.mubr.f32.gmra.mxu0 %v3379
      %v3471 = vpop.f32.mrf.mxu0
      %v3472 = vadd.f32 %v3335, %v3471
      %v3473 = vpop.f32.mrf.mxu0
      %v3474 = vadd.f32 %v3337, %v3473
      %3475 = vmatprep.mubr.f32.mxu0 0.0
      %3476 = vmatmul.mubr.f32.gmra.mxu0 %v3382
      %v3477 = vpop.f32.mrf.mxu0
      %v3478 = vadd.f32 %v3341, %v3477
      %v3479 = vpop.f32.mrf.mxu0
      %v3480 = vadd.f32 %v3343, %v3479
      %3481 = vmatprep.mubr.f32.mxu0 0.0
      %3482 = vmatmul.mubr.f32.gmra.mxu0 %v3385
      %v3483 = vpop.f32.mrf.mxu0
      %v3484 = vadd.f32 %v3347, %v3483
      %v3485 = vpop.f32.mrf.mxu0
      %v3486 = vadd.f32 %v3349, %v3485
      %3487 = vmatprep.mubr.f32.mxu0 0.0
      %3488 = vmatmul.mubr.f32.gmra.mxu0 %v3388
      %v3489 = vpop.f32.mrf.mxu0
      %v3490 = vadd.f32 %v3353, %v3489
      %v3491 = vpop.f32.mrf.mxu0
      %v3492 = vadd.f32 %v3355, %v3491
      %3493 = vmatprep.mubr.f32.mxu0 0.0
      %3494 = vmatmul.mubr.f32.gmra.mxu0 %v3391
      %v3495 = vpop.f32.mrf.mxu0
      %v3496 = vadd.f32 %v3359, %v3495
      %v3497 = vpop.f32.mrf.mxu0
      %v3498 = vadd.f32 %v3361, %v3497
      %3499 = vmatprep.mubr.f32.mxu0 0.0
      %3500 = vmatmul.mubr.f32.gmra.mxu0 %v3394
      %v3501 = vpop.f32.mrf.mxu0
      %v3502 = vadd.f32 %v3365, %v3501
      %v3503 = vpop.f32.mrf.mxu0
      %v3504 = vadd.f32 %v3367, %v3503
      %3505 = vmatprep.mubr.f32.mxu0 0.0
      %3506 = vmatmul.mubr.f32.gmra.mxu0 %v3397
      %v3507 = vpop.f32.mrf.mxu0
      %v3508 = vadd.f32 %v3371, %v3507
      %v3509 = vpop.f32.mrf.mxu0
      %v3510 = vadd.f32 %v3373, %v3509
      %3511 = vdwg.mxu0
      %s3512 = scalar_lea.vmem %s2, 832
      %v3513 = vld [vmem:[%s3512] sm:$0xff]
      %v3514 = vld [vmem:[%s3512 + $0x8] sm:$0xff]
      %v3515 = vld [vmem:[%s3512 + $0x10] sm:$0xff]
      %v3516 = vld [vmem:[%s3512 + $0x18] sm:$0xff]
      %v3517 = vld [vmem:[%s3512 + $0x20] sm:$0xff]
      %v3518 = vld [vmem:[%s3512 + $0x28] sm:$0xff]
      %v3519 = vld [vmem:[%s3512 + $0x30] sm:$0xff]
      %v3520 = vld [vmem:[%s3512 + $0x38] sm:$0xff]
      %3521 = vrot.lane.b32.xlu0 %v3083, 111
      %v3522 = vpop.permute.xlu0 %3521
      %3523 = vrot.lane.b32.xlu0 %v3084, 111
      %v3524 = vpop.permute.xlu0 %3523
      %3525 = vrot.lane.b32.xlu0 %v3108, 111
      %v3526 = vpop.permute.xlu0 %3525
      %3527 = vrot.lane.b32.xlu0 %v3085, 111
      %v3528 = vpop.permute.xlu0 %3527
      %3529 = vrot.lane.b32.xlu0 %v3086, 111
      %v3530 = vpop.permute.xlu0 %3529
      %3531 = vrot.lane.b32.xlu0 %v3109, 111
      %v3532 = vpop.permute.xlu0 %3531
      %3533 = vrot.lane.b32.xlu0 %v3087, 111
      %v3534 = vpop.permute.xlu0 %3533
      %3535 = vrot.lane.b32.xlu0 %v3088, 111
      %v3536 = vpop.permute.xlu0 %3535
      %3537 = vrot.lane.b32.xlu0 %v3110, 111
      %v3538 = vpop.permute.xlu0 %3537
      %3539 = vrot.lane.b32.xlu0 %v3089, 111
      %v3540 = vpop.permute.xlu0 %3539
      %3541 = vrot.lane.b32.xlu0 %v3090, 111
      %v3542 = vpop.permute.xlu0 %3541
      %3543 = vrot.lane.b32.xlu0 %v3111, 111
      %v3544 = vpop.permute.xlu0 %3543
      %3545 = vrot.lane.b32.xlu0 %v3091, 111
      %v3546 = vpop.permute.xlu0 %3545
      %3547 = vrot.lane.b32.xlu0 %v3092, 111
      %v3548 = vpop.permute.xlu0 %3547
      %3549 = vrot.lane.b32.xlu0 %v3112, 111
      %v3550 = vpop.permute.xlu0 %3549
      %3551 = vrot.lane.b32.xlu0 %v3093, 111
      %v3552 = vpop.permute.xlu0 %3551
      %3553 = vrot.lane.b32.xlu0 %v3094, 111
      %v3554 = vpop.permute.xlu0 %3553
      %3555 = vrot.lane.b32.xlu0 %v3113, 111
      %v3556 = vpop.permute.xlu0 %3555
      %3557 = vrot.lane.b32.xlu0 %v3095, 111
      %v3558 = vpop.permute.xlu0 %3557
      %3559 = vrot.lane.b32.xlu0 %v3096, 111
      %v3560 = vpop.permute.xlu0 %3559
      %3561 = vrot.lane.b32.xlu0 %v3114, 111
      %v3562 = vpop.permute.xlu0 %3561
      %3563 = vrot.lane.b32.xlu0 %v3097, 111
      %v3564 = vpop.permute.xlu0 %3563
      %3565 = vrot.lane.b32.xlu0 %v3098, 111
      %v3566 = vpop.permute.xlu0 %3565
      %3567 = vrot.lane.b32.xlu0 %v3115, 111
      %v3568 = vpop.permute.xlu0 %3567
      %v3569 = vsel %vm395, %v3522, %v3524
      %v3570 = vsel %vm395, %v3524, %v3526
      %v3571 = vsel %vm395, %v3528, %v3530
      %v3572 = vsel %vm395, %v3530, %v3532
      %v3573 = vsel %vm395, %v3534, %v3536
      %v3574 = vsel %vm395, %v3536, %v3538
      %v3575 = vsel %vm395, %v3540, %v3542
      %v3576 = vsel %vm395, %v3542, %v3544
      %v3577 = vsel %vm395, %v3546, %v3548
      %v3578 = vsel %vm395, %v3548, %v3550
      %v3579 = vsel %vm395, %v3552, %v3554
      %v3580 = vsel %vm395, %v3554, %v3556
      %v3581 = vsel %vm395, %v3558, %v3560
      %v3582 = vsel %vm395, %v3560, %v3562
      %v3583 = vsel %vm395, %v3564, %v3566
      %v3584 = vsel %vm395, %v3566, %v3568
      %v3602 = vsel %vm939, %v3513, 0
      %v3605 = vsel %vm939, %v3514, 0
      %v3608 = vsel %vm939, %v3515, 0
      %v3611 = vsel %vm939, %v3516, 0
      %v3614 = vsel %vm939, %v3517, 0
      %v3617 = vsel %vm939, %v3518, 0
      %v3620 = vsel %vm939, %v3519, 0
      %v3623 = vsel %vm939, %v3520, 0
      %3625 = vmatprep.subr.mxu0 0.0
      %3626 = vmatpush1.msra.mxu0 0.0
      %3627 = vmatprep.subr.mxu0 0.0
      %3628 = vmatpush1.msra.mxu0 0.0
      %3629 = vmatprep.subr.mxu0 0.0
      %3630 = vmatpush1.msra.mxu0 0.0
      %3631 = vmatprep.subr.mxu0 0.0
      %3632 = vmatpush1.msra.mxu0 0.0
      %3633 = vmatprep.subr.mxu0 0.0
      %3634 = vmatpush1.msra.mxu0 0.0
      %3635 = vmatprep.subr.mxu0 0.0
      %3636 = vmatpush1.msra.mxu0 0.0
      %3637 = vmatprep.subr.mxu0 0.0
      %3638 = vmatpush1.msra.mxu0 0.0
      %3639 = vmatprep.subr.mxu0 0.0
      %3640 = vmatpush1.msra.mxu0 0.0
      %3641 = vmatprep.subr.mxu0 %v3584
      %3642 = vmatpush1.msra.mxu0 %v3583
      %3643 = vmatprep.subr.mxu0 %v3582
      %3644 = vmatpush1.msra.mxu0 %v3581
      %3645 = vmatprep.subr.mxu0 %v3580
      %3646 = vmatpush1.msra.mxu0 %v3579
      %3647 = vmatprep.subr.mxu0 %v3578
      %3648 = vmatpush1.msra.mxu0 %v3577
      %3649 = vmatprep.subr.mxu0 %v3576
      %3650 = vmatpush1.msra.mxu0 %v3575
      %3651 = vmatprep.subr.mxu0 %v3574
      %3652 = vmatpush1.msra.mxu0 %v3573
      %3653 = vmatprep.subr.mxu0 %v3572
      %3654 = vmatpush1.msra.mxu0 %v3571
      %3655 = vmatprep.subr.mxu0 %v3570
      %3656 = vmatpush1.msra.mxu0 %v3569
      %3657 = vmatprep.subr.mxu0 0.0
      %3658 = vmatpush2.msra.mxu0 0.0
      %3659 = vmatprep.subr.mxu0 0.0
      %3660 = vmatpush2.msra.mxu0 0.0
      %3661 = vmatprep.subr.mxu0 0.0
      %3662 = vmatpush2.msra.mxu0 0.0
      %3663 = vmatprep.subr.mxu0 0.0
      %3664 = vmatpush2.msra.mxu0 0.0
      %3665 = vmatprep.subr.mxu0 0.0
      %3666 = vmatpush2.msra.mxu0 0.0
      %3667 = vmatprep.subr.mxu0 0.0
      %3668 = vmatpush2.msra.mxu0 0.0
      %3669 = vmatprep.subr.mxu0 0.0
      %3670 = vmatpush2.msra.mxu0 0.0
      %3671 = vmatprep.subr.mxu0 0.0
      %3672 = vmatpush2.msra.mxu0 0.0
      %3673 = vmatprep.subr.mxu0 0.0
      %3674 = vmatpush2.msra.mxu0 0.0
      %3675 = vmatprep.subr.mxu0 0.0
      %3676 = vmatpush2.msra.mxu0 0.0
      %3677 = vmatprep.subr.mxu0 0.0
      %3678 = vmatpush2.msra.mxu0 0.0
      %3679 = vmatprep.subr.mxu0 0.0
      %3680 = vmatpush2.msra.mxu0 0.0
      %3681 = vmatprep.subr.mxu0 0.0
      %3682 = vmatpush2.msra.mxu0 0.0
      %3683 = vmatprep.subr.mxu0 0.0
      %3684 = vmatpush2.msra.mxu0 0.0
      %3685 = vmatprep.subr.mxu0 0.0
      %3686 = vmatpush2.msra.mxu0 0.0
      %3687 = vmatprep.subr.mxu0 0.0
      %3688 = vmatpush2.msra.mxu0 0.0
      %3689 = vmatprep.mubr.f32.mxu0 0.0
      %3690 = vmatmul.mubr.f32.gmra.mxu0 %v3602
      %v3691 = vpop.f32.mrf.mxu0
      %v3692 = vadd.f32 0.0, %v3691
      %v3693 = vpop.f32.mrf.mxu0
      %v3694 = vadd.f32 0.0, %v3693
      %3695 = vmatprep.mubr.f32.mxu0 0.0
      %3696 = vmatmul.mubr.f32.gmra.mxu0 %v3605
      %v3697 = vpop.f32.mrf.mxu0
      %v3698 = vadd.f32 0.0, %v3697
      %v3699 = vpop.f32.mrf.mxu0
      %v3700 = vadd.f32 0.0, %v3699
      %3701 = vmatprep.mubr.f32.mxu0 0.0
      %3702 = vmatmul.mubr.f32.gmra.mxu0 %v3608
      %v3703 = vpop.f32.mrf.mxu0
      %v3704 = vadd.f32 0.0, %v3703
      %v3705 = vpop.f32.mrf.mxu0
      %v3706 = vadd.f32 0.0, %v3705
      %3707 = vmatprep.mubr.f32.mxu0 0.0
      %3708 = vmatmul.mubr.f32.gmra.mxu0 %v3611
      %v3709 = vpop.f32.mrf.mxu0
      %v3710 = vadd.f32 0.0, %v3709
      %v3711 = vpop.f32.mrf.mxu0
      %v3712 = vadd.f32 0.0, %v3711
      %3713 = vmatprep.mubr.f32.mxu0 0.0
      %3714 = vmatmul.mubr.f32.gmra.mxu0 %v3614
      %v3715 = vpop.f32.mrf.mxu0
      %v3716 = vadd.f32 0.0, %v3715
      %v3717 = vpop.f32.mrf.mxu0
      %v3718 = vadd.f32 0.0, %v3717
      %3719 = vmatprep.mubr.f32.mxu0 0.0
      %3720 = vmatmul.mubr.f32.gmra.mxu0 %v3617
      %v3721 = vpop.f32.mrf.mxu0
      %v3722 = vadd.f32 0.0, %v3721
      %v3723 = vpop.f32.mrf.mxu0
      %v3724 = vadd.f32 0.0, %v3723
      %3725 = vmatprep.mubr.f32.mxu0 0.0
      %3726 = vmatmul.mubr.f32.gmra.mxu0 %v3620
      %v3727 = vpop.f32.mrf.mxu0
      %v3728 = vadd.f32 0.0, %v3727
      %v3729 = vpop.f32.mrf.mxu0
      %v3730 = vadd.f32 0.0, %v3729
      %3731 = vmatprep.mubr.f32.mxu0 0.0
      %3732 = vmatmul.mubr.f32.gmra.mxu0 %v3623
      %v3733 = vpop.f32.mrf.mxu0
      %v3734 = vadd.f32 0.0, %v3733
      %v3735 = vpop.f32.mrf.mxu0
      %v3736 = vadd.f32 0.0, %v3735
      %3737 = vdwg.mxu0
      %3738 = vrot.lane.b32.xlu0 %v3083, 127
      %v3739 = vpop.permute.xlu0 %3738
      %3740 = vrot.lane.b32.xlu0 %v3084, 127
      %v3741 = vpop.permute.xlu0 %3740
      %3742 = vrot.lane.b32.xlu0 %v3108, 127
      %v3743 = vpop.permute.xlu0 %3742
      %3744 = vrot.lane.b32.xlu0 %v3085, 127
      %v3745 = vpop.permute.xlu0 %3744
      %3746 = vrot.lane.b32.xlu0 %v3086, 127
      %v3747 = vpop.permute.xlu0 %3746
      %3748 = vrot.lane.b32.xlu0 %v3109, 127
      %v3749 = vpop.permute.xlu0 %3748
      %3750 = vrot.lane.b32.xlu0 %v3087, 127
      %v3751 = vpop.permute.xlu0 %3750
      %3752 = vrot.lane.b32.xlu0 %v3088, 127
      %v3753 = vpop.permute.xlu0 %3752
      %3754 = vrot.lane.b32.xlu0 %v3110, 127
      %v3755 = vpop.permute.xlu0 %3754
      %3756 = vrot.lane.b32.xlu0 %v3089, 127
      %v3757 = vpop.permute.xlu0 %3756
      %3758 = vrot.lane.b32.xlu0 %v3090, 127
      %v3759 = vpop.permute.xlu0 %3758
      %3760 = vrot.lane.b32.xlu0 %v3111, 127
      %v3761 = vpop.permute.xlu0 %3760
      %3762 = vrot.lane.b32.xlu0 %v3091, 127
      %v3763 = vpop.permute.xlu0 %3762
      %3764 = vrot.lane.b32.xlu0 %v3092, 127
      %v3765 = vpop.permute.xlu0 %3764
      %3766 = vrot.lane.b32.xlu0 %v3112, 127
      %v3767 = vpop.permute.xlu0 %3766
      %3768 = vrot.lane.b32.xlu0 %v3093, 127
      %v3769 = vpop.permute.xlu0 %3768
      %3770 = vrot.lane.b32.xlu0 %v3094, 127
      %v3771 = vpop.permute.xlu0 %3770
      %3772 = vrot.lane.b32.xlu0 %v3113, 127
      %v3773 = vpop.permute.xlu0 %3772
      %3774 = vrot.lane.b32.xlu0 %v3095, 127
      %v3775 = vpop.permute.xlu0 %3774
      %3776 = vrot.lane.b32.xlu0 %v3096, 127
      %v3777 = vpop.permute.xlu0 %3776
      %3778 = vrot.lane.b32.xlu0 %v3114, 127
      %v3779 = vpop.permute.xlu0 %3778
      %3780 = vrot.lane.b32.xlu0 %v3097, 127
      %v3781 = vpop.permute.xlu0 %3780
      %3782 = vrot.lane.b32.xlu0 %v3098, 127
      %v3783 = vpop.permute.xlu0 %3782
      %3784 = vrot.lane.b32.xlu0 %v3115, 127
      %v3785 = vpop.permute.xlu0 %3784
      %v3786 = vsel %vm331, %v3739, %v3741
      %v3787 = vsel %vm331, %v3741, %v3743
      %v3788 = vsel %vm331, %v3745, %v3747
      %v3789 = vsel %vm331, %v3747, %v3749
      %v3790 = vsel %vm331, %v3751, %v3753
      %v3791 = vsel %vm331, %v3753, %v3755
      %v3792 = vsel %vm331, %v3757, %v3759
      %v3793 = vsel %vm331, %v3759, %v3761
      %v3794 = vsel %vm331, %v3763, %v3765
      %v3795 = vsel %vm331, %v3765, %v3767
      %v3796 = vsel %vm331, %v3769, %v3771
      %v3797 = vsel %vm331, %v3771, %v3773
      %v3798 = vsel %vm331, %v3775, %v3777
      %v3799 = vsel %vm331, %v3777, %v3779
      %v3800 = vsel %vm331, %v3781, %v3783
      %v3801 = vsel %vm331, %v3783, %v3785
      %v3819 = vsel %vm939, %v3100, 0
      %v3822 = vsel %vm939, %v3101, 0
      %v3825 = vsel %vm939, %v3102, 0
      %v3828 = vsel %vm939, %v3103, 0
      %v3831 = vsel %vm939, %v3104, 0
      %v3834 = vsel %vm939, %v3105, 0
      %v3837 = vsel %vm939, %v3106, 0
      %v3840 = vsel %vm939, %v3107, 0
      %3842 = vmatprep.subr.mxu0 0.0
      %3843 = vmatpush1.msra.mxu0 0.0
      %3844 = vmatprep.subr.mxu0 0.0
      %3845 = vmatpush1.msra.mxu0 0.0
      %3846 = vmatprep.subr.mxu0 0.0
      %3847 = vmatpush1.msra.mxu0 0.0
      %3848 = vmatprep.subr.mxu0 0.0
      %3849 = vmatpush1.msra.mxu0 0.0
      %3850 = vmatprep.subr.mxu0 0.0
      %3851 = vmatpush1.msra.mxu0 0.0
      %3852 = vmatprep.subr.mxu0 0.0
      %3853 = vmatpush1.msra.mxu0 0.0
      %3854 = vmatprep.subr.mxu0 0.0
      %3855 = vmatpush1.msra.mxu0 0.0
      %3856 = vmatprep.subr.mxu0 0.0
      %3857 = vmatpush1.msra.mxu0 0.0
      %3858 = vmatprep.subr.mxu0 %v3801
      %3859 = vmatpush1.msra.mxu0 %v3800
      %3860 = vmatprep.subr.mxu0 %v3799
      %3861 = vmatpush1.msra.mxu0 %v3798
      %3862 = vmatprep.subr.mxu0 %v3797
      %3863 = vmatpush1.msra.mxu0 %v3796
      %3864 = vmatprep.subr.mxu0 %v3795
      %3865 = vmatpush1.msra.mxu0 %v3794
      %3866 = vmatprep.subr.mxu0 %v3793
      %3867 = vmatpush1.msra.mxu0 %v3792
      %3868 = vmatprep.subr.mxu0 %v3791
      %3869 = vmatpush1.msra.mxu0 %v3790
      %3870 = vmatprep.subr.mxu0 %v3789
      %3871 = vmatpush1.msra.mxu0 %v3788
      %3872 = vmatprep.subr.mxu0 %v3787
      %3873 = vmatpush1.msra.mxu0 %v3786
      %3874 = vmatprep.subr.mxu0 0.0
      %3875 = vmatpush2.msra.mxu0 0.0
      %3876 = vmatprep.subr.mxu0 0.0
      %3877 = vmatpush2.msra.mxu0 0.0
      %3878 = vmatprep.subr.mxu0 0.0
      %3879 = vmatpush2.msra.mxu0 0.0
      %3880 = vmatprep.subr.mxu0 0.0
      %3881 = vmatpush2.msra.mxu0 0.0
      %3882 = vmatprep.subr.mxu0 0.0
      %3883 = vmatpush2.msra.mxu0 0.0
      %3884 = vmatprep.subr.mxu0 0.0
      %3885 = vmatpush2.msra.mxu0 0.0
      %3886 = vmatprep.subr.mxu0 0.0
      %3887 = vmatpush2.msra.mxu0 0.0
      %3888 = vmatprep.subr.mxu0 0.0
      %3889 = vmatpush2.msra.mxu0 0.0
      %3890 = vmatprep.subr.mxu0 0.0
      %3891 = vmatpush2.msra.mxu0 0.0
      %3892 = vmatprep.subr.mxu0 0.0
      %3893 = vmatpush2.msra.mxu0 0.0
      %3894 = vmatprep.subr.mxu0 0.0
      %3895 = vmatpush2.msra.mxu0 0.0
      %3896 = vmatprep.subr.mxu0 0.0
      %3897 = vmatpush2.msra.mxu0 0.0
      %3898 = vmatprep.subr.mxu0 0.0
      %3899 = vmatpush2.msra.mxu0 0.0
      %3900 = vmatprep.subr.mxu0 0.0
      %3901 = vmatpush2.msra.mxu0 0.0
      %3902 = vmatprep.subr.mxu0 0.0
      %3903 = vmatpush2.msra.mxu0 0.0
      %3904 = vmatprep.subr.mxu0 0.0
      %3905 = vmatpush2.msra.mxu0 0.0
      %3906 = vmatprep.mubr.f32.mxu0 0.0
      %3907 = vmatmul.mubr.f32.gmra.mxu0 %v3819
      %v3908 = vpop.f32.mrf.mxu0
      %v3909 = vadd.f32 %v3692, %v3908
      %v3910 = vpop.f32.mrf.mxu0
      %v3911 = vadd.f32 %v3694, %v3910
      %3912 = vmatprep.mubr.f32.mxu0 0.0
      %3913 = vmatmul.mubr.f32.gmra.mxu0 %v3822
      %v3914 = vpop.f32.mrf.mxu0
      %v3915 = vadd.f32 %v3698, %v3914
      %v3916 = vpop.f32.mrf.mxu0
      %v3917 = vadd.f32 %v3700, %v3916
      %3918 = vmatprep.mubr.f32.mxu0 0.0
      %3919 = vmatmul.mubr.f32.gmra.mxu0 %v3825
      %v3920 = vpop.f32.mrf.mxu0
      %v3921 = vadd.f32 %v3704, %v3920
      %v3922 = vpop.f32.mrf.mxu0
      %v3923 = vadd.f32 %v3706, %v3922
      %3924 = vmatprep.mubr.f32.mxu0 0.0
      %3925 = vmatmul.mubr.f32.gmra.mxu0 %v3828
      %v3926 = vpop.f32.mrf.mxu0
      %v3927 = vadd.f32 %v3710, %v3926
      %v3928 = vpop.f32.mrf.mxu0
      %v3929 = vadd.f32 %v3712, %v3928
      %3930 = vmatprep.mubr.f32.mxu0 0.0
      %3931 = vmatmul.mubr.f32.gmra.mxu0 %v3831
      %v3932 = vpop.f32.mrf.mxu0
      %v3933 = vadd.f32 %v3716, %v3932
      %v3934 = vpop.f32.mrf.mxu0
      %v3935 = vadd.f32 %v3718, %v3934
      %3936 = vmatprep.mubr.f32.mxu0 0.0
      %3937 = vmatmul.mubr.f32.gmra.mxu0 %v3834
      %v3938 = vpop.f32.mrf.mxu0
      %v3939 = vadd.f32 %v3722, %v3938
      %v3940 = vpop.f32.mrf.mxu0
      %v3941 = vadd.f32 %v3724, %v3940
      %3942 = vmatprep.mubr.f32.mxu0 0.0
      %3943 = vmatmul.mubr.f32.gmra.mxu0 %v3837
      %v3944 = vpop.f32.mrf.mxu0
      %v3945 = vadd.f32 %v3728, %v3944
      %v3946 = vpop.f32.mrf.mxu0
      %v3947 = vadd.f32 %v3730, %v3946
      %3948 = vmatprep.mubr.f32.mxu0 0.0
      %3949 = vmatmul.mubr.f32.gmra.mxu0 %v3840
      %v3950 = vpop.f32.mrf.mxu0
      %v3951 = vadd.f32 %v3734, %v3950
      %v3952 = vpop.f32.mrf.mxu0
      %v3953 = vadd.f32 %v3736, %v3952
      %3954 = vdwg.mxu0
      %s3955 = scalar_lea.vmem %s2, 896
      %v3956 = vld [vmem:[%s3955] sm:$0xff]
      %v3957 = vld [vmem:[%s3955 + $0x8] sm:$0xff]
      %v3958 = vld [vmem:[%s3955 + $0x10] sm:$0xff]
      %v3959 = vld [vmem:[%s3955 + $0x18] sm:$0xff]
      %v3960 = vld [vmem:[%s3955 + $0x20] sm:$0xff]
      %v3961 = vld [vmem:[%s3955 + $0x28] sm:$0xff]
      %v3962 = vld [vmem:[%s3955 + $0x30] sm:$0xff]
      %v3963 = vld [vmem:[%s3955 + $0x38] sm:$0xff]
      %3964 = vrot.lane.b32.xlu0 %v3083, 110
      %v3965 = vpop.permute.xlu0 %3964
      %3966 = vrot.lane.b32.xlu0 %v3084, 110
      %v3967 = vpop.permute.xlu0 %3966
      %3968 = vrot.lane.b32.xlu0 %v3108, 110
      %v3969 = vpop.permute.xlu0 %3968
      %3970 = vrot.lane.b32.xlu0 %v3085, 110
      %v3971 = vpop.permute.xlu0 %3970
      %3972 = vrot.lane.b32.xlu0 %v3086, 110
      %v3973 = vpop.permute.xlu0 %3972
      %3974 = vrot.lane.b32.xlu0 %v3109, 110
      %v3975 = vpop.permute.xlu0 %3974
      %3976 = vrot.lane.b32.xlu0 %v3087, 110
      %v3977 = vpop.permute.xlu0 %3976
      %3978 = vrot.lane.b32.xlu0 %v3088, 110
      %v3979 = vpop.permute.xlu0 %3978
      %3980 = vrot.lane.b32.xlu0 %v3110, 110
      %v3981 = vpop.permute.xlu0 %3980
      %3982 = vrot.lane.b32.xlu0 %v3089, 110
      %v3983 = vpop.permute.xlu0 %3982
      %3984 = vrot.lane.b32.xlu0 %v3090, 110
      %v3985 = vpop.permute.xlu0 %3984
      %3986 = vrot.lane.b32.xlu0 %v3111, 110
      %v3987 = vpop.permute.xlu0 %3986
      %3988 = vrot.lane.b32.xlu0 %v3091, 110
      %v3989 = vpop.permute.xlu0 %3988
      %3990 = vrot.lane.b32.xlu0 %v3092, 110
      %v3991 = vpop.permute.xlu0 %3990
      %3992 = vrot.lane.b32.xlu0 %v3112, 110
      %v3993 = vpop.permute.xlu0 %3992
      %3994 = vrot.lane.b32.xlu0 %v3093, 110
      %v3995 = vpop.permute.xlu0 %3994
      %3996 = vrot.lane.b32.xlu0 %v3094, 110
      %v3997 = vpop.permute.xlu0 %3996
      %3998 = vrot.lane.b32.xlu0 %v3113, 110
      %v3999 = vpop.permute.xlu0 %3998
      %4000 = vrot.lane.b32.xlu0 %v3095, 110
      %v4001 = vpop.permute.xlu0 %4000
      %4002 = vrot.lane.b32.xlu0 %v3096, 110
      %v4003 = vpop.permute.xlu0 %4002
      %4004 = vrot.lane.b32.xlu0 %v3114, 110
      %v4005 = vpop.permute.xlu0 %4004
      %4006 = vrot.lane.b32.xlu0 %v3097, 110
      %v4007 = vpop.permute.xlu0 %4006
      %4008 = vrot.lane.b32.xlu0 %v3098, 110
      %v4009 = vpop.permute.xlu0 %4008
      %4010 = vrot.lane.b32.xlu0 %v3115, 110
      %v4011 = vpop.permute.xlu0 %4010
      %v4012 = vsel %vm413, %v3965, %v3967
      %v4013 = vsel %vm413, %v3967, %v3969
      %v4014 = vsel %vm413, %v3971, %v3973
      %v4015 = vsel %vm413, %v3973, %v3975
      %v4016 = vsel %vm413, %v3977, %v3979
      %v4017 = vsel %vm413, %v3979, %v3981
      %v4018 = vsel %vm413, %v3983, %v3985
      %v4019 = vsel %vm413, %v3985, %v3987
      %v4020 = vsel %vm413, %v3989, %v3991
      %v4021 = vsel %vm413, %v3991, %v3993
      %v4022 = vsel %vm413, %v3995, %v3997
      %v4023 = vsel %vm413, %v3997, %v3999
      %v4024 = vsel %vm413, %v4001, %v4003
      %v4025 = vsel %vm413, %v4003, %v4005
      %v4026 = vsel %vm413, %v4007, %v4009
      %v4027 = vsel %vm413, %v4009, %v4011
      %v4045 = vsel %vm939, %v3956, 0
      %v4048 = vsel %vm939, %v3957, 0
      %v4051 = vsel %vm939, %v3958, 0
      %v4054 = vsel %vm939, %v3959, 0
      %v4057 = vsel %vm939, %v3960, 0
      %v4060 = vsel %vm939, %v3961, 0
      %v4063 = vsel %vm939, %v3962, 0
      %v4066 = vsel %vm939, %v3963, 0
      %4068 = vmatprep.subr.mxu0 0.0
      %4069 = vmatpush1.msra.mxu0 0.0
      %4070 = vmatprep.subr.mxu0 0.0
      %4071 = vmatpush1.msra.mxu0 0.0
      %4072 = vmatprep.subr.mxu0 0.0
      %4073 = vmatpush1.msra.mxu0 0.0
      %4074 = vmatprep.subr.mxu0 0.0
      %4075 = vmatpush1.msra.mxu0 0.0
      %4076 = vmatprep.subr.mxu0 0.0
      %4077 = vmatpush1.msra.mxu0 0.0
      %4078 = vmatprep.subr.mxu0 0.0
      %4079 = vmatpush1.msra.mxu0 0.0
      %4080 = vmatprep.subr.mxu0 0.0
      %4081 = vmatpush1.msra.mxu0 0.0
      %4082 = vmatprep.subr.mxu0 0.0
      %4083 = vmatpush1.msra.mxu0 0.0
      %4084 = vmatprep.subr.mxu0 %v4027
      %4085 = vmatpush1.msra.mxu0 %v4026
      %4086 = vmatprep.subr.mxu0 %v4025
      %4087 = vmatpush1.msra.mxu0 %v4024
      %4088 = vmatprep.subr.mxu0 %v4023
      %4089 = vmatpush1.msra.mxu0 %v4022
      %4090 = vmatprep.subr.mxu0 %v4021
      %4091 = vmatpush1.msra.mxu0 %v4020
      %4092 = vmatprep.subr.mxu0 %v4019
      %4093 = vmatpush1.msra.mxu0 %v4018
      %4094 = vmatprep.subr.mxu0 %v4017
      %4095 = vmatpush1.msra.mxu0 %v4016
      %4096 = vmatprep.subr.mxu0 %v4015
      %4097 = vmatpush1.msra.mxu0 %v4014
      %4098 = vmatprep.subr.mxu0 %v4013
      %4099 = vmatpush1.msra.mxu0 %v4012
      %4100 = vmatprep.subr.mxu0 0.0
      %4101 = vmatpush2.msra.mxu0 0.0
      %4102 = vmatprep.subr.mxu0 0.0
      %4103 = vmatpush2.msra.mxu0 0.0
      %4104 = vmatprep.subr.mxu0 0.0
      %4105 = vmatpush2.msra.mxu0 0.0
      %4106 = vmatprep.subr.mxu0 0.0
      %4107 = vmatpush2.msra.mxu0 0.0
      %4108 = vmatprep.subr.mxu0 0.0
      %4109 = vmatpush2.msra.mxu0 0.0
      %4110 = vmatprep.subr.mxu0 0.0
      %4111 = vmatpush2.msra.mxu0 0.0
      %4112 = vmatprep.subr.mxu0 0.0
      %4113 = vmatpush2.msra.mxu0 0.0
      %4114 = vmatprep.subr.mxu0 0.0
      %4115 = vmatpush2.msra.mxu0 0.0
      %4116 = vmatprep.subr.mxu0 0.0
      %4117 = vmatpush2.msra.mxu0 0.0
      %4118 = vmatprep.subr.mxu0 0.0
      %4119 = vmatpush2.msra.mxu0 0.0
      %4120 = vmatprep.subr.mxu0 0.0
      %4121 = vmatpush2.msra.mxu0 0.0
      %4122 = vmatprep.subr.mxu0 0.0
      %4123 = vmatpush2.msra.mxu0 0.0
      %4124 = vmatprep.subr.mxu0 0.0
      %4125 = vmatpush2.msra.mxu0 0.0
      %4126 = vmatprep.subr.mxu0 0.0
      %4127 = vmatpush2.msra.mxu0 0.0
      %4128 = vmatprep.subr.mxu0 0.0
      %4129 = vmatpush2.msra.mxu0 0.0
      %4130 = vmatprep.subr.mxu0 0.0
      %4131 = vmatpush2.msra.mxu0 0.0
      %4132 = vmatprep.mubr.f32.mxu0 0.0
      %4133 = vmatmul.mubr.f32.gmra.mxu0 %v4045
      %v4134 = vpop.f32.mrf.mxu0
      %v4135 = vadd.f32 0.0, %v4134
      %v4136 = vpop.f32.mrf.mxu0
      %v4137 = vadd.f32 0.0, %v4136
      %4138 = vmatprep.mubr.f32.mxu0 0.0
      %4139 = vmatmul.mubr.f32.gmra.mxu0 %v4048
      %v4140 = vpop.f32.mrf.mxu0
      %v4141 = vadd.f32 0.0, %v4140
      %v4142 = vpop.f32.mrf.mxu0
      %v4143 = vadd.f32 0.0, %v4142
      %4144 = vmatprep.mubr.f32.mxu0 0.0
      %4145 = vmatmul.mubr.f32.gmra.mxu0 %v4051
      %v4146 = vpop.f32.mrf.mxu0
      %v4147 = vadd.f32 0.0, %v4146
      %v4148 = vpop.f32.mrf.mxu0
      %v4149 = vadd.f32 0.0, %v4148
      %4150 = vmatprep.mubr.f32.mxu0 0.0
      %4151 = vmatmul.mubr.f32.gmra.mxu0 %v4054
      %v4152 = vpop.f32.mrf.mxu0
      %v4153 = vadd.f32 0.0, %v4152
      %v4154 = vpop.f32.mrf.mxu0
      %v4155 = vadd.f32 0.0, %v4154
      %4156 = vmatprep.mubr.f32.mxu0 0.0
      %4157 = vmatmul.mubr.f32.gmra.mxu0 %v4057
      %v4158 = vpop.f32.mrf.mxu0
      %v4159 = vadd.f32 0.0, %v4158
      %v4160 = vpop.f32.mrf.mxu0
      %v4161 = vadd.f32 0.0, %v4160
      %4162 = vmatprep.mubr.f32.mxu0 0.0
      %4163 = vmatmul.mubr.f32.gmra.mxu0 %v4060
      %v4164 = vpop.f32.mrf.mxu0
      %v4165 = vadd.f32 0.0, %v4164
      %v4166 = vpop.f32.mrf.mxu0
      %v4167 = vadd.f32 0.0, %v4166
      %4168 = vmatprep.mubr.f32.mxu0 0.0
      %4169 = vmatmul.mubr.f32.gmra.mxu0 %v4063
      %v4170 = vpop.f32.mrf.mxu0
      %v4171 = vadd.f32 0.0, %v4170
      %v4172 = vpop.f32.mrf.mxu0
      %v4173 = vadd.f32 0.0, %v4172
      %4174 = vmatprep.mubr.f32.mxu0 0.0
      %4175 = vmatmul.mubr.f32.gmra.mxu0 %v4066
      %v4176 = vpop.f32.mrf.mxu0
      %v4177 = vadd.f32 0.0, %v4176
      %v4178 = vpop.f32.mrf.mxu0
      %v4179 = vadd.f32 0.0, %v4178
      %4180 = vdwg.mxu0
      %4181 = vrot.lane.b32.xlu0 %v3083, 126
      %v4182 = vpop.permute.xlu0 %4181
      %4183 = vrot.lane.b32.xlu0 %v3084, 126
      %v4184 = vpop.permute.xlu0 %4183
      %4185 = vrot.lane.b32.xlu0 %v3108, 126
      %v4186 = vpop.permute.xlu0 %4185
      %4187 = vrot.lane.b32.xlu0 %v3085, 126
      %v4188 = vpop.permute.xlu0 %4187
      %4189 = vrot.lane.b32.xlu0 %v3086, 126
      %v4190 = vpop.permute.xlu0 %4189
      %4191 = vrot.lane.b32.xlu0 %v3109, 126
      %v4192 = vpop.permute.xlu0 %4191
      %4193 = vrot.lane.b32.xlu0 %v3087, 126
      %v4194 = vpop.permute.xlu0 %4193
      %4195 = vrot.lane.b32.xlu0 %v3088, 126
      %v4196 = vpop.permute.xlu0 %4195
      %4197 = vrot.lane.b32.xlu0 %v3110, 126
      %v4198 = vpop.permute.xlu0 %4197
      %4199 = vrot.lane.b32.xlu0 %v3089, 126
      %v4200 = vpop.permute.xlu0 %4199
      %4201 = vrot.lane.b32.xlu0 %v3090, 126
      %v4202 = vpop.permute.xlu0 %4201
      %4203 = vrot.lane.b32.xlu0 %v3111, 126
      %v4204 = vpop.permute.xlu0 %4203
      %4205 = vrot.lane.b32.xlu0 %v3091, 126
      %v4206 = vpop.permute.xlu0 %4205
      %4207 = vrot.lane.b32.xlu0 %v3092, 126
      %v4208 = vpop.permute.xlu0 %4207
      %4209 = vrot.lane.b32.xlu0 %v3112, 126
      %v4210 = vpop.permute.xlu0 %4209
      %4211 = vrot.lane.b32.xlu0 %v3093, 126
      %v4212 = vpop.permute.xlu0 %4211
      %4213 = vrot.lane.b32.xlu0 %v3094, 126
      %v4214 = vpop.permute.xlu0 %4213
      %4215 = vrot.lane.b32.xlu0 %v3113, 126
      %v4216 = vpop.permute.xlu0 %4215
      %4217 = vrot.lane.b32.xlu0 %v3095, 126
      %v4218 = vpop.permute.xlu0 %4217
      %4219 = vrot.lane.b32.xlu0 %v3096, 126
      %v4220 = vpop.permute.xlu0 %4219
      %4221 = vrot.lane.b32.xlu0 %v3114, 126
      %v4222 = vpop.permute.xlu0 %4221
      %4223 = vrot.lane.b32.xlu0 %v3097, 126
      %v4224 = vpop.permute.xlu0 %4223
      %4225 = vrot.lane.b32.xlu0 %v3098, 126
      %v4226 = vpop.permute.xlu0 %4225
      %4227 = vrot.lane.b32.xlu0 %v3115, 126
      %v4228 = vpop.permute.xlu0 %4227
      %v4229 = vsel %vm366, %v4182, %v4184
      %v4230 = vsel %vm366, %v4184, %v4186
      %v4231 = vsel %vm366, %v4188, %v4190
      %v4232 = vsel %vm366, %v4190, %v4192
      %v4233 = vsel %vm366, %v4194, %v4196
      %v4234 = vsel %vm366, %v4196, %v4198
      %v4235 = vsel %vm366, %v4200, %v4202
      %v4236 = vsel %vm366, %v4202, %v4204
      %v4237 = vsel %vm366, %v4206, %v4208
      %v4238 = vsel %vm366, %v4208, %v4210
      %v4239 = vsel %vm366, %v4212, %v4214
      %v4240 = vsel %vm366, %v4214, %v4216
      %v4241 = vsel %vm366, %v4218, %v4220
      %v4242 = vsel %vm366, %v4220, %v4222
      %v4243 = vsel %vm366, %v4224, %v4226
      %v4244 = vsel %vm366, %v4226, %v4228
      %v4262 = vsel %vm939, %v3117, 0
      %v4265 = vsel %vm939, %v3118, 0
      %v4268 = vsel %vm939, %v3119, 0
      %v4271 = vsel %vm939, %v3120, 0
      %v4274 = vsel %vm939, %v3121, 0
      %v4277 = vsel %vm939, %v3122, 0
      %v4280 = vsel %vm939, %v3123, 0
      %v4283 = vsel %vm939, %v3124, 0
      %4285 = vmatprep.subr.mxu0 0.0
      %4286 = vmatpush1.msra.mxu0 0.0
      %4287 = vmatprep.subr.mxu0 0.0
      %4288 = vmatpush1.msra.mxu0 0.0
      %4289 = vmatprep.subr.mxu0 0.0
      %4290 = vmatpush1.msra.mxu0 0.0
      %4291 = vmatprep.subr.mxu0 0.0
      %4292 = vmatpush1.msra.mxu0 0.0
      %4293 = vmatprep.subr.mxu0 0.0
      %4294 = vmatpush1.msra.mxu0 0.0
      %4295 = vmatprep.subr.mxu0 0.0
      %4296 = vmatpush1.msra.mxu0 0.0
      %4297 = vmatprep.subr.mxu0 0.0
      %4298 = vmatpush1.msra.mxu0 0.0
      %4299 = vmatprep.subr.mxu0 0.0
      %4300 = vmatpush1.msra.mxu0 0.0
      %4301 = vmatprep.subr.mxu0 %v4244
      %4302 = vmatpush1.msra.mxu0 %v4243
      %4303 = vmatprep.subr.mxu0 %v4242
      %4304 = vmatpush1.msra.mxu0 %v4241
      %4305 = vmatprep.subr.mxu0 %v4240
      %4306 = vmatpush1.msra.mxu0 %v4239
      %4307 = vmatprep.subr.mxu0 %v4238
      %4308 = vmatpush1.msra.mxu0 %v4237
      %4309 = vmatprep.subr.mxu0 %v4236
      %4310 = vmatpush1.msra.mxu0 %v4235
      %4311 = vmatprep.subr.mxu0 %v4234
      %4312 = vmatpush1.msra.mxu0 %v4233
      %4313 = vmatprep.subr.mxu0 %v4232
      %4314 = vmatpush1.msra.mxu0 %v4231
      %4315 = vmatprep.subr.mxu0 %v4230
      %4316 = vmatpush1.msra.mxu0 %v4229
      %4317 = vmatprep.subr.mxu0 0.0
      %4318 = vmatpush2.msra.mxu0 0.0
      %4319 = vmatprep.subr.mxu0 0.0
      %4320 = vmatpush2.msra.mxu0 0.0
      %4321 = vmatprep.subr.mxu0 0.0
      %4322 = vmatpush2.msra.mxu0 0.0
      %4323 = vmatprep.subr.mxu0 0.0
      %4324 = vmatpush2.msra.mxu0 0.0
      %4325 = vmatprep.subr.mxu0 0.0
      %4326 = vmatpush2.msra.mxu0 0.0
      %4327 = vmatprep.subr.mxu0 0.0
      %4328 = vmatpush2.msra.mxu0 0.0
      %4329 = vmatprep.subr.mxu0 0.0
      %4330 = vmatpush2.msra.mxu0 0.0
      %4331 = vmatprep.subr.mxu0 0.0
      %4332 = vmatpush2.msra.mxu0 0.0
      %4333 = vmatprep.subr.mxu0 0.0
      %4334 = vmatpush2.msra.mxu0 0.0
      %4335 = vmatprep.subr.mxu0 0.0
      %4336 = vmatpush2.msra.mxu0 0.0
      %4337 = vmatprep.subr.mxu0 0.0
      %4338 = vmatpush2.msra.mxu0 0.0
      %4339 = vmatprep.subr.mxu0 0.0
      %4340 = vmatpush2.msra.mxu0 0.0
      %4341 = vmatprep.subr.mxu0 0.0
      %4342 = vmatpush2.msra.mxu0 0.0
      %4343 = vmatprep.subr.mxu0 0.0
      %4344 = vmatpush2.msra.mxu0 0.0
      %4345 = vmatprep.subr.mxu0 0.0
      %4346 = vmatpush2.msra.mxu0 0.0
      %4347 = vmatprep.subr.mxu0 0.0
      %4348 = vmatpush2.msra.mxu0 0.0
      %4349 = vmatprep.mubr.f32.mxu0 0.0
      %4350 = vmatmul.mubr.f32.gmra.mxu0 %v4262
      %v4351 = vpop.f32.mrf.mxu0
      %v4352 = vadd.f32 %v4135, %v4351
      %v4353 = vpop.f32.mrf.mxu0
      %v4354 = vadd.f32 %v4137, %v4353
      %4355 = vmatprep.mubr.f32.mxu0 0.0
      %4356 = vmatmul.mubr.f32.gmra.mxu0 %v4265
      %v4357 = vpop.f32.mrf.mxu0
      %v4358 = vadd.f32 %v4141, %v4357
      %v4359 = vpop.f32.mrf.mxu0
      %v4360 = vadd.f32 %v4143, %v4359
      %4361 = vmatprep.mubr.f32.mxu0 0.0
      %4362 = vmatmul.mubr.f32.gmra.mxu0 %v4268
      %v4363 = vpop.f32.mrf.mxu0
      %v4364 = vadd.f32 %v4147, %v4363
      %v4365 = vpop.f32.mrf.mxu0
      %v4366 = vadd.f32 %v4149, %v4365
      %4367 = vmatprep.mubr.f32.mxu0 0.0
      %4368 = vmatmul.mubr.f32.gmra.mxu0 %v4271
      %v4369 = vpop.f32.mrf.mxu0
      %v4370 = vadd.f32 %v4153, %v4369
      %v4371 = vpop.f32.mrf.mxu0
      %v4372 = vadd.f32 %v4155, %v4371
      %4373 = vmatprep.mubr.f32.mxu0 0.0
      %4374 = vmatmul.mubr.f32.gmra.mxu0 %v4274
      %v4375 = vpop.f32.mrf.mxu0
      %v4376 = vadd.f32 %v4159, %v4375
      %v4377 = vpop.f32.mrf.mxu0
      %v4378 = vadd.f32 %v4161, %v4377
      %4379 = vmatprep.mubr.f32.mxu0 0.0
      %4380 = vmatmul.mubr.f32.gmra.mxu0 %v4277
      %v4381 = vpop.f32.mrf.mxu0
      %v4382 = vadd.f32 %v4165, %v4381
      %v4383 = vpop.f32.mrf.mxu0
      %v4384 = vadd.f32 %v4167, %v4383
      %4385 = vmatprep.mubr.f32.mxu0 0.0
      %4386 = vmatmul.mubr.f32.gmra.mxu0 %v4280
      %v4387 = vpop.f32.mrf.mxu0
      %v4388 = vadd.f32 %v4171, %v4387
      %v4389 = vpop.f32.mrf.mxu0
      %v4390 = vadd.f32 %v4173, %v4389
      %4391 = vmatprep.mubr.f32.mxu0 0.0
      %4392 = vmatmul.mubr.f32.gmra.mxu0 %v4283
      %v4393 = vpop.f32.mrf.mxu0
      %v4394 = vadd.f32 %v4177, %v4393
      %v4395 = vpop.f32.mrf.mxu0
      %v4396 = vadd.f32 %v4179, %v4395
      %4397 = vdwg.mxu0
      %s4398 = scalar_lea.vmem %s2, 960
      %v4399 = vld [vmem:[%s4398] sm:$0xff]
      %v4400 = vld [vmem:[%s4398 + $0x8] sm:$0xff]
      %v4401 = vld [vmem:[%s4398 + $0x10] sm:$0xff]
      %v4402 = vld [vmem:[%s4398 + $0x18] sm:$0xff]
      %v4403 = vld [vmem:[%s4398 + $0x20] sm:$0xff]
      %v4404 = vld [vmem:[%s4398 + $0x28] sm:$0xff]
      %v4405 = vld [vmem:[%s4398 + $0x30] sm:$0xff]
      %v4406 = vld [vmem:[%s4398 + $0x38] sm:$0xff]
      %4407 = vrot.lane.b32.xlu0 %v3083, 96
      %v4408 = vpop.permute.xlu0 %4407
      %4409 = vrot.lane.b32.xlu0 %v3084, 96
      %v4410 = vpop.permute.xlu0 %4409
      %4411 = vrot.lane.b32.xlu0 %v3108, 96
      %v4412 = vpop.permute.xlu0 %4411
      %4413 = vrot.lane.b32.xlu0 %v3085, 96
      %v4414 = vpop.permute.xlu0 %4413
      %4415 = vrot.lane.b32.xlu0 %v3086, 96
      %v4416 = vpop.permute.xlu0 %4415
      %4417 = vrot.lane.b32.xlu0 %v3109, 96
      %v4418 = vpop.permute.xlu0 %4417
      %4419 = vrot.lane.b32.xlu0 %v3087, 96
      %v4420 = vpop.permute.xlu0 %4419
      %4421 = vrot.lane.b32.xlu0 %v3088, 96
      %v4422 = vpop.permute.xlu0 %4421
      %4423 = vrot.lane.b32.xlu0 %v3110, 96
      %v4424 = vpop.permute.xlu0 %4423
      %4425 = vrot.lane.b32.xlu0 %v3089, 96
      %v4426 = vpop.permute.xlu0 %4425
      %4427 = vrot.lane.b32.xlu0 %v3090, 96
      %v4428 = vpop.permute.xlu0 %4427
      %4429 = vrot.lane.b32.xlu0 %v3111, 96
      %v4430 = vpop.permute.xlu0 %4429
      %4431 = vrot.lane.b32.xlu0 %v3091, 96
      %v4432 = vpop.permute.xlu0 %4431
      %4433 = vrot.lane.b32.xlu0 %v3092, 96
      %v4434 = vpop.permute.xlu0 %4433
      %4435 = vrot.lane.b32.xlu0 %v3112, 96
      %v4436 = vpop.permute.xlu0 %4435
      %4437 = vrot.lane.b32.xlu0 %v3093, 96
      %v4438 = vpop.permute.xlu0 %4437
      %4439 = vrot.lane.b32.xlu0 %v3094, 96
      %v4440 = vpop.permute.xlu0 %4439
      %4441 = vrot.lane.b32.xlu0 %v3113, 96
      %v4442 = vpop.permute.xlu0 %4441
      %4443 = vrot.lane.b32.xlu0 %v3095, 96
      %v4444 = vpop.permute.xlu0 %4443
      %4445 = vrot.lane.b32.xlu0 %v3096, 96
      %v4446 = vpop.permute.xlu0 %4445
      %4447 = vrot.lane.b32.xlu0 %v3114, 96
      %v4448 = vpop.permute.xlu0 %4447
      %4449 = vrot.lane.b32.xlu0 %v3097, 96
      %v4450 = vpop.permute.xlu0 %4449
      %4451 = vrot.lane.b32.xlu0 %v3098, 96
      %v4452 = vpop.permute.xlu0 %4451
      %4453 = vrot.lane.b32.xlu0 %v3115, 96
      %v4454 = vpop.permute.xlu0 %4453
      %v4455 = vsel %vm431, %v4408, %v4410
      %v4456 = vsel %vm431, %v4410, %v4412
      %v4457 = vsel %vm431, %v4414, %v4416
      %v4458 = vsel %vm431, %v4416, %v4418
      %v4459 = vsel %vm431, %v4420, %v4422
      %v4460 = vsel %vm431, %v4422, %v4424
      %v4461 = vsel %vm431, %v4426, %v4428
      %v4462 = vsel %vm431, %v4428, %v4430
      %v4463 = vsel %vm431, %v4432, %v4434
      %v4464 = vsel %vm431, %v4434, %v4436
      %v4465 = vsel %vm431, %v4438, %v4440
      %v4466 = vsel %vm431, %v4440, %v4442
      %v4467 = vsel %vm431, %v4444, %v4446
      %v4468 = vsel %vm431, %v4446, %v4448
      %v4469 = vsel %vm431, %v4450, %v4452
      %v4470 = vsel %vm431, %v4452, %v4454
      %v4488 = vsel %vm939, %v4399, 0
      %v4491 = vsel %vm939, %v4400, 0
      %v4494 = vsel %vm939, %v4401, 0
      %v4497 = vsel %vm939, %v4402, 0
      %v4500 = vsel %vm939, %v4403, 0
      %v4503 = vsel %vm939, %v4404, 0
      %v4506 = vsel %vm939, %v4405, 0
      %v4509 = vsel %vm939, %v4406, 0
      %4511 = vmatprep.subr.mxu0 0.0
      %4512 = vmatpush1.msra.mxu0 0.0
      %4513 = vmatprep.subr.mxu0 0.0
      %4514 = vmatpush1.msra.mxu0 0.0
      %4515 = vmatprep.subr.mxu0 0.0
      %4516 = vmatpush1.msra.mxu0 0.0
      %4517 = vmatprep.subr.mxu0 0.0
      %4518 = vmatpush1.msra.mxu0 0.0
      %4519 = vmatprep.subr.mxu0 0.0
      %4520 = vmatpush1.msra.mxu0 0.0
      %4521 = vmatprep.subr.mxu0 0.0
      %4522 = vmatpush1.msra.mxu0 0.0
      %4523 = vmatprep.subr.mxu0 0.0
      %4524 = vmatpush1.msra.mxu0 0.0
      %4525 = vmatprep.subr.mxu0 0.0
      %4526 = vmatpush1.msra.mxu0 0.0
      %4527 = vmatprep.subr.mxu0 %v4470
      %4528 = vmatpush1.msra.mxu0 %v4469
      %4529 = vmatprep.subr.mxu0 %v4468
      %4530 = vmatpush1.msra.mxu0 %v4467
      %4531 = vmatprep.subr.mxu0 %v4466
      %4532 = vmatpush1.msra.mxu0 %v4465
      %4533 = vmatprep.subr.mxu0 %v4464
      %4534 = vmatpush1.msra.mxu0 %v4463
      %4535 = vmatprep.subr.mxu0 %v4462
      %4536 = vmatpush1.msra.mxu0 %v4461
      %4537 = vmatprep.subr.mxu0 %v4460
      %4538 = vmatpush1.msra.mxu0 %v4459
      %4539 = vmatprep.subr.mxu0 %v4458
      %4540 = vmatpush1.msra.mxu0 %v4457
      %4541 = vmatprep.subr.mxu0 %v4456
      %4542 = vmatpush1.msra.mxu0 %v4455
      %4543 = vmatprep.subr.mxu0 0.0
      %4544 = vmatpush2.msra.mxu0 0.0
      %4545 = vmatprep.subr.mxu0 0.0
      %4546 = vmatpush2.msra.mxu0 0.0
      %4547 = vmatprep.subr.mxu0 0.0
      %4548 = vmatpush2.msra.mxu0 0.0
      %4549 = vmatprep.subr.mxu0 0.0
      %4550 = vmatpush2.msra.mxu0 0.0
      %4551 = vmatprep.subr.mxu0 0.0
      %4552 = vmatpush2.msra.mxu0 0.0
      %4553 = vmatprep.subr.mxu0 0.0
      %4554 = vmatpush2.msra.mxu0 0.0
      %4555 = vmatprep.subr.mxu0 0.0
      %4556 = vmatpush2.msra.mxu0 0.0
      %4557 = vmatprep.subr.mxu0 0.0
      %4558 = vmatpush2.msra.mxu0 0.0
      %4559 = vmatprep.subr.mxu0 0.0
      %4560 = vmatpush2.msra.mxu0 0.0
      %4561 = vmatprep.subr.mxu0 0.0
      %4562 = vmatpush2.msra.mxu0 0.0
      %4563 = vmatprep.subr.mxu0 0.0
      %4564 = vmatpush2.msra.mxu0 0.0
      %4565 = vmatprep.subr.mxu0 0.0
      %4566 = vmatpush2.msra.mxu0 0.0
      %4567 = vmatprep.subr.mxu0 0.0
      %4568 = vmatpush2.msra.mxu0 0.0
      %4569 = vmatprep.subr.mxu0 0.0
      %4570 = vmatpush2.msra.mxu0 0.0
      %4571 = vmatprep.subr.mxu0 0.0
      %4572 = vmatpush2.msra.mxu0 0.0
      %4573 = vmatprep.subr.mxu0 0.0
      %4574 = vmatpush2.msra.mxu0 0.0
      %4575 = vmatprep.mubr.f32.mxu0 0.0
      %4576 = vmatmul.mubr.f32.gmra.mxu0 %v4488
      %v4577 = vpop.f32.mrf.mxu0
      %v4578 = vadd.f32 0.0, %v4577
      %v4579 = vpop.f32.mrf.mxu0
      %v4580 = vadd.f32 0.0, %v4579
      %4581 = vmatprep.mubr.f32.mxu0 0.0
      %4582 = vmatmul.mubr.f32.gmra.mxu0 %v4491
      %v4583 = vpop.f32.mrf.mxu0
      %v4584 = vadd.f32 0.0, %v4583
      %v4585 = vpop.f32.mrf.mxu0
      %v4586 = vadd.f32 0.0, %v4585
      %4587 = vmatprep.mubr.f32.mxu0 0.0
      %4588 = vmatmul.mubr.f32.gmra.mxu0 %v4494
      %v4589 = vpop.f32.mrf.mxu0
      %v4590 = vadd.f32 0.0, %v4589
      %v4591 = vpop.f32.mrf.mxu0
      %v4592 = vadd.f32 0.0, %v4591
      %4593 = vmatprep.mubr.f32.mxu0 0.0
      %4594 = vmatmul.mubr.f32.gmra.mxu0 %v4497
      %v4595 = vpop.f32.mrf.mxu0
      %v4596 = vadd.f32 0.0, %v4595
      %v4597 = vpop.f32.mrf.mxu0
      %v4598 = vadd.f32 0.0, %v4597
      %4599 = vmatprep.mubr.f32.mxu0 0.0
      %4600 = vmatmul.mubr.f32.gmra.mxu0 %v4500
      %v4601 = vpop.f32.mrf.mxu0
      %v4602 = vadd.f32 0.0, %v4601
      %v4603 = vpop.f32.mrf.mxu0
      %v4604 = vadd.f32 0.0, %v4603
      %4605 = vmatprep.mubr.f32.mxu0 0.0
      %4606 = vmatmul.mubr.f32.gmra.mxu0 %v4503
      %v4607 = vpop.f32.mrf.mxu0
      %v4608 = vadd.f32 0.0, %v4607
      %v4609 = vpop.f32.mrf.mxu0
      %v4610 = vadd.f32 0.0, %v4609
      %4611 = vmatprep.mubr.f32.mxu0 0.0
      %4612 = vmatmul.mubr.f32.gmra.mxu0 %v4506
      %v4613 = vpop.f32.mrf.mxu0
      %v4614 = vadd.f32 0.0, %v4613
      %v4615 = vpop.f32.mrf.mxu0
      %v4616 = vadd.f32 0.0, %v4615
      %4617 = vmatprep.mubr.f32.mxu0 0.0
      %4618 = vmatmul.mubr.f32.gmra.mxu0 %v4509
      %v4619 = vpop.f32.mrf.mxu0
      %v4620 = vadd.f32 0.0, %v4619
      %v4621 = vpop.f32.mrf.mxu0
      %v4622 = vadd.f32 0.0, %v4621
      %4623 = vdwg.mxu0
      %v4624 = vadd.f32 %v3466, %v4578
      %v4625 = vadd.f32 %v3468, %v4580
      %v4626 = vadd.f32 %v3472, %v4584
      %v4627 = vadd.f32 %v3474, %v4586
      %v4628 = vadd.f32 %v3478, %v4590
      %v4629 = vadd.f32 %v3480, %v4592
      %v4630 = vadd.f32 %v3484, %v4596
      %v4631 = vadd.f32 %v3486, %v4598
      %v4632 = vadd.f32 %v3490, %v4602
      %v4633 = vadd.f32 %v3492, %v4604
      %v4634 = vadd.f32 %v3496, %v4608
      %v4635 = vadd.f32 %v3498, %v4610
      %v4636 = vadd.f32 %v3502, %v4614
      %v4637 = vadd.f32 %v3504, %v4616
      %v4638 = vadd.f32 %v3508, %v4620
      %v4639 = vadd.f32 %v3510, %v4622
      %s4640 = scalar_lea.vmem %s2, 1024
      %v4641 = vld [vmem:[%s4640] sm:$0xff]
      %v4642 = vld [vmem:[%s4640 + $0x8] sm:$0xff]
      %v4643 = vld [vmem:[%s4640 + $0x10] sm:$0xff]
      %v4644 = vld [vmem:[%s4640 + $0x18] sm:$0xff]
      %v4645 = vld [vmem:[%s4640 + $0x20] sm:$0xff]
      %v4646 = vld [vmem:[%s4640 + $0x28] sm:$0xff]
      %v4647 = vld [vmem:[%s4640 + $0x30] sm:$0xff]
      %v4648 = vld [vmem:[%s4640 + $0x38] sm:$0xff]
      %4649 = vrot.lane.b32.xlu0 %v3083, 95
      %v4650 = vpop.permute.xlu0 %4649
      %4651 = vrot.lane.b32.xlu0 %v3084, 95
      %v4652 = vpop.permute.xlu0 %4651
      %4653 = vrot.lane.b32.xlu0 %v3108, 95
      %v4654 = vpop.permute.xlu0 %4653
      %4655 = vrot.lane.b32.xlu0 %v3085, 95
      %v4656 = vpop.permute.xlu0 %4655
      %4657 = vrot.lane.b32.xlu0 %v3086, 95
      %v4658 = vpop.permute.xlu0 %4657
      %4659 = vrot.lane.b32.xlu0 %v3109, 95
      %v4660 = vpop.permute.xlu0 %4659
      %4661 = vrot.lane.b32.xlu0 %v3087, 95
      %v4662 = vpop.permute.xlu0 %4661
      %4663 = vrot.lane.b32.xlu0 %v3088, 95
      %v4664 = vpop.permute.xlu0 %4663
      %4665 = vrot.lane.b32.xlu0 %v3110, 95
      %v4666 = vpop.permute.xlu0 %4665
      %4667 = vrot.lane.b32.xlu0 %v3089, 95
      %v4668 = vpop.permute.xlu0 %4667
      %4669 = vrot.lane.b32.xlu0 %v3090, 95
      %v4670 = vpop.permute.xlu0 %4669
      %4671 = vrot.lane.b32.xlu0 %v3111, 95
      %v4672 = vpop.permute.xlu0 %4671
      %4673 = vrot.lane.b32.xlu0 %v3091, 95
      %v4674 = vpop.permute.xlu0 %4673
      %4675 = vrot.lane.b32.xlu0 %v3092, 95
      %v4676 = vpop.permute.xlu0 %4675
      %4677 = vrot.lane.b32.xlu0 %v3112, 95
      %v4678 = vpop.permute.xlu0 %4677
      %4679 = vrot.lane.b32.xlu0 %v3093, 95
      %v4680 = vpop.permute.xlu0 %4679
      %4681 = vrot.lane.b32.xlu0 %v3094, 95
      %v4682 = vpop.permute.xlu0 %4681
      %4683 = vrot.lane.b32.xlu0 %v3113, 95
      %v4684 = vpop.permute.xlu0 %4683
      %4685 = vrot.lane.b32.xlu0 %v3095, 95
      %v4686 = vpop.permute.xlu0 %4685
      %4687 = vrot.lane.b32.xlu0 %v3096, 95
      %v4688 = vpop.permute.xlu0 %4687
      %4689 = vrot.lane.b32.xlu0 %v3114, 95
      %v4690 = vpop.permute.xlu0 %4689
      %4691 = vrot.lane.b32.xlu0 %v3097, 95
      %v4692 = vpop.permute.xlu0 %4691
      %4693 = vrot.lane.b32.xlu0 %v3098, 95
      %v4694 = vpop.permute.xlu0 %4693
      %4695 = vrot.lane.b32.xlu0 %v3115, 95
      %v4696 = vpop.permute.xlu0 %4695
      %v4697 = vsel %vm442, %v4650, %v4652
      %v4698 = vsel %vm442, %v4652, %v4654
      %v4699 = vsel %vm442, %v4656, %v4658
      %v4700 = vsel %vm442, %v4658, %v4660
      %v4701 = vsel %vm442, %v4662, %v4664
      %v4702 = vsel %vm442, %v4664, %v4666
      %v4703 = vsel %vm442, %v4668, %v4670
      %v4704 = vsel %vm442, %v4670, %v4672
      %v4705 = vsel %vm442, %v4674, %v4676
      %v4706 = vsel %vm442, %v4676, %v4678
      %v4707 = vsel %vm442, %v4680, %v4682
      %v4708 = vsel %vm442, %v4682, %v4684
      %v4709 = vsel %vm442, %v4686, %v4688
      %v4710 = vsel %vm442, %v4688, %v4690
      %v4711 = vsel %vm442, %v4692, %v4694
      %v4712 = vsel %vm442, %v4694, %v4696
      %v4730 = vsel %vm939, %v4641, 0
      %v4733 = vsel %vm939, %v4642, 0
      %v4736 = vsel %vm939, %v4643, 0
      %v4739 = vsel %vm939, %v4644, 0
      %v4742 = vsel %vm939, %v4645, 0
      %v4745 = vsel %vm939, %v4646, 0
      %v4748 = vsel %vm939, %v4647, 0
      %v4751 = vsel %vm939, %v4648, 0
      %4753 = vmatprep.subr.mxu0 0.0
      %4754 = vmatpush1.msra.mxu0 0.0
      %4755 = vmatprep.subr.mxu0 0.0
      %4756 = vmatpush1.msra.mxu0 0.0
      %4757 = vmatprep.subr.mxu0 0.0
      %4758 = vmatpush1.msra.mxu0 0.0
      %4759 = vmatprep.subr.mxu0 0.0
      %4760 = vmatpush1.msra.mxu0 0.0
      %4761 = vmatprep.subr.mxu0 0.0
      %4762 = vmatpush1.msra.mxu0 0.0
      %4763 = vmatprep.subr.mxu0 0.0
      %4764 = vmatpush1.msra.mxu0 0.0
      %4765 = vmatprep.subr.mxu0 0.0
      %4766 = vmatpush1.msra.mxu0 0.0
      %4767 = vmatprep.subr.mxu0 0.0
      %4768 = vmatpush1.msra.mxu0 0.0
      %4769 = vmatprep.subr.mxu0 %v4712
      %4770 = vmatpush1.msra.mxu0 %v4711
      %4771 = vmatprep.subr.mxu0 %v4710
      %4772 = vmatpush1.msra.mxu0 %v4709
      %4773 = vmatprep.subr.mxu0 %v4708
      %4774 = vmatpush1.msra.mxu0 %v4707
      %4775 = vmatprep.subr.mxu0 %v4706
      %4776 = vmatpush1.msra.mxu0 %v4705
      %4777 = vmatprep.subr.mxu0 %v4704
      %4778 = vmatpush1.msra.mxu0 %v4703
      %4779 = vmatprep.subr.mxu0 %v4702
      %4780 = vmatpush1.msra.mxu0 %v4701
      %4781 = vmatprep.subr.mxu0 %v4700
      %4782 = vmatpush1.msra.mxu0 %v4699
      %4783 = vmatprep.subr.mxu0 %v4698
      %4784 = vmatpush1.msra.mxu0 %v4697
      %4785 = vmatprep.subr.mxu0 0.0
      %4786 = vmatpush2.msra.mxu0 0.0
      %4787 = vmatprep.subr.mxu0 0.0
      %4788 = vmatpush2.msra.mxu0 0.0
      %4789 = vmatprep.subr.mxu0 0.0
      %4790 = vmatpush2.msra.mxu0 0.0
      %4791 = vmatprep.subr.mxu0 0.0
      %4792 = vmatpush2.msra.mxu0 0.0
      %4793 = vmatprep.subr.mxu0 0.0
      %4794 = vmatpush2.msra.mxu0 0.0
      %4795 = vmatprep.subr.mxu0 0.0
      %4796 = vmatpush2.msra.mxu0 0.0
      %4797 = vmatprep.subr.mxu0 0.0
      %4798 = vmatpush2.msra.mxu0 0.0
      %4799 = vmatprep.subr.mxu0 0.0
      %4800 = vmatpush2.msra.mxu0 0.0
      %4801 = vmatprep.subr.mxu0 0.0
      %4802 = vmatpush2.msra.mxu0 0.0
      %4803 = vmatprep.subr.mxu0 0.0
      %4804 = vmatpush2.msra.mxu0 0.0
      %4805 = vmatprep.subr.mxu0 0.0
      %4806 = vmatpush2.msra.mxu0 0.0
      %4807 = vmatprep.subr.mxu0 0.0
      %4808 = vmatpush2.msra.mxu0 0.0
      %4809 = vmatprep.subr.mxu0 0.0
      %4810 = vmatpush2.msra.mxu0 0.0
      %4811 = vmatprep.subr.mxu0 0.0
      %4812 = vmatpush2.msra.mxu0 0.0
      %4813 = vmatprep.subr.mxu0 0.0
      %4814 = vmatpush2.msra.mxu0 0.0
      %4815 = vmatprep.subr.mxu0 0.0
      %4816 = vmatpush2.msra.mxu0 0.0
      %4817 = vmatprep.mubr.f32.mxu0 0.0
      %4818 = vmatmul.mubr.f32.gmra.mxu0 %v4730
      %v4819 = vpop.f32.mrf.mxu0
      %v4820 = vadd.f32 0.0, %v4819
      %v4821 = vpop.f32.mrf.mxu0
      %v4822 = vadd.f32 0.0, %v4821
      %4823 = vmatprep.mubr.f32.mxu0 0.0
      %4824 = vmatmul.mubr.f32.gmra.mxu0 %v4733
      %v4825 = vpop.f32.mrf.mxu0
      %v4826 = vadd.f32 0.0, %v4825
      %v4827 = vpop.f32.mrf.mxu0
      %v4828 = vadd.f32 0.0, %v4827
      %4829 = vmatprep.mubr.f32.mxu0 0.0
      %4830 = vmatmul.mubr.f32.gmra.mxu0 %v4736
      %v4831 = vpop.f32.mrf.mxu0
      %v4832 = vadd.f32 0.0, %v4831
      %v4833 = vpop.f32.mrf.mxu0
      %v4834 = vadd.f32 0.0, %v4833
      %4835 = vmatprep.mubr.f32.mxu0 0.0
      %4836 = vmatmul.mubr.f32.gmra.mxu0 %v4739
      %v4837 = vpop.f32.mrf.mxu0
      %v4838 = vadd.f32 0.0, %v4837
      %v4839 = vpop.f32.mrf.mxu0
      %v4840 = vadd.f32 0.0, %v4839
      %4841 = vmatprep.mubr.f32.mxu0 0.0
      %4842 = vmatmul.mubr.f32.gmra.mxu0 %v4742
      %v4843 = vpop.f32.mrf.mxu0
      %v4844 = vadd.f32 0.0, %v4843
      %v4845 = vpop.f32.mrf.mxu0
      %v4846 = vadd.f32 0.0, %v4845
      %4847 = vmatprep.mubr.f32.mxu0 0.0
      %4848 = vmatmul.mubr.f32.gmra.mxu0 %v4745
      %v4849 = vpop.f32.mrf.mxu0
      %v4850 = vadd.f32 0.0, %v4849
      %v4851 = vpop.f32.mrf.mxu0
      %v4852 = vadd.f32 0.0, %v4851
      %4853 = vmatprep.mubr.f32.mxu0 0.0
      %4854 = vmatmul.mubr.f32.gmra.mxu0 %v4748
      %v4855 = vpop.f32.mrf.mxu0
      %v4856 = vadd.f32 0.0, %v4855
      %v4857 = vpop.f32.mrf.mxu0
      %v4858 = vadd.f32 0.0, %v4857
      %4859 = vmatprep.mubr.f32.mxu0 0.0
      %4860 = vmatmul.mubr.f32.gmra.mxu0 %v4751
      %v4861 = vpop.f32.mrf.mxu0
      %v4862 = vadd.f32 0.0, %v4861
      %v4863 = vpop.f32.mrf.mxu0
      %v4864 = vadd.f32 0.0, %v4863
      %4865 = vdwg.mxu0
      %v4866 = vadd.f32 %v3909, %v4820
      %v4867 = vadd.f32 %v3911, %v4822
      %v4868 = vadd.f32 %v3915, %v4826
      %v4869 = vadd.f32 %v3917, %v4828
      %v4870 = vadd.f32 %v3921, %v4832
      %v4871 = vadd.f32 %v3923, %v4834
      %v4872 = vadd.f32 %v3927, %v4838
      %v4873 = vadd.f32 %v3929, %v4840
      %v4874 = vadd.f32 %v3933, %v4844
      %v4875 = vadd.f32 %v3935, %v4846
      %v4876 = vadd.f32 %v3939, %v4850
      %v4877 = vadd.f32 %v3941, %v4852
      %v4878 = vadd.f32 %v3945, %v4856
      %v4879 = vadd.f32 %v3947, %v4858
      %v4880 = vadd.f32 %v3951, %v4862
      %v4881 = vadd.f32 %v3953, %v4864
      %s4882 = scalar_lea.vmem %s2, 1088
      %v4883 = vld [vmem:[%s4882] sm:$0xff]
      %v4884 = vld [vmem:[%s4882 + $0x8] sm:$0xff]
      %v4885 = vld [vmem:[%s4882 + $0x10] sm:$0xff]
      %v4886 = vld [vmem:[%s4882 + $0x18] sm:$0xff]
      %v4887 = vld [vmem:[%s4882 + $0x20] sm:$0xff]
      %v4888 = vld [vmem:[%s4882 + $0x28] sm:$0xff]
      %v4889 = vld [vmem:[%s4882 + $0x30] sm:$0xff]
      %v4890 = vld [vmem:[%s4882 + $0x38] sm:$0xff]
      %4891 = vrot.lane.b32.xlu0 %v3083, 94
      %v4892 = vpop.permute.xlu0 %4891
      %4893 = vrot.lane.b32.xlu0 %v3084, 94
      %v4894 = vpop.permute.xlu0 %4893
      %4895 = vrot.lane.b32.xlu0 %v3108, 94
      %v4896 = vpop.permute.xlu0 %4895
      %4897 = vrot.lane.b32.xlu0 %v3085, 94
      %v4898 = vpop.permute.xlu0 %4897
      %4899 = vrot.lane.b32.xlu0 %v3086, 94
      %v4900 = vpop.permute.xlu0 %4899
      %4901 = vrot.lane.b32.xlu0 %v3109, 94
      %v4902 = vpop.permute.xlu0 %4901
      %4903 = vrot.lane.b32.xlu0 %v3087, 94
      %v4904 = vpop.permute.xlu0 %4903
      %4905 = vrot.lane.b32.xlu0 %v3088, 94
      %v4906 = vpop.permute.xlu0 %4905
      %4907 = vrot.lane.b32.xlu0 %v3110, 94
      %v4908 = vpop.permute.xlu0 %4907
      %4909 = vrot.lane.b32.xlu0 %v3089, 94
      %v4910 = vpop.permute.xlu0 %4909
      %4911 = vrot.lane.b32.xlu0 %v3090, 94
      %v4912 = vpop.permute.xlu0 %4911
      %4913 = vrot.lane.b32.xlu0 %v3111, 94
      %v4914 = vpop.permute.xlu0 %4913
      %4915 = vrot.lane.b32.xlu0 %v3091, 94
      %v4916 = vpop.permute.xlu0 %4915
      %4917 = vrot.lane.b32.xlu0 %v3092, 94
      %v4918 = vpop.permute.xlu0 %4917
      %4919 = vrot.lane.b32.xlu0 %v3112, 94
      %v4920 = vpop.permute.xlu0 %4919
      %4921 = vrot.lane.b32.xlu0 %v3093, 94
      %v4922 = vpop.permute.xlu0 %4921
      %4923 = vrot.lane.b32.xlu0 %v3094, 94
      %v4924 = vpop.permute.xlu0 %4923
      %4925 = vrot.lane.b32.xlu0 %v3113, 94
      %v4926 = vpop.permute.xlu0 %4925
      %4927 = vrot.lane.b32.xlu0 %v3095, 94
      %v4928 = vpop.permute.xlu0 %4927
      %4929 = vrot.lane.b32.xlu0 %v3096, 94
      %v4930 = vpop.permute.xlu0 %4929
      %4931 = vrot.lane.b32.xlu0 %v3114, 94
      %v4932 = vpop.permute.xlu0 %4931
      %4933 = vrot.lane.b32.xlu0 %v3097, 94
      %v4934 = vpop.permute.xlu0 %4933
      %4935 = vrot.lane.b32.xlu0 %v3098, 94
      %v4936 = vpop.permute.xlu0 %4935
      %4937 = vrot.lane.b32.xlu0 %v3115, 94
      %v4938 = vpop.permute.xlu0 %4937
      %v4939 = vsel %vm460, %v4892, %v4894
      %v4940 = vsel %vm460, %v4894, %v4896
      %v4941 = vsel %vm460, %v4898, %v4900
      %v4942 = vsel %vm460, %v4900, %v4902
      %v4943 = vsel %vm460, %v4904, %v4906
      %v4944 = vsel %vm460, %v4906, %v4908
      %v4945 = vsel %vm460, %v4910, %v4912
      %v4946 = vsel %vm460, %v4912, %v4914
      %v4947 = vsel %vm460, %v4916, %v4918
      %v4948 = vsel %vm460, %v4918, %v4920
      %v4949 = vsel %vm460, %v4922, %v4924
      %v4950 = vsel %vm460, %v4924, %v4926
      %v4951 = vsel %vm460, %v4928, %v4930
      %v4952 = vsel %vm460, %v4930, %v4932
      %v4953 = vsel %vm460, %v4934, %v4936
      %v4954 = vsel %vm460, %v4936, %v4938
      %v4972 = vsel %vm939, %v4883, 0
      %v4975 = vsel %vm939, %v4884, 0
      %v4978 = vsel %vm939, %v4885, 0
      %v4981 = vsel %vm939, %v4886, 0
      %v4984 = vsel %vm939, %v4887, 0
      %v4987 = vsel %vm939, %v4888, 0
      %v4990 = vsel %vm939, %v4889, 0
      %v4993 = vsel %vm939, %v4890, 0
      %4995 = vmatprep.subr.mxu0 0.0
      %4996 = vmatpush1.msra.mxu0 0.0
      %4997 = vmatprep.subr.mxu0 0.0
      %4998 = vmatpush1.msra.mxu0 0.0
      %4999 = vmatprep.subr.mxu0 0.0
      %5000 = vmatpush1.msra.mxu0 0.0
      %5001 = vmatprep.subr.mxu0 0.0
      %5002 = vmatpush1.msra.mxu0 0.0
      %5003 = vmatprep.subr.mxu0 0.0
      %5004 = vmatpush1.msra.mxu0 0.0
      %5005 = vmatprep.subr.mxu0 0.0
      %5006 = vmatpush1.msra.mxu0 0.0
      %5007 = vmatprep.subr.mxu0 0.0
      %5008 = vmatpush1.msra.mxu0 0.0
      %5009 = vmatprep.subr.mxu0 0.0
      %5010 = vmatpush1.msra.mxu0 0.0
      %5011 = vmatprep.subr.mxu0 %v4954
      %5012 = vmatpush1.msra.mxu0 %v4953
      %5013 = vmatprep.subr.mxu0 %v4952
      %5014 = vmatpush1.msra.mxu0 %v4951
      %5015 = vmatprep.subr.mxu0 %v4950
      %5016 = vmatpush1.msra.mxu0 %v4949
      %5017 = vmatprep.subr.mxu0 %v4948
      %5018 = vmatpush1.msra.mxu0 %v4947
      %5019 = vmatprep.subr.mxu0 %v4946
      %5020 = vmatpush1.msra.mxu0 %v4945
      %5021 = vmatprep.subr.mxu0 %v4944
      %5022 = vmatpush1.msra.mxu0 %v4943
      %5023 = vmatprep.subr.mxu0 %v4942
      %5024 = vmatpush1.msra.mxu0 %v4941
      %5025 = vmatprep.subr.mxu0 %v4940
      %5026 = vmatpush1.msra.mxu0 %v4939
      %5027 = vmatprep.subr.mxu0 0.0
      %5028 = vmatpush2.msra.mxu0 0.0
      %5029 = vmatprep.subr.mxu0 0.0
      %5030 = vmatpush2.msra.mxu0 0.0
      %5031 = vmatprep.subr.mxu0 0.0
      %5032 = vmatpush2.msra.mxu0 0.0
      %5033 = vmatprep.subr.mxu0 0.0
      %5034 = vmatpush2.msra.mxu0 0.0
      %5035 = vmatprep.subr.mxu0 0.0
      %5036 = vmatpush2.msra.mxu0 0.0
      %5037 = vmatprep.subr.mxu0 0.0
      %5038 = vmatpush2.msra.mxu0 0.0
      %5039 = vmatprep.subr.mxu0 0.0
      %5040 = vmatpush2.msra.mxu0 0.0
      %5041 = vmatprep.subr.mxu0 0.0
      %5042 = vmatpush2.msra.mxu0 0.0
      %5043 = vmatprep.subr.mxu0 0.0
      %5044 = vmatpush2.msra.mxu0 0.0
      %5045 = vmatprep.subr.mxu0 0.0
      %5046 = vmatpush2.msra.mxu0 0.0
      %5047 = vmatprep.subr.mxu0 0.0
      %5048 = vmatpush2.msra.mxu0 0.0
      %5049 = vmatprep.subr.mxu0 0.0
      %5050 = vmatpush2.msra.mxu0 0.0
      %5051 = vmatprep.subr.mxu0 0.0
      %5052 = vmatpush2.msra.mxu0 0.0
      %5053 = vmatprep.subr.mxu0 0.0
      %5054 = vmatpush2.msra.mxu0 0.0
      %5055 = vmatprep.subr.mxu0 0.0
      %5056 = vmatpush2.msra.mxu0 0.0
      %5057 = vmatprep.subr.mxu0 0.0
      %5058 = vmatpush2.msra.mxu0 0.0
      %5059 = vmatprep.mubr.f32.mxu0 0.0
      %5060 = vmatmul.mubr.f32.gmra.mxu0 %v4972
      %v5061 = vpop.f32.mrf.mxu0
      %v5062 = vadd.f32 0.0, %v5061
      %v5063 = vpop.f32.mrf.mxu0
      %v5064 = vadd.f32 0.0, %v5063
      %5065 = vmatprep.mubr.f32.mxu0 0.0
      %5066 = vmatmul.mubr.f32.gmra.mxu0 %v4975
      %v5067 = vpop.f32.mrf.mxu0
      %v5068 = vadd.f32 0.0, %v5067
      %v5069 = vpop.f32.mrf.mxu0
      %v5070 = vadd.f32 0.0, %v5069
      %5071 = vmatprep.mubr.f32.mxu0 0.0
      %5072 = vmatmul.mubr.f32.gmra.mxu0 %v4978
      %v5073 = vpop.f32.mrf.mxu0
      %v5074 = vadd.f32 0.0, %v5073
      %v5075 = vpop.f32.mrf.mxu0
      %v5076 = vadd.f32 0.0, %v5075
      %5077 = vmatprep.mubr.f32.mxu0 0.0
      %5078 = vmatmul.mubr.f32.gmra.mxu0 %v4981
      %v5079 = vpop.f32.mrf.mxu0
      %v5080 = vadd.f32 0.0, %v5079
      %v5081 = vpop.f32.mrf.mxu0
      %v5082 = vadd.f32 0.0, %v5081
      %5083 = vmatprep.mubr.f32.mxu0 0.0
      %5084 = vmatmul.mubr.f32.gmra.mxu0 %v4984
      %v5085 = vpop.f32.mrf.mxu0
      %v5086 = vadd.f32 0.0, %v5085
      %v5087 = vpop.f32.mrf.mxu0
      %v5088 = vadd.f32 0.0, %v5087
      %5089 = vmatprep.mubr.f32.mxu0 0.0
      %5090 = vmatmul.mubr.f32.gmra.mxu0 %v4987
      %v5091 = vpop.f32.mrf.mxu0
      %v5092 = vadd.f32 0.0, %v5091
      %v5093 = vpop.f32.mrf.mxu0
      %v5094 = vadd.f32 0.0, %v5093
      %5095 = vmatprep.mubr.f32.mxu0 0.0
      %5096 = vmatmul.mubr.f32.gmra.mxu0 %v4990
      %v5097 = vpop.f32.mrf.mxu0
      %v5098 = vadd.f32 0.0, %v5097
      %v5099 = vpop.f32.mrf.mxu0
      %v5100 = vadd.f32 0.0, %v5099
      %5101 = vmatprep.mubr.f32.mxu0 0.0
      %5102 = vmatmul.mubr.f32.gmra.mxu0 %v4993
      %v5103 = vpop.f32.mrf.mxu0
      %v5104 = vadd.f32 0.0, %v5103
      %v5105 = vpop.f32.mrf.mxu0
      %v5106 = vadd.f32 0.0, %v5105
      %5107 = vdwg.mxu0
      %v5108 = vadd.f32 %v4352, %v5062
      %v5109 = vadd.f32 %v4354, %v5064
      %v5110 = vadd.f32 %v4358, %v5068
      %v5111 = vadd.f32 %v4360, %v5070
      %v5112 = vadd.f32 %v4364, %v5074
      %v5113 = vadd.f32 %v4366, %v5076
      %v5114 = vadd.f32 %v4370, %v5080
      %v5115 = vadd.f32 %v4372, %v5082
      %v5116 = vadd.f32 %v4376, %v5086
      %v5117 = vadd.f32 %v4378, %v5088
      %v5118 = vadd.f32 %v4382, %v5092
      %v5119 = vadd.f32 %v4384, %v5094
      %v5120 = vadd.f32 %v4388, %v5098
      %v5121 = vadd.f32 %v4390, %v5100
      %v5122 = vadd.f32 %v4394, %v5104
      %v5123 = vadd.f32 %v4396, %v5106
      %v5124 = vmul.f32 %v4624, %v271
      %v5125 = vmul.f32 %v4625, %v272
      %v5126 = vmul.f32 %v4626, %v271
      %v5127 = vmul.f32 %v4627, %v272
      %v5128 = vmul.f32 %v4628, %v271
      %v5129 = vmul.f32 %v4629, %v272
      %v5130 = vmul.f32 %v4630, %v271
      %v5131 = vmul.f32 %v4631, %v272
      %v5132 = vmul.f32 %v4632, %v271
      %v5133 = vmul.f32 %v4633, %v272
      %v5134 = vmul.f32 %v4634, %v271
      %v5135 = vmul.f32 %v4635, %v272
      %v5136 = vmul.f32 %v4636, %v271
      %v5137 = vmul.f32 %v4637, %v272
      %v5138 = vmul.f32 %v4638, %v271
      %v5139 = vmul.f32 %v4639, %v272
      %v5140 = vadd.f32 %v5124, %v4866
      %v5141 = vadd.f32 %v5125, %v4867
      %v5142 = vadd.f32 %v5126, %v4868
      %v5143 = vadd.f32 %v5127, %v4869
      %v5144 = vadd.f32 %v5128, %v4870
      %v5145 = vadd.f32 %v5129, %v4871
      %v5146 = vadd.f32 %v5130, %v4872
      %v5147 = vadd.f32 %v5131, %v4873
      %v5148 = vadd.f32 %v5132, %v4874
      %v5149 = vadd.f32 %v5133, %v4875
      %v5150 = vadd.f32 %v5134, %v4876
      %v5151 = vadd.f32 %v5135, %v4877
      %v5152 = vadd.f32 %v5136, %v4878
      %v5153 = vadd.f32 %v5137, %v4879
      %v5154 = vadd.f32 %v5138, %v4880
      %v5155 = vadd.f32 %v5139, %v4881
      %v5156 = vmul.f32 %v5108, %v277
      %v5157 = vmul.f32 %v5109, %v278
      %v5158 = vmul.f32 %v5110, %v277
      %v5159 = vmul.f32 %v5111, %v278
      %v5160 = vmul.f32 %v5112, %v277
      %v5161 = vmul.f32 %v5113, %v278
      %v5162 = vmul.f32 %v5114, %v277
      %v5163 = vmul.f32 %v5115, %v278
      %v5164 = vmul.f32 %v5116, %v277
      %v5165 = vmul.f32 %v5117, %v278
      %v5166 = vmul.f32 %v5118, %v277
      %v5167 = vmul.f32 %v5119, %v278
      %v5168 = vmul.f32 %v5120, %v277
      %v5169 = vmul.f32 %v5121, %v278
      %v5170 = vmul.f32 %v5122, %v277
      %v5171 = vmul.f32 %v5123, %v278
      %v5172 = vadd.f32 %v5140, %v5156
      %v5173 = vadd.f32 %v5141, %v5157
      %v5174 = vadd.f32 %v5142, %v5158
      %v5175 = vadd.f32 %v5143, %v5159
      %v5176 = vadd.f32 %v5144, %v5160
      %v5177 = vadd.f32 %v5145, %v5161
      %v5178 = vadd.f32 %v5146, %v5162
      %v5179 = vadd.f32 %v5147, %v5163
      %v5180 = vadd.f32 %v5148, %v5164
      %v5181 = vadd.f32 %v5149, %v5165
      %v5182 = vadd.f32 %v5150, %v5166
      %v5183 = vadd.f32 %v5151, %v5167
      %v5184 = vadd.f32 %v5152, %v5168
      %v5185 = vadd.f32 %v5153, %v5169
      %v5186 = vadd.f32 %v5154, %v5170
      %v5187 = vadd.f32 %v5155, %v5171
      %v5188 = vld [vmem:[%s4] sm:$0xff]
      %v5189 = vld [vmem:[%s4 + $0x8] sm:$0xff]
      %v5190 = vld [vmem:[%s4 + $0x10] sm:$0xff]
      %v5191 = vld [vmem:[%s4 + $0x18] sm:$0xff]
      %v5192 = vld [vmem:[%s4 + $0x20] sm:$0xff]
      %v5193 = vld [vmem:[%s4 + $0x28] sm:$0xff]
      %v5194 = vld [vmem:[%s4 + $0x30] sm:$0xff]
      %v5195 = vld [vmem:[%s4 + $0x38] sm:$0xff]
      %5197 = vset.pattern.permute.xlu0 2
      %5198 = vperm.xlu0 %5197, %v5188
      %v5199 = vpop.permute.xlu0 %5198
      %5202 = vset.pattern.permute.xlu0 2
      %5203 = vperm.xlu0 %5202, %v5189
      %v5204 = vpop.permute.xlu0 %5203
      %5207 = vset.pattern.permute.xlu0 2
      %5208 = vperm.xlu0 %5207, %v5190
      %v5209 = vpop.permute.xlu0 %5208
      %5212 = vset.pattern.permute.xlu0 2
      %5213 = vperm.xlu0 %5212, %v5191
      %v5214 = vpop.permute.xlu0 %5213
      %5217 = vset.pattern.permute.xlu0 2
      %5218 = vperm.xlu0 %5217, %v5192
      %v5219 = vpop.permute.xlu0 %5218
      %5222 = vset.pattern.permute.xlu0 2
      %5223 = vperm.xlu0 %5222, %v5193
      %v5224 = vpop.permute.xlu0 %5223
      %5227 = vset.pattern.permute.xlu0 2
      %5228 = vperm.xlu0 %5227, %v5194
      %v5229 = vpop.permute.xlu0 %5228
      %5232 = vset.pattern.permute.xlu0 2
      %5233 = vperm.xlu0 %5232, %v5195
      %v5234 = vpop.permute.xlu0 %5233
      %v5236 = vadd.f32 %v5172, %v5199
      %v5237 = vadd.f32 %v5173, %v5199
      %v5238 = vadd.f32 %v5174, %v5204
      %v5239 = vadd.f32 %v5175, %v5204
      %v5240 = vadd.f32 %v5176, %v5209
      %v5241 = vadd.f32 %v5177, %v5209
      %v5242 = vadd.f32 %v5178, %v5214
      %v5243 = vadd.f32 %v5179, %v5214
      %v5244 = vadd.f32 %v5180, %v5219
      %v5245 = vadd.f32 %v5181, %v5219
      %v5246 = vadd.f32 %v5182, %v5224
      %v5247 = vadd.f32 %v5183, %v5224
      %v5248 = vadd.f32 %v5184, %v5229
      %v5249 = vadd.f32 %v5185, %v5229
      %v5250 = vadd.f32 %v5186, %v5234
      %v5251 = vadd.f32 %v5187, %v5234
      %v5252 = vmax.f32 %v5236, 0.0
      %v5253 = vmax.f32 %v5237, 0.0
      %v5254 = vmax.f32 %v5238, 0.0
      %v5255 = vmax.f32 %v5239, 0.0
      %v5256 = vmax.f32 %v5240, 0.0
      %v5257 = vmax.f32 %v5241, 0.0
      %v5258 = vmax.f32 %v5242, 0.0
      %v5259 = vmax.f32 %v5243, 0.0
      %v5260 = vmax.f32 %v5244, 0.0
      %v5261 = vmax.f32 %v5245, 0.0
      %v5262 = vmax.f32 %v5246, 0.0
      %v5263 = vmax.f32 %v5247, 0.0
      %v5264 = vmax.f32 %v5248, 0.0
      %v5265 = vmax.f32 %v5249, 0.0
      %v5266 = vmax.f32 %v5250, 0.0
      %v5267 = vmax.f32 %v5251, 0.0
      %5284 = vrot.lane.b32.xlu0 %v5252, 17
      %v5285 = vpop.permute.xlu0 %5284
      %5286 = vrot.lane.b32.xlu0 %v5253, 17
      %v5287 = vpop.permute.xlu0 %5286
      %5288 = vrot.lane.b32.xlu0 %v5254, 17
      %v5289 = vpop.permute.xlu0 %5288
      %5290 = vrot.lane.b32.xlu0 %v5255, 17
      %v5291 = vpop.permute.xlu0 %5290
      %5292 = vrot.lane.b32.xlu0 %v5256, 17
      %v5293 = vpop.permute.xlu0 %5292
      %5294 = vrot.lane.b32.xlu0 %v5257, 17
      %v5295 = vpop.permute.xlu0 %5294
      %5296 = vrot.lane.b32.xlu0 %v5258, 17
      %v5297 = vpop.permute.xlu0 %5296
      %5298 = vrot.lane.b32.xlu0 %v5259, 17
      %v5299 = vpop.permute.xlu0 %5298
      %5300 = vrot.lane.b32.xlu0 %v5260, 17
      %v5301 = vpop.permute.xlu0 %5300
      %5302 = vrot.lane.b32.xlu0 %v5261, 17
      %v5303 = vpop.permute.xlu0 %5302
      %5304 = vrot.lane.b32.xlu0 %v5262, 17
      %v5305 = vpop.permute.xlu0 %5304
      %5306 = vrot.lane.b32.xlu0 %v5263, 17
      %v5307 = vpop.permute.xlu0 %5306
      %5308 = vrot.lane.b32.xlu0 %v5264, 17
      %v5309 = vpop.permute.xlu0 %5308
      %5310 = vrot.lane.b32.xlu0 %v5265, 17
      %v5311 = vpop.permute.xlu0 %5310
      %5312 = vrot.lane.b32.xlu0 %v5266, 17
      %v5313 = vpop.permute.xlu0 %5312
      %5314 = vrot.lane.b32.xlu0 %v5267, 17
      %v5315 = vpop.permute.xlu0 %5314
      %v5316 = vsel %vm220, %v5285, %v5287
      %v5317 = vsel %vm220, %v5289, %v5291
      %v5318 = vsel %vm220, %v5293, %v5295
      %v5319 = vsel %vm220, %v5297, %v5299
      %v5320 = vsel %vm220, %v5301, %v5303
      %v5321 = vsel %vm220, %v5305, %v5307
      %v5322 = vsel %vm220, %v5309, %v5311
      %v5323 = vsel %vm220, %v5313, %v5315
      %5348 = vst.msk [vmem:[#allocation2] sm:$0xff] %vm751, %v5285
      %5349 = vst [vmem:[#allocation2 + $0x8] sm:$0xff] %v5316
      %5350 = vst.msk [vmem:[#allocation2 + $0x10] sm:$0xff] %vm220, %v5287
      %5351 = vst.msk [vmem:[#allocation2 + $0x18] sm:$0xff] %vm751, %v5289
      %5352 = vst [vmem:[#allocation2 + $0x20] sm:$0xff] %v5317
      %5353 = vst.msk [vmem:[#allocation2 + $0x28] sm:$0xff] %vm220, %v5291
      %5354 = vst.msk [vmem:[#allocation2 + $0x30] sm:$0xff] %vm751, %v5293
      %5355 = vst [vmem:[#allocation2 + $0x38] sm:$0xff] %v5318
      %5356 = vst.msk [vmem:[#allocation2 + $0x40] sm:$0xff] %vm220, %v5295
      %5357 = vst.msk [vmem:[#allocation2 + $0x48] sm:$0xff] %vm751, %v5297
      %5358 = vst [vmem:[#allocation2 + $0x50] sm:$0xff] %v5319
      %5359 = vst.msk [vmem:[#allocation2 + $0x58] sm:$0xff] %vm220, %v5299
      %5360 = vst.msk [vmem:[#allocation2 + $0x60] sm:$0xff] %vm751, %v5301
      %5361 = vst [vmem:[#allocation2 + $0x68] sm:$0xff] %v5320
      %5362 = vst.msk [vmem:[#allocation2 + $0x70] sm:$0xff] %vm220, %v5303
      %5363 = vst.msk [vmem:[#allocation2 + $0x78] sm:$0xff] %vm751, %v5305
      %5364 = vst [vmem:[#allocation2 + $0x80] sm:$0xff] %v5321
      %5365 = vst.msk [vmem:[#allocation2 + $0x88] sm:$0xff] %vm220, %v5307
      %5366 = vst.msk [vmem:[#allocation2 + $0x90] sm:$0xff] %vm751, %v5309
      %5367 = vst [vmem:[#allocation2 + $0x98] sm:$0xff] %v5322
      %5368 = vst.msk [vmem:[#allocation2 + $0xa0] sm:$0xff] %vm220, %v5311
      %5369 = vst.msk [vmem:[#allocation2 + $0xa8] sm:$0xff] %vm751, %v5313
      %5370 = vst [vmem:[#allocation2 + $0xb0] sm:$0xff] %v5323
      %5371 = vst.msk [vmem:[#allocation2 + $0xb8] sm:$0xff] %vm220, %v5315
      %s5372 = scalar_lea.vmem %s2, 1152
      %v5373 = vld [vmem:[%s5372] sm:$0xff]
      %v5374 = vld [vmem:[%s5372 + $0x8] sm:$0xff]
      %v5375 = vld [vmem:[%s5372 + $0x10] sm:$0xff]
      %v5376 = vld [vmem:[%s5372 + $0x18] sm:$0xff]
      %v5377 = vld [vmem:[%s5372 + $0x20] sm:$0xff]
      %v5378 = vld [vmem:[%s5372 + $0x28] sm:$0xff]
      %v5379 = vld [vmem:[%s5372 + $0x30] sm:$0xff]
      %v5380 = vld [vmem:[%s5372 + $0x38] sm:$0xff]
      %v5381 = vld [vmem:[#allocation2] sm:$0xff]
      %v5382 = vld [vmem:[#allocation2 + $0x8] sm:$0xff]
      %v5383 = vld [vmem:[#allocation2 + $0x18] sm:$0xff]
      %v5384 = vld [vmem:[#allocation2 + $0x20] sm:$0xff]
      %v5385 = vld [vmem:[#allocation2 + $0x30] sm:$0xff]
      %v5386 = vld [vmem:[#allocation2 + $0x38] sm:$0xff]
      %v5387 = vld [vmem:[#allocation2 + $0x48] sm:$0xff]
      %v5388 = vld [vmem:[#allocation2 + $0x50] sm:$0xff]
      %v5389 = vld [vmem:[#allocation2 + $0x60] sm:$0xff]
      %v5390 = vld [vmem:[#allocation2 + $0x68] sm:$0xff]
      %v5391 = vld [vmem:[#allocation2 + $0x78] sm:$0xff]
      %v5392 = vld [vmem:[#allocation2 + $0x80] sm:$0xff]
      %v5393 = vld [vmem:[#allocation2 + $0x90] sm:$0xff]
      %v5394 = vld [vmem:[#allocation2 + $0x98] sm:$0xff]
      %v5395 = vld [vmem:[#allocation2 + $0xa8] sm:$0xff]
      %v5396 = vld [vmem:[#allocation2 + $0xb0] sm:$0xff]
      %s5397 = scalar_lea.vmem %s2, 1216
      %v5398 = vld [vmem:[%s5397] sm:$0xff]
      %v5399 = vld [vmem:[%s5397 + $0x8] sm:$0xff]
      %v5400 = vld [vmem:[%s5397 + $0x10] sm:$0xff]
      %v5401 = vld [vmem:[%s5397 + $0x18] sm:$0xff]
      %v5402 = vld [vmem:[%s5397 + $0x20] sm:$0xff]
      %v5403 = vld [vmem:[%s5397 + $0x28] sm:$0xff]
      %v5404 = vld [vmem:[%s5397 + $0x30] sm:$0xff]
      %v5405 = vld [vmem:[%s5397 + $0x38] sm:$0xff]
      %v5406 = vld [vmem:[#allocation2 + $0x10] sm:$0xff]
      %v5407 = vld [vmem:[#allocation2 + $0x28] sm:$0xff]
      %v5408 = vld [vmem:[#allocation2 + $0x40] sm:$0xff]
      %v5409 = vld [vmem:[#allocation2 + $0x58] sm:$0xff]
      %v5410 = vld [vmem:[#allocation2 + $0x70] sm:$0xff]
      %v5411 = vld [vmem:[#allocation2 + $0x88] sm:$0xff]
      %v5412 = vld [vmem:[#allocation2 + $0xa0] sm:$0xff]
      %v5413 = vld [vmem:[#allocation2 + $0xb8] sm:$0xff]
      %s5414 = scalar_lea.vmem %s2, 1280
      %v5415 = vld [vmem:[%s5414] sm:$0xff]
      %v5416 = vld [vmem:[%s5414 + $0x8] sm:$0xff]
      %v5417 = vld [vmem:[%s5414 + $0x10] sm:$0xff]
      %v5418 = vld [vmem:[%s5414 + $0x18] sm:$0xff]
      %v5419 = vld [vmem:[%s5414 + $0x20] sm:$0xff]
      %v5420 = vld [vmem:[%s5414 + $0x28] sm:$0xff]
      %v5421 = vld [vmem:[%s5414 + $0x30] sm:$0xff]
      %v5422 = vld [vmem:[%s5414 + $0x38] sm:$0xff]
      %s5423 = scalar_lea.vmem %s2, 1344
      %v5424 = vld [vmem:[%s5423] sm:$0xff]
      %v5425 = vld [vmem:[%s5423 + $0x8] sm:$0xff]
      %v5426 = vld [vmem:[%s5423 + $0x10] sm:$0xff]
      %v5427 = vld [vmem:[%s5423 + $0x18] sm:$0xff]
      %v5428 = vld [vmem:[%s5423 + $0x20] sm:$0xff]
      %v5429 = vld [vmem:[%s5423 + $0x28] sm:$0xff]
      %v5430 = vld [vmem:[%s5423 + $0x30] sm:$0xff]
      %v5431 = vld [vmem:[%s5423 + $0x38] sm:$0xff]
      %5456 = vrot.lane.b32.xlu0 %v5381, 112
      %v5457 = vpop.permute.xlu0 %5456
      %5458 = vrot.lane.b32.xlu0 %v5382, 112
      %v5459 = vpop.permute.xlu0 %5458
      %5460 = vrot.lane.b32.xlu0 %v5406, 112
      %v5461 = vpop.permute.xlu0 %5460
      %5462 = vrot.lane.b32.xlu0 %v5383, 112
      %v5463 = vpop.permute.xlu0 %5462
      %5464 = vrot.lane.b32.xlu0 %v5384, 112
      %v5465 = vpop.permute.xlu0 %5464
      %5466 = vrot.lane.b32.xlu0 %v5407, 112
      %v5467 = vpop.permute.xlu0 %5466
      %5468 = vrot.lane.b32.xlu0 %v5385, 112
      %v5469 = vpop.permute.xlu0 %5468
      %5470 = vrot.lane.b32.xlu0 %v5386, 112
      %v5471 = vpop.permute.xlu0 %5470
      %5472 = vrot.lane.b32.xlu0 %v5408, 112
      %v5473 = vpop.permute.xlu0 %5472
      %5474 = vrot.lane.b32.xlu0 %v5387, 112
      %v5475 = vpop.permute.xlu0 %5474
      %5476 = vrot.lane.b32.xlu0 %v5388, 112
      %v5477 = vpop.permute.xlu0 %5476
      %5478 = vrot.lane.b32.xlu0 %v5409, 112
      %v5479 = vpop.permute.xlu0 %5478
      %5480 = vrot.lane.b32.xlu0 %v5389, 112
      %v5481 = vpop.permute.xlu0 %5480
      %5482 = vrot.lane.b32.xlu0 %v5390, 112
      %v5483 = vpop.permute.xlu0 %5482
      %5484 = vrot.lane.b32.xlu0 %v5410, 112
      %v5485 = vpop.permute.xlu0 %5484
      %5486 = vrot.lane.b32.xlu0 %v5391, 112
      %v5487 = vpop.permute.xlu0 %5486
      %5488 = vrot.lane.b32.xlu0 %v5392, 112
      %v5489 = vpop.permute.xlu0 %5488
      %5490 = vrot.lane.b32.xlu0 %v5411, 112
      %v5491 = vpop.permute.xlu0 %5490
      %5492 = vrot.lane.b32.xlu0 %v5393, 112
      %v5493 = vpop.permute.xlu0 %5492
      %5494 = vrot.lane.b32.xlu0 %v5394, 112
      %v5495 = vpop.permute.xlu0 %5494
      %5496 = vrot.lane.b32.xlu0 %v5412, 112
      %v5497 = vpop.permute.xlu0 %5496
      %5498 = vrot.lane.b32.xlu0 %v5395, 112
      %v5499 = vpop.permute.xlu0 %5498
      %5500 = vrot.lane.b32.xlu0 %v5396, 112
      %v5501 = vpop.permute.xlu0 %5500
      %5502 = vrot.lane.b32.xlu0 %v5413, 112
      %v5503 = vpop.permute.xlu0 %5502
      %v5504 = vsel %vm384, %v5457, %v5459
      %v5505 = vsel %vm384, %v5459, %v5461
      %v5506 = vsel %vm384, %v5463, %v5465
      %v5507 = vsel %vm384, %v5465, %v5467
      %v5508 = vsel %vm384, %v5469, %v5471
      %v5509 = vsel %vm384, %v5471, %v5473
      %v5510 = vsel %vm384, %v5475, %v5477
      %v5511 = vsel %vm384, %v5477, %v5479
      %v5512 = vsel %vm384, %v5481, %v5483
      %v5513 = vsel %vm384, %v5483, %v5485
      %v5514 = vsel %vm384, %v5487, %v5489
      %v5515 = vsel %vm384, %v5489, %v5491
      %v5516 = vsel %vm384, %v5493, %v5495
      %v5517 = vsel %vm384, %v5495, %v5497
      %v5518 = vsel %vm384, %v5499, %v5501
      %v5519 = vsel %vm384, %v5501, %v5503
      %v5537 = vsel %vm939, %v5424, 0
      %v5540 = vsel %vm939, %v5425, 0
      %v5543 = vsel %vm939, %v5426, 0
      %v5546 = vsel %vm939, %v5427, 0
      %v5549 = vsel %vm939, %v5428, 0
      %v5552 = vsel %vm939, %v5429, 0
      %v5555 = vsel %vm939, %v5430, 0
      %v5558 = vsel %vm939, %v5431, 0
      %5560 = vmatprep.subr.mxu0 0.0
      %5561 = vmatpush1.msra.mxu0 0.0
      %5562 = vmatprep.subr.mxu0 0.0
      %5563 = vmatpush1.msra.mxu0 0.0
      %5564 = vmatprep.subr.mxu0 0.0
      %5565 = vmatpush1.msra.mxu0 0.0
      %5566 = vmatprep.subr.mxu0 0.0
      %5567 = vmatpush1.msra.mxu0 0.0
      %5568 = vmatprep.subr.mxu0 0.0
      %5569 = vmatpush1.msra.mxu0 0.0
      %5570 = vmatprep.subr.mxu0 0.0
      %5571 = vmatpush1.msra.mxu0 0.0
      %5572 = vmatprep.subr.mxu0 0.0
      %5573 = vmatpush1.msra.mxu0 0.0
      %5574 = vmatprep.subr.mxu0 0.0
      %5575 = vmatpush1.msra.mxu0 0.0
      %5576 = vmatprep.subr.mxu0 %v5519
      %5577 = vmatpush1.msra.mxu0 %v5518
      %5578 = vmatprep.subr.mxu0 %v5517
      %5579 = vmatpush1.msra.mxu0 %v5516
      %5580 = vmatprep.subr.mxu0 %v5515
      %5581 = vmatpush1.msra.mxu0 %v5514
      %5582 = vmatprep.subr.mxu0 %v5513
      %5583 = vmatpush1.msra.mxu0 %v5512
      %5584 = vmatprep.subr.mxu0 %v5511
      %5585 = vmatpush1.msra.mxu0 %v5510
      %5586 = vmatprep.subr.mxu0 %v5509
      %5587 = vmatpush1.msra.mxu0 %v5508
      %5588 = vmatprep.subr.mxu0 %v5507
      %5589 = vmatpush1.msra.mxu0 %v5506
      %5590 = vmatprep.subr.mxu0 %v5505
      %5591 = vmatpush1.msra.mxu0 %v5504
      %5592 = vmatprep.subr.mxu0 0.0
      %5593 = vmatpush2.msra.mxu0 0.0
      %5594 = vmatprep.subr.mxu0 0.0
      %5595 = vmatpush2.msra.mxu0 0.0
      %5596 = vmatprep.subr.mxu0 0.0
      %5597 = vmatpush2.msra.mxu0 0.0
      %5598 = vmatprep.subr.mxu0 0.0
      %5599 = vmatpush2.msra.mxu0 0.0
      %5600 = vmatprep.subr.mxu0 0.0
      %5601 = vmatpush2.msra.mxu0 0.0
      %5602 = vmatprep.subr.mxu0 0.0
      %5603 = vmatpush2.msra.mxu0 0.0
      %5604 = vmatprep.subr.mxu0 0.0
      %5605 = vmatpush2.msra.mxu0 0.0
      %5606 = vmatprep.subr.mxu0 0.0
      %5607 = vmatpush2.msra.mxu0 0.0
      %5608 = vmatprep.subr.mxu0 0.0
      %5609 = vmatpush2.msra.mxu0 0.0
      %5610 = vmatprep.subr.mxu0 0.0
      %5611 = vmatpush2.msra.mxu0 0.0
      %5612 = vmatprep.subr.mxu0 0.0
      %5613 = vmatpush2.msra.mxu0 0.0
      %5614 = vmatprep.subr.mxu0 0.0
      %5615 = vmatpush2.msra.mxu0 0.0
      %5616 = vmatprep.subr.mxu0 0.0
      %5617 = vmatpush2.msra.mxu0 0.0
      %5618 = vmatprep.subr.mxu0 0.0
      %5619 = vmatpush2.msra.mxu0 0.0
      %5620 = vmatprep.subr.mxu0 0.0
      %5621 = vmatpush2.msra.mxu0 0.0
      %5622 = vmatprep.subr.mxu0 0.0
      %5623 = vmatpush2.msra.mxu0 0.0
      %5624 = vmatprep.mubr.f32.mxu0 0.0
      %5625 = vmatmul.mubr.f32.gmra.mxu0 %v5537
      %v5626 = vpop.f32.mrf.mxu0
      %v5627 = vadd.f32 0.0, %v5626
      %v5628 = vpop.f32.mrf.mxu0
      %v5629 = vadd.f32 0.0, %v5628
      %5630 = vmatprep.mubr.f32.mxu0 0.0
      %5631 = vmatmul.mubr.f32.gmra.mxu0 %v5540
      %v5632 = vpop.f32.mrf.mxu0
      %v5633 = vadd.f32 0.0, %v5632
      %v5634 = vpop.f32.mrf.mxu0
      %v5635 = vadd.f32 0.0, %v5634
      %5636 = vmatprep.mubr.f32.mxu0 0.0
      %5637 = vmatmul.mubr.f32.gmra.mxu0 %v5543
      %v5638 = vpop.f32.mrf.mxu0
      %v5639 = vadd.f32 0.0, %v5638
      %v5640 = vpop.f32.mrf.mxu0
      %v5641 = vadd.f32 0.0, %v5640
      %5642 = vmatprep.mubr.f32.mxu0 0.0
      %5643 = vmatmul.mubr.f32.gmra.mxu0 %v5546
      %v5644 = vpop.f32.mrf.mxu0
      %v5645 = vadd.f32 0.0, %v5644
      %v5646 = vpop.f32.mrf.mxu0
      %v5647 = vadd.f32 0.0, %v5646
      %5648 = vmatprep.mubr.f32.mxu0 0.0
      %5649 = vmatmul.mubr.f32.gmra.mxu0 %v5549
      %v5650 = vpop.f32.mrf.mxu0
      %v5651 = vadd.f32 0.0, %v5650
      %v5652 = vpop.f32.mrf.mxu0
      %v5653 = vadd.f32 0.0, %v5652
      %5654 = vmatprep.mubr.f32.mxu0 0.0
      %5655 = vmatmul.mubr.f32.gmra.mxu0 %v5552
      %v5656 = vpop.f32.mrf.mxu0
      %v5657 = vadd.f32 0.0, %v5656
      %v5658 = vpop.f32.mrf.mxu0
      %v5659 = vadd.f32 0.0, %v5658
      %5660 = vmatprep.mubr.f32.mxu0 0.0
      %5661 = vmatmul.mubr.f32.gmra.mxu0 %v5555
      %v5662 = vpop.f32.mrf.mxu0
      %v5663 = vadd.f32 0.0, %v5662
      %v5664 = vpop.f32.mrf.mxu0
      %v5665 = vadd.f32 0.0, %v5664
      %5666 = vmatprep.mubr.f32.mxu0 0.0
      %5667 = vmatmul.mubr.f32.gmra.mxu0 %v5558
      %v5668 = vpop.f32.mrf.mxu0
      %v5669 = vadd.f32 0.0, %v5668
      %v5670 = vpop.f32.mrf.mxu0
      %v5671 = vadd.f32 0.0, %v5670
      %5672 = vdwg.mxu0
      %v5674 = vsel %vm939, %v5373, 0
      %v5677 = vsel %vm939, %v5374, 0
      %v5680 = vsel %vm939, %v5375, 0
      %v5683 = vsel %vm939, %v5376, 0
      %v5686 = vsel %vm939, %v5377, 0
      %v5689 = vsel %vm939, %v5378, 0
      %v5692 = vsel %vm939, %v5379, 0
      %v5695 = vsel %vm939, %v5380, 0
      %5697 = vmatprep.subr.mxu0 0.0
      %5698 = vmatpush1.msra.mxu0 0.0
      %5699 = vmatprep.subr.mxu0 0.0
      %5700 = vmatpush1.msra.mxu0 0.0
      %5701 = vmatprep.subr.mxu0 0.0
      %5702 = vmatpush1.msra.mxu0 0.0
      %5703 = vmatprep.subr.mxu0 0.0
      %5704 = vmatpush1.msra.mxu0 0.0
      %5705 = vmatprep.subr.mxu0 0.0
      %5706 = vmatpush1.msra.mxu0 0.0
      %5707 = vmatprep.subr.mxu0 0.0
      %5708 = vmatpush1.msra.mxu0 0.0
      %5709 = vmatprep.subr.mxu0 0.0
      %5710 = vmatpush1.msra.mxu0 0.0
      %5711 = vmatprep.subr.mxu0 0.0
      %5712 = vmatpush1.msra.mxu0 0.0
      %5713 = vmatprep.subr.mxu0 %v5396
      %5714 = vmatpush1.msra.mxu0 %v5395
      %5715 = vmatprep.subr.mxu0 %v5394
      %5716 = vmatpush1.msra.mxu0 %v5393
      %5717 = vmatprep.subr.mxu0 %v5392
      %5718 = vmatpush1.msra.mxu0 %v5391
      %5719 = vmatprep.subr.mxu0 %v5390
      %5720 = vmatpush1.msra.mxu0 %v5389
      %5721 = vmatprep.subr.mxu0 %v5388
      %5722 = vmatpush1.msra.mxu0 %v5387
      %5723 = vmatprep.subr.mxu0 %v5386
      %5724 = vmatpush1.msra.mxu0 %v5385
      %5725 = vmatprep.subr.mxu0 %v5384
      %5726 = vmatpush1.msra.mxu0 %v5383
      %5727 = vmatprep.subr.mxu0 %v5382
      %5728 = vmatpush1.msra.mxu0 %v5381
      %5729 = vmatprep.subr.mxu0 0.0
      %5730 = vmatpush2.msra.mxu0 0.0
      %5731 = vmatprep.subr.mxu0 0.0
      %5732 = vmatpush2.msra.mxu0 0.0
      %5733 = vmatprep.subr.mxu0 0.0
      %5734 = vmatpush2.msra.mxu0 0.0
      %5735 = vmatprep.subr.mxu0 0.0
      %5736 = vmatpush2.msra.mxu0 0.0
      %5737 = vmatprep.subr.mxu0 0.0
      %5738 = vmatpush2.msra.mxu0 0.0
      %5739 = vmatprep.subr.mxu0 0.0
      %5740 = vmatpush2.msra.mxu0 0.0
      %5741 = vmatprep.subr.mxu0 0.0
      %5742 = vmatpush2.msra.mxu0 0.0
      %5743 = vmatprep.subr.mxu0 0.0
      %5744 = vmatpush2.msra.mxu0 0.0
      %5745 = vmatprep.subr.mxu0 0.0
      %5746 = vmatpush2.msra.mxu0 0.0
      %5747 = vmatprep.subr.mxu0 0.0
      %5748 = vmatpush2.msra.mxu0 0.0
      %5749 = vmatprep.subr.mxu0 0.0
      %5750 = vmatpush2.msra.mxu0 0.0
      %5751 = vmatprep.subr.mxu0 0.0
      %5752 = vmatpush2.msra.mxu0 0.0
      %5753 = vmatprep.subr.mxu0 0.0
      %5754 = vmatpush2.msra.mxu0 0.0
      %5755 = vmatprep.subr.mxu0 0.0
      %5756 = vmatpush2.msra.mxu0 0.0
      %5757 = vmatprep.subr.mxu0 0.0
      %5758 = vmatpush2.msra.mxu0 0.0
      %5759 = vmatprep.subr.mxu0 0.0
      %5760 = vmatpush2.msra.mxu0 0.0
      %5761 = vmatprep.mubr.f32.mxu0 0.0
      %5762 = vmatmul.mubr.f32.gmra.mxu0 %v5674
      %v5763 = vpop.f32.mrf.mxu0
      %v5764 = vadd.f32 %v5627, %v5763
      %v5765 = vpop.f32.mrf.mxu0
      %v5766 = vadd.f32 %v5629, %v5765
      %5767 = vmatprep.mubr.f32.mxu0 0.0
      %5768 = vmatmul.mubr.f32.gmra.mxu0 %v5677
      %v5769 = vpop.f32.mrf.mxu0
      %v5770 = vadd.f32 %v5633, %v5769
      %v5771 = vpop.f32.mrf.mxu0
      %v5772 = vadd.f32 %v5635, %v5771
      %5773 = vmatprep.mubr.f32.mxu0 0.0
      %5774 = vmatmul.mubr.f32.gmra.mxu0 %v5680
      %v5775 = vpop.f32.mrf.mxu0
      %v5776 = vadd.f32 %v5639, %v5775
      %v5777 = vpop.f32.mrf.mxu0
      %v5778 = vadd.f32 %v5641, %v5777
      %5779 = vmatprep.mubr.f32.mxu0 0.0
      %5780 = vmatmul.mubr.f32.gmra.mxu0 %v5683
      %v5781 = vpop.f32.mrf.mxu0
      %v5782 = vadd.f32 %v5645, %v5781
      %v5783 = vpop.f32.mrf.mxu0
      %v5784 = vadd.f32 %v5647, %v5783
      %5785 = vmatprep.mubr.f32.mxu0 0.0
      %5786 = vmatmul.mubr.f32.gmra.mxu0 %v5686
      %v5787 = vpop.f32.mrf.mxu0
      %v5788 = vadd.f32 %v5651, %v5787
      %v5789 = vpop.f32.mrf.mxu0
      %v5790 = vadd.f32 %v5653, %v5789
      %5791 = vmatprep.mubr.f32.mxu0 0.0
      %5792 = vmatmul.mubr.f32.gmra.mxu0 %v5689
      %v5793 = vpop.f32.mrf.mxu0
      %v5794 = vadd.f32 %v5657, %v5793
      %v5795 = vpop.f32.mrf.mxu0
      %v5796 = vadd.f32 %v5659, %v5795
      %5797 = vmatprep.mubr.f32.mxu0 0.0
      %5798 = vmatmul.mubr.f32.gmra.mxu0 %v5692
      %v5799 = vpop.f32.mrf.mxu0
      %v5800 = vadd.f32 %v5663, %v5799
      %v5801 = vpop.f32.mrf.mxu0
      %v5802 = vadd.f32 %v5665, %v5801
      %5803 = vmatprep.mubr.f32.mxu0 0.0
      %5804 = vmatmul.mubr.f32.gmra.mxu0 %v5695
      %v5805 = vpop.f32.mrf.mxu0
      %v5806 = vadd.f32 %v5669, %v5805
      %v5807 = vpop.f32.mrf.mxu0
      %v5808 = vadd.f32 %v5671, %v5807
      %5809 = vdwg.mxu0
      %s5810 = scalar_lea.vmem %s2, 1408
      %v5811 = vld [vmem:[%s5810] sm:$0xff]
      %v5812 = vld [vmem:[%s5810 + $0x8] sm:$0xff]
      %v5813 = vld [vmem:[%s5810 + $0x10] sm:$0xff]
      %v5814 = vld [vmem:[%s5810 + $0x18] sm:$0xff]
      %v5815 = vld [vmem:[%s5810 + $0x20] sm:$0xff]
      %v5816 = vld [vmem:[%s5810 + $0x28] sm:$0xff]
      %v5817 = vld [vmem:[%s5810 + $0x30] sm:$0xff]
      %v5818 = vld [vmem:[%s5810 + $0x38] sm:$0xff]
      %5819 = vrot.lane.b32.xlu0 %v5381, 111
      %v5820 = vpop.permute.xlu0 %5819
      %5821 = vrot.lane.b32.xlu0 %v5382, 111
      %v5822 = vpop.permute.xlu0 %5821
      %5823 = vrot.lane.b32.xlu0 %v5406, 111
      %v5824 = vpop.permute.xlu0 %5823
      %5825 = vrot.lane.b32.xlu0 %v5383, 111
      %v5826 = vpop.permute.xlu0 %5825
      %5827 = vrot.lane.b32.xlu0 %v5384, 111
      %v5828 = vpop.permute.xlu0 %5827
      %5829 = vrot.lane.b32.xlu0 %v5407, 111
      %v5830 = vpop.permute.xlu0 %5829
      %5831 = vrot.lane.b32.xlu0 %v5385, 111
      %v5832 = vpop.permute.xlu0 %5831
      %5833 = vrot.lane.b32.xlu0 %v5386, 111
      %v5834 = vpop.permute.xlu0 %5833
      %5835 = vrot.lane.b32.xlu0 %v5408, 111
      %v5836 = vpop.permute.xlu0 %5835
      %5837 = vrot.lane.b32.xlu0 %v5387, 111
      %v5838 = vpop.permute.xlu0 %5837
      %5839 = vrot.lane.b32.xlu0 %v5388, 111
      %v5840 = vpop.permute.xlu0 %5839
      %5841 = vrot.lane.b32.xlu0 %v5409, 111
      %v5842 = vpop.permute.xlu0 %5841
      %5843 = vrot.lane.b32.xlu0 %v5389, 111
      %v5844 = vpop.permute.xlu0 %5843
      %5845 = vrot.lane.b32.xlu0 %v5390, 111
      %v5846 = vpop.permute.xlu0 %5845
      %5847 = vrot.lane.b32.xlu0 %v5410, 111
      %v5848 = vpop.permute.xlu0 %5847
      %5849 = vrot.lane.b32.xlu0 %v5391, 111
      %v5850 = vpop.permute.xlu0 %5849
      %5851 = vrot.lane.b32.xlu0 %v5392, 111
      %v5852 = vpop.permute.xlu0 %5851
      %5853 = vrot.lane.b32.xlu0 %v5411, 111
      %v5854 = vpop.permute.xlu0 %5853
      %5855 = vrot.lane.b32.xlu0 %v5393, 111
      %v5856 = vpop.permute.xlu0 %5855
      %5857 = vrot.lane.b32.xlu0 %v5394, 111
      %v5858 = vpop.permute.xlu0 %5857
      %5859 = vrot.lane.b32.xlu0 %v5412, 111
      %v5860 = vpop.permute.xlu0 %5859
      %5861 = vrot.lane.b32.xlu0 %v5395, 111
      %v5862 = vpop.permute.xlu0 %5861
      %5863 = vrot.lane.b32.xlu0 %v5396, 111
      %v5864 = vpop.permute.xlu0 %5863
      %5865 = vrot.lane.b32.xlu0 %v5413, 111
      %v5866 = vpop.permute.xlu0 %5865
      %v5867 = vsel %vm395, %v5820, %v5822
      %v5868 = vsel %vm395, %v5822, %v5824
      %v5869 = vsel %vm395, %v5826, %v5828
      %v5870 = vsel %vm395, %v5828, %v5830
      %v5871 = vsel %vm395, %v5832, %v5834
      %v5872 = vsel %vm395, %v5834, %v5836
      %v5873 = vsel %vm395, %v5838, %v5840
      %v5874 = vsel %vm395, %v5840, %v5842
      %v5875 = vsel %vm395, %v5844, %v5846
      %v5876 = vsel %vm395, %v5846, %v5848
      %v5877 = vsel %vm395, %v5850, %v5852
      %v5878 = vsel %vm395, %v5852, %v5854
      %v5879 = vsel %vm395, %v5856, %v5858
      %v5880 = vsel %vm395, %v5858, %v5860
      %v5881 = vsel %vm395, %v5862, %v5864
      %v5882 = vsel %vm395, %v5864, %v5866
      %v5900 = vsel %vm939, %v5811, 0
      %v5903 = vsel %vm939, %v5812, 0
      %v5906 = vsel %vm939, %v5813, 0
      %v5909 = vsel %vm939, %v5814, 0
      %v5912 = vsel %vm939, %v5815, 0
      %v5915 = vsel %vm939, %v5816, 0
      %v5918 = vsel %vm939, %v5817, 0
      %v5921 = vsel %vm939, %v5818, 0
      %5923 = vmatprep.subr.mxu0 0.0
      %5924 = vmatpush1.msra.mxu0 0.0
      %5925 = vmatprep.subr.mxu0 0.0
      %5926 = vmatpush1.msra.mxu0 0.0
      %5927 = vmatprep.subr.mxu0 0.0
      %5928 = vmatpush1.msra.mxu0 0.0
      %5929 = vmatprep.subr.mxu0 0.0
      %5930 = vmatpush1.msra.mxu0 0.0
      %5931 = vmatprep.subr.mxu0 0.0
      %5932 = vmatpush1.msra.mxu0 0.0
      %5933 = vmatprep.subr.mxu0 0.0
      %5934 = vmatpush1.msra.mxu0 0.0
      %5935 = vmatprep.subr.mxu0 0.0
      %5936 = vmatpush1.msra.mxu0 0.0
      %5937 = vmatprep.subr.mxu0 0.0
      %5938 = vmatpush1.msra.mxu0 0.0
      %5939 = vmatprep.subr.mxu0 %v5882
      %5940 = vmatpush1.msra.mxu0 %v5881
      %5941 = vmatprep.subr.mxu0 %v5880
      %5942 = vmatpush1.msra.mxu0 %v5879
      %5943 = vmatprep.subr.mxu0 %v5878
      %5944 = vmatpush1.msra.mxu0 %v5877
      %5945 = vmatprep.subr.mxu0 %v5876
      %5946 = vmatpush1.msra.mxu0 %v5875
      %5947 = vmatprep.subr.mxu0 %v5874
      %5948 = vmatpush1.msra.mxu0 %v5873
      %5949 = vmatprep.subr.mxu0 %v5872
      %5950 = vmatpush1.msra.mxu0 %v5871
      %5951 = vmatprep.subr.mxu0 %v5870
      %5952 = vmatpush1.msra.mxu0 %v5869
      %5953 = vmatprep.subr.mxu0 %v5868
      %5954 = vmatpush1.msra.mxu0 %v5867
      %5955 = vmatprep.subr.mxu0 0.0
      %5956 = vmatpush2.msra.mxu0 0.0
      %5957 = vmatprep.subr.mxu0 0.0
      %5958 = vmatpush2.msra.mxu0 0.0
      %5959 = vmatprep.subr.mxu0 0.0
      %5960 = vmatpush2.msra.mxu0 0.0
      %5961 = vmatprep.subr.mxu0 0.0
      %5962 = vmatpush2.msra.mxu0 0.0
      %5963 = vmatprep.subr.mxu0 0.0
      %5964 = vmatpush2.msra.mxu0 0.0
      %5965 = vmatprep.subr.mxu0 0.0
      %5966 = vmatpush2.msra.mxu0 0.0
      %5967 = vmatprep.subr.mxu0 0.0
      %5968 = vmatpush2.msra.mxu0 0.0
      %5969 = vmatprep.subr.mxu0 0.0
      %5970 = vmatpush2.msra.mxu0 0.0
      %5971 = vmatprep.subr.mxu0 0.0
      %5972 = vmatpush2.msra.mxu0 0.0
      %5973 = vmatprep.subr.mxu0 0.0
      %5974 = vmatpush2.msra.mxu0 0.0
      %5975 = vmatprep.subr.mxu0 0.0
      %5976 = vmatpush2.msra.mxu0 0.0
      %5977 = vmatprep.subr.mxu0 0.0
      %5978 = vmatpush2.msra.mxu0 0.0
      %5979 = vmatprep.subr.mxu0 0.0
      %5980 = vmatpush2.msra.mxu0 0.0
      %5981 = vmatprep.subr.mxu0 0.0
      %5982 = vmatpush2.msra.mxu0 0.0
      %5983 = vmatprep.subr.mxu0 0.0
      %5984 = vmatpush2.msra.mxu0 0.0
      %5985 = vmatprep.subr.mxu0 0.0
      %5986 = vmatpush2.msra.mxu0 0.0
      %5987 = vmatprep.mubr.f32.mxu0 0.0
      %5988 = vmatmul.mubr.f32.gmra.mxu0 %v5900
      %v5989 = vpop.f32.mrf.mxu0
      %v5990 = vadd.f32 0.0, %v5989
      %v5991 = vpop.f32.mrf.mxu0
      %v5992 = vadd.f32 0.0, %v5991
      %5993 = vmatprep.mubr.f32.mxu0 0.0
      %5994 = vmatmul.mubr.f32.gmra.mxu0 %v5903
      %v5995 = vpop.f32.mrf.mxu0
      %v5996 = vadd.f32 0.0, %v5995
      %v5997 = vpop.f32.mrf.mxu0
      %v5998 = vadd.f32 0.0, %v5997
      %5999 = vmatprep.mubr.f32.mxu0 0.0
      %6000 = vmatmul.mubr.f32.gmra.mxu0 %v5906
      %v6001 = vpop.f32.mrf.mxu0
      %v6002 = vadd.f32 0.0, %v6001
      %v6003 = vpop.f32.mrf.mxu0
      %v6004 = vadd.f32 0.0, %v6003
      %6005 = vmatprep.mubr.f32.mxu0 0.0
      %6006 = vmatmul.mubr.f32.gmra.mxu0 %v5909
      %v6007 = vpop.f32.mrf.mxu0
      %v6008 = vadd.f32 0.0, %v6007
      %v6009 = vpop.f32.mrf.mxu0
      %v6010 = vadd.f32 0.0, %v6009
      %6011 = vmatprep.mubr.f32.mxu0 0.0
      %6012 = vmatmul.mubr.f32.gmra.mxu0 %v5912
      %v6013 = vpop.f32.mrf.mxu0
      %v6014 = vadd.f32 0.0, %v6013
      %v6015 = vpop.f32.mrf.mxu0
      %v6016 = vadd.f32 0.0, %v6015
      %6017 = vmatprep.mubr.f32.mxu0 0.0
      %6018 = vmatmul.mubr.f32.gmra.mxu0 %v5915
      %v6019 = vpop.f32.mrf.mxu0
      %v6020 = vadd.f32 0.0, %v6019
      %v6021 = vpop.f32.mrf.mxu0
      %v6022 = vadd.f32 0.0, %v6021
      %6023 = vmatprep.mubr.f32.mxu0 0.0
      %6024 = vmatmul.mubr.f32.gmra.mxu0 %v5918
      %v6025 = vpop.f32.mrf.mxu0
      %v6026 = vadd.f32 0.0, %v6025
      %v6027 = vpop.f32.mrf.mxu0
      %v6028 = vadd.f32 0.0, %v6027
      %6029 = vmatprep.mubr.f32.mxu0 0.0
      %6030 = vmatmul.mubr.f32.gmra.mxu0 %v5921
      %v6031 = vpop.f32.mrf.mxu0
      %v6032 = vadd.f32 0.0, %v6031
      %v6033 = vpop.f32.mrf.mxu0
      %v6034 = vadd.f32 0.0, %v6033
      %6035 = vdwg.mxu0
      %6036 = vrot.lane.b32.xlu0 %v5381, 127
      %v6037 = vpop.permute.xlu0 %6036
      %6038 = vrot.lane.b32.xlu0 %v5382, 127
      %v6039 = vpop.permute.xlu0 %6038
      %6040 = vrot.lane.b32.xlu0 %v5406, 127
      %v6041 = vpop.permute.xlu0 %6040
      %6042 = vrot.lane.b32.xlu0 %v5383, 127
      %v6043 = vpop.permute.xlu0 %6042
      %6044 = vrot.lane.b32.xlu0 %v5384, 127
      %v6045 = vpop.permute.xlu0 %6044
      %6046 = vrot.lane.b32.xlu0 %v5407, 127
      %v6047 = vpop.permute.xlu0 %6046
      %6048 = vrot.lane.b32.xlu0 %v5385, 127
      %v6049 = vpop.permute.xlu0 %6048
      %6050 = vrot.lane.b32.xlu0 %v5386, 127
      %v6051 = vpop.permute.xlu0 %6050
      %6052 = vrot.lane.b32.xlu0 %v5408, 127
      %v6053 = vpop.permute.xlu0 %6052
      %6054 = vrot.lane.b32.xlu0 %v5387, 127
      %v6055 = vpop.permute.xlu0 %6054
      %6056 = vrot.lane.b32.xlu0 %v5388, 127
      %v6057 = vpop.permute.xlu0 %6056
      %6058 = vrot.lane.b32.xlu0 %v5409, 127
      %v6059 = vpop.permute.xlu0 %6058
      %6060 = vrot.lane.b32.xlu0 %v5389, 127
      %v6061 = vpop.permute.xlu0 %6060
      %6062 = vrot.lane.b32.xlu0 %v5390, 127
      %v6063 = vpop.permute.xlu0 %6062
      %6064 = vrot.lane.b32.xlu0 %v5410, 127
      %v6065 = vpop.permute.xlu0 %6064
      %6066 = vrot.lane.b32.xlu0 %v5391, 127
      %v6067 = vpop.permute.xlu0 %6066
      %6068 = vrot.lane.b32.xlu0 %v5392, 127
      %v6069 = vpop.permute.xlu0 %6068
      %6070 = vrot.lane.b32.xlu0 %v5411, 127
      %v6071 = vpop.permute.xlu0 %6070
      %6072 = vrot.lane.b32.xlu0 %v5393, 127
      %v6073 = vpop.permute.xlu0 %6072
      %6074 = vrot.lane.b32.xlu0 %v5394, 127
      %v6075 = vpop.permute.xlu0 %6074
      %6076 = vrot.lane.b32.xlu0 %v5412, 127
      %v6077 = vpop.permute.xlu0 %6076
      %6078 = vrot.lane.b32.xlu0 %v5395, 127
      %v6079 = vpop.permute.xlu0 %6078
      %6080 = vrot.lane.b32.xlu0 %v5396, 127
      %v6081 = vpop.permute.xlu0 %6080
      %6082 = vrot.lane.b32.xlu0 %v5413, 127
      %v6083 = vpop.permute.xlu0 %6082
      %v6084 = vsel %vm331, %v6037, %v6039
      %v6085 = vsel %vm331, %v6039, %v6041
      %v6086 = vsel %vm331, %v6043, %v6045
      %v6087 = vsel %vm331, %v6045, %v6047
      %v6088 = vsel %vm331, %v6049, %v6051
      %v6089 = vsel %vm331, %v6051, %v6053
      %v6090 = vsel %vm331, %v6055, %v6057
      %v6091 = vsel %vm331, %v6057, %v6059
      %v6092 = vsel %vm331, %v6061, %v6063
      %v6093 = vsel %vm331, %v6063, %v6065
      %v6094 = vsel %vm331, %v6067, %v6069
      %v6095 = vsel %vm331, %v6069, %v6071
      %v6096 = vsel %vm331, %v6073, %v6075
      %v6097 = vsel %vm331, %v6075, %v6077
      %v6098 = vsel %vm331, %v6079, %v6081
      %v6099 = vsel %vm331, %v6081, %v6083
      %v6117 = vsel %vm939, %v5398, 0
      %v6120 = vsel %vm939, %v5399, 0
      %v6123 = vsel %vm939, %v5400, 0
      %v6126 = vsel %vm939, %v5401, 0
      %v6129 = vsel %vm939, %v5402, 0
      %v6132 = vsel %vm939, %v5403, 0
      %v6135 = vsel %vm939, %v5404, 0
      %v6138 = vsel %vm939, %v5405, 0
      %6140 = vmatprep.subr.mxu0 0.0
      %6141 = vmatpush1.msra.mxu0 0.0
      %6142 = vmatprep.subr.mxu0 0.0
      %6143 = vmatpush1.msra.mxu0 0.0
      %6144 = vmatprep.subr.mxu0 0.0
      %6145 = vmatpush1.msra.mxu0 0.0
      %6146 = vmatprep.subr.mxu0 0.0
      %6147 = vmatpush1.msra.mxu0 0.0
      %6148 = vmatprep.subr.mxu0 0.0
      %6149 = vmatpush1.msra.mxu0 0.0
      %6150 = vmatprep.subr.mxu0 0.0
      %6151 = vmatpush1.msra.mxu0 0.0
      %6152 = vmatprep.subr.mxu0 0.0
      %6153 = vmatpush1.msra.mxu0 0.0
      %6154 = vmatprep.subr.mxu0 0.0
      %6155 = vmatpush1.msra.mxu0 0.0
      %6156 = vmatprep.subr.mxu0 %v6099
      %6157 = vmatpush1.msra.mxu0 %v6098
      %6158 = vmatprep.subr.mxu0 %v6097
      %6159 = vmatpush1.msra.mxu0 %v6096
      %6160 = vmatprep.subr.mxu0 %v6095
      %6161 = vmatpush1.msra.mxu0 %v6094
      %6162 = vmatprep.subr.mxu0 %v6093
      %6163 = vmatpush1.msra.mxu0 %v6092
      %6164 = vmatprep.subr.mxu0 %v6091
      %6165 = vmatpush1.msra.mxu0 %v6090
      %6166 = vmatprep.subr.mxu0 %v6089
      %6167 = vmatpush1.msra.mxu0 %v6088
      %6168 = vmatprep.subr.mxu0 %v6087
      %6169 = vmatpush1.msra.mxu0 %v6086
      %6170 = vmatprep.subr.mxu0 %v6085
      %6171 = vmatpush1.msra.mxu0 %v6084
      %6172 = vmatprep.subr.mxu0 0.0
      %6173 = vmatpush2.msra.mxu0 0.0
      %6174 = vmatprep.subr.mxu0 0.0
      %6175 = vmatpush2.msra.mxu0 0.0
      %6176 = vmatprep.subr.mxu0 0.0
      %6177 = vmatpush2.msra.mxu0 0.0
      %6178 = vmatprep.subr.mxu0 0.0
      %6179 = vmatpush2.msra.mxu0 0.0
      %6180 = vmatprep.subr.mxu0 0.0
      %6181 = vmatpush2.msra.mxu0 0.0
      %6182 = vmatprep.subr.mxu0 0.0
      %6183 = vmatpush2.msra.mxu0 0.0
      %6184 = vmatprep.subr.mxu0 0.0
      %6185 = vmatpush2.msra.mxu0 0.0
      %6186 = vmatprep.subr.mxu0 0.0
      %6187 = vmatpush2.msra.mxu0 0.0
      %6188 = vmatprep.subr.mxu0 0.0
      %6189 = vmatpush2.msra.mxu0 0.0
      %6190 = vmatprep.subr.mxu0 0.0
      %6191 = vmatpush2.msra.mxu0 0.0
      %6192 = vmatprep.subr.mxu0 0.0
      %6193 = vmatpush2.msra.mxu0 0.0
      %6194 = vmatprep.subr.mxu0 0.0
      %6195 = vmatpush2.msra.mxu0 0.0
      %6196 = vmatprep.subr.mxu0 0.0
      %6197 = vmatpush2.msra.mxu0 0.0
      %6198 = vmatprep.subr.mxu0 0.0
      %6199 = vmatpush2.msra.mxu0 0.0
      %6200 = vmatprep.subr.mxu0 0.0
      %6201 = vmatpush2.msra.mxu0 0.0
      %6202 = vmatprep.subr.mxu0 0.0
      %6203 = vmatpush2.msra.mxu0 0.0
      %6204 = vmatprep.mubr.f32.mxu0 0.0
      %6205 = vmatmul.mubr.f32.gmra.mxu0 %v6117
      %v6206 = vpop.f32.mrf.mxu0
      %v6207 = vadd.f32 %v5990, %v6206
      %v6208 = vpop.f32.mrf.mxu0
      %v6209 = vadd.f32 %v5992, %v6208
      %6210 = vmatprep.mubr.f32.mxu0 0.0
      %6211 = vmatmul.mubr.f32.gmra.mxu0 %v6120
      %v6212 = vpop.f32.mrf.mxu0
      %v6213 = vadd.f32 %v5996, %v6212
      %v6214 = vpop.f32.mrf.mxu0
      %v6215 = vadd.f32 %v5998, %v6214
      %6216 = vmatprep.mubr.f32.mxu0 0.0
      %6217 = vmatmul.mubr.f32.gmra.mxu0 %v6123
      %v6218 = vpop.f32.mrf.mxu0
      %v6219 = vadd.f32 %v6002, %v6218
      %v6220 = vpop.f32.mrf.mxu0
      %v6221 = vadd.f32 %v6004, %v6220
      %6222 = vmatprep.mubr.f32.mxu0 0.0
      %6223 = vmatmul.mubr.f32.gmra.mxu0 %v6126
      %v6224 = vpop.f32.mrf.mxu0
      %v6225 = vadd.f32 %v6008, %v6224
      %v6226 = vpop.f32.mrf.mxu0
      %v6227 = vadd.f32 %v6010, %v6226
      %6228 = vmatprep.mubr.f32.mxu0 0.0
      %6229 = vmatmul.mubr.f32.gmra.mxu0 %v6129
      %v6230 = vpop.f32.mrf.mxu0
      %v6231 = vadd.f32 %v6014, %v6230
      %v6232 = vpop.f32.mrf.mxu0
      %v6233 = vadd.f32 %v6016, %v6232
      %6234 = vmatprep.mubr.f32.mxu0 0.0
      %6235 = vmatmul.mubr.f32.gmra.mxu0 %v6132
      %v6236 = vpop.f32.mrf.mxu0
      %v6237 = vadd.f32 %v6020, %v6236
      %v6238 = vpop.f32.mrf.mxu0
      %v6239 = vadd.f32 %v6022, %v6238
      %6240 = vmatprep.mubr.f32.mxu0 0.0
      %6241 = vmatmul.mubr.f32.gmra.mxu0 %v6135
      %v6242 = vpop.f32.mrf.mxu0
      %v6243 = vadd.f32 %v6026, %v6242
      %v6244 = vpop.f32.mrf.mxu0
      %v6245 = vadd.f32 %v6028, %v6244
      %6246 = vmatprep.mubr.f32.mxu0 0.0
      %6247 = vmatmul.mubr.f32.gmra.mxu0 %v6138
      %v6248 = vpop.f32.mrf.mxu0
      %v6249 = vadd.f32 %v6032, %v6248
      %v6250 = vpop.f32.mrf.mxu0
      %v6251 = vadd.f32 %v6034, %v6250
      %6252 = vdwg.mxu0
      %s6253 = scalar_lea.vmem %s2, 1472
      %v6254 = vld [vmem:[%s6253] sm:$0xff]
      %v6255 = vld [vmem:[%s6253 + $0x8] sm:$0xff]
      %v6256 = vld [vmem:[%s6253 + $0x10] sm:$0xff]
      %v6257 = vld [vmem:[%s6253 + $0x18] sm:$0xff]
      %v6258 = vld [vmem:[%s6253 + $0x20] sm:$0xff]
      %v6259 = vld [vmem:[%s6253 + $0x28] sm:$0xff]
      %v6260 = vld [vmem:[%s6253 + $0x30] sm:$0xff]
      %v6261 = vld [vmem:[%s6253 + $0x38] sm:$0xff]
      %6262 = vrot.lane.b32.xlu0 %v5381, 110
      %v6263 = vpop.permute.xlu0 %6262
      %6264 = vrot.lane.b32.xlu0 %v5382, 110
      %v6265 = vpop.permute.xlu0 %6264
      %6266 = vrot.lane.b32.xlu0 %v5406, 110
      %v6267 = vpop.permute.xlu0 %6266
      %6268 = vrot.lane.b32.xlu0 %v5383, 110
      %v6269 = vpop.permute.xlu0 %6268
      %6270 = vrot.lane.b32.xlu0 %v5384, 110
      %v6271 = vpop.permute.xlu0 %6270
      %6272 = vrot.lane.b32.xlu0 %v5407, 110
      %v6273 = vpop.permute.xlu0 %6272
      %6274 = vrot.lane.b32.xlu0 %v5385, 110
      %v6275 = vpop.permute.xlu0 %6274
      %6276 = vrot.lane.b32.xlu0 %v5386, 110
      %v6277 = vpop.permute.xlu0 %6276
      %6278 = vrot.lane.b32.xlu0 %v5408, 110
      %v6279 = vpop.permute.xlu0 %6278
      %6280 = vrot.lane.b32.xlu0 %v5387, 110
      %v6281 = vpop.permute.xlu0 %6280
      %6282 = vrot.lane.b32.xlu0 %v5388, 110
      %v6283 = vpop.permute.xlu0 %6282
      %6284 = vrot.lane.b32.xlu0 %v5409, 110
      %v6285 = vpop.permute.xlu0 %6284
      %6286 = vrot.lane.b32.xlu0 %v5389, 110
      %v6287 = vpop.permute.xlu0 %6286
      %6288 = vrot.lane.b32.xlu0 %v5390, 110
      %v6289 = vpop.permute.xlu0 %6288
      %6290 = vrot.lane.b32.xlu0 %v5410, 110
      %v6291 = vpop.permute.xlu0 %6290
      %6292 = vrot.lane.b32.xlu0 %v5391, 110
      %v6293 = vpop.permute.xlu0 %6292
      %6294 = vrot.lane.b32.xlu0 %v5392, 110
      %v6295 = vpop.permute.xlu0 %6294
      %6296 = vrot.lane.b32.xlu0 %v5411, 110
      %v6297 = vpop.permute.xlu0 %6296
      %6298 = vrot.lane.b32.xlu0 %v5393, 110
      %v6299 = vpop.permute.xlu0 %6298
      %6300 = vrot.lane.b32.xlu0 %v5394, 110
      %v6301 = vpop.permute.xlu0 %6300
      %6302 = vrot.lane.b32.xlu0 %v5412, 110
      %v6303 = vpop.permute.xlu0 %6302
      %6304 = vrot.lane.b32.xlu0 %v5395, 110
      %v6305 = vpop.permute.xlu0 %6304
      %6306 = vrot.lane.b32.xlu0 %v5396, 110
      %v6307 = vpop.permute.xlu0 %6306
      %6308 = vrot.lane.b32.xlu0 %v5413, 110
      %v6309 = vpop.permute.xlu0 %6308
      %v6310 = vsel %vm413, %v6263, %v6265
      %v6311 = vsel %vm413, %v6265, %v6267
      %v6312 = vsel %vm413, %v6269, %v6271
      %v6313 = vsel %vm413, %v6271, %v6273
      %v6314 = vsel %vm413, %v6275, %v6277
      %v6315 = vsel %vm413, %v6277, %v6279
      %v6316 = vsel %vm413, %v6281, %v6283
      %v6317 = vsel %vm413, %v6283, %v6285
      %v6318 = vsel %vm413, %v6287, %v6289
      %v6319 = vsel %vm413, %v6289, %v6291
      %v6320 = vsel %vm413, %v6293, %v6295
      %v6321 = vsel %vm413, %v6295, %v6297
      %v6322 = vsel %vm413, %v6299, %v6301
      %v6323 = vsel %vm413, %v6301, %v6303
      %v6324 = vsel %vm413, %v6305, %v6307
      %v6325 = vsel %vm413, %v6307, %v6309
      %v6343 = vsel %vm939, %v6254, 0
      %v6346 = vsel %vm939, %v6255, 0
      %v6349 = vsel %vm939, %v6256, 0
      %v6352 = vsel %vm939, %v6257, 0
      %v6355 = vsel %vm939, %v6258, 0
      %v6358 = vsel %vm939, %v6259, 0
      %v6361 = vsel %vm939, %v6260, 0
      %v6364 = vsel %vm939, %v6261, 0
      %6366 = vmatprep.subr.mxu0 0.0
      %6367 = vmatpush1.msra.mxu0 0.0
      %6368 = vmatprep.subr.mxu0 0.0
      %6369 = vmatpush1.msra.mxu0 0.0
      %6370 = vmatprep.subr.mxu0 0.0
      %6371 = vmatpush1.msra.mxu0 0.0
      %6372 = vmatprep.subr.mxu0 0.0
      %6373 = vmatpush1.msra.mxu0 0.0
      %6374 = vmatprep.subr.mxu0 0.0
      %6375 = vmatpush1.msra.mxu0 0.0
      %6376 = vmatprep.subr.mxu0 0.0
      %6377 = vmatpush1.msra.mxu0 0.0
      %6378 = vmatprep.subr.mxu0 0.0
      %6379 = vmatpush1.msra.mxu0 0.0
      %6380 = vmatprep.subr.mxu0 0.0
      %6381 = vmatpush1.msra.mxu0 0.0
      %6382 = vmatprep.subr.mxu0 %v6325
      %6383 = vmatpush1.msra.mxu0 %v6324
      %6384 = vmatprep.subr.mxu0 %v6323
      %6385 = vmatpush1.msra.mxu0 %v6322
      %6386 = vmatprep.subr.mxu0 %v6321
      %6387 = vmatpush1.msra.mxu0 %v6320
      %6388 = vmatprep.subr.mxu0 %v6319
      %6389 = vmatpush1.msra.mxu0 %v6318
      %6390 = vmatprep.subr.mxu0 %v6317
      %6391 = vmatpush1.msra.mxu0 %v6316
      %6392 = vmatprep.subr.mxu0 %v6315
      %6393 = vmatpush1.msra.mxu0 %v6314
      %6394 = vmatprep.subr.mxu0 %v6313
      %6395 = vmatpush1.msra.mxu0 %v6312
      %6396 = vmatprep.subr.mxu0 %v6311
      %6397 = vmatpush1.msra.mxu0 %v6310
      %6398 = vmatprep.subr.mxu0 0.0
      %6399 = vmatpush2.msra.mxu0 0.0
      %6400 = vmatprep.subr.mxu0 0.0
      %6401 = vmatpush2.msra.mxu0 0.0
      %6402 = vmatprep.subr.mxu0 0.0
      %6403 = vmatpush2.msra.mxu0 0.0
      %6404 = vmatprep.subr.mxu0 0.0
      %6405 = vmatpush2.msra.mxu0 0.0
      %6406 = vmatprep.subr.mxu0 0.0
      %6407 = vmatpush2.msra.mxu0 0.0
      %6408 = vmatprep.subr.mxu0 0.0
      %6409 = vmatpush2.msra.mxu0 0.0
      %6410 = vmatprep.subr.mxu0 0.0
      %6411 = vmatpush2.msra.mxu0 0.0
      %6412 = vmatprep.subr.mxu0 0.0
      %6413 = vmatpush2.msra.mxu0 0.0
      %6414 = vmatprep.subr.mxu0 0.0
      %6415 = vmatpush2.msra.mxu0 0.0
      %6416 = vmatprep.subr.mxu0 0.0
      %6417 = vmatpush2.msra.mxu0 0.0
      %6418 = vmatprep.subr.mxu0 0.0
      %6419 = vmatpush2.msra.mxu0 0.0
      %6420 = vmatprep.subr.mxu0 0.0
      %6421 = vmatpush2.msra.mxu0 0.0
      %6422 = vmatprep.subr.mxu0 0.0
      %6423 = vmatpush2.msra.mxu0 0.0
      %6424 = vmatprep.subr.mxu0 0.0
      %6425 = vmatpush2.msra.mxu0 0.0
      %6426 = vmatprep.subr.mxu0 0.0
      %6427 = vmatpush2.msra.mxu0 0.0
      %6428 = vmatprep.subr.mxu0 0.0
      %6429 = vmatpush2.msra.mxu0 0.0
      %6430 = vmatprep.mubr.f32.mxu0 0.0
      %6431 = vmatmul.mubr.f32.gmra.mxu0 %v6343
      %v6432 = vpop.f32.mrf.mxu0
      %v6433 = vadd.f32 0.0, %v6432
      %v6434 = vpop.f32.mrf.mxu0
      %v6435 = vadd.f32 0.0, %v6434
      %6436 = vmatprep.mubr.f32.mxu0 0.0
      %6437 = vmatmul.mubr.f32.gmra.mxu0 %v6346
      %v6438 = vpop.f32.mrf.mxu0
      %v6439 = vadd.f32 0.0, %v6438
      %v6440 = vpop.f32.mrf.mxu0
      %v6441 = vadd.f32 0.0, %v6440
      %6442 = vmatprep.mubr.f32.mxu0 0.0
      %6443 = vmatmul.mubr.f32.gmra.mxu0 %v6349
      %v6444 = vpop.f32.mrf.mxu0
      %v6445 = vadd.f32 0.0, %v6444
      %v6446 = vpop.f32.mrf.mxu0
      %v6447 = vadd.f32 0.0, %v6446
      %6448 = vmatprep.mubr.f32.mxu0 0.0
      %6449 = vmatmul.mubr.f32.gmra.mxu0 %v6352
      %v6450 = vpop.f32.mrf.mxu0
      %v6451 = vadd.f32 0.0, %v6450
      %v6452 = vpop.f32.mrf.mxu0
      %v6453 = vadd.f32 0.0, %v6452
      %6454 = vmatprep.mubr.f32.mxu0 0.0
      %6455 = vmatmul.mubr.f32.gmra.mxu0 %v6355
      %v6456 = vpop.f32.mrf.mxu0
      %v6457 = vadd.f32 0.0, %v6456
      %v6458 = vpop.f32.mrf.mxu0
      %v6459 = vadd.f32 0.0, %v6458
      %6460 = vmatprep.mubr.f32.mxu0 0.0
      %6461 = vmatmul.mubr.f32.gmra.mxu0 %v6358
      %v6462 = vpop.f32.mrf.mxu0
      %v6463 = vadd.f32 0.0, %v6462
      %v6464 = vpop.f32.mrf.mxu0
      %v6465 = vadd.f32 0.0, %v6464
      %6466 = vmatprep.mubr.f32.mxu0 0.0
      %6467 = vmatmul.mubr.f32.gmra.mxu0 %v6361
      %v6468 = vpop.f32.mrf.mxu0
      %v6469 = vadd.f32 0.0, %v6468
      %v6470 = vpop.f32.mrf.mxu0
      %v6471 = vadd.f32 0.0, %v6470
      %6472 = vmatprep.mubr.f32.mxu0 0.0
      %6473 = vmatmul.mubr.f32.gmra.mxu0 %v6364
      %v6474 = vpop.f32.mrf.mxu0
      %v6475 = vadd.f32 0.0, %v6474
      %v6476 = vpop.f32.mrf.mxu0
      %v6477 = vadd.f32 0.0, %v6476
      %6478 = vdwg.mxu0
      %6479 = vrot.lane.b32.xlu0 %v5381, 126
      %v6480 = vpop.permute.xlu0 %6479
      %6481 = vrot.lane.b32.xlu0 %v5382, 126
      %v6482 = vpop.permute.xlu0 %6481
      %6483 = vrot.lane.b32.xlu0 %v5406, 126
      %v6484 = vpop.permute.xlu0 %6483
      %6485 = vrot.lane.b32.xlu0 %v5383, 126
      %v6486 = vpop.permute.xlu0 %6485
      %6487 = vrot.lane.b32.xlu0 %v5384, 126
      %v6488 = vpop.permute.xlu0 %6487
      %6489 = vrot.lane.b32.xlu0 %v5407, 126
      %v6490 = vpop.permute.xlu0 %6489
      %6491 = vrot.lane.b32.xlu0 %v5385, 126
      %v6492 = vpop.permute.xlu0 %6491
      %6493 = vrot.lane.b32.xlu0 %v5386, 126
      %v6494 = vpop.permute.xlu0 %6493
      %6495 = vrot.lane.b32.xlu0 %v5408, 126
      %v6496 = vpop.permute.xlu0 %6495
      %6497 = vrot.lane.b32.xlu0 %v5387, 126
      %v6498 = vpop.permute.xlu0 %6497
      %6499 = vrot.lane.b32.xlu0 %v5388, 126
      %v6500 = vpop.permute.xlu0 %6499
      %6501 = vrot.lane.b32.xlu0 %v5409, 126
      %v6502 = vpop.permute.xlu0 %6501
      %6503 = vrot.lane.b32.xlu0 %v5389, 126
      %v6504 = vpop.permute.xlu0 %6503
      %6505 = vrot.lane.b32.xlu0 %v5390, 126
      %v6506 = vpop.permute.xlu0 %6505
      %6507 = vrot.lane.b32.xlu0 %v5410, 126
      %v6508 = vpop.permute.xlu0 %6507
      %6509 = vrot.lane.b32.xlu0 %v5391, 126
      %v6510 = vpop.permute.xlu0 %6509
      %6511 = vrot.lane.b32.xlu0 %v5392, 126
      %v6512 = vpop.permute.xlu0 %6511
      %6513 = vrot.lane.b32.xlu0 %v5411, 126
      %v6514 = vpop.permute.xlu0 %6513
      %6515 = vrot.lane.b32.xlu0 %v5393, 126
      %v6516 = vpop.permute.xlu0 %6515
      %6517 = vrot.lane.b32.xlu0 %v5394, 126
      %v6518 = vpop.permute.xlu0 %6517
      %6519 = vrot.lane.b32.xlu0 %v5412, 126
      %v6520 = vpop.permute.xlu0 %6519
      %6521 = vrot.lane.b32.xlu0 %v5395, 126
      %v6522 = vpop.permute.xlu0 %6521
      %6523 = vrot.lane.b32.xlu0 %v5396, 126
      %v6524 = vpop.permute.xlu0 %6523
      %6525 = vrot.lane.b32.xlu0 %v5413, 126
      %v6526 = vpop.permute.xlu0 %6525
      %v6527 = vsel %vm366, %v6480, %v6482
      %v6528 = vsel %vm366, %v6482, %v6484
      %v6529 = vsel %vm366, %v6486, %v6488
      %v6530 = vsel %vm366, %v6488, %v6490
      %v6531 = vsel %vm366, %v6492, %v6494
      %v6532 = vsel %vm366, %v6494, %v6496
      %v6533 = vsel %vm366, %v6498, %v6500
      %v6534 = vsel %vm366, %v6500, %v6502
      %v6535 = vsel %vm366, %v6504, %v6506
      %v6536 = vsel %vm366, %v6506, %v6508
      %v6537 = vsel %vm366, %v6510, %v6512
      %v6538 = vsel %vm366, %v6512, %v6514
      %v6539 = vsel %vm366, %v6516, %v6518
      %v6540 = vsel %vm366, %v6518, %v6520
      %v6541 = vsel %vm366, %v6522, %v6524
      %v6542 = vsel %vm366, %v6524, %v6526
      %v6560 = vsel %vm939, %v5415, 0
      %v6563 = vsel %vm939, %v5416, 0
      %v6566 = vsel %vm939, %v5417, 0
      %v6569 = vsel %vm939, %v5418, 0
      %v6572 = vsel %vm939, %v5419, 0
      %v6575 = vsel %vm939, %v5420, 0
      %v6578 = vsel %vm939, %v5421, 0
      %v6581 = vsel %vm939, %v5422, 0
      %6583 = vmatprep.subr.mxu0 0.0
      %6584 = vmatpush1.msra.mxu0 0.0
      %6585 = vmatprep.subr.mxu0 0.0
      %6586 = vmatpush1.msra.mxu0 0.0
      %6587 = vmatprep.subr.mxu0 0.0
      %6588 = vmatpush1.msra.mxu0 0.0
      %6589 = vmatprep.subr.mxu0 0.0
      %6590 = vmatpush1.msra.mxu0 0.0
      %6591 = vmatprep.subr.mxu0 0.0
      %6592 = vmatpush1.msra.mxu0 0.0
      %6593 = vmatprep.subr.mxu0 0.0
      %6594 = vmatpush1.msra.mxu0 0.0
      %6595 = vmatprep.subr.mxu0 0.0
      %6596 = vmatpush1.msra.mxu0 0.0
      %6597 = vmatprep.subr.mxu0 0.0
      %6598 = vmatpush1.msra.mxu0 0.0
      %6599 = vmatprep.subr.mxu0 %v6542
      %6600 = vmatpush1.msra.mxu0 %v6541
      %6601 = vmatprep.subr.mxu0 %v6540
      %6602 = vmatpush1.msra.mxu0 %v6539
      %6603 = vmatprep.subr.mxu0 %v6538
      %6604 = vmatpush1.msra.mxu0 %v6537
      %6605 = vmatprep.subr.mxu0 %v6536
      %6606 = vmatpush1.msra.mxu0 %v6535
      %6607 = vmatprep.subr.mxu0 %v6534
      %6608 = vmatpush1.msra.mxu0 %v6533
      %6609 = vmatprep.subr.mxu0 %v6532
      %6610 = vmatpush1.msra.mxu0 %v6531
      %6611 = vmatprep.subr.mxu0 %v6530
      %6612 = vmatpush1.msra.mxu0 %v6529
      %6613 = vmatprep.subr.mxu0 %v6528
      %6614 = vmatpush1.msra.mxu0 %v6527
      %6615 = vmatprep.subr.mxu0 0.0
      %6616 = vmatpush2.msra.mxu0 0.0
      %6617 = vmatprep.subr.mxu0 0.0
      %6618 = vmatpush2.msra.mxu0 0.0
      %6619 = vmatprep.subr.mxu0 0.0
      %6620 = vmatpush2.msra.mxu0 0.0
      %6621 = vmatprep.subr.mxu0 0.0
      %6622 = vmatpush2.msra.mxu0 0.0
      %6623 = vmatprep.subr.mxu0 0.0
      %6624 = vmatpush2.msra.mxu0 0.0
      %6625 = vmatprep.subr.mxu0 0.0
      %6626 = vmatpush2.msra.mxu0 0.0
      %6627 = vmatprep.subr.mxu0 0.0
      %6628 = vmatpush2.msra.mxu0 0.0
      %6629 = vmatprep.subr.mxu0 0.0
      %6630 = vmatpush2.msra.mxu0 0.0
      %6631 = vmatprep.subr.mxu0 0.0
      %6632 = vmatpush2.msra.mxu0 0.0
      %6633 = vmatprep.subr.mxu0 0.0
      %6634 = vmatpush2.msra.mxu0 0.0
      %6635 = vmatprep.subr.mxu0 0.0
      %6636 = vmatpush2.msra.mxu0 0.0
      %6637 = vmatprep.subr.mxu0 0.0
      %6638 = vmatpush2.msra.mxu0 0.0
      %6639 = vmatprep.subr.mxu0 0.0
      %6640 = vmatpush2.msra.mxu0 0.0
      %6641 = vmatprep.subr.mxu0 0.0
      %6642 = vmatpush2.msra.mxu0 0.0
      %6643 = vmatprep.subr.mxu0 0.0
      %6644 = vmatpush2.msra.mxu0 0.0
      %6645 = vmatprep.subr.mxu0 0.0
      %6646 = vmatpush2.msra.mxu0 0.0
      %6647 = vmatprep.mubr.f32.mxu0 0.0
      %6648 = vmatmul.mubr.f32.gmra.mxu0 %v6560
      %v6649 = vpop.f32.mrf.mxu0
      %v6650 = vadd.f32 %v6433, %v6649
      %v6651 = vpop.f32.mrf.mxu0
      %v6652 = vadd.f32 %v6435, %v6651
      %6653 = vmatprep.mubr.f32.mxu0 0.0
      %6654 = vmatmul.mubr.f32.gmra.mxu0 %v6563
      %v6655 = vpop.f32.mrf.mxu0
      %v6656 = vadd.f32 %v6439, %v6655
      %v6657 = vpop.f32.mrf.mxu0
      %v6658 = vadd.f32 %v6441, %v6657
      %6659 = vmatprep.mubr.f32.mxu0 0.0
      %6660 = vmatmul.mubr.f32.gmra.mxu0 %v6566
      %v6661 = vpop.f32.mrf.mxu0
      %v6662 = vadd.f32 %v6445, %v6661
      %v6663 = vpop.f32.mrf.mxu0
      %v6664 = vadd.f32 %v6447, %v6663
      %6665 = vmatprep.mubr.f32.mxu0 0.0
      %6666 = vmatmul.mubr.f32.gmra.mxu0 %v6569
      %v6667 = vpop.f32.mrf.mxu0
      %v6668 = vadd.f32 %v6451, %v6667
      %v6669 = vpop.f32.mrf.mxu0
      %v6670 = vadd.f32 %v6453, %v6669
      %6671 = vmatprep.mubr.f32.mxu0 0.0
      %6672 = vmatmul.mubr.f32.gmra.mxu0 %v6572
      %v6673 = vpop.f32.mrf.mxu0
      %v6674 = vadd.f32 %v6457, %v6673
      %v6675 = vpop.f32.mrf.mxu0
      %v6676 = vadd.f32 %v6459, %v6675
      %6677 = vmatprep.mubr.f32.mxu0 0.0
      %6678 = vmatmul.mubr.f32.gmra.mxu0 %v6575
      %v6679 = vpop.f32.mrf.mxu0
      %v6680 = vadd.f32 %v6463, %v6679
      %v6681 = vpop.f32.mrf.mxu0
      %v6682 = vadd.f32 %v6465, %v6681
      %6683 = vmatprep.mubr.f32.mxu0 0.0
      %6684 = vmatmul.mubr.f32.gmra.mxu0 %v6578
      %v6685 = vpop.f32.mrf.mxu0
      %v6686 = vadd.f32 %v6469, %v6685
      %v6687 = vpop.f32.mrf.mxu0
      %v6688 = vadd.f32 %v6471, %v6687
      %6689 = vmatprep.mubr.f32.mxu0 0.0
      %6690 = vmatmul.mubr.f32.gmra.mxu0 %v6581
      %v6691 = vpop.f32.mrf.mxu0
      %v6692 = vadd.f32 %v6475, %v6691
      %v6693 = vpop.f32.mrf.mxu0
      %v6694 = vadd.f32 %v6477, %v6693
      %6695 = vdwg.mxu0
      %s6696 = scalar_lea.vmem %s2, 1536
      %v6697 = vld [vmem:[%s6696] sm:$0xff]
      %v6698 = vld [vmem:[%s6696 + $0x8] sm:$0xff]
      %v6699 = vld [vmem:[%s6696 + $0x10] sm:$0xff]
      %v6700 = vld [vmem:[%s6696 + $0x18] sm:$0xff]
      %v6701 = vld [vmem:[%s6696 + $0x20] sm:$0xff]
      %v6702 = vld [vmem:[%s6696 + $0x28] sm:$0xff]
      %v6703 = vld [vmem:[%s6696 + $0x30] sm:$0xff]
      %v6704 = vld [vmem:[%s6696 + $0x38] sm:$0xff]
      %6705 = vrot.lane.b32.xlu0 %v5381, 96
      %v6706 = vpop.permute.xlu0 %6705
      %6707 = vrot.lane.b32.xlu0 %v5382, 96
      %v6708 = vpop.permute.xlu0 %6707
      %6709 = vrot.lane.b32.xlu0 %v5406, 96
      %v6710 = vpop.permute.xlu0 %6709
      %6711 = vrot.lane.b32.xlu0 %v5383, 96
      %v6712 = vpop.permute.xlu0 %6711
      %6713 = vrot.lane.b32.xlu0 %v5384, 96
      %v6714 = vpop.permute.xlu0 %6713
      %6715 = vrot.lane.b32.xlu0 %v5407, 96
      %v6716 = vpop.permute.xlu0 %6715
      %6717 = vrot.lane.b32.xlu0 %v5385, 96
      %v6718 = vpop.permute.xlu0 %6717
      %6719 = vrot.lane.b32.xlu0 %v5386, 96
      %v6720 = vpop.permute.xlu0 %6719
      %6721 = vrot.lane.b32.xlu0 %v5408, 96
      %v6722 = vpop.permute.xlu0 %6721
      %6723 = vrot.lane.b32.xlu0 %v5387, 96
      %v6724 = vpop.permute.xlu0 %6723
      %6725 = vrot.lane.b32.xlu0 %v5388, 96
      %v6726 = vpop.permute.xlu0 %6725
      %6727 = vrot.lane.b32.xlu0 %v5409, 96
      %v6728 = vpop.permute.xlu0 %6727
      %6729 = vrot.lane.b32.xlu0 %v5389, 96
      %v6730 = vpop.permute.xlu0 %6729
      %6731 = vrot.lane.b32.xlu0 %v5390, 96
      %v6732 = vpop.permute.xlu0 %6731
      %6733 = vrot.lane.b32.xlu0 %v5410, 96
      %v6734 = vpop.permute.xlu0 %6733
      %6735 = vrot.lane.b32.xlu0 %v5391, 96
      %v6736 = vpop.permute.xlu0 %6735
      %6737 = vrot.lane.b32.xlu0 %v5392, 96
      %v6738 = vpop.permute.xlu0 %6737
      %6739 = vrot.lane.b32.xlu0 %v5411, 96
      %v6740 = vpop.permute.xlu0 %6739
      %6741 = vrot.lane.b32.xlu0 %v5393, 96
      %v6742 = vpop.permute.xlu0 %6741
      %6743 = vrot.lane.b32.xlu0 %v5394, 96
      %v6744 = vpop.permute.xlu0 %6743
      %6745 = vrot.lane.b32.xlu0 %v5412, 96
      %v6746 = vpop.permute.xlu0 %6745
      %6747 = vrot.lane.b32.xlu0 %v5395, 96
      %v6748 = vpop.permute.xlu0 %6747
      %6749 = vrot.lane.b32.xlu0 %v5396, 96
      %v6750 = vpop.permute.xlu0 %6749
      %6751 = vrot.lane.b32.xlu0 %v5413, 96
      %v6752 = vpop.permute.xlu0 %6751
      %v6753 = vsel %vm431, %v6706, %v6708
      %v6754 = vsel %vm431, %v6708, %v6710
      %v6755 = vsel %vm431, %v6712, %v6714
      %v6756 = vsel %vm431, %v6714, %v6716
      %v6757 = vsel %vm431, %v6718, %v6720
      %v6758 = vsel %vm431, %v6720, %v6722
      %v6759 = vsel %vm431, %v6724, %v6726
      %v6760 = vsel %vm431, %v6726, %v6728
      %v6761 = vsel %vm431, %v6730, %v6732
      %v6762 = vsel %vm431, %v6732, %v6734
      %v6763 = vsel %vm431, %v6736, %v6738
      %v6764 = vsel %vm431, %v6738, %v6740
      %v6765 = vsel %vm431, %v6742, %v6744
      %v6766 = vsel %vm431, %v6744, %v6746
      %v6767 = vsel %vm431, %v6748, %v6750
      %v6768 = vsel %vm431, %v6750, %v6752
      %v6786 = vsel %vm939, %v6697, 0
      %v6789 = vsel %vm939, %v6698, 0
      %v6792 = vsel %vm939, %v6699, 0
      %v6795 = vsel %vm939, %v6700, 0
      %v6798 = vsel %vm939, %v6701, 0
      %v6801 = vsel %vm939, %v6702, 0
      %v6804 = vsel %vm939, %v6703, 0
      %v6807 = vsel %vm939, %v6704, 0
      %6809 = vmatprep.subr.mxu0 0.0
      %6810 = vmatpush1.msra.mxu0 0.0
      %6811 = vmatprep.subr.mxu0 0.0
      %6812 = vmatpush1.msra.mxu0 0.0
      %6813 = vmatprep.subr.mxu0 0.0
      %6814 = vmatpush1.msra.mxu0 0.0
      %6815 = vmatprep.subr.mxu0 0.0
      %6816 = vmatpush1.msra.mxu0 0.0
      %6817 = vmatprep.subr.mxu0 0.0
      %6818 = vmatpush1.msra.mxu0 0.0
      %6819 = vmatprep.subr.mxu0 0.0
      %6820 = vmatpush1.msra.mxu0 0.0
      %6821 = vmatprep.subr.mxu0 0.0
      %6822 = vmatpush1.msra.mxu0 0.0
      %6823 = vmatprep.subr.mxu0 0.0
      %6824 = vmatpush1.msra.mxu0 0.0
      %6825 = vmatprep.subr.mxu0 %v6768
      %6826 = vmatpush1.msra.mxu0 %v6767
      %6827 = vmatprep.subr.mxu0 %v6766
      %6828 = vmatpush1.msra.mxu0 %v6765
      %6829 = vmatprep.subr.mxu0 %v6764
      %6830 = vmatpush1.msra.mxu0 %v6763
      %6831 = vmatprep.subr.mxu0 %v6762
      %6832 = vmatpush1.msra.mxu0 %v6761
      %6833 = vmatprep.subr.mxu0 %v6760
      %6834 = vmatpush1.msra.mxu0 %v6759
      %6835 = vmatprep.subr.mxu0 %v6758
      %6836 = vmatpush1.msra.mxu0 %v6757
      %6837 = vmatprep.subr.mxu0 %v6756
      %6838 = vmatpush1.msra.mxu0 %v6755
      %6839 = vmatprep.subr.mxu0 %v6754
      %6840 = vmatpush1.msra.mxu0 %v6753
      %6841 = vmatprep.subr.mxu0 0.0
      %6842 = vmatpush2.msra.mxu0 0.0
      %6843 = vmatprep.subr.mxu0 0.0
      %6844 = vmatpush2.msra.mxu0 0.0
      %6845 = vmatprep.subr.mxu0 0.0
      %6846 = vmatpush2.msra.mxu0 0.0
      %6847 = vmatprep.subr.mxu0 0.0
      %6848 = vmatpush2.msra.mxu0 0.0
      %6849 = vmatprep.subr.mxu0 0.0
      %6850 = vmatpush2.msra.mxu0 0.0
      %6851 = vmatprep.subr.mxu0 0.0
      %6852 = vmatpush2.msra.mxu0 0.0
      %6853 = vmatprep.subr.mxu0 0.0
      %6854 = vmatpush2.msra.mxu0 0.0
      %6855 = vmatprep.subr.mxu0 0.0
      %6856 = vmatpush2.msra.mxu0 0.0
      %6857 = vmatprep.subr.mxu0 0.0
      %6858 = vmatpush2.msra.mxu0 0.0
      %6859 = vmatprep.subr.mxu0 0.0
      %6860 = vmatpush2.msra.mxu0 0.0
      %6861 = vmatprep.subr.mxu0 0.0
      %6862 = vmatpush2.msra.mxu0 0.0
      %6863 = vmatprep.subr.mxu0 0.0
      %6864 = vmatpush2.msra.mxu0 0.0
      %6865 = vmatprep.subr.mxu0 0.0
      %6866 = vmatpush2.msra.mxu0 0.0
      %6867 = vmatprep.subr.mxu0 0.0
      %6868 = vmatpush2.msra.mxu0 0.0
      %6869 = vmatprep.subr.mxu0 0.0
      %6870 = vmatpush2.msra.mxu0 0.0
      %6871 = vmatprep.subr.mxu0 0.0
      %6872 = vmatpush2.msra.mxu0 0.0
      %6873 = vmatprep.mubr.f32.mxu0 0.0
      %6874 = vmatmul.mubr.f32.gmra.mxu0 %v6786
      %v6875 = vpop.f32.mrf.mxu0
      %v6876 = vadd.f32 0.0, %v6875
      %v6877 = vpop.f32.mrf.mxu0
      %v6878 = vadd.f32 0.0, %v6877
      %6879 = vmatprep.mubr.f32.mxu0 0.0
      %6880 = vmatmul.mubr.f32.gmra.mxu0 %v6789
      %v6881 = vpop.f32.mrf.mxu0
      %v6882 = vadd.f32 0.0, %v6881
      %v6883 = vpop.f32.mrf.mxu0
      %v6884 = vadd.f32 0.0, %v6883
      %6885 = vmatprep.mubr.f32.mxu0 0.0
      %6886 = vmatmul.mubr.f32.gmra.mxu0 %v6792
      %v6887 = vpop.f32.mrf.mxu0
      %v6888 = vadd.f32 0.0, %v6887
      %v6889 = vpop.f32.mrf.mxu0
      %v6890 = vadd.f32 0.0, %v6889
      %6891 = vmatprep.mubr.f32.mxu0 0.0
      %6892 = vmatmul.mubr.f32.gmra.mxu0 %v6795
      %v6893 = vpop.f32.mrf.mxu0
      %v6894 = vadd.f32 0.0, %v6893
      %v6895 = vpop.f32.mrf.mxu0
      %v6896 = vadd.f32 0.0, %v6895
      %6897 = vmatprep.mubr.f32.mxu0 0.0
      %6898 = vmatmul.mubr.f32.gmra.mxu0 %v6798
      %v6899 = vpop.f32.mrf.mxu0
      %v6900 = vadd.f32 0.0, %v6899
      %v6901 = vpop.f32.mrf.mxu0
      %v6902 = vadd.f32 0.0, %v6901
      %6903 = vmatprep.mubr.f32.mxu0 0.0
      %6904 = vmatmul.mubr.f32.gmra.mxu0 %v6801
      %v6905 = vpop.f32.mrf.mxu0
      %v6906 = vadd.f32 0.0, %v6905
      %v6907 = vpop.f32.mrf.mxu0
      %v6908 = vadd.f32 0.0, %v6907
      %6909 = vmatprep.mubr.f32.mxu0 0.0
      %6910 = vmatmul.mubr.f32.gmra.mxu0 %v6804
      %v6911 = vpop.f32.mrf.mxu0
      %v6912 = vadd.f32 0.0, %v6911
      %v6913 = vpop.f32.mrf.mxu0
      %v6914 = vadd.f32 0.0, %v6913
      %6915 = vmatprep.mubr.f32.mxu0 0.0
      %6916 = vmatmul.mubr.f32.gmra.mxu0 %v6807
      %v6917 = vpop.f32.mrf.mxu0
      %v6918 = vadd.f32 0.0, %v6917
      %v6919 = vpop.f32.mrf.mxu0
      %v6920 = vadd.f32 0.0, %v6919
      %6921 = vdwg.mxu0
      %v6922 = vadd.f32 %v5764, %v6876
      %v6923 = vadd.f32 %v5766, %v6878
      %v6924 = vadd.f32 %v5770, %v6882
      %v6925 = vadd.f32 %v5772, %v6884
      %v6926 = vadd.f32 %v5776, %v6888
      %v6927 = vadd.f32 %v5778, %v6890
      %v6928 = vadd.f32 %v5782, %v6894
      %v6929 = vadd.f32 %v5784, %v6896
      %v6930 = vadd.f32 %v5788, %v6900
      %v6931 = vadd.f32 %v5790, %v6902
      %v6932 = vadd.f32 %v5794, %v6906
      %v6933 = vadd.f32 %v5796, %v6908
      %v6934 = vadd.f32 %v5800, %v6912
      %v6935 = vadd.f32 %v5802, %v6914
      %v6936 = vadd.f32 %v5806, %v6918
      %v6937 = vadd.f32 %v5808, %v6920
      %s6938 = scalar_lea.vmem %s2, 1600
      %v6939 = vld [vmem:[%s6938] sm:$0xff]
      %v6940 = vld [vmem:[%s6938 + $0x8] sm:$0xff]
      %v6941 = vld [vmem:[%s6938 + $0x10] sm:$0xff]
      %v6942 = vld [vmem:[%s6938 + $0x18] sm:$0xff]
      %v6943 = vld [vmem:[%s6938 + $0x20] sm:$0xff]
      %v6944 = vld [vmem:[%s6938 + $0x28] sm:$0xff]
      %v6945 = vld [vmem:[%s6938 + $0x30] sm:$0xff]
      %v6946 = vld [vmem:[%s6938 + $0x38] sm:$0xff]
      %6947 = vrot.lane.b32.xlu0 %v5381, 95
      %v6948 = vpop.permute.xlu0 %6947
      %6949 = vrot.lane.b32.xlu0 %v5382, 95
      %v6950 = vpop.permute.xlu0 %6949
      %6951 = vrot.lane.b32.xlu0 %v5406, 95
      %v6952 = vpop.permute.xlu0 %6951
      %6953 = vrot.lane.b32.xlu0 %v5383, 95
      %v6954 = vpop.permute.xlu0 %6953
      %6955 = vrot.lane.b32.xlu0 %v5384, 95
      %v6956 = vpop.permute.xlu0 %6955
      %6957 = vrot.lane.b32.xlu0 %v5407, 95
      %v6958 = vpop.permute.xlu0 %6957
      %6959 = vrot.lane.b32.xlu0 %v5385, 95
      %v6960 = vpop.permute.xlu0 %6959
      %6961 = vrot.lane.b32.xlu0 %v5386, 95
      %v6962 = vpop.permute.xlu0 %6961
      %6963 = vrot.lane.b32.xlu0 %v5408, 95
      %v6964 = vpop.permute.xlu0 %6963
      %6965 = vrot.lane.b32.xlu0 %v5387, 95
      %v6966 = vpop.permute.xlu0 %6965
      %6967 = vrot.lane.b32.xlu0 %v5388, 95
      %v6968 = vpop.permute.xlu0 %6967
      %6969 = vrot.lane.b32.xlu0 %v5409, 95
      %v6970 = vpop.permute.xlu0 %6969
      %6971 = vrot.lane.b32.xlu0 %v5389, 95
      %v6972 = vpop.permute.xlu0 %6971
      %6973 = vrot.lane.b32.xlu0 %v5390, 95
      %v6974 = vpop.permute.xlu0 %6973
      %6975 = vrot.lane.b32.xlu0 %v5410, 95
      %v6976 = vpop.permute.xlu0 %6975
      %6977 = vrot.lane.b32.xlu0 %v5391, 95
      %v6978 = vpop.permute.xlu0 %6977
      %6979 = vrot.lane.b32.xlu0 %v5392, 95
      %v6980 = vpop.permute.xlu0 %6979
      %6981 = vrot.lane.b32.xlu0 %v5411, 95
      %v6982 = vpop.permute.xlu0 %6981
      %6983 = vrot.lane.b32.xlu0 %v5393, 95
      %v6984 = vpop.permute.xlu0 %6983
      %6985 = vrot.lane.b32.xlu0 %v5394, 95
      %v6986 = vpop.permute.xlu0 %6985
      %6987 = vrot.lane.b32.xlu0 %v5412, 95
      %v6988 = vpop.permute.xlu0 %6987
      %6989 = vrot.lane.b32.xlu0 %v5395, 95
      %v6990 = vpop.permute.xlu0 %6989
      %6991 = vrot.lane.b32.xlu0 %v5396, 95
      %v6992 = vpop.permute.xlu0 %6991
      %6993 = vrot.lane.b32.xlu0 %v5413, 95
      %v6994 = vpop.permute.xlu0 %6993
      %v6995 = vsel %vm442, %v6948, %v6950
      %v6996 = vsel %vm442, %v6950, %v6952
      %v6997 = vsel %vm442, %v6954, %v6956
      %v6998 = vsel %vm442, %v6956, %v6958
      %v6999 = vsel %vm442, %v6960, %v6962
      %v7000 = vsel %vm442, %v6962, %v6964
      %v7001 = vsel %vm442, %v6966, %v6968
      %v7002 = vsel %vm442, %v6968, %v6970
      %v7003 = vsel %vm442, %v6972, %v6974
      %v7004 = vsel %vm442, %v6974, %v6976
      %v7005 = vsel %vm442, %v6978, %v6980
      %v7006 = vsel %vm442, %v6980, %v6982
      %v7007 = vsel %vm442, %v6984, %v6986
      %v7008 = vsel %vm442, %v6986, %v6988
      %v7009 = vsel %vm442, %v6990, %v6992
      %v7010 = vsel %vm442, %v6992, %v6994
      %v7028 = vsel %vm939, %v6939, 0
      %v7031 = vsel %vm939, %v6940, 0
      %v7034 = vsel %vm939, %v6941, 0
      %v7037 = vsel %vm939, %v6942, 0
      %v7040 = vsel %vm939, %v6943, 0
      %v7043 = vsel %vm939, %v6944, 0
      %v7046 = vsel %vm939, %v6945, 0
      %v7049 = vsel %vm939, %v6946, 0
      %7051 = vmatprep.subr.mxu0 0.0
      %7052 = vmatpush1.msra.mxu0 0.0
      %7053 = vmatprep.subr.mxu0 0.0
      %7054 = vmatpush1.msra.mxu0 0.0
      %7055 = vmatprep.subr.mxu0 0.0
      %7056 = vmatpush1.msra.mxu0 0.0
      %7057 = vmatprep.subr.mxu0 0.0
      %7058 = vmatpush1.msra.mxu0 0.0
      %7059 = vmatprep.subr.mxu0 0.0
      %7060 = vmatpush1.msra.mxu0 0.0
      %7061 = vmatprep.subr.mxu0 0.0
      %7062 = vmatpush1.msra.mxu0 0.0
      %7063 = vmatprep.subr.mxu0 0.0
      %7064 = vmatpush1.msra.mxu0 0.0
      %7065 = vmatprep.subr.mxu0 0.0
      %7066 = vmatpush1.msra.mxu0 0.0
      %7067 = vmatprep.subr.mxu0 %v7010
      %7068 = vmatpush1.msra.mxu0 %v7009
      %7069 = vmatprep.subr.mxu0 %v7008
      %7070 = vmatpush1.msra.mxu0 %v7007
      %7071 = vmatprep.subr.mxu0 %v7006
      %7072 = vmatpush1.msra.mxu0 %v7005
      %7073 = vmatprep.subr.mxu0 %v7004
      %7074 = vmatpush1.msra.mxu0 %v7003
      %7075 = vmatprep.subr.mxu0 %v7002
      %7076 = vmatpush1.msra.mxu0 %v7001
      %7077 = vmatprep.subr.mxu0 %v7000
      %7078 = vmatpush1.msra.mxu0 %v6999
      %7079 = vmatprep.subr.mxu0 %v6998
      %7080 = vmatpush1.msra.mxu0 %v6997
      %7081 = vmatprep.subr.mxu0 %v6996
      %7082 = vmatpush1.msra.mxu0 %v6995
      %7083 = vmatprep.subr.mxu0 0.0
      %7084 = vmatpush2.msra.mxu0 0.0
      %7085 = vmatprep.subr.mxu0 0.0
      %7086 = vmatpush2.msra.mxu0 0.0
      %7087 = vmatprep.subr.mxu0 0.0
      %7088 = vmatpush2.msra.mxu0 0.0
      %7089 = vmatprep.subr.mxu0 0.0
      %7090 = vmatpush2.msra.mxu0 0.0
      %7091 = vmatprep.subr.mxu0 0.0
      %7092 = vmatpush2.msra.mxu0 0.0
      %7093 = vmatprep.subr.mxu0 0.0
      %7094 = vmatpush2.msra.mxu0 0.0
      %7095 = vmatprep.subr.mxu0 0.0
      %7096 = vmatpush2.msra.mxu0 0.0
      %7097 = vmatprep.subr.mxu0 0.0
      %7098 = vmatpush2.msra.mxu0 0.0
      %7099 = vmatprep.subr.mxu0 0.0
      %7100 = vmatpush2.msra.mxu0 0.0
      %7101 = vmatprep.subr.mxu0 0.0
      %7102 = vmatpush2.msra.mxu0 0.0
      %7103 = vmatprep.subr.mxu0 0.0
      %7104 = vmatpush2.msra.mxu0 0.0
      %7105 = vmatprep.subr.mxu0 0.0
      %7106 = vmatpush2.msra.mxu0 0.0
      %7107 = vmatprep.subr.mxu0 0.0
      %7108 = vmatpush2.msra.mxu0 0.0
      %7109 = vmatprep.subr.mxu0 0.0
      %7110 = vmatpush2.msra.mxu0 0.0
      %7111 = vmatprep.subr.mxu0 0.0
      %7112 = vmatpush2.msra.mxu0 0.0
      %7113 = vmatprep.subr.mxu0 0.0
      %7114 = vmatpush2.msra.mxu0 0.0
      %7115 = vmatprep.mubr.f32.mxu0 0.0
      %7116 = vmatmul.mubr.f32.gmra.mxu0 %v7028
      %v7117 = vpop.f32.mrf.mxu0
      %v7118 = vadd.f32 0.0, %v7117
      %v7119 = vpop.f32.mrf.mxu0
      %v7120 = vadd.f32 0.0, %v7119
      %7121 = vmatprep.mubr.f32.mxu0 0.0
      %7122 = vmatmul.mubr.f32.gmra.mxu0 %v7031
      %v7123 = vpop.f32.mrf.mxu0
      %v7124 = vadd.f32 0.0, %v7123
      %v7125 = vpop.f32.mrf.mxu0
      %v7126 = vadd.f32 0.0, %v7125
      %7127 = vmatprep.mubr.f32.mxu0 0.0
      %7128 = vmatmul.mubr.f32.gmra.mxu0 %v7034
      %v7129 = vpop.f32.mrf.mxu0
      %v7130 = vadd.f32 0.0, %v7129
      %v7131 = vpop.f32.mrf.mxu0
      %v7132 = vadd.f32 0.0, %v7131
      %7133 = vmatprep.mubr.f32.mxu0 0.0
      %7134 = vmatmul.mubr.f32.gmra.mxu0 %v7037
      %v7135 = vpop.f32.mrf.mxu0
      %v7136 = vadd.f32 0.0, %v7135
      %v7137 = vpop.f32.mrf.mxu0
      %v7138 = vadd.f32 0.0, %v7137
      %7139 = vmatprep.mubr.f32.mxu0 0.0
      %7140 = vmatmul.mubr.f32.gmra.mxu0 %v7040
      %v7141 = vpop.f32.mrf.mxu0
      %v7142 = vadd.f32 0.0, %v7141
      %v7143 = vpop.f32.mrf.mxu0
      %v7144 = vadd.f32 0.0, %v7143
      %7145 = vmatprep.mubr.f32.mxu0 0.0
      %7146 = vmatmul.mubr.f32.gmra.mxu0 %v7043
      %v7147 = vpop.f32.mrf.mxu0
      %v7148 = vadd.f32 0.0, %v7147
      %v7149 = vpop.f32.mrf.mxu0
      %v7150 = vadd.f32 0.0, %v7149
      %7151 = vmatprep.mubr.f32.mxu0 0.0
      %7152 = vmatmul.mubr.f32.gmra.mxu0 %v7046
      %v7153 = vpop.f32.mrf.mxu0
      %v7154 = vadd.f32 0.0, %v7153
      %v7155 = vpop.f32.mrf.mxu0
      %v7156 = vadd.f32 0.0, %v7155
      %7157 = vmatprep.mubr.f32.mxu0 0.0
      %7158 = vmatmul.mubr.f32.gmra.mxu0 %v7049
      %v7159 = vpop.f32.mrf.mxu0
      %v7160 = vadd.f32 0.0, %v7159
      %v7161 = vpop.f32.mrf.mxu0
      %v7162 = vadd.f32 0.0, %v7161
      %7163 = vdwg.mxu0
      %v7164 = vadd.f32 %v6207, %v7118
      %v7165 = vadd.f32 %v6209, %v7120
      %v7166 = vadd.f32 %v6213, %v7124
      %v7167 = vadd.f32 %v6215, %v7126
      %v7168 = vadd.f32 %v6219, %v7130
      %v7169 = vadd.f32 %v6221, %v7132
      %v7170 = vadd.f32 %v6225, %v7136
      %v7171 = vadd.f32 %v6227, %v7138
      %v7172 = vadd.f32 %v6231, %v7142
      %v7173 = vadd.f32 %v6233, %v7144
      %v7174 = vadd.f32 %v6237, %v7148
      %v7175 = vadd.f32 %v6239, %v7150
      %v7176 = vadd.f32 %v6243, %v7154
      %v7177 = vadd.f32 %v6245, %v7156
      %v7178 = vadd.f32 %v6249, %v7160
      %v7179 = vadd.f32 %v6251, %v7162
      %s7180 = scalar_lea.vmem %s2, 1664
      %v7181 = vld [vmem:[%s7180] sm:$0xff]
      %v7182 = vld [vmem:[%s7180 + $0x8] sm:$0xff]
      %v7183 = vld [vmem:[%s7180 + $0x10] sm:$0xff]
      %v7184 = vld [vmem:[%s7180 + $0x18] sm:$0xff]
      %v7185 = vld [vmem:[%s7180 + $0x20] sm:$0xff]
      %v7186 = vld [vmem:[%s7180 + $0x28] sm:$0xff]
      %v7187 = vld [vmem:[%s7180 + $0x30] sm:$0xff]
      %v7188 = vld [vmem:[%s7180 + $0x38] sm:$0xff]
      %7189 = vrot.lane.b32.xlu0 %v5381, 94
      %v7190 = vpop.permute.xlu0 %7189
      %7191 = vrot.lane.b32.xlu0 %v5382, 94
      %v7192 = vpop.permute.xlu0 %7191
      %7193 = vrot.lane.b32.xlu0 %v5406, 94
      %v7194 = vpop.permute.xlu0 %7193
      %7195 = vrot.lane.b32.xlu0 %v5383, 94
      %v7196 = vpop.permute.xlu0 %7195
      %7197 = vrot.lane.b32.xlu0 %v5384, 94
      %v7198 = vpop.permute.xlu0 %7197
      %7199 = vrot.lane.b32.xlu0 %v5407, 94
      %v7200 = vpop.permute.xlu0 %7199
      %7201 = vrot.lane.b32.xlu0 %v5385, 94
      %v7202 = vpop.permute.xlu0 %7201
      %7203 = vrot.lane.b32.xlu0 %v5386, 94
      %v7204 = vpop.permute.xlu0 %7203
      %7205 = vrot.lane.b32.xlu0 %v5408, 94
      %v7206 = vpop.permute.xlu0 %7205
      %7207 = vrot.lane.b32.xlu0 %v5387, 94
      %v7208 = vpop.permute.xlu0 %7207
      %7209 = vrot.lane.b32.xlu0 %v5388, 94
      %v7210 = vpop.permute.xlu0 %7209
      %7211 = vrot.lane.b32.xlu0 %v5409, 94
      %v7212 = vpop.permute.xlu0 %7211
      %7213 = vrot.lane.b32.xlu0 %v5389, 94
      %v7214 = vpop.permute.xlu0 %7213
      %7215 = vrot.lane.b32.xlu0 %v5390, 94
      %v7216 = vpop.permute.xlu0 %7215
      %7217 = vrot.lane.b32.xlu0 %v5410, 94
      %v7218 = vpop.permute.xlu0 %7217
      %7219 = vrot.lane.b32.xlu0 %v5391, 94
      %v7220 = vpop.permute.xlu0 %7219
      %7221 = vrot.lane.b32.xlu0 %v5392, 94
      %v7222 = vpop.permute.xlu0 %7221
      %7223 = vrot.lane.b32.xlu0 %v5411, 94
      %v7224 = vpop.permute.xlu0 %7223
      %7225 = vrot.lane.b32.xlu0 %v5393, 94
      %v7226 = vpop.permute.xlu0 %7225
      %7227 = vrot.lane.b32.xlu0 %v5394, 94
      %v7228 = vpop.permute.xlu0 %7227
      %7229 = vrot.lane.b32.xlu0 %v5412, 94
      %v7230 = vpop.permute.xlu0 %7229
      %7231 = vrot.lane.b32.xlu0 %v5395, 94
      %v7232 = vpop.permute.xlu0 %7231
      %7233 = vrot.lane.b32.xlu0 %v5396, 94
      %v7234 = vpop.permute.xlu0 %7233
      %7235 = vrot.lane.b32.xlu0 %v5413, 94
      %v7236 = vpop.permute.xlu0 %7235
      %v7237 = vsel %vm460, %v7190, %v7192
      %v7238 = vsel %vm460, %v7192, %v7194
      %v7239 = vsel %vm460, %v7196, %v7198
      %v7240 = vsel %vm460, %v7198, %v7200
      %v7241 = vsel %vm460, %v7202, %v7204
      %v7242 = vsel %vm460, %v7204, %v7206
      %v7243 = vsel %vm460, %v7208, %v7210
      %v7244 = vsel %vm460, %v7210, %v7212
      %v7245 = vsel %vm460, %v7214, %v7216
      %v7246 = vsel %vm460, %v7216, %v7218
      %v7247 = vsel %vm460, %v7220, %v7222
      %v7248 = vsel %vm460, %v7222, %v7224
      %v7249 = vsel %vm460, %v7226, %v7228
      %v7250 = vsel %vm460, %v7228, %v7230
      %v7251 = vsel %vm460, %v7232, %v7234
      %v7252 = vsel %vm460, %v7234, %v7236
      %v7270 = vsel %vm939, %v7181, 0
      %v7273 = vsel %vm939, %v7182, 0
      %v7276 = vsel %vm939, %v7183, 0
      %v7279 = vsel %vm939, %v7184, 0
      %v7282 = vsel %vm939, %v7185, 0
      %v7285 = vsel %vm939, %v7186, 0
      %v7288 = vsel %vm939, %v7187, 0
      %v7291 = vsel %vm939, %v7188, 0
      %7293 = vmatprep.subr.mxu0 0.0
      %7294 = vmatpush1.msra.mxu0 0.0
      %7295 = vmatprep.subr.mxu0 0.0
      %7296 = vmatpush1.msra.mxu0 0.0
      %7297 = vmatprep.subr.mxu0 0.0
      %7298 = vmatpush1.msra.mxu0 0.0
      %7299 = vmatprep.subr.mxu0 0.0
      %7300 = vmatpush1.msra.mxu0 0.0
      %7301 = vmatprep.subr.mxu0 0.0
      %7302 = vmatpush1.msra.mxu0 0.0
      %7303 = vmatprep.subr.mxu0 0.0
      %7304 = vmatpush1.msra.mxu0 0.0
      %7305 = vmatprep.subr.mxu0 0.0
      %7306 = vmatpush1.msra.mxu0 0.0
      %7307 = vmatprep.subr.mxu0 0.0
      %7308 = vmatpush1.msra.mxu0 0.0
      %7309 = vmatprep.subr.mxu0 %v7252
      %7310 = vmatpush1.msra.mxu0 %v7251
      %7311 = vmatprep.subr.mxu0 %v7250
      %7312 = vmatpush1.msra.mxu0 %v7249
      %7313 = vmatprep.subr.mxu0 %v7248
      %7314 = vmatpush1.msra.mxu0 %v7247
      %7315 = vmatprep.subr.mxu0 %v7246
      %7316 = vmatpush1.msra.mxu0 %v7245
      %7317 = vmatprep.subr.mxu0 %v7244
      %7318 = vmatpush1.msra.mxu0 %v7243
      %7319 = vmatprep.subr.mxu0 %v7242
      %7320 = vmatpush1.msra.mxu0 %v7241
      %7321 = vmatprep.subr.mxu0 %v7240
      %7322 = vmatpush1.msra.mxu0 %v7239
      %7323 = vmatprep.subr.mxu0 %v7238
      %7324 = vmatpush1.msra.mxu0 %v7237
      %7325 = vmatprep.subr.mxu0 0.0
      %7326 = vmatpush2.msra.mxu0 0.0
      %7327 = vmatprep.subr.mxu0 0.0
      %7328 = vmatpush2.msra.mxu0 0.0
      %7329 = vmatprep.subr.mxu0 0.0
      %7330 = vmatpush2.msra.mxu0 0.0
      %7331 = vmatprep.subr.mxu0 0.0
      %7332 = vmatpush2.msra.mxu0 0.0
      %7333 = vmatprep.subr.mxu0 0.0
      %7334 = vmatpush2.msra.mxu0 0.0
      %7335 = vmatprep.subr.mxu0 0.0
      %7336 = vmatpush2.msra.mxu0 0.0
      %7337 = vmatprep.subr.mxu0 0.0
      %7338 = vmatpush2.msra.mxu0 0.0
      %7339 = vmatprep.subr.mxu0 0.0
      %7340 = vmatpush2.msra.mxu0 0.0
      %7341 = vmatprep.subr.mxu0 0.0
      %7342 = vmatpush2.msra.mxu0 0.0
      %7343 = vmatprep.subr.mxu0 0.0
      %7344 = vmatpush2.msra.mxu0 0.0
      %7345 = vmatprep.subr.mxu0 0.0
      %7346 = vmatpush2.msra.mxu0 0.0
      %7347 = vmatprep.subr.mxu0 0.0
      %7348 = vmatpush2.msra.mxu0 0.0
      %7349 = vmatprep.subr.mxu0 0.0
      %7350 = vmatpush2.msra.mxu0 0.0
      %7351 = vmatprep.subr.mxu0 0.0
      %7352 = vmatpush2.msra.mxu0 0.0
      %7353 = vmatprep.subr.mxu0 0.0
      %7354 = vmatpush2.msra.mxu0 0.0
      %7355 = vmatprep.subr.mxu0 0.0
      %7356 = vmatpush2.msra.mxu0 0.0
      %7357 = vmatprep.mubr.f32.mxu0 0.0
      %7358 = vmatmul.mubr.f32.gmra.mxu0 %v7270
      %v7359 = vpop.f32.mrf.mxu0
      %v7360 = vadd.f32 0.0, %v7359
      %v7361 = vpop.f32.mrf.mxu0
      %v7362 = vadd.f32 0.0, %v7361
      %7363 = vmatprep.mubr.f32.mxu0 0.0
      %7364 = vmatmul.mubr.f32.gmra.mxu0 %v7273
      %v7365 = vpop.f32.mrf.mxu0
      %v7366 = vadd.f32 0.0, %v7365
      %v7367 = vpop.f32.mrf.mxu0
      %v7368 = vadd.f32 0.0, %v7367
      %7369 = vmatprep.mubr.f32.mxu0 0.0
      %7370 = vmatmul.mubr.f32.gmra.mxu0 %v7276
      %v7371 = vpop.f32.mrf.mxu0
      %v7372 = vadd.f32 0.0, %v7371
      %v7373 = vpop.f32.mrf.mxu0
      %v7374 = vadd.f32 0.0, %v7373
      %7375 = vmatprep.mubr.f32.mxu0 0.0
      %7376 = vmatmul.mubr.f32.gmra.mxu0 %v7279
      %v7377 = vpop.f32.mrf.mxu0
      %v7378 = vadd.f32 0.0, %v7377
      %v7379 = vpop.f32.mrf.mxu0
      %v7380 = vadd.f32 0.0, %v7379
      %7381 = vmatprep.mubr.f32.mxu0 0.0
      %7382 = vmatmul.mubr.f32.gmra.mxu0 %v7282
      %v7383 = vpop.f32.mrf.mxu0
      %v7384 = vadd.f32 0.0, %v7383
      %v7385 = vpop.f32.mrf.mxu0
      %v7386 = vadd.f32 0.0, %v7385
      %7387 = vmatprep.mubr.f32.mxu0 0.0
      %7388 = vmatmul.mubr.f32.gmra.mxu0 %v7285
      %v7389 = vpop.f32.mrf.mxu0
      %v7390 = vadd.f32 0.0, %v7389
      %v7391 = vpop.f32.mrf.mxu0
      %v7392 = vadd.f32 0.0, %v7391
      %7393 = vmatprep.mubr.f32.mxu0 0.0
      %7394 = vmatmul.mubr.f32.gmra.mxu0 %v7288
      %v7395 = vpop.f32.mrf.mxu0
      %v7396 = vadd.f32 0.0, %v7395
      %v7397 = vpop.f32.mrf.mxu0
      %v7398 = vadd.f32 0.0, %v7397
      %7399 = vmatprep.mubr.f32.mxu0 0.0
      %7400 = vmatmul.mubr.f32.gmra.mxu0 %v7291
      %v7401 = vpop.f32.mrf.mxu0
      %v7402 = vadd.f32 0.0, %v7401
      %v7403 = vpop.f32.mrf.mxu0
      %v7404 = vadd.f32 0.0, %v7403
      %7405 = vdwg.mxu0
      %v7406 = vadd.f32 %v6650, %v7360
      %v7407 = vadd.f32 %v6652, %v7362
      %v7408 = vadd.f32 %v6656, %v7366
      %v7409 = vadd.f32 %v6658, %v7368
      %v7410 = vadd.f32 %v6662, %v7372
      %v7411 = vadd.f32 %v6664, %v7374
      %v7412 = vadd.f32 %v6668, %v7378
      %v7413 = vadd.f32 %v6670, %v7380
      %v7414 = vadd.f32 %v6674, %v7384
      %v7415 = vadd.f32 %v6676, %v7386
      %v7416 = vadd.f32 %v6680, %v7390
      %v7417 = vadd.f32 %v6682, %v7392
      %v7418 = vadd.f32 %v6686, %v7396
      %v7419 = vadd.f32 %v6688, %v7398
      %v7420 = vadd.f32 %v6692, %v7402
      %v7421 = vadd.f32 %v6694, %v7404
      %v7422 = vmul.f32 %v6922, %v271
      %v7423 = vmul.f32 %v6923, %v272
      %v7424 = vmul.f32 %v6924, %v271
      %v7425 = vmul.f32 %v6925, %v272
      %v7426 = vmul.f32 %v6926, %v271
      %v7427 = vmul.f32 %v6927, %v272
      %v7428 = vmul.f32 %v6928, %v271
      %v7429 = vmul.f32 %v6929, %v272
      %v7430 = vmul.f32 %v6930, %v271
      %v7431 = vmul.f32 %v6931, %v272
      %v7432 = vmul.f32 %v6932, %v271
      %v7433 = vmul.f32 %v6933, %v272
      %v7434 = vmul.f32 %v6934, %v271
      %v7435 = vmul.f32 %v6935, %v272
      %v7436 = vmul.f32 %v6936, %v271
      %v7437 = vmul.f32 %v6937, %v272
      %v7438 = vadd.f32 %v7422, %v7164
      %v7439 = vadd.f32 %v7423, %v7165
      %v7440 = vadd.f32 %v7424, %v7166
      %v7441 = vadd.f32 %v7425, %v7167
      %v7442 = vadd.f32 %v7426, %v7168
      %v7443 = vadd.f32 %v7427, %v7169
      %v7444 = vadd.f32 %v7428, %v7170
      %v7445 = vadd.f32 %v7429, %v7171
      %v7446 = vadd.f32 %v7430, %v7172
      %v7447 = vadd.f32 %v7431, %v7173
      %v7448 = vadd.f32 %v7432, %v7174
      %v7449 = vadd.f32 %v7433, %v7175
      %v7450 = vadd.f32 %v7434, %v7176
      %v7451 = vadd.f32 %v7435, %v7177
      %v7452 = vadd.f32 %v7436, %v7178
      %v7453 = vadd.f32 %v7437, %v7179
      %v7454 = vmul.f32 %v7406, %v277
      %v7455 = vmul.f32 %v7407, %v278
      %v7456 = vmul.f32 %v7408, %v277
      %v7457 = vmul.f32 %v7409, %v278
      %v7458 = vmul.f32 %v7410, %v277
      %v7459 = vmul.f32 %v7411, %v278
      %v7460 = vmul.f32 %v7412, %v277
      %v7461 = vmul.f32 %v7413, %v278
      %v7462 = vmul.f32 %v7414, %v277
      %v7463 = vmul.f32 %v7415, %v278
      %v7464 = vmul.f32 %v7416, %v277
      %v7465 = vmul.f32 %v7417, %v278
      %v7466 = vmul.f32 %v7418, %v277
      %v7467 = vmul.f32 %v7419, %v278
      %v7468 = vmul.f32 %v7420, %v277
      %v7469 = vmul.f32 %v7421, %v278
      %v7470 = vadd.f32 %v7438, %v7454
      %v7471 = vadd.f32 %v7439, %v7455
      %v7472 = vadd.f32 %v7440, %v7456
      %v7473 = vadd.f32 %v7441, %v7457
      %v7474 = vadd.f32 %v7442, %v7458
      %v7475 = vadd.f32 %v7443, %v7459
      %v7476 = vadd.f32 %v7444, %v7460
      %v7477 = vadd.f32 %v7445, %v7461
      %v7478 = vadd.f32 %v7446, %v7462
      %v7479 = vadd.f32 %v7447, %v7463
      %v7480 = vadd.f32 %v7448, %v7464
      %v7481 = vadd.f32 %v7449, %v7465
      %v7482 = vadd.f32 %v7450, %v7466
      %v7483 = vadd.f32 %v7451, %v7467
      %v7484 = vadd.f32 %v7452, %v7468
      %v7485 = vadd.f32 %v7453, %v7469
      %v7486 = vld [vmem:[%s4] sm:$0xff]
      %v7487 = vld [vmem:[%s4 + $0x8] sm:$0xff]
      %v7488 = vld [vmem:[%s4 + $0x10] sm:$0xff]
      %v7489 = vld [vmem:[%s4 + $0x18] sm:$0xff]
      %v7490 = vld [vmem:[%s4 + $0x20] sm:$0xff]
      %v7491 = vld [vmem:[%s4 + $0x28] sm:$0xff]
      %v7492 = vld [vmem:[%s4 + $0x30] sm:$0xff]
      %v7493 = vld [vmem:[%s4 + $0x38] sm:$0xff]
      %7495 = vset.pattern.permute.xlu0 3
      %7496 = vperm.xlu0 %7495, %v7486
      %v7497 = vpop.permute.xlu0 %7496
      %7500 = vset.pattern.permute.xlu0 3
      %7501 = vperm.xlu0 %7500, %v7487
      %v7502 = vpop.permute.xlu0 %7501
      %7505 = vset.pattern.permute.xlu0 3
      %7506 = vperm.xlu0 %7505, %v7488
      %v7507 = vpop.permute.xlu0 %7506
      %7510 = vset.pattern.permute.xlu0 3
      %7511 = vperm.xlu0 %7510, %v7489
      %v7512 = vpop.permute.xlu0 %7511
      %7515 = vset.pattern.permute.xlu0 3
      %7516 = vperm.xlu0 %7515, %v7490
      %v7517 = vpop.permute.xlu0 %7516
      %7520 = vset.pattern.permute.xlu0 3
      %7521 = vperm.xlu0 %7520, %v7491
      %v7522 = vpop.permute.xlu0 %7521
      %7525 = vset.pattern.permute.xlu0 3
      %7526 = vperm.xlu0 %7525, %v7492
      %v7527 = vpop.permute.xlu0 %7526
      %7530 = vset.pattern.permute.xlu0 3
      %7531 = vperm.xlu0 %7530, %v7493
      %v7532 = vpop.permute.xlu0 %7531
      %v7534 = vadd.f32 %v7470, %v7497
      %v7535 = vadd.f32 %v7471, %v7497
      %v7536 = vadd.f32 %v7472, %v7502
      %v7537 = vadd.f32 %v7473, %v7502
      %v7538 = vadd.f32 %v7474, %v7507
      %v7539 = vadd.f32 %v7475, %v7507
      %v7540 = vadd.f32 %v7476, %v7512
      %v7541 = vadd.f32 %v7477, %v7512
      %v7542 = vadd.f32 %v7478, %v7517
      %v7543 = vadd.f32 %v7479, %v7517
      %v7544 = vadd.f32 %v7480, %v7522
      %v7545 = vadd.f32 %v7481, %v7522
      %v7546 = vadd.f32 %v7482, %v7527
      %v7547 = vadd.f32 %v7483, %v7527
      %v7548 = vadd.f32 %v7484, %v7532
      %v7549 = vadd.f32 %v7485, %v7532
      %v7550 = vmax.f32 %v7534, 0.0
      %v7551 = vmax.f32 %v7535, 0.0
      %v7552 = vmax.f32 %v7536, 0.0
      %v7553 = vmax.f32 %v7537, 0.0
      %v7554 = vmax.f32 %v7538, 0.0
      %v7555 = vmax.f32 %v7539, 0.0
      %v7556 = vmax.f32 %v7540, 0.0
      %v7557 = vmax.f32 %v7541, 0.0
      %v7558 = vmax.f32 %v7542, 0.0
      %v7559 = vmax.f32 %v7543, 0.0
      %v7560 = vmax.f32 %v7544, 0.0
      %v7561 = vmax.f32 %v7545, 0.0
      %v7562 = vmax.f32 %v7546, 0.0
      %v7563 = vmax.f32 %v7547, 0.0
      %v7564 = vmax.f32 %v7548, 0.0
      %v7565 = vmax.f32 %v7549, 0.0
      %7582 = vrot.lane.b32.xlu0 %v7550, 17
      %v7583 = vpop.permute.xlu0 %7582
      %7584 = vrot.lane.b32.xlu0 %v7551, 17
      %v7585 = vpop.permute.xlu0 %7584
      %7586 = vrot.lane.b32.xlu0 %v7552, 17
      %v7587 = vpop.permute.xlu0 %7586
      %7588 = vrot.lane.b32.xlu0 %v7553, 17
      %v7589 = vpop.permute.xlu0 %7588
      %7590 = vrot.lane.b32.xlu0 %v7554, 17
      %v7591 = vpop.permute.xlu0 %7590
      %7592 = vrot.lane.b32.xlu0 %v7555, 17
      %v7593 = vpop.permute.xlu0 %7592
      %7594 = vrot.lane.b32.xlu0 %v7556, 17
      %v7595 = vpop.permute.xlu0 %7594
      %7596 = vrot.lane.b32.xlu0 %v7557, 17
      %v7597 = vpop.permute.xlu0 %7596
      %7598 = vrot.lane.b32.xlu0 %v7558, 17
      %v7599 = vpop.permute.xlu0 %7598
      %7600 = vrot.lane.b32.xlu0 %v7559, 17
      %v7601 = vpop.permute.xlu0 %7600
      %7602 = vrot.lane.b32.xlu0 %v7560, 17
      %v7603 = vpop.permute.xlu0 %7602
      %7604 = vrot.lane.b32.xlu0 %v7561, 17
      %v7605 = vpop.permute.xlu0 %7604
      %7606 = vrot.lane.b32.xlu0 %v7562, 17
      %v7607 = vpop.permute.xlu0 %7606
      %7608 = vrot.lane.b32.xlu0 %v7563, 17
      %v7609 = vpop.permute.xlu0 %7608
      %7610 = vrot.lane.b32.xlu0 %v7564, 17
      %v7611 = vpop.permute.xlu0 %7610
      %7612 = vrot.lane.b32.xlu0 %v7565, 17
      %v7613 = vpop.permute.xlu0 %7612
      %v7614 = vsel %vm220, %v7583, %v7585
      %v7615 = vsel %vm220, %v7587, %v7589
      %v7616 = vsel %vm220, %v7591, %v7593
      %v7617 = vsel %vm220, %v7595, %v7597
      %v7618 = vsel %vm220, %v7599, %v7601
      %v7619 = vsel %vm220, %v7603, %v7605
      %v7620 = vsel %vm220, %v7607, %v7609
      %v7621 = vsel %vm220, %v7611, %v7613
      %7646 = vst.msk [vmem:[#allocation2] sm:$0xff] %vm751, %v7583
      %7647 = vst [vmem:[#allocation2 + $0x8] sm:$0xff] %v7614
      %7648 = vst.msk [vmem:[#allocation2 + $0x10] sm:$0xff] %vm220, %v7585
      %7649 = vst.msk [vmem:[#allocation2 + $0x18] sm:$0xff] %vm751, %v7587
      %7650 = vst [vmem:[#allocation2 + $0x20] sm:$0xff] %v7615
      %7651 = vst.msk [vmem:[#allocation2 + $0x28] sm:$0xff] %vm220, %v7589
      %7652 = vst.msk [vmem:[#allocation2 + $0x30] sm:$0xff] %vm751, %v7591
      %7653 = vst [vmem:[#allocation2 + $0x38] sm:$0xff] %v7616
      %7654 = vst.msk [vmem:[#allocation2 + $0x40] sm:$0xff] %vm220, %v7593
      %7655 = vst.msk [vmem:[#allocation2 + $0x48] sm:$0xff] %vm751, %v7595
      %7656 = vst [vmem:[#allocation2 + $0x50] sm:$0xff] %v7617
      %7657 = vst.msk [vmem:[#allocation2 + $0x58] sm:$0xff] %vm220, %v7597
      %7658 = vst.msk [vmem:[#allocation2 + $0x60] sm:$0xff] %vm751, %v7599
      %7659 = vst [vmem:[#allocation2 + $0x68] sm:$0xff] %v7618
      %7660 = vst.msk [vmem:[#allocation2 + $0x70] sm:$0xff] %vm220, %v7601
      %7661 = vst.msk [vmem:[#allocation2 + $0x78] sm:$0xff] %vm751, %v7603
      %7662 = vst [vmem:[#allocation2 + $0x80] sm:$0xff] %v7619
      %7663 = vst.msk [vmem:[#allocation2 + $0x88] sm:$0xff] %vm220, %v7605
      %7664 = vst.msk [vmem:[#allocation2 + $0x90] sm:$0xff] %vm751, %v7607
      %7665 = vst [vmem:[#allocation2 + $0x98] sm:$0xff] %v7620
      %7666 = vst.msk [vmem:[#allocation2 + $0xa0] sm:$0xff] %vm220, %v7609
      %7667 = vst.msk [vmem:[#allocation2 + $0xa8] sm:$0xff] %vm751, %v7611
      %7668 = vst [vmem:[#allocation2 + $0xb0] sm:$0xff] %v7621
      %7669 = vst.msk [vmem:[#allocation2 + $0xb8] sm:$0xff] %vm220, %v7613
      %v7670 = vld [vmem:[%s3] sm:$0x1]
      %v7671 = vld [vmem:[#allocation2] sm:$0xff]
      %v7672 = vld [vmem:[#allocation2 + $0x8] sm:$0xff]
      %v7673 = vld [vmem:[#allocation2 + $0x18] sm:$0xff]
      %v7674 = vld [vmem:[#allocation2 + $0x20] sm:$0xff]
      %v7675 = vld [vmem:[#allocation2 + $0x30] sm:$0xff]
      %v7676 = vld [vmem:[#allocation2 + $0x38] sm:$0xff]
      %v7677 = vld [vmem:[#allocation2 + $0x48] sm:$0xff]
      %v7678 = vld [vmem:[#allocation2 + $0x50] sm:$0xff]
      %v7679 = vld [vmem:[#allocation2 + $0x60] sm:$0xff]
      %v7680 = vld [vmem:[#allocation2 + $0x68] sm:$0xff]
      %v7681 = vld [vmem:[#allocation2 + $0x78] sm:$0xff]
      %v7682 = vld [vmem:[#allocation2 + $0x80] sm:$0xff]
      %v7683 = vld [vmem:[#allocation2 + $0x90] sm:$0xff]
      %v7684 = vld [vmem:[#allocation2 + $0x98] sm:$0xff]
      %v7685 = vld [vmem:[#allocation2 + $0xa8] sm:$0xff]
      %v7686 = vld [vmem:[#allocation2 + $0xb0] sm:$0xff]
      %s7687 = scalar_lea.vmem %s3, 1
      %v7688 = vld [vmem:[%s7687] sm:$0x1]
      %v7689 = vld [vmem:[#allocation2 + $0x10] sm:$0xff]
      %v7690 = vld [vmem:[#allocation2 + $0x28] sm:$0xff]
      %v7691 = vld [vmem:[#allocation2 + $0x40] sm:$0xff]
      %v7692 = vld [vmem:[#allocation2 + $0x58] sm:$0xff]
      %v7693 = vld [vmem:[#allocation2 + $0x70] sm:$0xff]
      %v7694 = vld [vmem:[#allocation2 + $0x88] sm:$0xff]
      %v7695 = vld [vmem:[#allocation2 + $0xa0] sm:$0xff]
      %v7696 = vld [vmem:[#allocation2 + $0xb8] sm:$0xff]
      %s7697 = scalar_lea.vmem %s3, 2
      %v7698 = vld [vmem:[%s7697] sm:$0x1]
      %s7699 = scalar_lea.vmem %s3, 3
      %v7700 = vld [vmem:[%s7699] sm:$0x1]
      %7725 = vrot.lane.b32.xlu0 %v7671, 112
      %v7726 = vpop.permute.xlu0 %7725
      %7727 = vrot.lane.b32.xlu0 %v7672, 112
      %v7728 = vpop.permute.xlu0 %7727
      %7729 = vrot.lane.b32.xlu0 %v7689, 112
      %v7730 = vpop.permute.xlu0 %7729
      %7731 = vrot.lane.b32.xlu0 %v7673, 112
      %v7732 = vpop.permute.xlu0 %7731
      %7733 = vrot.lane.b32.xlu0 %v7674, 112
      %v7734 = vpop.permute.xlu0 %7733
      %7735 = vrot.lane.b32.xlu0 %v7690, 112
      %v7736 = vpop.permute.xlu0 %7735
      %7737 = vrot.lane.b32.xlu0 %v7675, 112
      %v7738 = vpop.permute.xlu0 %7737
      %7739 = vrot.lane.b32.xlu0 %v7676, 112
      %v7740 = vpop.permute.xlu0 %7739
      %7741 = vrot.lane.b32.xlu0 %v7691, 112
      %v7742 = vpop.permute.xlu0 %7741
      %7743 = vrot.lane.b32.xlu0 %v7677, 112
      %v7744 = vpop.permute.xlu0 %7743
      %7745 = vrot.lane.b32.xlu0 %v7678, 112
      %v7746 = vpop.permute.xlu0 %7745
      %7747 = vrot.lane.b32.xlu0 %v7692, 112
      %v7748 = vpop.permute.xlu0 %7747
      %7749 = vrot.lane.b32.xlu0 %v7679, 112
      %v7750 = vpop.permute.xlu0 %7749
      %7751 = vrot.lane.b32.xlu0 %v7680, 112
      %v7752 = vpop.permute.xlu0 %7751
      %7753 = vrot.lane.b32.xlu0 %v7693, 112
      %v7754 = vpop.permute.xlu0 %7753
      %7755 = vrot.lane.b32.xlu0 %v7681, 112
      %v7756 = vpop.permute.xlu0 %7755
      %7757 = vrot.lane.b32.xlu0 %v7682, 112
      %v7758 = vpop.permute.xlu0 %7757
      %7759 = vrot.lane.b32.xlu0 %v7694, 112
      %v7760 = vpop.permute.xlu0 %7759
      %7761 = vrot.lane.b32.xlu0 %v7683, 112
      %v7762 = vpop.permute.xlu0 %7761
      %7763 = vrot.lane.b32.xlu0 %v7684, 112
      %v7764 = vpop.permute.xlu0 %7763
      %7765 = vrot.lane.b32.xlu0 %v7695, 112
      %v7766 = vpop.permute.xlu0 %7765
      %7767 = vrot.lane.b32.xlu0 %v7685, 112
      %v7768 = vpop.permute.xlu0 %7767
      %7769 = vrot.lane.b32.xlu0 %v7686, 112
      %v7770 = vpop.permute.xlu0 %7769
      %7771 = vrot.lane.b32.xlu0 %v7696, 112
      %v7772 = vpop.permute.xlu0 %7771
      %v7773 = vsel %vm384, %v7726, %v7728
      %v7774 = vsel %vm384, %v7728, %v7730
      %v7775 = vsel %vm384, %v7732, %v7734
      %v7776 = vsel %vm384, %v7734, %v7736
      %v7777 = vsel %vm384, %v7738, %v7740
      %v7778 = vsel %vm384, %v7740, %v7742
      %v7779 = vsel %vm384, %v7744, %v7746
      %v7780 = vsel %vm384, %v7746, %v7748
      %v7781 = vsel %vm384, %v7750, %v7752
      %v7782 = vsel %vm384, %v7752, %v7754
      %v7783 = vsel %vm384, %v7756, %v7758
      %v7784 = vsel %vm384, %v7758, %v7760
      %v7785 = vsel %vm384, %v7762, %v7764
      %v7786 = vsel %vm384, %v7764, %v7766
      %v7787 = vsel %vm384, %v7768, %v7770
      %v7788 = vsel %vm384, %v7770, %v7772
      %v7806 = vsel %vm939, %v7700, 0
      %7808 = vmatprep.subr.mxu0 0.0
      %7809 = vmatpush1.msra.mxu0 0.0
      %7810 = vmatprep.subr.mxu0 0.0
      %7811 = vmatpush1.msra.mxu0 0.0
      %7812 = vmatprep.subr.mxu0 0.0
      %7813 = vmatpush1.msra.mxu0 0.0
      %7814 = vmatprep.subr.mxu0 0.0
      %7815 = vmatpush1.msra.mxu0 0.0
      %7816 = vmatprep.subr.mxu0 0.0
      %7817 = vmatpush1.msra.mxu0 0.0
      %7818 = vmatprep.subr.mxu0 0.0
      %7819 = vmatpush1.msra.mxu0 0.0
      %7820 = vmatprep.subr.mxu0 0.0
      %7821 = vmatpush1.msra.mxu0 0.0
      %7822 = vmatprep.subr.mxu0 0.0
      %7823 = vmatpush1.msra.mxu0 0.0
      %7824 = vmatprep.subr.mxu0 %v7788
      %7825 = vmatpush1.msra.mxu0 %v7787
      %7826 = vmatprep.subr.mxu0 %v7786
      %7827 = vmatpush1.msra.mxu0 %v7785
      %7828 = vmatprep.subr.mxu0 %v7784
      %7829 = vmatpush1.msra.mxu0 %v7783
      %7830 = vmatprep.subr.mxu0 %v7782
      %7831 = vmatpush1.msra.mxu0 %v7781
      %7832 = vmatprep.subr.mxu0 %v7780
      %7833 = vmatpush1.msra.mxu0 %v7779
      %7834 = vmatprep.subr.mxu0 %v7778
      %7835 = vmatpush1.msra.mxu0 %v7777
      %7836 = vmatprep.subr.mxu0 %v7776
      %7837 = vmatpush1.msra.mxu0 %v7775
      %7838 = vmatprep.subr.mxu0 %v7774
      %7839 = vmatpush1.msra.mxu0 %v7773
      %7840 = vmatprep.subr.mxu0 0.0
      %7841 = vmatpush2.msra.mxu0 0.0
      %7842 = vmatprep.subr.mxu0 0.0
      %7843 = vmatpush2.msra.mxu0 0.0
      %7844 = vmatprep.subr.mxu0 0.0
      %7845 = vmatpush2.msra.mxu0 0.0
      %7846 = vmatprep.subr.mxu0 0.0
      %7847 = vmatpush2.msra.mxu0 0.0
      %7848 = vmatprep.subr.mxu0 0.0
      %7849 = vmatpush2.msra.mxu0 0.0
      %7850 = vmatprep.subr.mxu0 0.0
      %7851 = vmatpush2.msra.mxu0 0.0
      %7852 = vmatprep.subr.mxu0 0.0
      %7853 = vmatpush2.msra.mxu0 0.0
      %7854 = vmatprep.subr.mxu0 0.0
      %7855 = vmatpush2.msra.mxu0 0.0
      %7856 = vmatprep.subr.mxu0 0.0
      %7857 = vmatpush2.msra.mxu0 0.0
      %7858 = vmatprep.subr.mxu0 0.0
      %7859 = vmatpush2.msra.mxu0 0.0
      %7860 = vmatprep.subr.mxu0 0.0
      %7861 = vmatpush2.msra.mxu0 0.0
      %7862 = vmatprep.subr.mxu0 0.0
      %7863 = vmatpush2.msra.mxu0 0.0
      %7864 = vmatprep.subr.mxu0 0.0
      %7865 = vmatpush2.msra.mxu0 0.0
      %7866 = vmatprep.subr.mxu0 0.0
      %7867 = vmatpush2.msra.mxu0 0.0
      %7868 = vmatprep.subr.mxu0 0.0
      %7869 = vmatpush2.msra.mxu0 0.0
      %7870 = vmatprep.subr.mxu0 0.0
      %7871 = vmatpush2.msra.mxu0 0.0
      %7872 = vmatprep.mubr.f32.mxu0 0.0
      %7873 = vmatmul.mubr.f32.gmra.mxu0 %v7806
      %v7874 = vpop.f32.mrf.mxu0
      %v7875 = vadd.f32 0.0, %v7874
      %v7876 = vpop.f32.mrf.mxu0
      %v7877 = vadd.f32 0.0, %v7876
      %7878 = vdwg.mxu0
      %v7880 = vsel %vm939, %v7670, 0
      %7882 = vmatprep.subr.mxu0 0.0
      %7883 = vmatpush1.msra.mxu0 0.0
      %7884 = vmatprep.subr.mxu0 0.0
      %7885 = vmatpush1.msra.mxu0 0.0
      %7886 = vmatprep.subr.mxu0 0.0
      %7887 = vmatpush1.msra.mxu0 0.0
      %7888 = vmatprep.subr.mxu0 0.0
      %7889 = vmatpush1.msra.mxu0 0.0
      %7890 = vmatprep.subr.mxu0 0.0
      %7891 = vmatpush1.msra.mxu0 0.0
      %7892 = vmatprep.subr.mxu0 0.0
      %7893 = vmatpush1.msra.mxu0 0.0
      %7894 = vmatprep.subr.mxu0 0.0
      %7895 = vmatpush1.msra.mxu0 0.0
      %7896 = vmatprep.subr.mxu0 0.0
      %7897 = vmatpush1.msra.mxu0 0.0
      %7898 = vmatprep.subr.mxu0 %v7686
      %7899 = vmatpush1.msra.mxu0 %v7685
      %7900 = vmatprep.subr.mxu0 %v7684
      %7901 = vmatpush1.msra.mxu0 %v7683
      %7902 = vmatprep.subr.mxu0 %v7682
      %7903 = vmatpush1.msra.mxu0 %v7681
      %7904 = vmatprep.subr.mxu0 %v7680
      %7905 = vmatpush1.msra.mxu0 %v7679
      %7906 = vmatprep.subr.mxu0 %v7678
      %7907 = vmatpush1.msra.mxu0 %v7677
      %7908 = vmatprep.subr.mxu0 %v7676
      %7909 = vmatpush1.msra.mxu0 %v7675
      %7910 = vmatprep.subr.mxu0 %v7674
      %7911 = vmatpush1.msra.mxu0 %v7673
      %7912 = vmatprep.subr.mxu0 %v7672
      %7913 = vmatpush1.msra.mxu0 %v7671
      %7914 = vmatprep.subr.mxu0 0.0
      %7915 = vmatpush2.msra.mxu0 0.0
      %7916 = vmatprep.subr.mxu0 0.0
      %7917 = vmatpush2.msra.mxu0 0.0
      %7918 = vmatprep.subr.mxu0 0.0
      %7919 = vmatpush2.msra.mxu0 0.0
      %7920 = vmatprep.subr.mxu0 0.0
      %7921 = vmatpush2.msra.mxu0 0.0
      %7922 = vmatprep.subr.mxu0 0.0
      %7923 = vmatpush2.msra.mxu0 0.0
      %7924 = vmatprep.subr.mxu0 0.0
      %7925 = vmatpush2.msra.mxu0 0.0
      %7926 = vmatprep.subr.mxu0 0.0
      %7927 = vmatpush2.msra.mxu0 0.0
      %7928 = vmatprep.subr.mxu0 0.0
      %7929 = vmatpush2.msra.mxu0 0.0
      %7930 = vmatprep.subr.mxu0 0.0
      %7931 = vmatpush2.msra.mxu0 0.0
      %7932 = vmatprep.subr.mxu0 0.0
      %7933 = vmatpush2.msra.mxu0 0.0
      %7934 = vmatprep.subr.mxu0 0.0
      %7935 = vmatpush2.msra.mxu0 0.0
      %7936 = vmatprep.subr.mxu0 0.0
      %7937 = vmatpush2.msra.mxu0 0.0
      %7938 = vmatprep.subr.mxu0 0.0
      %7939 = vmatpush2.msra.mxu0 0.0
      %7940 = vmatprep.subr.mxu0 0.0
      %7941 = vmatpush2.msra.mxu0 0.0
      %7942 = vmatprep.subr.mxu0 0.0
      %7943 = vmatpush2.msra.mxu0 0.0
      %7944 = vmatprep.subr.mxu0 0.0
      %7945 = vmatpush2.msra.mxu0 0.0
      %7946 = vmatprep.mubr.f32.mxu0 0.0
      %7947 = vmatmul.mubr.f32.gmra.mxu0 %v7880
      %v7948 = vpop.f32.mrf.mxu0
      %v7949 = vadd.f32 %v7875, %v7948
      %v7950 = vpop.f32.mrf.mxu0
      %v7951 = vadd.f32 %v7877, %v7950
      %7952 = vdwg.mxu0
      %s7953 = scalar_lea.vmem %s3, 4
      %v7954 = vld [vmem:[%s7953] sm:$0x1]
      %7955 = vrot.lane.b32.xlu0 %v7671, 111
      %v7956 = vpop.permute.xlu0 %7955
      %7957 = vrot.lane.b32.xlu0 %v7672, 111
      %v7958 = vpop.permute.xlu0 %7957
      %7959 = vrot.lane.b32.xlu0 %v7689, 111
      %v7960 = vpop.permute.xlu0 %7959
      %7961 = vrot.lane.b32.xlu0 %v7673, 111
      %v7962 = vpop.permute.xlu0 %7961
      %7963 = vrot.lane.b32.xlu0 %v7674, 111
      %v7964 = vpop.permute.xlu0 %7963
      %7965 = vrot.lane.b32.xlu0 %v7690, 111
      %v7966 = vpop.permute.xlu0 %7965
      %7967 = vrot.lane.b32.xlu0 %v7675, 111
      %v7968 = vpop.permute.xlu0 %7967
      %7969 = vrot.lane.b32.xlu0 %v7676, 111
      %v7970 = vpop.permute.xlu0 %7969
      %7971 = vrot.lane.b32.xlu0 %v7691, 111
      %v7972 = vpop.permute.xlu0 %7971
      %7973 = vrot.lane.b32.xlu0 %v7677, 111
      %v7974 = vpop.permute.xlu0 %7973
      %7975 = vrot.lane.b32.xlu0 %v7678, 111
      %v7976 = vpop.permute.xlu0 %7975
      %7977 = vrot.lane.b32.xlu0 %v7692, 111
      %v7978 = vpop.permute.xlu0 %7977
      %7979 = vrot.lane.b32.xlu0 %v7679, 111
      %v7980 = vpop.permute.xlu0 %7979
      %7981 = vrot.lane.b32.xlu0 %v7680, 111
      %v7982 = vpop.permute.xlu0 %7981
      %7983 = vrot.lane.b32.xlu0 %v7693, 111
      %v7984 = vpop.permute.xlu0 %7983
      %7985 = vrot.lane.b32.xlu0 %v7681, 111
      %v7986 = vpop.permute.xlu0 %7985
      %7987 = vrot.lane.b32.xlu0 %v7682, 111
      %v7988 = vpop.permute.xlu0 %7987
      %7989 = vrot.lane.b32.xlu0 %v7694, 111
      %v7990 = vpop.permute.xlu0 %7989
      %7991 = vrot.lane.b32.xlu0 %v7683, 111
      %v7992 = vpop.permute.xlu0 %7991
      %7993 = vrot.lane.b32.xlu0 %v7684, 111
      %v7994 = vpop.permute.xlu0 %7993
      %7995 = vrot.lane.b32.xlu0 %v7695, 111
      %v7996 = vpop.permute.xlu0 %7995
      %7997 = vrot.lane.b32.xlu0 %v7685, 111
      %v7998 = vpop.permute.xlu0 %7997
      %7999 = vrot.lane.b32.xlu0 %v7686, 111
      %v8000 = vpop.permute.xlu0 %7999
      %8001 = vrot.lane.b32.xlu0 %v7696, 111
      %v8002 = vpop.permute.xlu0 %8001
      %v8003 = vsel %vm395, %v7956, %v7958
      %v8004 = vsel %vm395, %v7958, %v7960
      %v8005 = vsel %vm395, %v7962, %v7964
      %v8006 = vsel %vm395, %v7964, %v7966
      %v8007 = vsel %vm395, %v7968, %v7970
      %v8008 = vsel %vm395, %v7970, %v7972
      %v8009 = vsel %vm395, %v7974, %v7976
      %v8010 = vsel %vm395, %v7976, %v7978
      %v8011 = vsel %vm395, %v7980, %v7982
      %v8012 = vsel %vm395, %v7982, %v7984
      %v8013 = vsel %vm395, %v7986, %v7988
      %v8014 = vsel %vm395, %v7988, %v7990
      %v8015 = vsel %vm395, %v7992, %v7994
      %v8016 = vsel %vm395, %v7994, %v7996
      %v8017 = vsel %vm395, %v7998, %v8000
      %v8018 = vsel %vm395, %v8000, %v8002
      %v8036 = vsel %vm939, %v7954, 0
      %8038 = vmatprep.subr.mxu0 0.0
      %8039 = vmatpush1.msra.mxu0 0.0
      %8040 = vmatprep.subr.mxu0 0.0
      %8041 = vmatpush1.msra.mxu0 0.0
      %8042 = vmatprep.subr.mxu0 0.0
      %8043 = vmatpush1.msra.mxu0 0.0
      %8044 = vmatprep.subr.mxu0 0.0
      %8045 = vmatpush1.msra.mxu0 0.0
      %8046 = vmatprep.subr.mxu0 0.0
      %8047 = vmatpush1.msra.mxu0 0.0
      %8048 = vmatprep.subr.mxu0 0.0
      %8049 = vmatpush1.msra.mxu0 0.0
      %8050 = vmatprep.subr.mxu0 0.0
      %8051 = vmatpush1.msra.mxu0 0.0
      %8052 = vmatprep.subr.mxu0 0.0
      %8053 = vmatpush1.msra.mxu0 0.0
      %8054 = vmatprep.subr.mxu0 %v8018
      %8055 = vmatpush1.msra.mxu0 %v8017
      %8056 = vmatprep.subr.mxu0 %v8016
      %8057 = vmatpush1.msra.mxu0 %v8015
      %8058 = vmatprep.subr.mxu0 %v8014
      %8059 = vmatpush1.msra.mxu0 %v8013
      %8060 = vmatprep.subr.mxu0 %v8012
      %8061 = vmatpush1.msra.mxu0 %v8011
      %8062 = vmatprep.subr.mxu0 %v8010
      %8063 = vmatpush1.msra.mxu0 %v8009
      %8064 = vmatprep.subr.mxu0 %v8008
      %8065 = vmatpush1.msra.mxu0 %v8007
      %8066 = vmatprep.subr.mxu0 %v8006
      %8067 = vmatpush1.msra.mxu0 %v8005
      %8068 = vmatprep.subr.mxu0 %v8004
      %8069 = vmatpush1.msra.mxu0 %v8003
      %8070 = vmatprep.subr.mxu0 0.0
      %8071 = vmatpush2.msra.mxu0 0.0
      %8072 = vmatprep.subr.mxu0 0.0
      %8073 = vmatpush2.msra.mxu0 0.0
      %8074 = vmatprep.subr.mxu0 0.0
      %8075 = vmatpush2.msra.mxu0 0.0
      %8076 = vmatprep.subr.mxu0 0.0
      %8077 = vmatpush2.msra.mxu0 0.0
      %8078 = vmatprep.subr.mxu0 0.0
      %8079 = vmatpush2.msra.mxu0 0.0
      %8080 = vmatprep.subr.mxu0 0.0
      %8081 = vmatpush2.msra.mxu0 0.0
      %8082 = vmatprep.subr.mxu0 0.0
      %8083 = vmatpush2.msra.mxu0 0.0
      %8084 = vmatprep.subr.mxu0 0.0
      %8085 = vmatpush2.msra.mxu0 0.0
      %8086 = vmatprep.subr.mxu0 0.0
      %8087 = vmatpush2.msra.mxu0 0.0
      %8088 = vmatprep.subr.mxu0 0.0
      %8089 = vmatpush2.msra.mxu0 0.0
      %8090 = vmatprep.subr.mxu0 0.0
      %8091 = vmatpush2.msra.mxu0 0.0
      %8092 = vmatprep.subr.mxu0 0.0
      %8093 = vmatpush2.msra.mxu0 0.0
      %8094 = vmatprep.subr.mxu0 0.0
      %8095 = vmatpush2.msra.mxu0 0.0
      %8096 = vmatprep.subr.mxu0 0.0
      %8097 = vmatpush2.msra.mxu0 0.0
      %8098 = vmatprep.subr.mxu0 0.0
      %8099 = vmatpush2.msra.mxu0 0.0
      %8100 = vmatprep.subr.mxu0 0.0
      %8101 = vmatpush2.msra.mxu0 0.0
      %8102 = vmatprep.mubr.f32.mxu0 0.0
      %8103 = vmatmul.mubr.f32.gmra.mxu0 %v8036
      %v8104 = vpop.f32.mrf.mxu0
      %v8105 = vadd.f32 0.0, %v8104
      %v8106 = vpop.f32.mrf.mxu0
      %v8107 = vadd.f32 0.0, %v8106
      %8108 = vdwg.mxu0
      %8109 = vrot.lane.b32.xlu0 %v7671, 127
      %v8110 = vpop.permute.xlu0 %8109
      %8111 = vrot.lane.b32.xlu0 %v7672, 127
      %v8112 = vpop.permute.xlu0 %8111
      %8113 = vrot.lane.b32.xlu0 %v7689, 127
      %v8114 = vpop.permute.xlu0 %8113
      %8115 = vrot.lane.b32.xlu0 %v7673, 127
      %v8116 = vpop.permute.xlu0 %8115
      %8117 = vrot.lane.b32.xlu0 %v7674, 127
      %v8118 = vpop.permute.xlu0 %8117
      %8119 = vrot.lane.b32.xlu0 %v7690, 127
      %v8120 = vpop.permute.xlu0 %8119
      %8121 = vrot.lane.b32.xlu0 %v7675, 127
      %v8122 = vpop.permute.xlu0 %8121
      %8123 = vrot.lane.b32.xlu0 %v7676, 127
      %v8124 = vpop.permute.xlu0 %8123
      %8125 = vrot.lane.b32.xlu0 %v7691, 127
      %v8126 = vpop.permute.xlu0 %8125
      %8127 = vrot.lane.b32.xlu0 %v7677, 127
      %v8128 = vpop.permute.xlu0 %8127
      %8129 = vrot.lane.b32.xlu0 %v7678, 127
      %v8130 = vpop.permute.xlu0 %8129
      %8131 = vrot.lane.b32.xlu0 %v7692, 127
      %v8132 = vpop.permute.xlu0 %8131
      %8133 = vrot.lane.b32.xlu0 %v7679, 127
      %v8134 = vpop.permute.xlu0 %8133
      %8135 = vrot.lane.b32.xlu0 %v7680, 127
      %v8136 = vpop.permute.xlu0 %8135
      %8137 = vrot.lane.b32.xlu0 %v7693, 127
      %v8138 = vpop.permute.xlu0 %8137
      %8139 = vrot.lane.b32.xlu0 %v7681, 127
      %v8140 = vpop.permute.xlu0 %8139
      %8141 = vrot.lane.b32.xlu0 %v7682, 127
      %v8142 = vpop.permute.xlu0 %8141
      %8143 = vrot.lane.b32.xlu0 %v7694, 127
      %v8144 = vpop.permute.xlu0 %8143
      %8145 = vrot.lane.b32.xlu0 %v7683, 127
      %v8146 = vpop.permute.xlu0 %8145
      %8147 = vrot.lane.b32.xlu0 %v7684, 127
      %v8148 = vpop.permute.xlu0 %8147
      %8149 = vrot.lane.b32.xlu0 %v7695, 127
      %v8150 = vpop.permute.xlu0 %8149
      %8151 = vrot.lane.b32.xlu0 %v7685, 127
      %v8152 = vpop.permute.xlu0 %8151
      %8153 = vrot.lane.b32.xlu0 %v7686, 127
      %v8154 = vpop.permute.xlu0 %8153
      %8155 = vrot.lane.b32.xlu0 %v7696, 127
      %v8156 = vpop.permute.xlu0 %8155
      %v8157 = vsel %vm331, %v8110, %v8112
      %v8158 = vsel %vm331, %v8112, %v8114
      %v8159 = vsel %vm331, %v8116, %v8118
      %v8160 = vsel %vm331, %v8118, %v8120
      %v8161 = vsel %vm331, %v8122, %v8124
      %v8162 = vsel %vm331, %v8124, %v8126
      %v8163 = vsel %vm331, %v8128, %v8130
      %v8164 = vsel %vm331, %v8130, %v8132
      %v8165 = vsel %vm331, %v8134, %v8136
      %v8166 = vsel %vm331, %v8136, %v8138
      %v8167 = vsel %vm331, %v8140, %v8142
      %v8168 = vsel %vm331, %v8142, %v8144
      %v8169 = vsel %vm331, %v8146, %v8148
      %v8170 = vsel %vm331, %v8148, %v8150
      %v8171 = vsel %vm331, %v8152, %v8154
      %v8172 = vsel %vm331, %v8154, %v8156
      %v8190 = vsel %vm939, %v7688, 0
      %8192 = vmatprep.subr.mxu0 0.0
      %8193 = vmatpush1.msra.mxu0 0.0
      %8194 = vmatprep.subr.mxu0 0.0
      %8195 = vmatpush1.msra.mxu0 0.0
      %8196 = vmatprep.subr.mxu0 0.0
      %8197 = vmatpush1.msra.mxu0 0.0
      %8198 = vmatprep.subr.mxu0 0.0
      %8199 = vmatpush1.msra.mxu0 0.0
      %8200 = vmatprep.subr.mxu0 0.0
      %8201 = vmatpush1.msra.mxu0 0.0
      %8202 = vmatprep.subr.mxu0 0.0
      %8203 = vmatpush1.msra.mxu0 0.0
      %8204 = vmatprep.subr.mxu0 0.0
      %8205 = vmatpush1.msra.mxu0 0.0
      %8206 = vmatprep.subr.mxu0 0.0
      %8207 = vmatpush1.msra.mxu0 0.0
      %8208 = vmatprep.subr.mxu0 %v8172
      %8209 = vmatpush1.msra.mxu0 %v8171
      %8210 = vmatprep.subr.mxu0 %v8170
      %8211 = vmatpush1.msra.mxu0 %v8169
      %8212 = vmatprep.subr.mxu0 %v8168
      %8213 = vmatpush1.msra.mxu0 %v8167
      %8214 = vmatprep.subr.mxu0 %v8166
      %8215 = vmatpush1.msra.mxu0 %v8165
      %8216 = vmatprep.subr.mxu0 %v8164
      %8217 = vmatpush1.msra.mxu0 %v8163
      %8218 = vmatprep.subr.mxu0 %v8162
      %8219 = vmatpush1.msra.mxu0 %v8161
      %8220 = vmatprep.subr.mxu0 %v8160
      %8221 = vmatpush1.msra.mxu0 %v8159
      %8222 = vmatprep.subr.mxu0 %v8158
      %8223 = vmatpush1.msra.mxu0 %v8157
      %8224 = vmatprep.subr.mxu0 0.0
      %8225 = vmatpush2.msra.mxu0 0.0
      %8226 = vmatprep.subr.mxu0 0.0
      %8227 = vmatpush2.msra.mxu0 0.0
      %8228 = vmatprep.subr.mxu0 0.0
      %8229 = vmatpush2.msra.mxu0 0.0
      %8230 = vmatprep.subr.mxu0 0.0
      %8231 = vmatpush2.msra.mxu0 0.0
      %8232 = vmatprep.subr.mxu0 0.0
      %8233 = vmatpush2.msra.mxu0 0.0
      %8234 = vmatprep.subr.mxu0 0.0
      %8235 = vmatpush2.msra.mxu0 0.0
      %8236 = vmatprep.subr.mxu0 0.0
      %8237 = vmatpush2.msra.mxu0 0.0
      %8238 = vmatprep.subr.mxu0 0.0
      %8239 = vmatpush2.msra.mxu0 0.0
      %8240 = vmatprep.subr.mxu0 0.0
      %8241 = vmatpush2.msra.mxu0 0.0
      %8242 = vmatprep.subr.mxu0 0.0
      %8243 = vmatpush2.msra.mxu0 0.0
      %8244 = vmatprep.subr.mxu0 0.0
      %8245 = vmatpush2.msra.mxu0 0.0
      %8246 = vmatprep.subr.mxu0 0.0
      %8247 = vmatpush2.msra.mxu0 0.0
      %8248 = vmatprep.subr.mxu0 0.0
      %8249 = vmatpush2.msra.mxu0 0.0
      %8250 = vmatprep.subr.mxu0 0.0
      %8251 = vmatpush2.msra.mxu0 0.0
      %8252 = vmatprep.subr.mxu0 0.0
      %8253 = vmatpush2.msra.mxu0 0.0
      %8254 = vmatprep.subr.mxu0 0.0
      %8255 = vmatpush2.msra.mxu0 0.0
      %8256 = vmatprep.mubr.f32.mxu0 0.0
      %8257 = vmatmul.mubr.f32.gmra.mxu0 %v8190
      %v8258 = vpop.f32.mrf.mxu0
      %v8259 = vadd.f32 %v8105, %v8258
      %v8260 = vpop.f32.mrf.mxu0
      %v8261 = vadd.f32 %v8107, %v8260
      %8262 = vdwg.mxu0
      %s8263 = scalar_lea.vmem %s3, 5
      %v8264 = vld [vmem:[%s8263] sm:$0x1]
      %8265 = vrot.lane.b32.xlu0 %v7671, 110
      %v8266 = vpop.permute.xlu0 %8265
      %8267 = vrot.lane.b32.xlu0 %v7672, 110
      %v8268 = vpop.permute.xlu0 %8267
      %8269 = vrot.lane.b32.xlu0 %v7689, 110
      %v8270 = vpop.permute.xlu0 %8269
      %8271 = vrot.lane.b32.xlu0 %v7673, 110
      %v8272 = vpop.permute.xlu0 %8271
      %8273 = vrot.lane.b32.xlu0 %v7674, 110
      %v8274 = vpop.permute.xlu0 %8273
      %8275 = vrot.lane.b32.xlu0 %v7690, 110
      %v8276 = vpop.permute.xlu0 %8275
      %8277 = vrot.lane.b32.xlu0 %v7675, 110
      %v8278 = vpop.permute.xlu0 %8277
      %8279 = vrot.lane.b32.xlu0 %v7676, 110
      %v8280 = vpop.permute.xlu0 %8279
      %8281 = vrot.lane.b32.xlu0 %v7691, 110
      %v8282 = vpop.permute.xlu0 %8281
      %8283 = vrot.lane.b32.xlu0 %v7677, 110
      %v8284 = vpop.permute.xlu0 %8283
      %8285 = vrot.lane.b32.xlu0 %v7678, 110
      %v8286 = vpop.permute.xlu0 %8285
      %8287 = vrot.lane.b32.xlu0 %v7692, 110
      %v8288 = vpop.permute.xlu0 %8287
      %8289 = vrot.lane.b32.xlu0 %v7679, 110
      %v8290 = vpop.permute.xlu0 %8289
      %8291 = vrot.lane.b32.xlu0 %v7680, 110
      %v8292 = vpop.permute.xlu0 %8291
      %8293 = vrot.lane.b32.xlu0 %v7693, 110
      %v8294 = vpop.permute.xlu0 %8293
      %8295 = vrot.lane.b32.xlu0 %v7681, 110
      %v8296 = vpop.permute.xlu0 %8295
      %8297 = vrot.lane.b32.xlu0 %v7682, 110
      %v8298 = vpop.permute.xlu0 %8297
      %8299 = vrot.lane.b32.xlu0 %v7694, 110
      %v8300 = vpop.permute.xlu0 %8299
      %8301 = vrot.lane.b32.xlu0 %v7683, 110
      %v8302 = vpop.permute.xlu0 %8301
      %8303 = vrot.lane.b32.xlu0 %v7684, 110
      %v8304 = vpop.permute.xlu0 %8303
      %8305 = vrot.lane.b32.xlu0 %v7695, 110
      %v8306 = vpop.permute.xlu0 %8305
      %8307 = vrot.lane.b32.xlu0 %v7685, 110
      %v8308 = vpop.permute.xlu0 %8307
      %8309 = vrot.lane.b32.xlu0 %v7686, 110
      %v8310 = vpop.permute.xlu0 %8309
      %8311 = vrot.lane.b32.xlu0 %v7696, 110
      %v8312 = vpop.permute.xlu0 %8311
      %v8313 = vsel %vm413, %v8266, %v8268
      %v8314 = vsel %vm413, %v8268, %v8270
      %v8315 = vsel %vm413, %v8272, %v8274
      %v8316 = vsel %vm413, %v8274, %v8276
      %v8317 = vsel %vm413, %v8278, %v8280
      %v8318 = vsel %vm413, %v8280, %v8282
      %v8319 = vsel %vm413, %v8284, %v8286
      %v8320 = vsel %vm413, %v8286, %v8288
      %v8321 = vsel %vm413, %v8290, %v8292
      %v8322 = vsel %vm413, %v8292, %v8294
      %v8323 = vsel %vm413, %v8296, %v8298
      %v8324 = vsel %vm413, %v8298, %v8300
      %v8325 = vsel %vm413, %v8302, %v8304
      %v8326 = vsel %vm413, %v8304, %v8306
      %v8327 = vsel %vm413, %v8308, %v8310
      %v8328 = vsel %vm413, %v8310, %v8312
      %v8346 = vsel %vm939, %v8264, 0
      %8348 = vmatprep.subr.mxu0 0.0
      %8349 = vmatpush1.msra.mxu0 0.0
      %8350 = vmatprep.subr.mxu0 0.0
      %8351 = vmatpush1.msra.mxu0 0.0
      %8352 = vmatprep.subr.mxu0 0.0
      %8353 = vmatpush1.msra.mxu0 0.0
      %8354 = vmatprep.subr.mxu0 0.0
      %8355 = vmatpush1.msra.mxu0 0.0
      %8356 = vmatprep.subr.mxu0 0.0
      %8357 = vmatpush1.msra.mxu0 0.0
      %8358 = vmatprep.subr.mxu0 0.0
      %8359 = vmatpush1.msra.mxu0 0.0
      %8360 = vmatprep.subr.mxu0 0.0
      %8361 = vmatpush1.msra.mxu0 0.0
      %8362 = vmatprep.subr.mxu0 0.0
      %8363 = vmatpush1.msra.mxu0 0.0
      %8364 = vmatprep.subr.mxu0 %v8328
      %8365 = vmatpush1.msra.mxu0 %v8327
      %8366 = vmatprep.subr.mxu0 %v8326
      %8367 = vmatpush1.msra.mxu0 %v8325
      %8368 = vmatprep.subr.mxu0 %v8324
      %8369 = vmatpush1.msra.mxu0 %v8323
      %8370 = vmatprep.subr.mxu0 %v8322
      %8371 = vmatpush1.msra.mxu0 %v8321
      %8372 = vmatprep.subr.mxu0 %v8320
      %8373 = vmatpush1.msra.mxu0 %v8319
      %8374 = vmatprep.subr.mxu0 %v8318
      %8375 = vmatpush1.msra.mxu0 %v8317
      %8376 = vmatprep.subr.mxu0 %v8316
      %8377 = vmatpush1.msra.mxu0 %v8315
      %8378 = vmatprep.subr.mxu0 %v8314
      %8379 = vmatpush1.msra.mxu0 %v8313
      %8380 = vmatprep.subr.mxu0 0.0
      %8381 = vmatpush2.msra.mxu0 0.0
      %8382 = vmatprep.subr.mxu0 0.0
      %8383 = vmatpush2.msra.mxu0 0.0
      %8384 = vmatprep.subr.mxu0 0.0
      %8385 = vmatpush2.msra.mxu0 0.0
      %8386 = vmatprep.subr.mxu0 0.0
      %8387 = vmatpush2.msra.mxu0 0.0
      %8388 = vmatprep.subr.mxu0 0.0
      %8389 = vmatpush2.msra.mxu0 0.0
      %8390 = vmatprep.subr.mxu0 0.0
      %8391 = vmatpush2.msra.mxu0 0.0
      %8392 = vmatprep.subr.mxu0 0.0
      %8393 = vmatpush2.msra.mxu0 0.0
      %8394 = vmatprep.subr.mxu0 0.0
      %8395 = vmatpush2.msra.mxu0 0.0
      %8396 = vmatprep.subr.mxu0 0.0
      %8397 = vmatpush2.msra.mxu0 0.0
      %8398 = vmatprep.subr.mxu0 0.0
      %8399 = vmatpush2.msra.mxu0 0.0
      %8400 = vmatprep.subr.mxu0 0.0
      %8401 = vmatpush2.msra.mxu0 0.0
      %8402 = vmatprep.subr.mxu0 0.0
      %8403 = vmatpush2.msra.mxu0 0.0
      %8404 = vmatprep.subr.mxu0 0.0
      %8405 = vmatpush2.msra.mxu0 0.0
      %8406 = vmatprep.subr.mxu0 0.0
      %8407 = vmatpush2.msra.mxu0 0.0
      %8408 = vmatprep.subr.mxu0 0.0
      %8409 = vmatpush2.msra.mxu0 0.0
      %8410 = vmatprep.subr.mxu0 0.0
      %8411 = vmatpush2.msra.mxu0 0.0
      %8412 = vmatprep.mubr.f32.mxu0 0.0
      %8413 = vmatmul.mubr.f32.gmra.mxu0 %v8346
      %v8414 = vpop.f32.mrf.mxu0
      %v8415 = vadd.f32 0.0, %v8414
      %v8416 = vpop.f32.mrf.mxu0
      %v8417 = vadd.f32 0.0, %v8416
      %8418 = vdwg.mxu0
      %8419 = vrot.lane.b32.xlu0 %v7671, 126
      %v8420 = vpop.permute.xlu0 %8419
      %8421 = vrot.lane.b32.xlu0 %v7672, 126
      %v8422 = vpop.permute.xlu0 %8421
      %8423 = vrot.lane.b32.xlu0 %v7689, 126
      %v8424 = vpop.permute.xlu0 %8423
      %8425 = vrot.lane.b32.xlu0 %v7673, 126
      %v8426 = vpop.permute.xlu0 %8425
      %8427 = vrot.lane.b32.xlu0 %v7674, 126
      %v8428 = vpop.permute.xlu0 %8427
      %8429 = vrot.lane.b32.xlu0 %v7690, 126
      %v8430 = vpop.permute.xlu0 %8429
      %8431 = vrot.lane.b32.xlu0 %v7675, 126
      %v8432 = vpop.permute.xlu0 %8431
      %8433 = vrot.lane.b32.xlu0 %v7676, 126
      %v8434 = vpop.permute.xlu0 %8433
      %8435 = vrot.lane.b32.xlu0 %v7691, 126
      %v8436 = vpop.permute.xlu0 %8435
      %8437 = vrot.lane.b32.xlu0 %v7677, 126
      %v8438 = vpop.permute.xlu0 %8437
      %8439 = vrot.lane.b32.xlu0 %v7678, 126
      %v8440 = vpop.permute.xlu0 %8439
      %8441 = vrot.lane.b32.xlu0 %v7692, 126
      %v8442 = vpop.permute.xlu0 %8441
      %8443 = vrot.lane.b32.xlu0 %v7679, 126
      %v8444 = vpop.permute.xlu0 %8443
      %8445 = vrot.lane.b32.xlu0 %v7680, 126
      %v8446 = vpop.permute.xlu0 %8445
      %8447 = vrot.lane.b32.xlu0 %v7693, 126
      %v8448 = vpop.permute.xlu0 %8447
      %8449 = vrot.lane.b32.xlu0 %v7681, 126
      %v8450 = vpop.permute.xlu0 %8449
      %8451 = vrot.lane.b32.xlu0 %v7682, 126
      %v8452 = vpop.permute.xlu0 %8451
      %8453 = vrot.lane.b32.xlu0 %v7694, 126
      %v8454 = vpop.permute.xlu0 %8453
      %8455 = vrot.lane.b32.xlu0 %v7683, 126
      %v8456 = vpop.permute.xlu0 %8455
      %8457 = vrot.lane.b32.xlu0 %v7684, 126
      %v8458 = vpop.permute.xlu0 %8457
      %8459 = vrot.lane.b32.xlu0 %v7695, 126
      %v8460 = vpop.permute.xlu0 %8459
      %8461 = vrot.lane.b32.xlu0 %v7685, 126
      %v8462 = vpop.permute.xlu0 %8461
      %8463 = vrot.lane.b32.xlu0 %v7686, 126
      %v8464 = vpop.permute.xlu0 %8463
      %8465 = vrot.lane.b32.xlu0 %v7696, 126
      %v8466 = vpop.permute.xlu0 %8465
      %v8467 = vsel %vm366, %v8420, %v8422
      %v8468 = vsel %vm366, %v8422, %v8424
      %v8469 = vsel %vm366, %v8426, %v8428
      %v8470 = vsel %vm366, %v8428, %v8430
      %v8471 = vsel %vm366, %v8432, %v8434
      %v8472 = vsel %vm366, %v8434, %v8436
      %v8473 = vsel %vm366, %v8438, %v8440
      %v8474 = vsel %vm366, %v8440, %v8442
      %v8475 = vsel %vm366, %v8444, %v8446
      %v8476 = vsel %vm366, %v8446, %v8448
      %v8477 = vsel %vm366, %v8450, %v8452
      %v8478 = vsel %vm366, %v8452, %v8454
      %v8479 = vsel %vm366, %v8456, %v8458
      %v8480 = vsel %vm366, %v8458, %v8460
      %v8481 = vsel %vm366, %v8462, %v8464
      %v8482 = vsel %vm366, %v8464, %v8466
      %v8500 = vsel %vm939, %v7698, 0
      %8502 = vmatprep.subr.mxu0 0.0
      %8503 = vmatpush1.msra.mxu0 0.0
      %8504 = vmatprep.subr.mxu0 0.0
      %8505 = vmatpush1.msra.mxu0 0.0
      %8506 = vmatprep.subr.mxu0 0.0
      %8507 = vmatpush1.msra.mxu0 0.0
      %8508 = vmatprep.subr.mxu0 0.0
      %8509 = vmatpush1.msra.mxu0 0.0
      %8510 = vmatprep.subr.mxu0 0.0
      %8511 = vmatpush1.msra.mxu0 0.0
      %8512 = vmatprep.subr.mxu0 0.0
      %8513 = vmatpush1.msra.mxu0 0.0
      %8514 = vmatprep.subr.mxu0 0.0
      %8515 = vmatpush1.msra.mxu0 0.0
      %8516 = vmatprep.subr.mxu0 0.0
      %8517 = vmatpush1.msra.mxu0 0.0
      %8518 = vmatprep.subr.mxu0 %v8482
      %8519 = vmatpush1.msra.mxu0 %v8481
      %8520 = vmatprep.subr.mxu0 %v8480
      %8521 = vmatpush1.msra.mxu0 %v8479
      %8522 = vmatprep.subr.mxu0 %v8478
      %8523 = vmatpush1.msra.mxu0 %v8477
      %8524 = vmatprep.subr.mxu0 %v8476
      %8525 = vmatpush1.msra.mxu0 %v8475
      %8526 = vmatprep.subr.mxu0 %v8474
      %8527 = vmatpush1.msra.mxu0 %v8473
      %8528 = vmatprep.subr.mxu0 %v8472
      %8529 = vmatpush1.msra.mxu0 %v8471
      %8530 = vmatprep.subr.mxu0 %v8470
      %8531 = vmatpush1.msra.mxu0 %v8469
      %8532 = vmatprep.subr.mxu0 %v8468
      %8533 = vmatpush1.msra.mxu0 %v8467
      %8534 = vmatprep.subr.mxu0 0.0
      %8535 = vmatpush2.msra.mxu0 0.0
      %8536 = vmatprep.subr.mxu0 0.0
      %8537 = vmatpush2.msra.mxu0 0.0
      %8538 = vmatprep.subr.mxu0 0.0
      %8539 = vmatpush2.msra.mxu0 0.0
      %8540 = vmatprep.subr.mxu0 0.0
      %8541 = vmatpush2.msra.mxu0 0.0
      %8542 = vmatprep.subr.mxu0 0.0
      %8543 = vmatpush2.msra.mxu0 0.0
      %8544 = vmatprep.subr.mxu0 0.0
      %8545 = vmatpush2.msra.mxu0 0.0
      %8546 = vmatprep.subr.mxu0 0.0
      %8547 = vmatpush2.msra.mxu0 0.0
      %8548 = vmatprep.subr.mxu0 0.0
      %8549 = vmatpush2.msra.mxu0 0.0
      %8550 = vmatprep.subr.mxu0 0.0
      %8551 = vmatpush2.msra.mxu0 0.0
      %8552 = vmatprep.subr.mxu0 0.0
      %8553 = vmatpush2.msra.mxu0 0.0
      %8554 = vmatprep.subr.mxu0 0.0
      %8555 = vmatpush2.msra.mxu0 0.0
      %8556 = vmatprep.subr.mxu0 0.0
      %8557 = vmatpush2.msra.mxu0 0.0
      %8558 = vmatprep.subr.mxu0 0.0
      %8559 = vmatpush2.msra.mxu0 0.0
      %8560 = vmatprep.subr.mxu0 0.0
      %8561 = vmatpush2.msra.mxu0 0.0
      %8562 = vmatprep.subr.mxu0 0.0
      %8563 = vmatpush2.msra.mxu0 0.0
      %8564 = vmatprep.subr.mxu0 0.0
      %8565 = vmatpush2.msra.mxu0 0.0
      %8566 = vmatprep.mubr.f32.mxu0 0.0
      %8567 = vmatmul.mubr.f32.gmra.mxu0 %v8500
      %v8568 = vpop.f32.mrf.mxu0
      %v8569 = vadd.f32 %v8415, %v8568
      %v8570 = vpop.f32.mrf.mxu0
      %v8571 = vadd.f32 %v8417, %v8570
      %8572 = vdwg.mxu0
      %s8573 = scalar_lea.vmem %s3, 6
      %v8574 = vld [vmem:[%s8573] sm:$0x1]
      %8575 = vrot.lane.b32.xlu0 %v7671, 96
      %v8576 = vpop.permute.xlu0 %8575
      %8577 = vrot.lane.b32.xlu0 %v7672, 96
      %v8578 = vpop.permute.xlu0 %8577
      %8579 = vrot.lane.b32.xlu0 %v7689, 96
      %v8580 = vpop.permute.xlu0 %8579
      %8581 = vrot.lane.b32.xlu0 %v7673, 96
      %v8582 = vpop.permute.xlu0 %8581
      %8583 = vrot.lane.b32.xlu0 %v7674, 96
      %v8584 = vpop.permute.xlu0 %8583
      %8585 = vrot.lane.b32.xlu0 %v7690, 96
      %v8586 = vpop.permute.xlu0 %8585
      %8587 = vrot.lane.b32.xlu0 %v7675, 96
      %v8588 = vpop.permute.xlu0 %8587
      %8589 = vrot.lane.b32.xlu0 %v7676, 96
      %v8590 = vpop.permute.xlu0 %8589
      %8591 = vrot.lane.b32.xlu0 %v7691, 96
      %v8592 = vpop.permute.xlu0 %8591
      %8593 = vrot.lane.b32.xlu0 %v7677, 96
      %v8594 = vpop.permute.xlu0 %8593
      %8595 = vrot.lane.b32.xlu0 %v7678, 96
      %v8596 = vpop.permute.xlu0 %8595
      %8597 = vrot.lane.b32.xlu0 %v7692, 96
      %v8598 = vpop.permute.xlu0 %8597
      %8599 = vrot.lane.b32.xlu0 %v7679, 96
      %v8600 = vpop.permute.xlu0 %8599
      %8601 = vrot.lane.b32.xlu0 %v7680, 96
      %v8602 = vpop.permute.xlu0 %8601
      %8603 = vrot.lane.b32.xlu0 %v7693, 96
      %v8604 = vpop.permute.xlu0 %8603
      %8605 = vrot.lane.b32.xlu0 %v7681, 96
      %v8606 = vpop.permute.xlu0 %8605
      %8607 = vrot.lane.b32.xlu0 %v7682, 96
      %v8608 = vpop.permute.xlu0 %8607
      %8609 = vrot.lane.b32.xlu0 %v7694, 96
      %v8610 = vpop.permute.xlu0 %8609
      %8611 = vrot.lane.b32.xlu0 %v7683, 96
      %v8612 = vpop.permute.xlu0 %8611
      %8613 = vrot.lane.b32.xlu0 %v7684, 96
      %v8614 = vpop.permute.xlu0 %8613
      %8615 = vrot.lane.b32.xlu0 %v7695, 96
      %v8616 = vpop.permute.xlu0 %8615
      %8617 = vrot.lane.b32.xlu0 %v7685, 96
      %v8618 = vpop.permute.xlu0 %8617
      %8619 = vrot.lane.b32.xlu0 %v7686, 96
      %v8620 = vpop.permute.xlu0 %8619
      %8621 = vrot.lane.b32.xlu0 %v7696, 96
      %v8622 = vpop.permute.xlu0 %8621
      %v8623 = vsel %vm431, %v8576, %v8578
      %v8624 = vsel %vm431, %v8578, %v8580
      %v8625 = vsel %vm431, %v8582, %v8584
      %v8626 = vsel %vm431, %v8584, %v8586
      %v8627 = vsel %vm431, %v8588, %v8590
      %v8628 = vsel %vm431, %v8590, %v8592
      %v8629 = vsel %vm431, %v8594, %v8596
      %v8630 = vsel %vm431, %v8596, %v8598
      %v8631 = vsel %vm431, %v8600, %v8602
      %v8632 = vsel %vm431, %v8602, %v8604
      %v8633 = vsel %vm431, %v8606, %v8608
      %v8634 = vsel %vm431, %v8608, %v8610
      %v8635 = vsel %vm431, %v8612, %v8614
      %v8636 = vsel %vm431, %v8614, %v8616
      %v8637 = vsel %vm431, %v8618, %v8620
      %v8638 = vsel %vm431, %v8620, %v8622
      %v8656 = vsel %vm939, %v8574, 0
      %8658 = vmatprep.subr.mxu0 0.0
      %8659 = vmatpush1.msra.mxu0 0.0
      %8660 = vmatprep.subr.mxu0 0.0
      %8661 = vmatpush1.msra.mxu0 0.0
      %8662 = vmatprep.subr.mxu0 0.0
      %8663 = vmatpush1.msra.mxu0 0.0
      %8664 = vmatprep.subr.mxu0 0.0
      %8665 = vmatpush1.msra.mxu0 0.0
      %8666 = vmatprep.subr.mxu0 0.0
      %8667 = vmatpush1.msra.mxu0 0.0
      %8668 = vmatprep.subr.mxu0 0.0
      %8669 = vmatpush1.msra.mxu0 0.0
      %8670 = vmatprep.subr.mxu0 0.0
      %8671 = vmatpush1.msra.mxu0 0.0
      %8672 = vmatprep.subr.mxu0 0.0
      %8673 = vmatpush1.msra.mxu0 0.0
      %8674 = vmatprep.subr.mxu0 %v8638
      %8675 = vmatpush1.msra.mxu0 %v8637
      %8676 = vmatprep.subr.mxu0 %v8636
      %8677 = vmatpush1.msra.mxu0 %v8635
      %8678 = vmatprep.subr.mxu0 %v8634
      %8679 = vmatpush1.msra.mxu0 %v8633
      %8680 = vmatprep.subr.mxu0 %v8632
      %8681 = vmatpush1.msra.mxu0 %v8631
      %8682 = vmatprep.subr.mxu0 %v8630
      %8683 = vmatpush1.msra.mxu0 %v8629
      %8684 = vmatprep.subr.mxu0 %v8628
      %8685 = vmatpush1.msra.mxu0 %v8627
      %8686 = vmatprep.subr.mxu0 %v8626
      %8687 = vmatpush1.msra.mxu0 %v8625
      %8688 = vmatprep.subr.mxu0 %v8624
      %8689 = vmatpush1.msra.mxu0 %v8623
      %8690 = vmatprep.subr.mxu0 0.0
      %8691 = vmatpush2.msra.mxu0 0.0
      %8692 = vmatprep.subr.mxu0 0.0
      %8693 = vmatpush2.msra.mxu0 0.0
      %8694 = vmatprep.subr.mxu0 0.0
      %8695 = vmatpush2.msra.mxu0 0.0
      %8696 = vmatprep.subr.mxu0 0.0
      %8697 = vmatpush2.msra.mxu0 0.0
      %8698 = vmatprep.subr.mxu0 0.0
      %8699 = vmatpush2.msra.mxu0 0.0
      %8700 = vmatprep.subr.mxu0 0.0
      %8701 = vmatpush2.msra.mxu0 0.0
      %8702 = vmatprep.subr.mxu0 0.0
      %8703 = vmatpush2.msra.mxu0 0.0
      %8704 = vmatprep.subr.mxu0 0.0
      %8705 = vmatpush2.msra.mxu0 0.0
      %8706 = vmatprep.subr.mxu0 0.0
      %8707 = vmatpush2.msra.mxu0 0.0
      %8708 = vmatprep.subr.mxu0 0.0
      %8709 = vmatpush2.msra.mxu0 0.0
      %8710 = vmatprep.subr.mxu0 0.0
      %8711 = vmatpush2.msra.mxu0 0.0
      %8712 = vmatprep.subr.mxu0 0.0
      %8713 = vmatpush2.msra.mxu0 0.0
      %8714 = vmatprep.subr.mxu0 0.0
      %8715 = vmatpush2.msra.mxu0 0.0
      %8716 = vmatprep.subr.mxu0 0.0
      %8717 = vmatpush2.msra.mxu0 0.0
      %8718 = vmatprep.subr.mxu0 0.0
      %8719 = vmatpush2.msra.mxu0 0.0
      %8720 = vmatprep.subr.mxu0 0.0
      %8721 = vmatpush2.msra.mxu0 0.0
      %8722 = vmatprep.mubr.f32.mxu0 0.0
      %8723 = vmatmul.mubr.f32.gmra.mxu0 %v8656
      %v8724 = vpop.f32.mrf.mxu0
      %v8725 = vadd.f32 0.0, %v8724
      %v8726 = vpop.f32.mrf.mxu0
      %v8727 = vadd.f32 0.0, %v8726
      %8728 = vdwg.mxu0
      %v8729 = vadd.f32 %v7949, %v8725
      %v8730 = vadd.f32 %v7951, %v8727
      %s8731 = scalar_lea.vmem %s3, 7
      %v8732 = vld [vmem:[%s8731] sm:$0x1]
      %8733 = vrot.lane.b32.xlu0 %v7671, 95
      %v8734 = vpop.permute.xlu0 %8733
      %8735 = vrot.lane.b32.xlu0 %v7672, 95
      %v8736 = vpop.permute.xlu0 %8735
      %8737 = vrot.lane.b32.xlu0 %v7689, 95
      %v8738 = vpop.permute.xlu0 %8737
      %8739 = vrot.lane.b32.xlu0 %v7673, 95
      %v8740 = vpop.permute.xlu0 %8739
      %8741 = vrot.lane.b32.xlu0 %v7674, 95
      %v8742 = vpop.permute.xlu0 %8741
      %8743 = vrot.lane.b32.xlu0 %v7690, 95
      %v8744 = vpop.permute.xlu0 %8743
      %8745 = vrot.lane.b32.xlu0 %v7675, 95
      %v8746 = vpop.permute.xlu0 %8745
      %8747 = vrot.lane.b32.xlu0 %v7676, 95
      %v8748 = vpop.permute.xlu0 %8747
      %8749 = vrot.lane.b32.xlu0 %v7691, 95
      %v8750 = vpop.permute.xlu0 %8749
      %8751 = vrot.lane.b32.xlu0 %v7677, 95
      %v8752 = vpop.permute.xlu0 %8751
      %8753 = vrot.lane.b32.xlu0 %v7678, 95
      %v8754 = vpop.permute.xlu0 %8753
      %8755 = vrot.lane.b32.xlu0 %v7692, 95
      %v8756 = vpop.permute.xlu0 %8755
      %8757 = vrot.lane.b32.xlu0 %v7679, 95
      %v8758 = vpop.permute.xlu0 %8757
      %8759 = vrot.lane.b32.xlu0 %v7680, 95
      %v8760 = vpop.permute.xlu0 %8759
      %8761 = vrot.lane.b32.xlu0 %v7693, 95
      %v8762 = vpop.permute.xlu0 %8761
      %8763 = vrot.lane.b32.xlu0 %v7681, 95
      %v8764 = vpop.permute.xlu0 %8763
      %8765 = vrot.lane.b32.xlu0 %v7682, 95
      %v8766 = vpop.permute.xlu0 %8765
      %8767 = vrot.lane.b32.xlu0 %v7694, 95
      %v8768 = vpop.permute.xlu0 %8767
      %8769 = vrot.lane.b32.xlu0 %v7683, 95
      %v8770 = vpop.permute.xlu0 %8769
      %8771 = vrot.lane.b32.xlu0 %v7684, 95
      %v8772 = vpop.permute.xlu0 %8771
      %8773 = vrot.lane.b32.xlu0 %v7695, 95
      %v8774 = vpop.permute.xlu0 %8773
      %8775 = vrot.lane.b32.xlu0 %v7685, 95
      %v8776 = vpop.permute.xlu0 %8775
      %8777 = vrot.lane.b32.xlu0 %v7686, 95
      %v8778 = vpop.permute.xlu0 %8777
      %8779 = vrot.lane.b32.xlu0 %v7696, 95
      %v8780 = vpop.permute.xlu0 %8779
      %v8781 = vsel %vm442, %v8734, %v8736
      %v8782 = vsel %vm442, %v8736, %v8738
      %v8783 = vsel %vm442, %v8740, %v8742
      %v8784 = vsel %vm442, %v8742, %v8744
      %v8785 = vsel %vm442, %v8746, %v8748
      %v8786 = vsel %vm442, %v8748, %v8750
      %v8787 = vsel %vm442, %v8752, %v8754
      %v8788 = vsel %vm442, %v8754, %v8756
      %v8789 = vsel %vm442, %v8758, %v8760
      %v8790 = vsel %vm442, %v8760, %v8762
      %v8791 = vsel %vm442, %v8764, %v8766
      %v8792 = vsel %vm442, %v8766, %v8768
      %v8793 = vsel %vm442, %v8770, %v8772
      %v8794 = vsel %vm442, %v8772, %v8774
      %v8795 = vsel %vm442, %v8776, %v8778
      %v8796 = vsel %vm442, %v8778, %v8780
      %v8814 = vsel %vm939, %v8732, 0
      %8816 = vmatprep.subr.mxu0 0.0
      %8817 = vmatpush1.msra.mxu0 0.0
      %8818 = vmatprep.subr.mxu0 0.0
      %8819 = vmatpush1.msra.mxu0 0.0
      %8820 = vmatprep.subr.mxu0 0.0
      %8821 = vmatpush1.msra.mxu0 0.0
      %8822 = vmatprep.subr.mxu0 0.0
      %8823 = vmatpush1.msra.mxu0 0.0
      %8824 = vmatprep.subr.mxu0 0.0
      %8825 = vmatpush1.msra.mxu0 0.0
      %8826 = vmatprep.subr.mxu0 0.0
      %8827 = vmatpush1.msra.mxu0 0.0
      %8828 = vmatprep.subr.mxu0 0.0
      %8829 = vmatpush1.msra.mxu0 0.0
      %8830 = vmatprep.subr.mxu0 0.0
      %8831 = vmatpush1.msra.mxu0 0.0
      %8832 = vmatprep.subr.mxu0 %v8796
      %8833 = vmatpush1.msra.mxu0 %v8795
      %8834 = vmatprep.subr.mxu0 %v8794
      %8835 = vmatpush1.msra.mxu0 %v8793
      %8836 = vmatprep.subr.mxu0 %v8792
      %8837 = vmatpush1.msra.mxu0 %v8791
      %8838 = vmatprep.subr.mxu0 %v8790
      %8839 = vmatpush1.msra.mxu0 %v8789
      %8840 = vmatprep.subr.mxu0 %v8788
      %8841 = vmatpush1.msra.mxu0 %v8787
      %8842 = vmatprep.subr.mxu0 %v8786
      %8843 = vmatpush1.msra.mxu0 %v8785
      %8844 = vmatprep.subr.mxu0 %v8784
      %8845 = vmatpush1.msra.mxu0 %v8783
      %8846 = vmatprep.subr.mxu0 %v8782
      %8847 = vmatpush1.msra.mxu0 %v8781
      %8848 = vmatprep.subr.mxu0 0.0
      %8849 = vmatpush2.msra.mxu0 0.0
      %8850 = vmatprep.subr.mxu0 0.0
      %8851 = vmatpush2.msra.mxu0 0.0
      %8852 = vmatprep.subr.mxu0 0.0
      %8853 = vmatpush2.msra.mxu0 0.0
      %8854 = vmatprep.subr.mxu0 0.0
      %8855 = vmatpush2.msra.mxu0 0.0
      %8856 = vmatprep.subr.mxu0 0.0
      %8857 = vmatpush2.msra.mxu0 0.0
      %8858 = vmatprep.subr.mxu0 0.0
      %8859 = vmatpush2.msra.mxu0 0.0
      %8860 = vmatprep.subr.mxu0 0.0
      %8861 = vmatpush2.msra.mxu0 0.0
      %8862 = vmatprep.subr.mxu0 0.0
      %8863 = vmatpush2.msra.mxu0 0.0
      %8864 = vmatprep.subr.mxu0 0.0
      %8865 = vmatpush2.msra.mxu0 0.0
      %8866 = vmatprep.subr.mxu0 0.0
      %8867 = vmatpush2.msra.mxu0 0.0
      %8868 = vmatprep.subr.mxu0 0.0
      %8869 = vmatpush2.msra.mxu0 0.0
      %8870 = vmatprep.subr.mxu0 0.0
      %8871 = vmatpush2.msra.mxu0 0.0
      %8872 = vmatprep.subr.mxu0 0.0
      %8873 = vmatpush2.msra.mxu0 0.0
      %8874 = vmatprep.subr.mxu0 0.0
      %8875 = vmatpush2.msra.mxu0 0.0
      %8876 = vmatprep.subr.mxu0 0.0
      %8877 = vmatpush2.msra.mxu0 0.0
      %8878 = vmatprep.subr.mxu0 0.0
      %8879 = vmatpush2.msra.mxu0 0.0
      %8880 = vmatprep.mubr.f32.mxu0 0.0
      %8881 = vmatmul.mubr.f32.gmra.mxu0 %v8814
      %v8882 = vpop.f32.mrf.mxu0
      %v8883 = vadd.f32 0.0, %v8882
      %v8884 = vpop.f32.mrf.mxu0
      %v8885 = vadd.f32 0.0, %v8884
      %8886 = vdwg.mxu0
      %v8887 = vadd.f32 %v8259, %v8883
      %v8888 = vadd.f32 %v8261, %v8885
      %s8889 = scalar_lea.vmem %s3, 8
      %v8890 = vld [vmem:[%s8889] sm:$0x1]
      %8891 = vrot.lane.b32.xlu0 %v7671, 94
      %v8892 = vpop.permute.xlu0 %8891
      %8893 = vrot.lane.b32.xlu0 %v7672, 94
      %v8894 = vpop.permute.xlu0 %8893
      %8895 = vrot.lane.b32.xlu0 %v7689, 94
      %v8896 = vpop.permute.xlu0 %8895
      %8897 = vrot.lane.b32.xlu0 %v7673, 94
      %v8898 = vpop.permute.xlu0 %8897
      %8899 = vrot.lane.b32.xlu0 %v7674, 94
      %v8900 = vpop.permute.xlu0 %8899
      %8901 = vrot.lane.b32.xlu0 %v7690, 94
      %v8902 = vpop.permute.xlu0 %8901
      %8903 = vrot.lane.b32.xlu0 %v7675, 94
      %v8904 = vpop.permute.xlu0 %8903
      %8905 = vrot.lane.b32.xlu0 %v7676, 94
      %v8906 = vpop.permute.xlu0 %8905
      %8907 = vrot.lane.b32.xlu0 %v7691, 94
      %v8908 = vpop.permute.xlu0 %8907
      %8909 = vrot.lane.b32.xlu0 %v7677, 94
      %v8910 = vpop.permute.xlu0 %8909
      %8911 = vrot.lane.b32.xlu0 %v7678, 94
      %v8912 = vpop.permute.xlu0 %8911
      %8913 = vrot.lane.b32.xlu0 %v7692, 94
      %v8914 = vpop.permute.xlu0 %8913
      %8915 = vrot.lane.b32.xlu0 %v7679, 94
      %v8916 = vpop.permute.xlu0 %8915
      %8917 = vrot.lane.b32.xlu0 %v7680, 94
      %v8918 = vpop.permute.xlu0 %8917
      %8919 = vrot.lane.b32.xlu0 %v7693, 94
      %v8920 = vpop.permute.xlu0 %8919
      %8921 = vrot.lane.b32.xlu0 %v7681, 94
      %v8922 = vpop.permute.xlu0 %8921
      %8923 = vrot.lane.b32.xlu0 %v7682, 94
      %v8924 = vpop.permute.xlu0 %8923
      %8925 = vrot.lane.b32.xlu0 %v7694, 94
      %v8926 = vpop.permute.xlu0 %8925
      %8927 = vrot.lane.b32.xlu0 %v7683, 94
      %v8928 = vpop.permute.xlu0 %8927
      %8929 = vrot.lane.b32.xlu0 %v7684, 94
      %v8930 = vpop.permute.xlu0 %8929
      %8931 = vrot.lane.b32.xlu0 %v7695, 94
      %v8932 = vpop.permute.xlu0 %8931
      %8933 = vrot.lane.b32.xlu0 %v7685, 94
      %v8934 = vpop.permute.xlu0 %8933
      %8935 = vrot.lane.b32.xlu0 %v7686, 94
      %v8936 = vpop.permute.xlu0 %8935
      %8937 = vrot.lane.b32.xlu0 %v7696, 94
      %v8938 = vpop.permute.xlu0 %8937
      %v8939 = vsel %vm460, %v8892, %v8894
      %v8940 = vsel %vm460, %v8894, %v8896
      %v8941 = vsel %vm460, %v8898, %v8900
      %v8942 = vsel %vm460, %v8900, %v8902
      %v8943 = vsel %vm460, %v8904, %v8906
      %v8944 = vsel %vm460, %v8906, %v8908
      %v8945 = vsel %vm460, %v8910, %v8912
      %v8946 = vsel %vm460, %v8912, %v8914
      %v8947 = vsel %vm460, %v8916, %v8918
      %v8948 = vsel %vm460, %v8918, %v8920
      %v8949 = vsel %vm460, %v8922, %v8924
      %v8950 = vsel %vm460, %v8924, %v8926
      %v8951 = vsel %vm460, %v8928, %v8930
      %v8952 = vsel %vm460, %v8930, %v8932
      %v8953 = vsel %vm460, %v8934, %v8936
      %v8954 = vsel %vm460, %v8936, %v8938
      %v8972 = vsel %vm939, %v8890, 0
      %8974 = vmatprep.subr.mxu0 0.0
      %8975 = vmatpush1.msra.mxu0 0.0
      %8976 = vmatprep.subr.mxu0 0.0
      %8977 = vmatpush1.msra.mxu0 0.0
      %8978 = vmatprep.subr.mxu0 0.0
      %8979 = vmatpush1.msra.mxu0 0.0
      %8980 = vmatprep.subr.mxu0 0.0
      %8981 = vmatpush1.msra.mxu0 0.0
      %8982 = vmatprep.subr.mxu0 0.0
      %8983 = vmatpush1.msra.mxu0 0.0
      %8984 = vmatprep.subr.mxu0 0.0
      %8985 = vmatpush1.msra.mxu0 0.0
      %8986 = vmatprep.subr.mxu0 0.0
      %8987 = vmatpush1.msra.mxu0 0.0
      %8988 = vmatprep.subr.mxu0 0.0
      %8989 = vmatpush1.msra.mxu0 0.0
      %8990 = vmatprep.subr.mxu0 %v8954
      %8991 = vmatpush1.msra.mxu0 %v8953
      %8992 = vmatprep.subr.mxu0 %v8952
      %8993 = vmatpush1.msra.mxu0 %v8951
      %8994 = vmatprep.subr.mxu0 %v8950
      %8995 = vmatpush1.msra.mxu0 %v8949
      %8996 = vmatprep.subr.mxu0 %v8948
      %8997 = vmatpush1.msra.mxu0 %v8947
      %8998 = vmatprep.subr.mxu0 %v8946
      %8999 = vmatpush1.msra.mxu0 %v8945
      %9000 = vmatprep.subr.mxu0 %v8944
      %9001 = vmatpush1.msra.mxu0 %v8943
      %9002 = vmatprep.subr.mxu0 %v8942
      %9003 = vmatpush1.msra.mxu0 %v8941
      %9004 = vmatprep.subr.mxu0 %v8940
      %9005 = vmatpush1.msra.mxu0 %v8939
      %9006 = vmatprep.subr.mxu0 0.0
      %9007 = vmatpush2.msra.mxu0 0.0
      %9008 = vmatprep.subr.mxu0 0.0
      %9009 = vmatpush2.msra.mxu0 0.0
      %9010 = vmatprep.subr.mxu0 0.0
      %9011 = vmatpush2.msra.mxu0 0.0
      %9012 = vmatprep.subr.mxu0 0.0
      %9013 = vmatpush2.msra.mxu0 0.0
      %9014 = vmatprep.subr.mxu0 0.0
      %9015 = vmatpush2.msra.mxu0 0.0
      %9016 = vmatprep.subr.mxu0 0.0
      %9017 = vmatpush2.msra.mxu0 0.0
      %9018 = vmatprep.subr.mxu0 0.0
      %9019 = vmatpush2.msra.mxu0 0.0
      %9020 = vmatprep.subr.mxu0 0.0
      %9021 = vmatpush2.msra.mxu0 0.0
      %9022 = vmatprep.subr.mxu0 0.0
      %9023 = vmatpush2.msra.mxu0 0.0
      %9024 = vmatprep.subr.mxu0 0.0
      %9025 = vmatpush2.msra.mxu0 0.0
      %9026 = vmatprep.subr.mxu0 0.0
      %9027 = vmatpush2.msra.mxu0 0.0
      %9028 = vmatprep.subr.mxu0 0.0
      %9029 = vmatpush2.msra.mxu0 0.0
      %9030 = vmatprep.subr.mxu0 0.0
      %9031 = vmatpush2.msra.mxu0 0.0
      %9032 = vmatprep.subr.mxu0 0.0
      %9033 = vmatpush2.msra.mxu0 0.0
      %9034 = vmatprep.subr.mxu0 0.0
      %9035 = vmatpush2.msra.mxu0 0.0
      %9036 = vmatprep.subr.mxu0 0.0
      %9037 = vmatpush2.msra.mxu0 0.0
      %9038 = vmatprep.mubr.f32.mxu0 0.0
      %9039 = vmatmul.mubr.f32.gmra.mxu0 %v8972
      %v9040 = vpop.f32.mrf.mxu0
      %v9041 = vadd.f32 0.0, %v9040
      %v9042 = vpop.f32.mrf.mxu0
      %v9043 = vadd.f32 0.0, %v9042
      %9044 = vdwg.mxu0
      %v9045 = vadd.f32 %v8569, %v9041
      %v9046 = vadd.f32 %v8571, %v9043
      %v9047 = vmul.f32 %v8729, %v271
      %v9048 = vmul.f32 %v8730, %v272
      %v9049 = vadd.f32 %v9047, %v8887
      %v9050 = vadd.f32 %v9048, %v8888
      %v9051 = vmul.f32 %v9045, %v277
      %v9052 = vmul.f32 %v9046, %v278
      %v9053 = vadd.f32 %v9049, %v9051
      %v9054 = vadd.f32 %v9050, %v9052
      %9056 = vset.pattern.permute.xlu0 4
      %9057 = vperm.xlu0 %9056, %v287
      %v9058 = vpop.permute.xlu0 %9057
      %v9060 = vadd.f32 %v9053, %v9058
      %v9061 = vadd.f32 %v9054, %v9058
      %v9062 = vmax.f32 %v9060, 0.0
      %v9063 = vmax.f32 %v9061, 0.0
      %v9066 = vcombine.low %v9062, %v9063
      %v9068 = vunpack.c.l.s4 1966171168
      %v9069 = vunpack.c.0.s8 %v9068
      %v9070 = vlaneseq
      %v9071 = vshrl.u32 %v9070, 7
      %v9072 = vsub.s32 %v9069, %v9071
      %v9073 = vrot.slane %v9066, %v9072
      %v9075 = vunpack.c.l.s4 1966171168
      %v9076 = vunpack.c.0.s8 %v9075
      %v9077 = vlaneseq
      %v9078 = vshrl.u32 %v9077, 7
      %v9079 = vsub.s32 %v9076, %v9078
      %v9080 = vrot.slane %v9073, %v9079
      %9082 = vst.msk [vmem:[%s219] sm:$0x3] %vm323, %v9080
      %p9083 = scmp.lt.s32.totalorder %s16, 1
      %s9084 = scalar_select %p9083, %s16, 1
      %s9085 = smul.addr %s9084, 2
      %s9086 = scalar_lea.vmem %s5, %s9085
      // Predicated region
      $region41: #{denoiser_forward.1} parent=39 // pred_check
        %p9087 = pneg %p144
      $region42: #{denoiser_forward.1} parent=39 // pred_check_branch
        %9089 = sbr.rel (%p9087) target = $region44
      $region43: #{denoiser_forward.1} parent=39 // pred_region
        _
      $region44: #{denoiser_forward.1} parent=39 // pred_fallthru
        _
    $region40: #{denoiser_forward.1} parent=5 // pred_fallthru
      _
    %p9090 = scmp.le.s32.totalorder 2, %s11
    // Predicated region
    $region45: #{denoiser_forward.1} parent=5 // pred_check
      %p9091 = pneg %p9090
    $region46: #{denoiser_forward.1} parent=5 // pred_check_branch
      %9093 = sbr.rel (%p9091) target = $region48
    $region47: #{denoiser_forward.1} parent=5 // pred_region
      %s9094 = ssub.s32 %s11, 2
      // Predicated region
      $region49: #{denoiser_forward.1} parent=47 // pred_check
        %p9095 = pneg %p150
      $region50: #{denoiser_forward.1} parent=47 // pred_check_branch
        %9097 = sbr.rel (%p9095) target = $region52
      $region51: #{denoiser_forward.1} parent=47 // pred_region
        %p9098 = scmp.lt.s32.totalorder %s17, 1
        %s9099 = scalar_select %p9098, %s17, 1
        %s9100 = smul.addr %s9099, 2
        %s9101 = scalar_lea.vmem %s5, %s9100
      $region52: #{denoiser_forward.1} parent=47 // pred_fallthru
        _
    $region48: #{denoiser_forward.1} parent=5 // pred_fallthru
      _
  $region6: #{denoiser_forward.1} parent=0 // loop_footer
    %s15 = sadd.s32 1, %s11
  $region7: #{denoiser_forward.1} parent=0 // loop_footer_branch
    %10 = sbr.rel target = $region3
  $region8: #{denoiser_forward.1} parent=0 // loop_exit
    _

</llo_original>
